<compile_context>
chip_gen: v7x
topology: tpu7x:2x2x1
jax: 0.10.0
libtpu: 0.0.40
codegen_flags: <defaults>
</compile_context>

<pallas_src>
import jax
import jax.numpy as jnp
from jax.experimental import pallas as pl
from jax.experimental.pallas import tpu as pltpu

NUM_LAYERS = 3
HIDDEN = 30
INPUT_SIZE = 1
OUTPUT_SIZE = 1

GATE_PAD = 128          # lane-aligned width of each gate block (i, f, g, o)
K_PAD = 32              # sublane-aligned contraction padding for h / c (30 -> 32)
GATES_W = 4 * GATE_PAD  # 512


def lstm_kernel(seq_ref, w0x_ref, w0h_ref, w12_ref, b_ref, w_lin_ref, b_lin_ref, o_ref):
    L = seq_ref.shape[0]

    # Hoist loop-invariant small loads (would otherwise be re-issued every iteration).
    w0x = w0x_ref[...]      # (1, 512)
    b0 = b_ref[0]           # (1, 512)
    b1 = b_ref[1]
    b2 = b_ref[2]

    def cell(gates, c):
        # gates: (1, 512) pre-activations; i/f/o columns were pre-scaled by 0.5 at pack
        # time so sigmoid(z) == 0.5 + 0.5*tanh(scaled pre-activation). One EUP tanh pass
        # over the whole gate row, every slice below starts on a 128-lane boundary.
        t = jnp.tanh(gates)
        i_g = 0.5 + 0.5 * t[:, 0 * GATE_PAD:0 * GATE_PAD + K_PAD]
        f_g = 0.5 + 0.5 * t[:, 1 * GATE_PAD:1 * GATE_PAD + K_PAD]
        g_g =             t[:, 2 * GATE_PAD:2 * GATE_PAD + K_PAD]
        o_g = 0.5 + 0.5 * t[:, 3 * GATE_PAD:3 * GATE_PAD + K_PAD]
        # Padded lanes (30, 31): pre-activation 0 -> i=f=o=0.5, g=0 -> c, h stay exactly 0.
        c_new = f_g * c + i_g * g_g
        h_new = o_g * jnp.tanh(c_new)
        return h_new, c_new

    def step(k, carry):
        # Layer wavefront: iteration k computes layer0 at t=k, layer1 at t=k-1 and
        # layer2 at t=k-2, each using only carry-in values -> the three matmuls are
        # mutually independent within one iteration.
        h0, c0, h1, c1, h2, c2 = carry

        # ---- layer 2 at t = k-2 (reads carry-in h1 = layer1 output for t=k-2) ----
        g2 = (jnp.dot(h1, w12_ref[2], preferred_element_type=jnp.float32)
              + jnp.dot(h2, w12_ref[3], preferred_element_type=jnp.float32)
              + b2)
        h2n, c2n = cell(g2, c2)

        # ---- layer 1 at t = k-1 (reads carry-in h0 = layer0 output for t=k-1) ----
        g1 = (jnp.dot(h0, w12_ref[0], preferred_element_type=jnp.float32)
              + jnp.dot(h1, w12_ref[1], preferred_element_type=jnp.float32)
              + b1)
        h1n, c1n = cell(g1, c1)

        # ---- layer 0 at t = k (scalar input -> VPU broadcast-mul; only h uses MXU) ----
        x_t = seq_ref[jnp.minimum(k, L - 1)]      # clamp for the 2 drain iterations
        g0 = (x_t * w0x
              + jnp.dot(h0, w0h_ref[...], preferred_element_type=jnp.float32)
              + b0)
        h0n, c0n = cell(g0, c0)

        # Warmup gating: layer1 valid from k>=1, layer2 from k>=2. Trailing (k>=L)
        # garbage in h0/c0 (and h1/c1 at k=L+1) never reaches the layer2 output state.
        h1n = jnp.where(k >= 1, h1n, h1)
        c1n = jnp.where(k >= 1, c1n, c1)
        h2n = jnp.where(k >= 2, h2n, h2)
        c2n = jnp.where(k >= 2, c2n, c2)
        return (h0n, c0n, h1n, c1n, h2n, c2n)

    zeros = jnp.zeros((1, K_PAD), jnp.float32)
    init = (zeros, zeros, zeros, zeros, zeros, zeros)
    n_iters = L + 2                                  # 2 wavefront warmup/drain iterations
    unroll = True if n_iters <= 16 else 4
    _, _, _, _, h2, _ = jax.lax.fori_loop(0, n_iters, step, init, unroll=unroll)

    # Linear head on the last timestep: (1,30)x(30,1) as VPU mul + lane reduce.
    o_ref[...] = (jnp.sum(h2 * w_lin_ref[...], axis=-1, keepdims=True)
                  + b_lin_ref[...])


def lstm_forward(input_seq, packed):
    """input_seq: (L,) float32 -> (OUTPUT_SIZE,) float32 (== y_pred[-1] of the module)."""
    w0x, w0h, w12, b, w_lin_p, b_lin_p = packed
    out = pl.pallas_call(
        lstm_kernel,
        out_shape=jax.ShapeDtypeStruct((1, 1), jnp.float32),
        in_specs=[
            pl.BlockSpec(memory_space=pltpu.MemorySpace.SMEM),   # input_seq (L,)
            pl.BlockSpec(memory_space=pltpu.MemorySpace.VMEM),   # w0x   (1, 512)
            pl.BlockSpec(memory_space=pltpu.MemorySpace.VMEM),   # w0h   (32, 512)
            pl.BlockSpec(memory_space=pltpu.MemorySpace.VMEM),   # w12   (4, 32, 512)
            pl.BlockSpec(memory_space=pltpu.MemorySpace.VMEM),   # b     (3, 1, 512)
            pl.BlockSpec(memory_space=pltpu.MemorySpace.VMEM),   # w_lin (1, 32)
            pl.BlockSpec(memory_space=pltpu.MemorySpace.VMEM),   # b_lin (1, 1)
        ],
        out_specs=pl.BlockSpec(memory_space=pltpu.MemorySpace.VMEM),
    )(input_seq, w0x, w0h, w12, b, w_lin_p, b_lin_p)
    return out.reshape(OUTPUT_SIZE)


# ----------------------------------------------------------------------------- packing

def _pack_gate_weight(w, rows):
    """w: (4*HIDDEN, in_dim) PyTorch layout -> (rows, 512), transposed, gate g at
    lane-aligned columns [g*128, g*128+HIDDEN). i/f/o columns pre-scaled by 0.5 for the
    sigmoid(z) = 0.5 + 0.5*tanh(z/2) folding used in the kernel."""
    in_dim = w.shape[1]
    out = jnp.zeros((rows, GATES_W), jnp.float32)
    for g in range(4):
        blk = w[g * HIDDEN:(g + 1) * HIDDEN, :].T        # (in_dim, HIDDEN)
        if g != 2:                                       # i, f, o gates -> sigmoid fold
            blk = blk * 0.5
        out = out.at[:in_dim, g * GATE_PAD:g * GATE_PAD + HIDDEN].set(blk)
    return out


def pack_params(raw, w_lin, b_lin):
    w_ih0, w_hh0, _, _ = raw[0]
    w0x = _pack_gate_weight(w_ih0, 1)            # (1, 512) row for the scalar input
    w0h = _pack_gate_weight(w_hh0, K_PAD)        # (32, 512)

    w12 = []
    for l in (1, 2):
        w_ih, w_hh, _, _ = raw[l]
        w12.append(_pack_gate_weight(w_ih, K_PAD))   # lower-layer h contribution
        w12.append(_pack_gate_weight(w_hh, K_PAD))   # self-recurrent contribution
    w12 = jnp.stack(w12)                          # (4, 32, 512): [l1_ih, l1_hh, l2_ih, l2_hh]

    b = []
    for l in range(NUM_LAYERS):
        _, _, b_ih, b_hh = raw[l]
        bsum = b_ih + b_hh
        bl = jnp.zeros((1, GATES_W), jnp.float32)
        for g in range(4):
            scale = 1.0 if g == 2 else 0.5           # sigmoid-as-tanh folding
            bl = bl.at[0, g * GATE_PAD:g * GATE_PAD + HIDDEN].set(
                scale * bsum[g * HIDDEN:(g + 1) * HIDDEN])
        b.append(bl)
    b = jnp.stack(b)                              # (3, 1, 512)

    w_lin_p = jnp.zeros((1, K_PAD), jnp.float32).at[0, :HIDDEN].set(w_lin[0])
    b_lin_p = b_lin.reshape(1, 1)
    return w0x, w0h, w12, b, w_lin_p, b_lin_p


def init_params(key):
    """Deterministic init mimicking PyTorch's uniform(-1/sqrt(H), 1/sqrt(H))."""
    k = 1.0 / jnp.sqrt(jnp.float32(HIDDEN))
    keys = jax.random.split(key, NUM_LAYERS * 4 + 2)
    raw = []
    for l in range(NUM_LAYERS):
        in_sz = INPUT_SIZE if l == 0 else HIDDEN
        kw = keys[4 * l:4 * l + 4]
        w_ih = jax.random.uniform(kw[0], (4 * HIDDEN, in_sz), jnp.float32, -k, k)
        w_hh = jax.random.uniform(kw[1], (4 * HIDDEN, HIDDEN), jnp.float32, -k, k)
        b_ih = jax.random.uniform(kw[2], (4 * HIDDEN,), jnp.float32, -k, k)
        b_hh = jax.random.uniform(kw[3], (4 * HIDDEN,), jnp.float32, -k, k)
        raw.append((w_ih, w_hh, b_ih, b_hh))
    w_lin = jax.random.uniform(keys[-2], (OUTPUT_SIZE, HIDDEN), jnp.float32, -k, k)
    b_lin = jax.random.uniform(keys[-1], (OUTPUT_SIZE,), jnp.float32, -k, k)
    packed = pack_params(raw, w_lin, b_lin)
    return raw, (w_lin, b_lin), packed


# ----------------------------------------------------------------------------- reference

def reference_forward(input_seq, raw, lin):
    """Plain-JAX mirror of the PyTorch forward (eval mode), for validation."""
    w_lin, b_lin = lin
    L = input_seq.shape[0]
    h = [jnp.zeros((1, HIDDEN), jnp.float32) for _ in range(NUM_LAYERS)]
    c = [jnp.zeros((1, HIDDEN), jnp.float32) for _ in range(NUM_LAYERS)]
    last = None
    for t in range(L):
        x = input_seq[t].reshape(1, INPUT_SIZE)
        for l in range(NUM_LAYERS):
            w_ih, w_hh, b_ih, b_hh = raw[l]
            gates = x @ w_ih.T + h[l] @ w_hh.T + b_ih + b_hh
            i_g = jax.nn.sigmoid(gates[:, 0 * HIDDEN:1 * HIDDEN])
            f_g = jax.nn.sigmoid(gates[:, 1 * HIDDEN:2 * HIDDEN])
            g_g = jnp.tanh(gates[:, 2 * HIDDEN:3 * HIDDEN])
            o_g = jax.nn.sigmoid(gates[:, 3 * HIDDEN:4 * HIDDEN])
            c[l] = f_g * c[l] + i_g * g_g
            h[l] = o_g * jnp.tanh(c[l])
            x = h[l]
        last = x
    return (last @ w_lin.T + b_lin).reshape(OUTPUT_SIZE)


if __name__ == "__main__":
    key = jax.random.PRNGKey(0)
    k_param, k_x = jax.random.split(key)
    raw, lin, packed = init_params(k_param)

    L = 8  # sequence length
    input_seq = jax.random.normal(k_x, (L,), jnp.float32)

    y = lstm_forward(input_seq, packed)
    y = jax.block_until_ready(y)

    y_ref = reference_forward(input_seq, raw, lin)
    assert y.shape == (OUTPUT_SIZE,)
    assert jnp.allclose(y, y_ref, atol=5e-5, rtol=1e-5), (y, y_ref)
    print("KERNEL_OK")
</pallas_src>

<mosaic_0001>
module attributes {stable_mosaic.version = 11 : i64} {
  func.func @lstm_kernel(%arg0: memref<8xf32, #tpu.memory_space<smem>>, %arg1: memref<1x512xf32, #tpu.memory_space<vmem>>, %arg2: memref<32x512xf32, #tpu.memory_space<vmem>>, %arg3: memref<4x32x512xf32, #tpu.memory_space<vmem>>, %arg4: memref<3x1x512xf32, #tpu.memory_space<vmem>>, %arg5: memref<1x32xf32, #tpu.memory_space<vmem>>, %arg6: memref<1x1xf32, #tpu.memory_space<vmem>>, %arg7: memref<1x1xf32, #tpu.memory_space<vmem>>) attributes {dimension_semantics = [], scalar_prefetch = 0 : i64, scratch_operands = 0 : i64, tpu.core_type = #tpu.core_type<tc>} {
    %c0 = arith.constant 0 : index
    %c0_0 = arith.constant 0 : index
    %0 = vector.load %arg1[%c0, %c0_0] : memref<1x512xf32, #tpu.memory_space<vmem>>, vector<1x512xf32>
    %c0_1 = arith.constant 0 : index
    %c0_2 = arith.constant 0 : index
    %c0_3 = arith.constant 0 : index
    %1 = vector.load %arg4[%c0_1, %c0_2, %c0_3] : memref<3x1x512xf32, #tpu.memory_space<vmem>>, vector<1x1x512xf32>
    %2 = vector.shape_cast %1 : vector<1x1x512xf32> to vector<1x512xf32>
    %c1 = arith.constant 1 : index
    %c0_4 = arith.constant 0 : index
    %c0_5 = arith.constant 0 : index
    %3 = vector.load %arg4[%c1, %c0_4, %c0_5] : memref<3x1x512xf32, #tpu.memory_space<vmem>>, vector<1x1x512xf32>
    %4 = vector.shape_cast %3 : vector<1x1x512xf32> to vector<1x512xf32>
    %c2 = arith.constant 2 : index
    %c0_6 = arith.constant 0 : index
    %c0_7 = arith.constant 0 : index
    %5 = vector.load %arg4[%c2, %c0_6, %c0_7] : memref<3x1x512xf32, #tpu.memory_space<vmem>>, vector<1x1x512xf32>
    %6 = vector.shape_cast %5 : vector<1x1x512xf32> to vector<1x512xf32>
    %cst = arith.constant 0.000000e+00 : f32
    %7 = vector.broadcast %cst : f32 to vector<1x32xf32>
    %c0_i32 = arith.constant 0 : i32
    %c2_8 = arith.constant 2 : index
    %c0_9 = arith.constant 0 : index
    %c0_10 = arith.constant 0 : index
    %8 = vector.load %arg3[%c2_8, %c0_9, %c0_10] : memref<4x32x512xf32, #tpu.memory_space<vmem>>, vector<1x32x512xf32>
    %9 = vector.shape_cast %8 : vector<1x32x512xf32> to vector<32x512xf32>
    %cst_11 = arith.constant dense<0.000000e+00> : vector<1x512xf32>
    %10 = tpu.matmul %7, %9, %cst_11 {dimension_numbers = #tpu.dot_dimension_numbers<[1], [0], [0], [1], [0, 0, 1, 1], [], []>} : vector<1x32xf32>, vector<32x512xf32>, vector<1x512xf32> -> vector<1x512xf32>
    %c3 = arith.constant 3 : index
    %c0_12 = arith.constant 0 : index
    %c0_13 = arith.constant 0 : index
    %11 = vector.load %arg3[%c3, %c0_12, %c0_13] : memref<4x32x512xf32, #tpu.memory_space<vmem>>, vector<1x32x512xf32>
    %12 = vector.shape_cast %11 : vector<1x32x512xf32> to vector<32x512xf32>
    %cst_14 = arith.constant dense<0.000000e+00> : vector<1x512xf32>
    %13 = tpu.matmul %7, %12, %cst_14 {dimension_numbers = #tpu.dot_dimension_numbers<[1], [0], [0], [1], [0, 0, 1, 1], [], []>} : vector<1x32xf32>, vector<32x512xf32>, vector<1x512xf32> -> vector<1x512xf32>
    %14 = arith.addf %10, %13 : vector<1x512xf32>
    %15 = arith.addf %14, %6 : vector<1x512xf32>
    %16 = math.tanh %15 : vector<1x512xf32>
    %17 = vector.extract_strided_slice %16 {offsets = [0, 0], sizes = [1, 32], strides = [1, 1]} : vector<1x512xf32> to vector<1x32xf32>
    %cst_15 = arith.constant 5.000000e-01 : f32
    %18 = vector.broadcast %cst_15 : f32 to vector<1x32xf32>
    %19 = arith.mulf %18, %17 : vector<1x32xf32>
    %cst_16 = arith.constant 5.000000e-01 : f32
    %20 = vector.broadcast %cst_16 : f32 to vector<1x32xf32>
    %21 = arith.addf %20, %19 : vector<1x32xf32>
    %22 = vector.extract_strided_slice %16 {offsets = [0, 128], sizes = [1, 32], strides = [1, 1]} : vector<1x512xf32> to vector<1x32xf32>
    %cst_17 = arith.constant 5.000000e-01 : f32
    %23 = vector.broadcast %cst_17 : f32 to vector<1x32xf32>
    %24 = arith.mulf %23, %22 : vector<1x32xf32>
    %cst_18 = arith.constant 5.000000e-01 : f32
    %25 = vector.broadcast %cst_18 : f32 to vector<1x32xf32>
    %26 = arith.addf %25, %24 : vector<1x32xf32>
    %27 = vector.extract_strided_slice %16 {offsets = [0, 256], sizes = [1, 32], strides = [1, 1]} : vector<1x512xf32> to vector<1x32xf32>
    %28 = vector.extract_strided_slice %16 {offsets = [0, 384], sizes = [1, 32], strides = [1, 1]} : vector<1x512xf32> to vector<1x32xf32>
    %cst_19 = arith.constant 5.000000e-01 : f32
    %29 = vector.broadcast %cst_19 : f32 to vector<1x32xf32>
    %30 = arith.mulf %29, %28 : vector<1x32xf32>
    %cst_20 = arith.constant 5.000000e-01 : f32
    %31 = vector.broadcast %cst_20 : f32 to vector<1x32xf32>
    %32 = arith.addf %31, %30 : vector<1x32xf32>
    %33 = arith.mulf %26, %7 : vector<1x32xf32>
    %34 = arith.mulf %21, %27 : vector<1x32xf32>
    %35 = arith.addf %33, %34 : vector<1x32xf32>
    %36 = math.tanh %35 : vector<1x32xf32>
    %37 = arith.mulf %32, %36 : vector<1x32xf32>
    %c0_21 = arith.constant 0 : index
    %c0_22 = arith.constant 0 : index
    %c0_23 = arith.constant 0 : index
    %38 = vector.load %arg3[%c0_21, %c0_22, %c0_23] : memref<4x32x512xf32, #tpu.memory_space<vmem>>, vector<1x32x512xf32>
    %39 = vector.shape_cast %38 : vector<1x32x512xf32> to vector<32x512xf32>
    %cst_24 = arith.constant dense<0.000000e+00> : vector<1x512xf32>
    %40 = tpu.matmul %7, %39, %cst_24 {dimension_numbers = #tpu.dot_dimension_numbers<[1], [0], [0], [1], [0, 0, 1, 1], [], []>} : vector<1x32xf32>, vector<32x512xf32>, vector<1x512xf32> -> vector<1x512xf32>
    %c1_25 = arith.constant 1 : index
    %c0_26 = arith.constant 0 : index
    %c0_27 = arith.constant 0 : index
    %41 = vector.load %arg3[%c1_25, %c0_26, %c0_27] : memref<4x32x512xf32, #tpu.memory_space<vmem>>, vector<1x32x512xf32>
    %42 = vector.shape_cast %41 : vector<1x32x512xf32> to vector<32x512xf32>
    %cst_28 = arith.constant dense<0.000000e+00> : vector<1x512xf32>
    %43 = tpu.matmul %7, %42, %cst_28 {dimension_numbers = #tpu.dot_dimension_numbers<[1], [0], [0], [1], [0, 0, 1, 1], [], []>} : vector<1x32xf32>, vector<32x512xf32>, vector<1x512xf32> -> vector<1x512xf32>
    %44 = arith.addf %40, %43 : vector<1x512xf32>
    %45 = arith.addf %44, %4 : vector<1x512xf32>
    %46 = math.tanh %45 : vector<1x512xf32>
    %47 = vector.extract_strided_slice %46 {offsets = [0, 0], sizes = [1, 32], strides = [1, 1]} : vector<1x512xf32> to vector<1x32xf32>
    %cst_29 = arith.constant 5.000000e-01 : f32
    %48 = vector.broadcast %cst_29 : f32 to vector<1x32xf32>
    %49 = arith.mulf %48, %47 : vector<1x32xf32>
    %cst_30 = arith.constant 5.000000e-01 : f32
    %50 = vector.broadcast %cst_30 : f32 to vector<1x32xf32>
    %51 = arith.addf %50, %49 : vector<1x32xf32>
    %52 = vector.extract_strided_slice %46 {offsets = [0, 128], sizes = [1, 32], strides = [1, 1]} : vector<1x512xf32> to vector<1x32xf32>
    %cst_31 = arith.constant 5.000000e-01 : f32
    %53 = vector.broadcast %cst_31 : f32 to vector<1x32xf32>
    %54 = arith.mulf %53, %52 : vector<1x32xf32>
    %cst_32 = arith.constant 5.000000e-01 : f32
    %55 = vector.broadcast %cst_32 : f32 to vector<1x32xf32>
    %56 = arith.addf %55, %54 : vector<1x32xf32>
    %57 = vector.extract_strided_slice %46 {offsets = [0, 256], sizes = [1, 32], strides = [1, 1]} : vector<1x512xf32> to vector<1x32xf32>
    %58 = vector.extract_strided_slice %46 {offsets = [0, 384], sizes = [1, 32], strides = [1, 1]} : vector<1x512xf32> to vector<1x32xf32>
    %cst_33 = arith.constant 5.000000e-01 : f32
    %59 = vector.broadcast %cst_33 : f32 to vector<1x32xf32>
    %60 = arith.mulf %59, %58 : vector<1x32xf32>
    %cst_34 = arith.constant 5.000000e-01 : f32
    %61 = vector.broadcast %cst_34 : f32 to vector<1x32xf32>
    %62 = arith.addf %61, %60 : vector<1x32xf32>
    %63 = arith.mulf %56, %7 : vector<1x32xf32>
    %64 = arith.mulf %51, %57 : vector<1x32xf32>
    %65 = arith.addf %63, %64 : vector<1x32xf32>
    %66 = math.tanh %65 : vector<1x32xf32>
    %67 = arith.mulf %62, %66 : vector<1x32xf32>
    %c7_i32 = arith.constant 7 : i32
    %68 = arith.minsi %c0_i32, %c7_i32 : i32
    %69 = arith.index_cast %68 : i32 to index
    %70 = memref.load %arg0[%69] : memref<8xf32, #tpu.memory_space<smem>>
    %71 = vector.broadcast %70 : f32 to vector<1x512xf32>
    %72 = arith.mulf %71, %0 : vector<1x512xf32>
    %c0_35 = arith.constant 0 : index
    %c0_36 = arith.constant 0 : index
    %73 = vector.load %arg2[%c0_35, %c0_36] : memref<32x512xf32, #tpu.memory_space<vmem>>, vector<32x512xf32>
    %cst_37 = arith.constant dense<0.000000e+00> : vector<1x512xf32>
    %74 = tpu.matmul %7, %73, %cst_37 {dimension_numbers = #tpu.dot_dimension_numbers<[1], [0], [0], [1], [0, 0, 1, 1], [], []>} : vector<1x32xf32>, vector<32x512xf32>, vector<1x512xf32> -> vector<1x512xf32>
    %75 = arith.addf %72, %74 : vector<1x512xf32>
    %76 = arith.addf %75, %2 : vector<1x512xf32>
    %77 = math.tanh %76 : vector<1x512xf32>
    %78 = vector.extract_strided_slice %77 {offsets = [0, 0], sizes = [1, 32], strides = [1, 1]} : vector<1x512xf32> to vector<1x32xf32>
    %cst_38 = arith.constant 5.000000e-01 : f32
    %79 = vector.broadcast %cst_38 : f32 to vector<1x32xf32>
    %80 = arith.mulf %79, %78 : vector<1x32xf32>
    %cst_39 = arith.constant 5.000000e-01 : f32
    %81 = vector.broadcast %cst_39 : f32 to vector<1x32xf32>
    %82 = arith.addf %81, %80 : vector<1x32xf32>
    %83 = vector.extract_strided_slice %77 {offsets = [0, 128], sizes = [1, 32], strides = [1, 1]} : vector<1x512xf32> to vector<1x32xf32>
    %cst_40 = arith.constant 5.000000e-01 : f32
    %84 = vector.broadcast %cst_40 : f32 to vector<1x32xf32>
    %85 = arith.mulf %84, %83 : vector<1x32xf32>
    %cst_41 = arith.constant 5.000000e-01 : f32
    %86 = vector.broadcast %cst_41 : f32 to vector<1x32xf32>
    %87 = arith.addf %86, %85 : vector<1x32xf32>
    %88 = vector.extract_strided_slice %77 {offsets = [0, 256], sizes = [1, 32], strides = [1, 1]} : vector<1x512xf32> to vector<1x32xf32>
    %89 = vector.extract_strided_slice %77 {offsets = [0, 384], sizes = [1, 32], strides = [1, 1]} : vector<1x512xf32> to vector<1x32xf32>
    %cst_42 = arith.constant 5.000000e-01 : f32
    %90 = vector.broadcast %cst_42 : f32 to vector<1x32xf32>
    %91 = arith.mulf %90, %89 : vector<1x32xf32>
    %cst_43 = arith.constant 5.000000e-01 : f32
    %92 = vector.broadcast %cst_43 : f32 to vector<1x32xf32>
    %93 = arith.addf %92, %91 : vector<1x32xf32>
    %94 = arith.mulf %87, %7 : vector<1x32xf32>
    %95 = arith.mulf %82, %88 : vector<1x32xf32>
    %96 = arith.addf %94, %95 : vector<1x32xf32>
    %97 = math.tanh %96 : vector<1x32xf32>
    %98 = arith.mulf %93, %97 : vector<1x32xf32>
    %c1_i32 = arith.constant 1 : i32
    %99 = arith.cmpi sge, %c0_i32, %c1_i32 : i32
    %100 = arith.select %99, %67, %7 : vector<1x32xf32>
    %c1_i32_44 = arith.constant 1 : i32
    %101 = arith.cmpi sge, %c0_i32, %c1_i32_44 : i32
    %102 = arith.select %101, %65, %7 : vector<1x32xf32>
    %c2_i32 = arith.constant 2 : i32
    %103 = arith.cmpi sge, %c0_i32, %c2_i32 : i32
    %104 = arith.select %103, %37, %7 : vector<1x32xf32>
    %c2_i32_45 = arith.constant 2 : i32
    %105 = arith.cmpi sge, %c0_i32, %c2_i32_45 : i32
    %106 = arith.select %105, %35, %7 : vector<1x32xf32>
    %c1_i32_46 = arith.constant 1 : i32
    %c2_47 = arith.constant 2 : index
    %c0_48 = arith.constant 0 : index
    %c0_49 = arith.constant 0 : index
    %107 = vector.load %arg3[%c2_47, %c0_48, %c0_49] : memref<4x32x512xf32, #tpu.memory_space<vmem>>, vector<1x32x512xf32>
    %108 = vector.shape_cast %107 : vector<1x32x512xf32> to vector<32x512xf32>
    %cst_50 = arith.constant dense<0.000000e+00> : vector<1x512xf32>
    %109 = tpu.matmul %100, %108, %cst_50 {dimension_numbers = #tpu.dot_dimension_numbers<[1], [0], [0], [1], [0, 0, 1, 1], [], []>} : vector<1x32xf32>, vector<32x512xf32>, vector<1x512xf32> -> vector<1x512xf32>
    %c3_51 = arith.constant 3 : index
    %c0_52 = arith.constant 0 : index
    %c0_53 = arith.constant 0 : index
    %110 = vector.load %arg3[%c3_51, %c0_52, %c0_53] : memref<4x32x512xf32, #tpu.memory_space<vmem>>, vector<1x32x512xf32>
    %111 = vector.shape_cast %110 : vector<1x32x512xf32> to vector<32x512xf32>
    %cst_54 = arith.constant dense<0.000000e+00> : vector<1x512xf32>
    %112 = tpu.matmul %104, %111, %cst_54 {dimension_numbers = #tpu.dot_dimension_numbers<[1], [0], [0], [1], [0, 0, 1, 1], [], []>} : vector<1x32xf32>, vector<32x512xf32>, vector<1x512xf32> -> vector<1x512xf32>
    %113 = arith.addf %109, %112 : vector<1x512xf32>
    %114 = arith.addf %113, %6 : vector<1x512xf32>
    %115 = math.tanh %114 : vector<1x512xf32>
    %116 = vector.extract_strided_slice %115 {offsets = [0, 0], sizes = [1, 32], strides = [1, 1]} : vector<1x512xf32> to vector<1x32xf32>
    %cst_55 = arith.constant 5.000000e-01 : f32
    %117 = vector.broadcast %cst_55 : f32 to vector<1x32xf32>
    %118 = arith.mulf %117, %116 : vector<1x32xf32>
    %cst_56 = arith.constant 5.000000e-01 : f32
    %119 = vector.broadcast %cst_56 : f32 to vector<1x32xf32>
    %120 = arith.addf %119, %118 : vector<1x32xf32>
    %121 = vector.extract_strided_slice %115 {offsets = [0, 128], sizes = [1, 32], strides = [1, 1]} : vector<1x512xf32> to vector<1x32xf32>
    %cst_57 = arith.constant 5.000000e-01 : f32
    %122 = vector.broadcast %cst_57 : f32 to vector<1x32xf32>
    %123 = arith.mulf %122, %121 : vector<1x32xf32>
    %cst_58 = arith.constant 5.000000e-01 : f32
    %124 = vector.broadcast %cst_58 : f32 to vector<1x32xf32>
    %125 = arith.addf %124, %123 : vector<1x32xf32>
    %126 = vector.extract_strided_slice %115 {offsets = [0, 256], sizes = [1, 32], strides = [1, 1]} : vector<1x512xf32> to vector<1x32xf32>
    %127 = vector.extract_strided_slice %115 {offsets = [0, 384], sizes = [1, 32], strides = [1, 1]} : vector<1x512xf32> to vector<1x32xf32>
    %cst_59 = arith.constant 5.000000e-01 : f32
    %128 = vector.broadcast %cst_59 : f32 to vector<1x32xf32>
    %129 = arith.mulf %128, %127 : vector<1x32xf32>
    %cst_60 = arith.constant 5.000000e-01 : f32
    %130 = vector.broadcast %cst_60 : f32 to vector<1x32xf32>
    %131 = arith.addf %130, %129 : vector<1x32xf32>
    %132 = arith.mulf %125, %106 : vector<1x32xf32>
    %133 = arith.mulf %120, %126 : vector<1x32xf32>
    %134 = arith.addf %132, %133 : vector<1x32xf32>
    %135 = math.tanh %134 : vector<1x32xf32>
    %136 = arith.mulf %131, %135 : vector<1x32xf32>
    %c0_61 = arith.constant 0 : index
    %c0_62 = arith.constant 0 : index
    %c0_63 = arith.constant 0 : index
    %137 = vector.load %arg3[%c0_61, %c0_62, %c0_63] : memref<4x32x512xf32, #tpu.memory_space<vmem>>, vector<1x32x512xf32>
    %138 = vector.shape_cast %137 : vector<1x32x512xf32> to vector<32x512xf32>
    %cst_64 = arith.constant dense<0.000000e+00> : vector<1x512xf32>
    %139 = tpu.matmul %98, %138, %cst_64 {dimension_numbers = #tpu.dot_dimension_numbers<[1], [0], [0], [1], [0, 0, 1, 1], [], []>} : vector<1x32xf32>, vector<32x512xf32>, vector<1x512xf32> -> vector<1x512xf32>
    %c1_65 = arith.constant 1 : index
    %c0_66 = arith.constant 0 : index
    %c0_67 = arith.constant 0 : index
    %140 = vector.load %arg3[%c1_65, %c0_66, %c0_67] : memref<4x32x512xf32, #tpu.memory_space<vmem>>, vector<1x32x512xf32>
    %141 = vector.shape_cast %140 : vector<1x32x512xf32> to vector<32x512xf32>
    %cst_68 = arith.constant dense<0.000000e+00> : vector<1x512xf32>
    %142 = tpu.matmul %100, %141, %cst_68 {dimension_numbers = #tpu.dot_dimension_numbers<[1], [0], [0], [1], [0, 0, 1, 1], [], []>} : vector<1x32xf32>, vector<32x512xf32>, vector<1x512xf32> -> vector<1x512xf32>
    %143 = arith.addf %139, %142 : vector<1x512xf32>
    %144 = arith.addf %143, %4 : vector<1x512xf32>
    %145 = math.tanh %144 : vector<1x512xf32>
    %146 = vector.extract_strided_slice %145 {offsets = [0, 0], sizes = [1, 32], strides = [1, 1]} : vector<1x512xf32> to vector<1x32xf32>
    %cst_69 = arith.constant 5.000000e-01 : f32
    %147 = vector.broadcast %cst_69 : f32 to vector<1x32xf32>
    %148 = arith.mulf %147, %146 : vector<1x32xf32>
    %cst_70 = arith.constant 5.000000e-01 : f32
    %149 = vector.broadcast %cst_70 : f32 to vector<1x32xf32>
    %150 = arith.addf %149, %148 : vector<1x32xf32>
    %151 = vector.extract_strided_slice %145 {offsets = [0, 128], sizes = [1, 32], strides = [1, 1]} : vector<1x512xf32> to vector<1x32xf32>
    %cst_71 = arith.constant 5.000000e-01 : f32
    %152 = vector.broadcast %cst_71 : f32 to vector<1x32xf32>
    %153 = arith.mulf %152, %151 : vector<1x32xf32>
    %cst_72 = arith.constant 5.000000e-01 : f32
    %154 = vector.broadcast %cst_72 : f32 to vector<1x32xf32>
    %155 = arith.addf %154, %153 : vector<1x32xf32>
    %156 = vector.extract_strided_slice %145 {offsets = [0, 256], sizes = [1, 32], strides = [1, 1]} : vector<1x512xf32> to vector<1x32xf32>
    %157 = vector.extract_strided_slice %145 {offsets = [0, 384], sizes = [1, 32], strides = [1, 1]} : vector<1x512xf32> to vector<1x32xf32>
    %cst_73 = arith.constant 5.000000e-01 : f32
    %158 = vector.broadcast %cst_73 : f32 to vector<1x32xf32>
    %159 = arith.mulf %158, %157 : vector<1x32xf32>
    %cst_74 = arith.constant 5.000000e-01 : f32
    %160 = vector.broadcast %cst_74 : f32 to vector<1x32xf32>
    %161 = arith.addf %160, %159 : vector<1x32xf32>
    %162 = arith.mulf %155, %102 : vector<1x32xf32>
    %163 = arith.mulf %150, %156 : vector<1x32xf32>
    %164 = arith.addf %162, %163 : vector<1x32xf32>
    %165 = math.tanh %164 : vector<1x32xf32>
    %166 = arith.mulf %161, %165 : vector<1x32xf32>
    %c7_i32_75 = arith.constant 7 : i32
    %167 = arith.minsi %c1_i32_46, %c7_i32_75 : i32
    %168 = arith.index_cast %167 : i32 to index
    %169 = memref.load %arg0[%168] : memref<8xf32, #tpu.memory_space<smem>>
    %170 = vector.broadcast %169 : f32 to vector<1x512xf32>
    %171 = arith.mulf %170, %0 : vector<1x512xf32>
    %c0_76 = arith.constant 0 : index
    %c0_77 = arith.constant 0 : index
    %172 = vector.load %arg2[%c0_76, %c0_77] : memref<32x512xf32, #tpu.memory_space<vmem>>, vector<32x512xf32>
    %cst_78 = arith.constant dense<0.000000e+00> : vector<1x512xf32>
    %173 = tpu.matmul %98, %172, %cst_78 {dimension_numbers = #tpu.dot_dimension_numbers<[1], [0], [0], [1], [0, 0, 1, 1], [], []>} : vector<1x32xf32>, vector<32x512xf32>, vector<1x512xf32> -> vector<1x512xf32>
    %174 = arith.addf %171, %173 : vector<1x512xf32>
    %175 = arith.addf %174, %2 : vector<1x512xf32>
    %176 = math.tanh %175 : vector<1x512xf32>
    %177 = vector.extract_strided_slice %176 {offsets = [0, 0], sizes = [1, 32], strides = [1, 1]} : vector<1x512xf32> to vector<1x32xf32>
    %cst_79 = arith.constant 5.000000e-01 : f32
    %178 = vector.broadcast %cst_79 : f32 to vector<1x32xf32>
    %179 = arith.mulf %178, %177 : vector<1x32xf32>
    %cst_80 = arith.constant 5.000000e-01 : f32
    %180 = vector.broadcast %cst_80 : f32 to vector<1x32xf32>
    %181 = arith.addf %180, %179 : vector<1x32xf32>
    %182 = vector.extract_strided_slice %176 {offsets = [0, 128], sizes = [1, 32], strides = [1, 1]} : vector<1x512xf32> to vector<1x32xf32>
    %cst_81 = arith.constant 5.000000e-01 : f32
    %183 = vector.broadcast %cst_81 : f32 to vector<1x32xf32>
    %184 = arith.mulf %183, %182 : vector<1x32xf32>
    %cst_82 = arith.constant 5.000000e-01 : f32
    %185 = vector.broadcast %cst_82 : f32 to vector<1x32xf32>
    %186 = arith.addf %185, %184 : vector<1x32xf32>
    %187 = vector.extract_strided_slice %176 {offsets = [0, 256], sizes = [1, 32], strides = [1, 1]} : vector<1x512xf32> to vector<1x32xf32>
    %188 = vector.extract_strided_slice %176 {offsets = [0, 384], sizes = [1, 32], strides = [1, 1]} : vector<1x512xf32> to vector<1x32xf32>
    %cst_83 = arith.constant 5.000000e-01 : f32
    %189 = vector.broadcast %cst_83 : f32 to vector<1x32xf32>
    %190 = arith.mulf %189, %188 : vector<1x32xf32>
    %cst_84 = arith.constant 5.000000e-01 : f32
    %191 = vector.broadcast %cst_84 : f32 to vector<1x32xf32>
    %192 = arith.addf %191, %190 : vector<1x32xf32>
    %193 = arith.mulf %186, %96 : vector<1x32xf32>
    %194 = arith.mulf %181, %187 : vector<1x32xf32>
    %195 = arith.addf %193, %194 : vector<1x32xf32>
    %196 = math.tanh %195 : vector<1x32xf32>
    %197 = arith.mulf %192, %196 : vector<1x32xf32>
    %c1_i32_85 = arith.constant 1 : i32
    %198 = arith.cmpi sge, %c1_i32_46, %c1_i32_85 : i32
    %199 = arith.select %198, %166, %100 : vector<1x32xf32>
    %c1_i32_86 = arith.constant 1 : i32
    %200 = arith.cmpi sge, %c1_i32_46, %c1_i32_86 : i32
    %201 = arith.select %200, %164, %102 : vector<1x32xf32>
    %c2_i32_87 = arith.constant 2 : i32
    %202 = arith.cmpi sge, %c1_i32_46, %c2_i32_87 : i32
    %203 = arith.select %202, %136, %104 : vector<1x32xf32>
    %c2_i32_88 = arith.constant 2 : i32
    %204 = arith.cmpi sge, %c1_i32_46, %c2_i32_88 : i32
    %205 = arith.select %204, %134, %106 : vector<1x32xf32>
    %c2_i32_89 = arith.constant 2 : i32
    %c2_90 = arith.constant 2 : index
    %c0_91 = arith.constant 0 : index
    %c0_92 = arith.constant 0 : index
    %206 = vector.load %arg3[%c2_90, %c0_91, %c0_92] : memref<4x32x512xf32, #tpu.memory_space<vmem>>, vector<1x32x512xf32>
    %207 = vector.shape_cast %206 : vector<1x32x512xf32> to vector<32x512xf32>
    %cst_93 = arith.constant dense<0.000000e+00> : vector<1x512xf32>
    %208 = tpu.matmul %199, %207, %cst_93 {dimension_numbers = #tpu.dot_dimension_numbers<[1], [0], [0], [1], [0, 0, 1, 1], [], []>} : vector<1x32xf32>, vector<32x512xf32>, vector<1x512xf32> -> vector<1x512xf32>
    %c3_94 = arith.constant 3 : index
    %c0_95 = arith.constant 0 : index
    %c0_96 = arith.constant 0 : index
    %209 = vector.load %arg3[%c3_94, %c0_95, %c0_96] : memref<4x32x512xf32, #tpu.memory_space<vmem>>, vector<1x32x512xf32>
    %210 = vector.shape_cast %209 : vector<1x32x512xf32> to vector<32x512xf32>
    %cst_97 = arith.constant dense<0.000000e+00> : vector<1x512xf32>
    %211 = tpu.matmul %203, %210, %cst_97 {dimension_numbers = #tpu.dot_dimension_numbers<[1], [0], [0], [1], [0, 0, 1, 1], [], []>} : vector<1x32xf32>, vector<32x512xf32>, vector<1x512xf32> -> vector<1x512xf32>
    %212 = arith.addf %208, %211 : vector<1x512xf32>
    %213 = arith.addf %212, %6 : vector<1x512xf32>
    %214 = math.tanh %213 : vector<1x512xf32>
    %215 = vector.extract_strided_slice %214 {offsets = [0, 0], sizes = [1, 32], strides = [1, 1]} : vector<1x512xf32> to vector<1x32xf32>
    %cst_98 = arith.constant 5.000000e-01 : f32
    %216 = vector.broadcast %cst_98 : f32 to vector<1x32xf32>
    %217 = arith.mulf %216, %215 : vector<1x32xf32>
    %cst_99 = arith.constant 5.000000e-01 : f32
    %218 = vector.broadcast %cst_99 : f32 to vector<1x32xf32>
    %219 = arith.addf %218, %217 : vector<1x32xf32>
    %220 = vector.extract_strided_slice %214 {offsets = [0, 128], sizes = [1, 32], strides = [1, 1]} : vector<1x512xf32> to vector<1x32xf32>
    %cst_100 = arith.constant 5.000000e-01 : f32
    %221 = vector.broadcast %cst_100 : f32 to vector<1x32xf32>
    %222 = arith.mulf %221, %220 : vector<1x32xf32>
    %cst_101 = arith.constant 5.000000e-01 : f32
    %223 = vector.broadcast %cst_101 : f32 to vector<1x32xf32>
    %224 = arith.addf %223, %222 : vector<1x32xf32>
    %225 = vector.extract_strided_slice %214 {offsets = [0, 256], sizes = [1, 32], strides = [1, 1]} : vector<1x512xf32> to vector<1x32xf32>
    %226 = vector.extract_strided_slice %214 {offsets = [0, 384], sizes = [1, 32], strides = [1, 1]} : vector<1x512xf32> to vector<1x32xf32>
    %cst_102 = arith.constant 5.000000e-01 : f32
    %227 = vector.broadcast %cst_102 : f32 to vector<1x32xf32>
    %228 = arith.mulf %227, %226 : vector<1x32xf32>
    %cst_103 = arith.constant 5.000000e-01 : f32
    %229 = vector.broadcast %cst_103 : f32 to vector<1x32xf32>
    %230 = arith.addf %229, %228 : vector<1x32xf32>
    %231 = arith.mulf %224, %205 : vector<1x32xf32>
    %232 = arith.mulf %219, %225 : vector<1x32xf32>
    %233 = arith.addf %231, %232 : vector<1x32xf32>
    %234 = math.tanh %233 : vector<1x32xf32>
    %235 = arith.mulf %230, %234 : vector<1x32xf32>
    %c0_104 = arith.constant 0 : index
    %c0_105 = arith.constant 0 : index
    %c0_106 = arith.constant 0 : index
    %236 = vector.load %arg3[%c0_104, %c0_105, %c0_106] : memref<4x32x512xf32, #tpu.memory_space<vmem>>, vector<1x32x512xf32>
    %237 = vector.shape_cast %236 : vector<1x32x512xf32> to vector<32x512xf32>
    %cst_107 = arith.constant dense<0.000000e+00> : vector<1x512xf32>
    %238 = tpu.matmul %197, %237, %cst_107 {dimension_numbers = #tpu.dot_dimension_numbers<[1], [0], [0], [1], [0, 0, 1, 1], [], []>} : vector<1x32xf32>, vector<32x512xf32>, vector<1x512xf32> -> vector<1x512xf32>
    %c1_108 = arith.constant 1 : index
    %c0_109 = arith.constant 0 : index
    %c0_110 = arith.constant 0 : index
    %239 = vector.load %arg3[%c1_108, %c0_109, %c0_110] : memref<4x32x512xf32, #tpu.memory_space<vmem>>, vector<1x32x512xf32>
    %240 = vector.shape_cast %239 : vector<1x32x512xf32> to vector<32x512xf32>
    %cst_111 = arith.constant dense<0.000000e+00> : vector<1x512xf32>
    %241 = tpu.matmul %199, %240, %cst_111 {dimension_numbers = #tpu.dot_dimension_numbers<[1], [0], [0], [1], [0, 0, 1, 1], [], []>} : vector<1x32xf32>, vector<32x512xf32>, vector<1x512xf32> -> vector<1x512xf32>
    %242 = arith.addf %238, %241 : vector<1x512xf32>
    %243 = arith.addf %242, %4 : vector<1x512xf32>
    %244 = math.tanh %243 : vector<1x512xf32>
    %245 = vector.extract_strided_slice %244 {offsets = [0, 0], sizes = [1, 32], strides = [1, 1]} : vector<1x512xf32> to vector<1x32xf32>
    %cst_112 = arith.constant 5.000000e-01 : f32
    %246 = vector.broadcast %cst_112 : f32 to vector<1x32xf32>
    %247 = arith.mulf %246, %245 : vector<1x32xf32>
    %cst_113 = arith.constant 5.000000e-01 : f32
    %248 = vector.broadcast %cst_113 : f32 to vector<1x32xf32>
    %249 = arith.addf %248, %247 : vector<1x32xf32>
    %250 = vector.extract_strided_slice %244 {offsets = [0, 128], sizes = [1, 32], strides = [1, 1]} : vector<1x512xf32> to vector<1x32xf32>
    %cst_114 = arith.constant 5.000000e-01 : f32
    %251 = vector.broadcast %cst_114 : f32 to vector<1x32xf32>
    %252 = arith.mulf %251, %250 : vector<1x32xf32>
    %cst_115 = arith.constant 5.000000e-01 : f32
    %253 = vector.broadcast %cst_115 : f32 to vector<1x32xf32>
    %254 = arith.addf %253, %252 : vector<1x32xf32>
    %255 = vector.extract_strided_slice %244 {offsets = [0, 256], sizes = [1, 32], strides = [1, 1]} : vector<1x512xf32> to vector<1x32xf32>
    %256 = vector.extract_strided_slice %244 {offsets = [0, 384], sizes = [1, 32], strides = [1, 1]} : vector<1x512xf32> to vector<1x32xf32>
    %cst_116 = arith.constant 5.000000e-01 : f32
    %257 = vector.broadcast %cst_116 : f32 to vector<1x32xf32>
    %258 = arith.mulf %257, %256 : vector<1x32xf32>
    %cst_117 = arith.constant 5.000000e-01 : f32
    %259 = vector.broadcast %cst_117 : f32 to vector<1x32xf32>
    %260 = arith.addf %259, %258 : vector<1x32xf32>
    %261 = arith.mulf %254, %201 : vector<1x32xf32>
    %262 = arith.mulf %249, %255 : vector<1x32xf32>
    %263 = arith.addf %261, %262 : vector<1x32xf32>
    %264 = math.tanh %263 : vector<1x32xf32>
    %265 = arith.mulf %260, %264 : vector<1x32xf32>
    %c7_i32_118 = arith.constant 7 : i32
    %266 = arith.minsi %c2_i32_89, %c7_i32_118 : i32
    %267 = arith.index_cast %266 : i32 to index
    %268 = memref.load %arg0[%267] : memref<8xf32, #tpu.memory_space<smem>>
    %269 = vector.broadcast %268 : f32 to vector<1x512xf32>
    %270 = arith.mulf %269, %0 : vector<1x512xf32>
    %c0_119 = arith.constant 0 : index
    %c0_120 = arith.constant 0 : index
    %271 = vector.load %arg2[%c0_119, %c0_120] : memref<32x512xf32, #tpu.memory_space<vmem>>, vector<32x512xf32>
    %cst_121 = arith.constant dense<0.000000e+00> : vector<1x512xf32>
    %272 = tpu.matmul %197, %271, %cst_121 {dimension_numbers = #tpu.dot_dimension_numbers<[1], [0], [0], [1], [0, 0, 1, 1], [], []>} : vector<1x32xf32>, vector<32x512xf32>, vector<1x512xf32> -> vector<1x512xf32>
    %273 = arith.addf %270, %272 : vector<1x512xf32>
    %274 = arith.addf %273, %2 : vector<1x512xf32>
    %275 = math.tanh %274 : vector<1x512xf32>
    %276 = vector.extract_strided_slice %275 {offsets = [0, 0], sizes = [1, 32], strides = [1, 1]} : vector<1x512xf32> to vector<1x32xf32>
    %cst_122 = arith.constant 5.000000e-01 : f32
    %277 = vector.broadcast %cst_122 : f32 to vector<1x32xf32>
    %278 = arith.mulf %277, %276 : vector<1x32xf32>
    %cst_123 = arith.constant 5.000000e-01 : f32
    %279 = vector.broadcast %cst_123 : f32 to vector<1x32xf32>
    %280 = arith.addf %279, %278 : vector<1x32xf32>
    %281 = vector.extract_strided_slice %275 {offsets = [0, 128], sizes = [1, 32], strides = [1, 1]} : vector<1x512xf32> to vector<1x32xf32>
    %cst_124 = arith.constant 5.000000e-01 : f32
    %282 = vector.broadcast %cst_124 : f32 to vector<1x32xf32>
    %283 = arith.mulf %282, %281 : vector<1x32xf32>
    %cst_125 = arith.constant 5.000000e-01 : f32
    %284 = vector.broadcast %cst_125 : f32 to vector<1x32xf32>
    %285 = arith.addf %284, %283 : vector<1x32xf32>
    %286 = vector.extract_strided_slice %275 {offsets = [0, 256], sizes = [1, 32], strides = [1, 1]} : vector<1x512xf32> to vector<1x32xf32>
    %287 = vector.extract_strided_slice %275 {offsets = [0, 384], sizes = [1, 32], strides = [1, 1]} : vector<1x512xf32> to vector<1x32xf32>
    %cst_126 = arith.constant 5.000000e-01 : f32
    %288 = vector.broadcast %cst_126 : f32 to vector<1x32xf32>
    %289 = arith.mulf %288, %287 : vector<1x32xf32>
    %cst_127 = arith.constant 5.000000e-01 : f32
    %290 = vector.broadcast %cst_127 : f32 to vector<1x32xf32>
    %291 = arith.addf %290, %289 : vector<1x32xf32>
    %292 = arith.mulf %285, %195 : vector<1x32xf32>
    %293 = arith.mulf %280, %286 : vector<1x32xf32>
    %294 = arith.addf %292, %293 : vector<1x32xf32>
    %295 = math.tanh %294 : vector<1x32xf32>
    %296 = arith.mulf %291, %295 : vector<1x32xf32>
    %c1_i32_128 = arith.constant 1 : i32
    %297 = arith.cmpi sge, %c2_i32_89, %c1_i32_128 : i32
    %298 = arith.select %297, %265, %199 : vector<1x32xf32>
    %c1_i32_129 = arith.constant 1 : i32
    %299 = arith.cmpi sge, %c2_i32_89, %c1_i32_129 : i32
    %300 = arith.select %299, %263, %201 : vector<1x32xf32>
    %c2_i32_130 = arith.constant 2 : i32
    %301 = arith.cmpi sge, %c2_i32_89, %c2_i32_130 : i32
    %302 = arith.select %301, %235, %203 : vector<1x32xf32>
    %c2_i32_131 = arith.constant 2 : i32
    %303 = arith.cmpi sge, %c2_i32_89, %c2_i32_131 : i32
    %304 = arith.select %303, %233, %205 : vector<1x32xf32>
    %c3_i32 = arith.constant 3 : i32
    %c2_132 = arith.constant 2 : index
    %c0_133 = arith.constant 0 : index
    %c0_134 = arith.constant 0 : index
    %305 = vector.load %arg3[%c2_132, %c0_133, %c0_134] : memref<4x32x512xf32, #tpu.memory_space<vmem>>, vector<1x32x512xf32>
    %306 = vector.shape_cast %305 : vector<1x32x512xf32> to vector<32x512xf32>
    %cst_135 = arith.constant dense<0.000000e+00> : vector<1x512xf32>
    %307 = tpu.matmul %298, %306, %cst_135 {dimension_numbers = #tpu.dot_dimension_numbers<[1], [0], [0], [1], [0, 0, 1, 1], [], []>} : vector<1x32xf32>, vector<32x512xf32>, vector<1x512xf32> -> vector<1x512xf32>
    %c3_136 = arith.constant 3 : index
    %c0_137 = arith.constant 0 : index
    %c0_138 = arith.constant 0 : index
    %308 = vector.load %arg3[%c3_136, %c0_137, %c0_138] : memref<4x32x512xf32, #tpu.memory_space<vmem>>, vector<1x32x512xf32>
    %309 = vector.shape_cast %308 : vector<1x32x512xf32> to vector<32x512xf32>
    %cst_139 = arith.constant dense<0.000000e+00> : vector<1x512xf32>
    %310 = tpu.matmul %302, %309, %cst_139 {dimension_numbers = #tpu.dot_dimension_numbers<[1], [0], [0], [1], [0, 0, 1, 1], [], []>} : vector<1x32xf32>, vector<32x512xf32>, vector<1x512xf32> -> vector<1x512xf32>
    %311 = arith.addf %307, %310 : vector<1x512xf32>
    %312 = arith.addf %311, %6 : vector<1x512xf32>
    %313 = math.tanh %312 : vector<1x512xf32>
    %314 = vector.extract_strided_slice %313 {offsets = [0, 0], sizes = [1, 32], strides = [1, 1]} : vector<1x512xf32> to vector<1x32xf32>
    %cst_140 = arith.constant 5.000000e-01 : f32
    %315 = vector.broadcast %cst_140 : f32 to vector<1x32xf32>
    %316 = arith.mulf %315, %314 : vector<1x32xf32>
    %cst_141 = arith.constant 5.000000e-01 : f32
    %317 = vector.broadcast %cst_141 : f32 to vector<1x32xf32>
    %318 = arith.addf %317, %316 : vector<1x32xf32>
    %319 = vector.extract_strided_slice %313 {offsets = [0, 128], sizes = [1, 32], strides = [1, 1]} : vector<1x512xf32> to vector<1x32xf32>
    %cst_142 = arith.constant 5.000000e-01 : f32
    %320 = vector.broadcast %cst_142 : f32 to vector<1x32xf32>
    %321 = arith.mulf %320, %319 : vector<1x32xf32>
    %cst_143 = arith.constant 5.000000e-01 : f32
    %322 = vector.broadcast %cst_143 : f32 to vector<1x32xf32>
    %323 = arith.addf %322, %321 : vector<1x32xf32>
    %324 = vector.extract_strided_slice %313 {offsets = [0, 256], sizes = [1, 32], strides = [1, 1]} : vector<1x512xf32> to vector<1x32xf32>
    %325 = vector.extract_strided_slice %313 {offsets = [0, 384], sizes = [1, 32], strides = [1, 1]} : vector<1x512xf32> to vector<1x32xf32>
    %cst_144 = arith.constant 5.000000e-01 : f32
    %326 = vector.broadcast %cst_144 : f32 to vector<1x32xf32>
    %327 = arith.mulf %326, %325 : vector<1x32xf32>
    %cst_145 = arith.constant 5.000000e-01 : f32
    %328 = vector.broadcast %cst_145 : f32 to vector<1x32xf32>
    %329 = arith.addf %328, %327 : vector<1x32xf32>
    %330 = arith.mulf %323, %304 : vector<1x32xf32>
    %331 = arith.mulf %318, %324 : vector<1x32xf32>
    %332 = arith.addf %330, %331 : vector<1x32xf32>
    %333 = math.tanh %332 : vector<1x32xf32>
    %334 = arith.mulf %329, %333 : vector<1x32xf32>
    %c0_146 = arith.constant 0 : index
    %c0_147 = arith.constant 0 : index
    %c0_148 = arith.constant 0 : index
    %335 = vector.load %arg3[%c0_146, %c0_147, %c0_148] : memref<4x32x512xf32, #tpu.memory_space<vmem>>, vector<1x32x512xf32>
    %336 = vector.shape_cast %335 : vector<1x32x512xf32> to vector<32x512xf32>
    %cst_149 = arith.constant dense<0.000000e+00> : vector<1x512xf32>
    %337 = tpu.matmul %296, %336, %cst_149 {dimension_numbers = #tpu.dot_dimension_numbers<[1], [0], [0], [1], [0, 0, 1, 1], [], []>} : vector<1x32xf32>, vector<32x512xf32>, vector<1x512xf32> -> vector<1x512xf32>
    %c1_150 = arith.constant 1 : index
    %c0_151 = arith.constant 0 : index
    %c0_152 = arith.constant 0 : index
    %338 = vector.load %arg3[%c1_150, %c0_151, %c0_152] : memref<4x32x512xf32, #tpu.memory_space<vmem>>, vector<1x32x512xf32>
    %339 = vector.shape_cast %338 : vector<1x32x512xf32> to vector<32x512xf32>
    %cst_153 = arith.constant dense<0.000000e+00> : vector<1x512xf32>
    %340 = tpu.matmul %298, %339, %cst_153 {dimension_numbers = #tpu.dot_dimension_numbers<[1], [0], [0], [1], [0, 0, 1, 1], [], []>} : vector<1x32xf32>, vector<32x512xf32>, vector<1x512xf32> -> vector<1x512xf32>
    %341 = arith.addf %337, %340 : vector<1x512xf32>
    %342 = arith.addf %341, %4 : vector<1x512xf32>
    %343 = math.tanh %342 : vector<1x512xf32>
    %344 = vector.extract_strided_slice %343 {offsets = [0, 0], sizes = [1, 32], strides = [1, 1]} : vector<1x512xf32> to vector<1x32xf32>
    %cst_154 = arith.constant 5.000000e-01 : f32
    %345 = vector.broadcast %cst_154 : f32 to vector<1x32xf32>
    %346 = arith.mulf %345, %344 : vector<1x32xf32>
    %cst_155 = arith.constant 5.000000e-01 : f32
    %347 = vector.broadcast %cst_155 : f32 to vector<1x32xf32>
    %348 = arith.addf %347, %346 : vector<1x32xf32>
    %349 = vector.extract_strided_slice %343 {offsets = [0, 128], sizes = [1, 32], strides = [1, 1]} : vector<1x512xf32> to vector<1x32xf32>
    %cst_156 = arith.constant 5.000000e-01 : f32
    %350 = vector.broadcast %cst_156 : f32 to vector<1x32xf32>
    %351 = arith.mulf %350, %349 : vector<1x32xf32>
    %cst_157 = arith.constant 5.000000e-01 : f32
    %352 = vector.broadcast %cst_157 : f32 to vector<1x32xf32>
    %353 = arith.addf %352, %351 : vector<1x32xf32>
    %354 = vector.extract_strided_slice %343 {offsets = [0, 256], sizes = [1, 32], strides = [1, 1]} : vector<1x512xf32> to vector<1x32xf32>
    %355 = vector.extract_strided_slice %343 {offsets = [0, 384], sizes = [1, 32], strides = [1, 1]} : vector<1x512xf32> to vector<1x32xf32>
    %cst_158 = arith.constant 5.000000e-01 : f32
    %356 = vector.broadcast %cst_158 : f32 to vector<1x32xf32>
    %357 = arith.mulf %356, %355 : vector<1x32xf32>
    %cst_159 = arith.constant 5.000000e-01 : f32
    %358 = vector.broadcast %cst_159 : f32 to vector<1x32xf32>
    %359 = arith.addf %358, %357 : vector<1x32xf32>
    %360 = arith.mulf %353, %300 : vector<1x32xf32>
    %361 = arith.mulf %348, %354 : vector<1x32xf32>
    %362 = arith.addf %360, %361 : vector<1x32xf32>
    %363 = math.tanh %362 : vector<1x32xf32>
    %364 = arith.mulf %359, %363 : vector<1x32xf32>
    %c7_i32_160 = arith.constant 7 : i32
    %365 = arith.minsi %c3_i32, %c7_i32_160 : i32
    %366 = arith.index_cast %365 : i32 to index
    %367 = memref.load %arg0[%366] : memref<8xf32, #tpu.memory_space<smem>>
    %368 = vector.broadcast %367 : f32 to vector<1x512xf32>
    %369 = arith.mulf %368, %0 : vector<1x512xf32>
    %c0_161 = arith.constant 0 : index
    %c0_162 = arith.constant 0 : index
    %370 = vector.load %arg2[%c0_161, %c0_162] : memref<32x512xf32, #tpu.memory_space<vmem>>, vector<32x512xf32>
    %cst_163 = arith.constant dense<0.000000e+00> : vector<1x512xf32>
    %371 = tpu.matmul %296, %370, %cst_163 {dimension_numbers = #tpu.dot_dimension_numbers<[1], [0], [0], [1], [0, 0, 1, 1], [], []>} : vector<1x32xf32>, vector<32x512xf32>, vector<1x512xf32> -> vector<1x512xf32>
    %372 = arith.addf %369, %371 : vector<1x512xf32>
    %373 = arith.addf %372, %2 : vector<1x512xf32>
    %374 = math.tanh %373 : vector<1x512xf32>
    %375 = vector.extract_strided_slice %374 {offsets = [0, 0], sizes = [1, 32], strides = [1, 1]} : vector<1x512xf32> to vector<1x32xf32>
    %cst_164 = arith.constant 5.000000e-01 : f32
    %376 = vector.broadcast %cst_164 : f32 to vector<1x32xf32>
    %377 = arith.mulf %376, %375 : vector<1x32xf32>
    %cst_165 = arith.constant 5.000000e-01 : f32
    %378 = vector.broadcast %cst_165 : f32 to vector<1x32xf32>
    %379 = arith.addf %378, %377 : vector<1x32xf32>
    %380 = vector.extract_strided_slice %374 {offsets = [0, 128], sizes = [1, 32], strides = [1, 1]} : vector<1x512xf32> to vector<1x32xf32>
    %cst_166 = arith.constant 5.000000e-01 : f32
    %381 = vector.broadcast %cst_166 : f32 to vector<1x32xf32>
    %382 = arith.mulf %381, %380 : vector<1x32xf32>
    %cst_167 = arith.constant 5.000000e-01 : f32
    %383 = vector.broadcast %cst_167 : f32 to vector<1x32xf32>
    %384 = arith.addf %383, %382 : vector<1x32xf32>
    %385 = vector.extract_strided_slice %374 {offsets = [0, 256], sizes = [1, 32], strides = [1, 1]} : vector<1x512xf32> to vector<1x32xf32>
    %386 = vector.extract_strided_slice %374 {offsets = [0, 384], sizes = [1, 32], strides = [1, 1]} : vector<1x512xf32> to vector<1x32xf32>
    %cst_168 = arith.constant 5.000000e-01 : f32
    %387 = vector.broadcast %cst_168 : f32 to vector<1x32xf32>
    %388 = arith.mulf %387, %386 : vector<1x32xf32>
    %cst_169 = arith.constant 5.000000e-01 : f32
    %389 = vector.broadcast %cst_169 : f32 to vector<1x32xf32>
    %390 = arith.addf %389, %388 : vector<1x32xf32>
    %391 = arith.mulf %384, %294 : vector<1x32xf32>
    %392 = arith.mulf %379, %385 : vector<1x32xf32>
    %393 = arith.addf %391, %392 : vector<1x32xf32>
    %394 = math.tanh %393 : vector<1x32xf32>
    %395 = arith.mulf %390, %394 : vector<1x32xf32>
    %c1_i32_170 = arith.constant 1 : i32
    %396 = arith.cmpi sge, %c3_i32, %c1_i32_170 : i32
    %397 = arith.select %396, %364, %298 : vector<1x32xf32>
    %c1_i32_171 = arith.constant 1 : i32
    %398 = arith.cmpi sge, %c3_i32, %c1_i32_171 : i32
    %399 = arith.select %398, %362, %300 : vector<1x32xf32>
    %c2_i32_172 = arith.constant 2 : i32
    %400 = arith.cmpi sge, %c3_i32, %c2_i32_172 : i32
    %401 = arith.select %400, %334, %302 : vector<1x32xf32>
    %c2_i32_173 = arith.constant 2 : i32
    %402 = arith.cmpi sge, %c3_i32, %c2_i32_173 : i32
    %403 = arith.select %402, %332, %304 : vector<1x32xf32>
    %c4_i32 = arith.constant 4 : i32
    %c2_174 = arith.constant 2 : index
    %c0_175 = arith.constant 0 : index
    %c0_176 = arith.constant 0 : index
    %404 = vector.load %arg3[%c2_174, %c0_175, %c0_176] : memref<4x32x512xf32, #tpu.memory_space<vmem>>, vector<1x32x512xf32>
    %405 = vector.shape_cast %404 : vector<1x32x512xf32> to vector<32x512xf32>
    %cst_177 = arith.constant dense<0.000000e+00> : vector<1x512xf32>
    %406 = tpu.matmul %397, %405, %cst_177 {dimension_numbers = #tpu.dot_dimension_numbers<[1], [0], [0], [1], [0, 0, 1, 1], [], []>} : vector<1x32xf32>, vector<32x512xf32>, vector<1x512xf32> -> vector<1x512xf32>
    %c3_178 = arith.constant 3 : index
    %c0_179 = arith.constant 0 : index
    %c0_180 = arith.constant 0 : index
    %407 = vector.load %arg3[%c3_178, %c0_179, %c0_180] : memref<4x32x512xf32, #tpu.memory_space<vmem>>, vector<1x32x512xf32>
    %408 = vector.shape_cast %407 : vector<1x32x512xf32> to vector<32x512xf32>
    %cst_181 = arith.constant dense<0.000000e+00> : vector<1x512xf32>
    %409 = tpu.matmul %401, %408, %cst_181 {dimension_numbers = #tpu.dot_dimension_numbers<[1], [0], [0], [1], [0, 0, 1, 1], [], []>} : vector<1x32xf32>, vector<32x512xf32>, vector<1x512xf32> -> vector<1x512xf32>
    %410 = arith.addf %406, %409 : vector<1x512xf32>
    %411 = arith.addf %410, %6 : vector<1x512xf32>
    %412 = math.tanh %411 : vector<1x512xf32>
    %413 = vector.extract_strided_slice %412 {offsets = [0, 0], sizes = [1, 32], strides = [1, 1]} : vector<1x512xf32> to vector<1x32xf32>
    %cst_182 = arith.constant 5.000000e-01 : f32
    %414 = vector.broadcast %cst_182 : f32 to vector<1x32xf32>
    %415 = arith.mulf %414, %413 : vector<1x32xf32>
    %cst_183 = arith.constant 5.000000e-01 : f32
    %416 = vector.broadcast %cst_183 : f32 to vector<1x32xf32>
    %417 = arith.addf %416, %415 : vector<1x32xf32>
    %418 = vector.extract_strided_slice %412 {offsets = [0, 128], sizes = [1, 32], strides = [1, 1]} : vector<1x512xf32> to vector<1x32xf32>
    %cst_184 = arith.constant 5.000000e-01 : f32
    %419 = vector.broadcast %cst_184 : f32 to vector<1x32xf32>
    %420 = arith.mulf %419, %418 : vector<1x32xf32>
    %cst_185 = arith.constant 5.000000e-01 : f32
    %421 = vector.broadcast %cst_185 : f32 to vector<1x32xf32>
    %422 = arith.addf %421, %420 : vector<1x32xf32>
    %423 = vector.extract_strided_slice %412 {offsets = [0, 256], sizes = [1, 32], strides = [1, 1]} : vector<1x512xf32> to vector<1x32xf32>
    %424 = vector.extract_strided_slice %412 {offsets = [0, 384], sizes = [1, 32], strides = [1, 1]} : vector<1x512xf32> to vector<1x32xf32>
    %cst_186 = arith.constant 5.000000e-01 : f32
    %425 = vector.broadcast %cst_186 : f32 to vector<1x32xf32>
    %426 = arith.mulf %425, %424 : vector<1x32xf32>
    %cst_187 = arith.constant 5.000000e-01 : f32
    %427 = vector.broadcast %cst_187 : f32 to vector<1x32xf32>
    %428 = arith.addf %427, %426 : vector<1x32xf32>
    %429 = arith.mulf %422, %403 : vector<1x32xf32>
    %430 = arith.mulf %417, %423 : vector<1x32xf32>
    %431 = arith.addf %429, %430 : vector<1x32xf32>
    %432 = math.tanh %431 : vector<1x32xf32>
    %433 = arith.mulf %428, %432 : vector<1x32xf32>
    %c0_188 = arith.constant 0 : index
    %c0_189 = arith.constant 0 : index
    %c0_190 = arith.constant 0 : index
    %434 = vector.load %arg3[%c0_188, %c0_189, %c0_190] : memref<4x32x512xf32, #tpu.memory_space<vmem>>, vector<1x32x512xf32>
    %435 = vector.shape_cast %434 : vector<1x32x512xf32> to vector<32x512xf32>
    %cst_191 = arith.constant dense<0.000000e+00> : vector<1x512xf32>
    %436 = tpu.matmul %395, %435, %cst_191 {dimension_numbers = #tpu.dot_dimension_numbers<[1], [0], [0], [1], [0, 0, 1, 1], [], []>} : vector<1x32xf32>, vector<32x512xf32>, vector<1x512xf32> -> vector<1x512xf32>
    %c1_192 = arith.constant 1 : index
    %c0_193 = arith.constant 0 : index
    %c0_194 = arith.constant 0 : index
    %437 = vector.load %arg3[%c1_192, %c0_193, %c0_194] : memref<4x32x512xf32, #tpu.memory_space<vmem>>, vector<1x32x512xf32>
    %438 = vector.shape_cast %437 : vector<1x32x512xf32> to vector<32x512xf32>
    %cst_195 = arith.constant dense<0.000000e+00> : vector<1x512xf32>
    %439 = tpu.matmul %397, %438, %cst_195 {dimension_numbers = #tpu.dot_dimension_numbers<[1], [0], [0], [1], [0, 0, 1, 1], [], []>} : vector<1x32xf32>, vector<32x512xf32>, vector<1x512xf32> -> vector<1x512xf32>
    %440 = arith.addf %436, %439 : vector<1x512xf32>
    %441 = arith.addf %440, %4 : vector<1x512xf32>
    %442 = math.tanh %441 : vector<1x512xf32>
    %443 = vector.extract_strided_slice %442 {offsets = [0, 0], sizes = [1, 32], strides = [1, 1]} : vector<1x512xf32> to vector<1x32xf32>
    %cst_196 = arith.constant 5.000000e-01 : f32
    %444 = vector.broadcast %cst_196 : f32 to vector<1x32xf32>
    %445 = arith.mulf %444, %443 : vector<1x32xf32>
    %cst_197 = arith.constant 5.000000e-01 : f32
    %446 = vector.broadcast %cst_197 : f32 to vector<1x32xf32>
    %447 = arith.addf %446, %445 : vector<1x32xf32>
    %448 = vector.extract_strided_slice %442 {offsets = [0, 128], sizes = [1, 32], strides = [1, 1]} : vector<1x512xf32> to vector<1x32xf32>
    %cst_198 = arith.constant 5.000000e-01 : f32
    %449 = vector.broadcast %cst_198 : f32 to vector<1x32xf32>
    %450 = arith.mulf %449, %448 : vector<1x32xf32>
    %cst_199 = arith.constant 5.000000e-01 : f32
    %451 = vector.broadcast %cst_199 : f32 to vector<1x32xf32>
    %452 = arith.addf %451, %450 : vector<1x32xf32>
    %453 = vector.extract_strided_slice %442 {offsets = [0, 256], sizes = [1, 32], strides = [1, 1]} : vector<1x512xf32> to vector<1x32xf32>
    %454 = vector.extract_strided_slice %442 {offsets = [0, 384], sizes = [1, 32], strides = [1, 1]} : vector<1x512xf32> to vector<1x32xf32>
    %cst_200 = arith.constant 5.000000e-01 : f32
    %455 = vector.broadcast %cst_200 : f32 to vector<1x32xf32>
    %456 = arith.mulf %455, %454 : vector<1x32xf32>
    %cst_201 = arith.constant 5.000000e-01 : f32
    %457 = vector.broadcast %cst_201 : f32 to vector<1x32xf32>
    %458 = arith.addf %457, %456 : vector<1x32xf32>
    %459 = arith.mulf %452, %399 : vector<1x32xf32>
    %460 = arith.mulf %447, %453 : vector<1x32xf32>
    %461 = arith.addf %459, %460 : vector<1x32xf32>
    %462 = math.tanh %461 : vector<1x32xf32>
    %463 = arith.mulf %458, %462 : vector<1x32xf32>
    %c7_i32_202 = arith.constant 7 : i32
    %464 = arith.minsi %c4_i32, %c7_i32_202 : i32
    %465 = arith.index_cast %464 : i32 to index
    %466 = memref.load %arg0[%465] : memref<8xf32, #tpu.memory_space<smem>>
    %467 = vector.broadcast %466 : f32 to vector<1x512xf32>
    %468 = arith.mulf %467, %0 : vector<1x512xf32>
    %c0_203 = arith.constant 0 : index
    %c0_204 = arith.constant 0 : index
    %469 = vector.load %arg2[%c0_203, %c0_204] : memref<32x512xf32, #tpu.memory_space<vmem>>, vector<32x512xf32>
    %cst_205 = arith.constant dense<0.000000e+00> : vector<1x512xf32>
    %470 = tpu.matmul %395, %469, %cst_205 {dimension_numbers = #tpu.dot_dimension_numbers<[1], [0], [0], [1], [0, 0, 1, 1], [], []>} : vector<1x32xf32>, vector<32x512xf32>, vector<1x512xf32> -> vector<1x512xf32>
    %471 = arith.addf %468, %470 : vector<1x512xf32>
    %472 = arith.addf %471, %2 : vector<1x512xf32>
    %473 = math.tanh %472 : vector<1x512xf32>
    %474 = vector.extract_strided_slice %473 {offsets = [0, 0], sizes = [1, 32], strides = [1, 1]} : vector<1x512xf32> to vector<1x32xf32>
    %cst_206 = arith.constant 5.000000e-01 : f32
    %475 = vector.broadcast %cst_206 : f32 to vector<1x32xf32>
    %476 = arith.mulf %475, %474 : vector<1x32xf32>
    %cst_207 = arith.constant 5.000000e-01 : f32
    %477 = vector.broadcast %cst_207 : f32 to vector<1x32xf32>
    %478 = arith.addf %477, %476 : vector<1x32xf32>
    %479 = vector.extract_strided_slice %473 {offsets = [0, 128], sizes = [1, 32], strides = [1, 1]} : vector<1x512xf32> to vector<1x32xf32>
    %cst_208 = arith.constant 5.000000e-01 : f32
    %480 = vector.broadcast %cst_208 : f32 to vector<1x32xf32>
    %481 = arith.mulf %480, %479 : vector<1x32xf32>
    %cst_209 = arith.constant 5.000000e-01 : f32
    %482 = vector.broadcast %cst_209 : f32 to vector<1x32xf32>
    %483 = arith.addf %482, %481 : vector<1x32xf32>
    %484 = vector.extract_strided_slice %473 {offsets = [0, 256], sizes = [1, 32], strides = [1, 1]} : vector<1x512xf32> to vector<1x32xf32>
    %485 = vector.extract_strided_slice %473 {offsets = [0, 384], sizes = [1, 32], strides = [1, 1]} : vector<1x512xf32> to vector<1x32xf32>
    %cst_210 = arith.constant 5.000000e-01 : f32
    %486 = vector.broadcast %cst_210 : f32 to vector<1x32xf32>
    %487 = arith.mulf %486, %485 : vector<1x32xf32>
    %cst_211 = arith.constant 5.000000e-01 : f32
    %488 = vector.broadcast %cst_211 : f32 to vector<1x32xf32>
    %489 = arith.addf %488, %487 : vector<1x32xf32>
    %490 = arith.mulf %483, %393 : vector<1x32xf32>
    %491 = arith.mulf %478, %484 : vector<1x32xf32>
    %492 = arith.addf %490, %491 : vector<1x32xf32>
    %493 = math.tanh %492 : vector<1x32xf32>
    %494 = arith.mulf %489, %493 : vector<1x32xf32>
    %c1_i32_212 = arith.constant 1 : i32
    %495 = arith.cmpi sge, %c4_i32, %c1_i32_212 : i32
    %496 = arith.select %495, %463, %397 : vector<1x32xf32>
    %c1_i32_213 = arith.constant 1 : i32
    %497 = arith.cmpi sge, %c4_i32, %c1_i32_213 : i32
    %498 = arith.select %497, %461, %399 : vector<1x32xf32>
    %c2_i32_214 = arith.constant 2 : i32
    %499 = arith.cmpi sge, %c4_i32, %c2_i32_214 : i32
    %500 = arith.select %499, %433, %401 : vector<1x32xf32>
    %c2_i32_215 = arith.constant 2 : i32
    %501 = arith.cmpi sge, %c4_i32, %c2_i32_215 : i32
    %502 = arith.select %501, %431, %403 : vector<1x32xf32>
    %c5_i32 = arith.constant 5 : i32
    %c2_216 = arith.constant 2 : index
    %c0_217 = arith.constant 0 : index
    %c0_218 = arith.constant 0 : index
    %503 = vector.load %arg3[%c2_216, %c0_217, %c0_218] : memref<4x32x512xf32, #tpu.memory_space<vmem>>, vector<1x32x512xf32>
    %504 = vector.shape_cast %503 : vector<1x32x512xf32> to vector<32x512xf32>
    %cst_219 = arith.constant dense<0.000000e+00> : vector<1x512xf32>
    %505 = tpu.matmul %496, %504, %cst_219 {dimension_numbers = #tpu.dot_dimension_numbers<[1], [0], [0], [1], [0, 0, 1, 1], [], []>} : vector<1x32xf32>, vector<32x512xf32>, vector<1x512xf32> -> vector<1x512xf32>
    %c3_220 = arith.constant 3 : index
    %c0_221 = arith.constant 0 : index
    %c0_222 = arith.constant 0 : index
    %506 = vector.load %arg3[%c3_220, %c0_221, %c0_222] : memref<4x32x512xf32, #tpu.memory_space<vmem>>, vector<1x32x512xf32>
    %507 = vector.shape_cast %506 : vector<1x32x512xf32> to vector<32x512xf32>
    %cst_223 = arith.constant dense<0.000000e+00> : vector<1x512xf32>
    %508 = tpu.matmul %500, %507, %cst_223 {dimension_numbers = #tpu.dot_dimension_numbers<[1], [0], [0], [1], [0, 0, 1, 1], [], []>} : vector<1x32xf32>, vector<32x512xf32>, vector<1x512xf32> -> vector<1x512xf32>
    %509 = arith.addf %505, %508 : vector<1x512xf32>
    %510 = arith.addf %509, %6 : vector<1x512xf32>
    %511 = math.tanh %510 : vector<1x512xf32>
    %512 = vector.extract_strided_slice %511 {offsets = [0, 0], sizes = [1, 32], strides = [1, 1]} : vector<1x512xf32> to vector<1x32xf32>
    %cst_224 = arith.constant 5.000000e-01 : f32
    %513 = vector.broadcast %cst_224 : f32 to vector<1x32xf32>
    %514 = arith.mulf %513, %512 : vector<1x32xf32>
    %cst_225 = arith.constant 5.000000e-01 : f32
    %515 = vector.broadcast %cst_225 : f32 to vector<1x32xf32>
    %516 = arith.addf %515, %514 : vector<1x32xf32>
    %517 = vector.extract_strided_slice %511 {offsets = [0, 128], sizes = [1, 32], strides = [1, 1]} : vector<1x512xf32> to vector<1x32xf32>
    %cst_226 = arith.constant 5.000000e-01 : f32
    %518 = vector.broadcast %cst_226 : f32 to vector<1x32xf32>
    %519 = arith.mulf %518, %517 : vector<1x32xf32>
    %cst_227 = arith.constant 5.000000e-01 : f32
    %520 = vector.broadcast %cst_227 : f32 to vector<1x32xf32>
    %521 = arith.addf %520, %519 : vector<1x32xf32>
    %522 = vector.extract_strided_slice %511 {offsets = [0, 256], sizes = [1, 32], strides = [1, 1]} : vector<1x512xf32> to vector<1x32xf32>
    %523 = vector.extract_strided_slice %511 {offsets = [0, 384], sizes = [1, 32], strides = [1, 1]} : vector<1x512xf32> to vector<1x32xf32>
    %cst_228 = arith.constant 5.000000e-01 : f32
    %524 = vector.broadcast %cst_228 : f32 to vector<1x32xf32>
    %525 = arith.mulf %524, %523 : vector<1x32xf32>
    %cst_229 = arith.constant 5.000000e-01 : f32
    %526 = vector.broadcast %cst_229 : f32 to vector<1x32xf32>
    %527 = arith.addf %526, %525 : vector<1x32xf32>
    %528 = arith.mulf %521, %502 : vector<1x32xf32>
    %529 = arith.mulf %516, %522 : vector<1x32xf32>
    %530 = arith.addf %528, %529 : vector<1x32xf32>
    %531 = math.tanh %530 : vector<1x32xf32>
    %532 = arith.mulf %527, %531 : vector<1x32xf32>
    %c0_230 = arith.constant 0 : index
    %c0_231 = arith.constant 0 : index
    %c0_232 = arith.constant 0 : index
    %533 = vector.load %arg3[%c0_230, %c0_231, %c0_232] : memref<4x32x512xf32, #tpu.memory_space<vmem>>, vector<1x32x512xf32>
    %534 = vector.shape_cast %533 : vector<1x32x512xf32> to vector<32x512xf32>
    %cst_233 = arith.constant dense<0.000000e+00> : vector<1x512xf32>
    %535 = tpu.matmul %494, %534, %cst_233 {dimension_numbers = #tpu.dot_dimension_numbers<[1], [0], [0], [1], [0, 0, 1, 1], [], []>} : vector<1x32xf32>, vector<32x512xf32>, vector<1x512xf32> -> vector<1x512xf32>
    %c1_234 = arith.constant 1 : index
    %c0_235 = arith.constant 0 : index
    %c0_236 = arith.constant 0 : index
    %536 = vector.load %arg3[%c1_234, %c0_235, %c0_236] : memref<4x32x512xf32, #tpu.memory_space<vmem>>, vector<1x32x512xf32>
    %537 = vector.shape_cast %536 : vector<1x32x512xf32> to vector<32x512xf32>
    %cst_237 = arith.constant dense<0.000000e+00> : vector<1x512xf32>
    %538 = tpu.matmul %496, %537, %cst_237 {dimension_numbers = #tpu.dot_dimension_numbers<[1], [0], [0], [1], [0, 0, 1, 1], [], []>} : vector<1x32xf32>, vector<32x512xf32>, vector<1x512xf32> -> vector<1x512xf32>
    %539 = arith.addf %535, %538 : vector<1x512xf32>
    %540 = arith.addf %539, %4 : vector<1x512xf32>
    %541 = math.tanh %540 : vector<1x512xf32>
    %542 = vector.extract_strided_slice %541 {offsets = [0, 0], sizes = [1, 32], strides = [1, 1]} : vector<1x512xf32> to vector<1x32xf32>
    %cst_238 = arith.constant 5.000000e-01 : f32
    %543 = vector.broadcast %cst_238 : f32 to vector<1x32xf32>
    %544 = arith.mulf %543, %542 : vector<1x32xf32>
    %cst_239 = arith.constant 5.000000e-01 : f32
    %545 = vector.broadcast %cst_239 : f32 to vector<1x32xf32>
    %546 = arith.addf %545, %544 : vector<1x32xf32>
    %547 = vector.extract_strided_slice %541 {offsets = [0, 128], sizes = [1, 32], strides = [1, 1]} : vector<1x512xf32> to vector<1x32xf32>
    %cst_240 = arith.constant 5.000000e-01 : f32
    %548 = vector.broadcast %cst_240 : f32 to vector<1x32xf32>
    %549 = arith.mulf %548, %547 : vector<1x32xf32>
    %cst_241 = arith.constant 5.000000e-01 : f32
    %550 = vector.broadcast %cst_241 : f32 to vector<1x32xf32>
    %551 = arith.addf %550, %549 : vector<1x32xf32>
    %552 = vector.extract_strided_slice %541 {offsets = [0, 256], sizes = [1, 32], strides = [1, 1]} : vector<1x512xf32> to vector<1x32xf32>
    %553 = vector.extract_strided_slice %541 {offsets = [0, 384], sizes = [1, 32], strides = [1, 1]} : vector<1x512xf32> to vector<1x32xf32>
    %cst_242 = arith.constant 5.000000e-01 : f32
    %554 = vector.broadcast %cst_242 : f32 to vector<1x32xf32>
    %555 = arith.mulf %554, %553 : vector<1x32xf32>
    %cst_243 = arith.constant 5.000000e-01 : f32
    %556 = vector.broadcast %cst_243 : f32 to vector<1x32xf32>
    %557 = arith.addf %556, %555 : vector<1x32xf32>
    %558 = arith.mulf %551, %498 : vector<1x32xf32>
    %559 = arith.mulf %546, %552 : vector<1x32xf32>
    %560 = arith.addf %558, %559 : vector<1x32xf32>
    %561 = math.tanh %560 : vector<1x32xf32>
    %562 = arith.mulf %557, %561 : vector<1x32xf32>
    %c7_i32_244 = arith.constant 7 : i32
    %563 = arith.minsi %c5_i32, %c7_i32_244 : i32
    %564 = arith.index_cast %563 : i32 to index
    %565 = memref.load %arg0[%564] : memref<8xf32, #tpu.memory_space<smem>>
    %566 = vector.broadcast %565 : f32 to vector<1x512xf32>
    %567 = arith.mulf %566, %0 : vector<1x512xf32>
    %c0_245 = arith.constant 0 : index
    %c0_246 = arith.constant 0 : index
    %568 = vector.load %arg2[%c0_245, %c0_246] : memref<32x512xf32, #tpu.memory_space<vmem>>, vector<32x512xf32>
    %cst_247 = arith.constant dense<0.000000e+00> : vector<1x512xf32>
    %569 = tpu.matmul %494, %568, %cst_247 {dimension_numbers = #tpu.dot_dimension_numbers<[1], [0], [0], [1], [0, 0, 1, 1], [], []>} : vector<1x32xf32>, vector<32x512xf32>, vector<1x512xf32> -> vector<1x512xf32>
    %570 = arith.addf %567, %569 : vector<1x512xf32>
    %571 = arith.addf %570, %2 : vector<1x512xf32>
    %572 = math.tanh %571 : vector<1x512xf32>
    %573 = vector.extract_strided_slice %572 {offsets = [0, 0], sizes = [1, 32], strides = [1, 1]} : vector<1x512xf32> to vector<1x32xf32>
    %cst_248 = arith.constant 5.000000e-01 : f32
    %574 = vector.broadcast %cst_248 : f32 to vector<1x32xf32>
    %575 = arith.mulf %574, %573 : vector<1x32xf32>
    %cst_249 = arith.constant 5.000000e-01 : f32
    %576 = vector.broadcast %cst_249 : f32 to vector<1x32xf32>
    %577 = arith.addf %576, %575 : vector<1x32xf32>
    %578 = vector.extract_strided_slice %572 {offsets = [0, 128], sizes = [1, 32], strides = [1, 1]} : vector<1x512xf32> to vector<1x32xf32>
    %cst_250 = arith.constant 5.000000e-01 : f32
    %579 = vector.broadcast %cst_250 : f32 to vector<1x32xf32>
    %580 = arith.mulf %579, %578 : vector<1x32xf32>
    %cst_251 = arith.constant 5.000000e-01 : f32
    %581 = vector.broadcast %cst_251 : f32 to vector<1x32xf32>
    %582 = arith.addf %581, %580 : vector<1x32xf32>
    %583 = vector.extract_strided_slice %572 {offsets = [0, 256], sizes = [1, 32], strides = [1, 1]} : vector<1x512xf32> to vector<1x32xf32>
    %584 = vector.extract_strided_slice %572 {offsets = [0, 384], sizes = [1, 32], strides = [1, 1]} : vector<1x512xf32> to vector<1x32xf32>
    %cst_252 = arith.constant 5.000000e-01 : f32
    %585 = vector.broadcast %cst_252 : f32 to vector<1x32xf32>
    %586 = arith.mulf %585, %584 : vector<1x32xf32>
    %cst_253 = arith.constant 5.000000e-01 : f32
    %587 = vector.broadcast %cst_253 : f32 to vector<1x32xf32>
    %588 = arith.addf %587, %586 : vector<1x32xf32>
    %589 = arith.mulf %582, %492 : vector<1x32xf32>
    %590 = arith.mulf %577, %583 : vector<1x32xf32>
    %591 = arith.addf %589, %590 : vector<1x32xf32>
    %592 = math.tanh %591 : vector<1x32xf32>
    %593 = arith.mulf %588, %592 : vector<1x32xf32>
    %c1_i32_254 = arith.constant 1 : i32
    %594 = arith.cmpi sge, %c5_i32, %c1_i32_254 : i32
    %595 = arith.select %594, %562, %496 : vector<1x32xf32>
    %c1_i32_255 = arith.constant 1 : i32
    %596 = arith.cmpi sge, %c5_i32, %c1_i32_255 : i32
    %597 = arith.select %596, %560, %498 : vector<1x32xf32>
    %c2_i32_256 = arith.constant 2 : i32
    %598 = arith.cmpi sge, %c5_i32, %c2_i32_256 : i32
    %599 = arith.select %598, %532, %500 : vector<1x32xf32>
    %c2_i32_257 = arith.constant 2 : i32
    %600 = arith.cmpi sge, %c5_i32, %c2_i32_257 : i32
    %601 = arith.select %600, %530, %502 : vector<1x32xf32>
    %c6_i32 = arith.constant 6 : i32
    %c2_258 = arith.constant 2 : index
    %c0_259 = arith.constant 0 : index
    %c0_260 = arith.constant 0 : index
    %602 = vector.load %arg3[%c2_258, %c0_259, %c0_260] : memref<4x32x512xf32, #tpu.memory_space<vmem>>, vector<1x32x512xf32>
    %603 = vector.shape_cast %602 : vector<1x32x512xf32> to vector<32x512xf32>
    %cst_261 = arith.constant dense<0.000000e+00> : vector<1x512xf32>
    %604 = tpu.matmul %595, %603, %cst_261 {dimension_numbers = #tpu.dot_dimension_numbers<[1], [0], [0], [1], [0, 0, 1, 1], [], []>} : vector<1x32xf32>, vector<32x512xf32>, vector<1x512xf32> -> vector<1x512xf32>
    %c3_262 = arith.constant 3 : index
    %c0_263 = arith.constant 0 : index
    %c0_264 = arith.constant 0 : index
    %605 = vector.load %arg3[%c3_262, %c0_263, %c0_264] : memref<4x32x512xf32, #tpu.memory_space<vmem>>, vector<1x32x512xf32>
    %606 = vector.shape_cast %605 : vector<1x32x512xf32> to vector<32x512xf32>
    %cst_265 = arith.constant dense<0.000000e+00> : vector<1x512xf32>
    %607 = tpu.matmul %599, %606, %cst_265 {dimension_numbers = #tpu.dot_dimension_numbers<[1], [0], [0], [1], [0, 0, 1, 1], [], []>} : vector<1x32xf32>, vector<32x512xf32>, vector<1x512xf32> -> vector<1x512xf32>
    %608 = arith.addf %604, %607 : vector<1x512xf32>
    %609 = arith.addf %608, %6 : vector<1x512xf32>
    %610 = math.tanh %609 : vector<1x512xf32>
    %611 = vector.extract_strided_slice %610 {offsets = [0, 0], sizes = [1, 32], strides = [1, 1]} : vector<1x512xf32> to vector<1x32xf32>
    %cst_266 = arith.constant 5.000000e-01 : f32
    %612 = vector.broadcast %cst_266 : f32 to vector<1x32xf32>
    %613 = arith.mulf %612, %611 : vector<1x32xf32>
    %cst_267 = arith.constant 5.000000e-01 : f32
    %614 = vector.broadcast %cst_267 : f32 to vector<1x32xf32>
    %615 = arith.addf %614, %613 : vector<1x32xf32>
    %616 = vector.extract_strided_slice %610 {offsets = [0, 128], sizes = [1, 32], strides = [1, 1]} : vector<1x512xf32> to vector<1x32xf32>
    %cst_268 = arith.constant 5.000000e-01 : f32
    %617 = vector.broadcast %cst_268 : f32 to vector<1x32xf32>
    %618 = arith.mulf %617, %616 : vector<1x32xf32>
    %cst_269 = arith.constant 5.000000e-01 : f32
    %619 = vector.broadcast %cst_269 : f32 to vector<1x32xf32>
    %620 = arith.addf %619, %618 : vector<1x32xf32>
    %621 = vector.extract_strided_slice %610 {offsets = [0, 256], sizes = [1, 32], strides = [1, 1]} : vector<1x512xf32> to vector<1x32xf32>
    %622 = vector.extract_strided_slice %610 {offsets = [0, 384], sizes = [1, 32], strides = [1, 1]} : vector<1x512xf32> to vector<1x32xf32>
    %cst_270 = arith.constant 5.000000e-01 : f32
    %623 = vector.broadcast %cst_270 : f32 to vector<1x32xf32>
    %624 = arith.mulf %623, %622 : vector<1x32xf32>
    %cst_271 = arith.constant 5.000000e-01 : f32
    %625 = vector.broadcast %cst_271 : f32 to vector<1x32xf32>
    %626 = arith.addf %625, %624 : vector<1x32xf32>
    %627 = arith.mulf %620, %601 : vector<1x32xf32>
    %628 = arith.mulf %615, %621 : vector<1x32xf32>
    %629 = arith.addf %627, %628 : vector<1x32xf32>
    %630 = math.tanh %629 : vector<1x32xf32>
    %631 = arith.mulf %626, %630 : vector<1x32xf32>
    %c0_272 = arith.constant 0 : index
    %c0_273 = arith.constant 0 : index
    %c0_274 = arith.constant 0 : index
    %632 = vector.load %arg3[%c0_272, %c0_273, %c0_274] : memref<4x32x512xf32, #tpu.memory_space<vmem>>, vector<1x32x512xf32>
    %633 = vector.shape_cast %632 : vector<1x32x512xf32> to vector<32x512xf32>
    %cst_275 = arith.constant dense<0.000000e+00> : vector<1x512xf32>
    %634 = tpu.matmul %593, %633, %cst_275 {dimension_numbers = #tpu.dot_dimension_numbers<[1], [0], [0], [1], [0, 0, 1, 1], [], []>} : vector<1x32xf32>, vector<32x512xf32>, vector<1x512xf32> -> vector<1x512xf32>
    %c1_276 = arith.constant 1 : index
    %c0_277 = arith.constant 0 : index
    %c0_278 = arith.constant 0 : index
    %635 = vector.load %arg3[%c1_276, %c0_277, %c0_278] : memref<4x32x512xf32, #tpu.memory_space<vmem>>, vector<1x32x512xf32>
    %636 = vector.shape_cast %635 : vector<1x32x512xf32> to vector<32x512xf32>
    %cst_279 = arith.constant dense<0.000000e+00> : vector<1x512xf32>
    %637 = tpu.matmul %595, %636, %cst_279 {dimension_numbers = #tpu.dot_dimension_numbers<[1], [0], [0], [1], [0, 0, 1, 1], [], []>} : vector<1x32xf32>, vector<32x512xf32>, vector<1x512xf32> -> vector<1x512xf32>
    %638 = arith.addf %634, %637 : vector<1x512xf32>
    %639 = arith.addf %638, %4 : vector<1x512xf32>
    %640 = math.tanh %639 : vector<1x512xf32>
    %641 = vector.extract_strided_slice %640 {offsets = [0, 0], sizes = [1, 32], strides = [1, 1]} : vector<1x512xf32> to vector<1x32xf32>
    %cst_280 = arith.constant 5.000000e-01 : f32
    %642 = vector.broadcast %cst_280 : f32 to vector<1x32xf32>
    %643 = arith.mulf %642, %641 : vector<1x32xf32>
    %cst_281 = arith.constant 5.000000e-01 : f32
    %644 = vector.broadcast %cst_281 : f32 to vector<1x32xf32>
    %645 = arith.addf %644, %643 : vector<1x32xf32>
    %646 = vector.extract_strided_slice %640 {offsets = [0, 128], sizes = [1, 32], strides = [1, 1]} : vector<1x512xf32> to vector<1x32xf32>
    %cst_282 = arith.constant 5.000000e-01 : f32
    %647 = vector.broadcast %cst_282 : f32 to vector<1x32xf32>
    %648 = arith.mulf %647, %646 : vector<1x32xf32>
    %cst_283 = arith.constant 5.000000e-01 : f32
    %649 = vector.broadcast %cst_283 : f32 to vector<1x32xf32>
    %650 = arith.addf %649, %648 : vector<1x32xf32>
    %651 = vector.extract_strided_slice %640 {offsets = [0, 256], sizes = [1, 32], strides = [1, 1]} : vector<1x512xf32> to vector<1x32xf32>
    %652 = vector.extract_strided_slice %640 {offsets = [0, 384], sizes = [1, 32], strides = [1, 1]} : vector<1x512xf32> to vector<1x32xf32>
    %cst_284 = arith.constant 5.000000e-01 : f32
    %653 = vector.broadcast %cst_284 : f32 to vector<1x32xf32>
    %654 = arith.mulf %653, %652 : vector<1x32xf32>
    %cst_285 = arith.constant 5.000000e-01 : f32
    %655 = vector.broadcast %cst_285 : f32 to vector<1x32xf32>
    %656 = arith.addf %655, %654 : vector<1x32xf32>
    %657 = arith.mulf %650, %597 : vector<1x32xf32>
    %658 = arith.mulf %645, %651 : vector<1x32xf32>
    %659 = arith.addf %657, %658 : vector<1x32xf32>
    %660 = math.tanh %659 : vector<1x32xf32>
    %661 = arith.mulf %656, %660 : vector<1x32xf32>
    %c7_i32_286 = arith.constant 7 : i32
    %662 = arith.minsi %c6_i32, %c7_i32_286 : i32
    %663 = arith.index_cast %662 : i32 to index
    %664 = memref.load %arg0[%663] : memref<8xf32, #tpu.memory_space<smem>>
    %665 = vector.broadcast %664 : f32 to vector<1x512xf32>
    %666 = arith.mulf %665, %0 : vector<1x512xf32>
    %c0_287 = arith.constant 0 : index
    %c0_288 = arith.constant 0 : index
    %667 = vector.load %arg2[%c0_287, %c0_288] : memref<32x512xf32, #tpu.memory_space<vmem>>, vector<32x512xf32>
    %cst_289 = arith.constant dense<0.000000e+00> : vector<1x512xf32>
    %668 = tpu.matmul %593, %667, %cst_289 {dimension_numbers = #tpu.dot_dimension_numbers<[1], [0], [0], [1], [0, 0, 1, 1], [], []>} : vector<1x32xf32>, vector<32x512xf32>, vector<1x512xf32> -> vector<1x512xf32>
    %669 = arith.addf %666, %668 : vector<1x512xf32>
    %670 = arith.addf %669, %2 : vector<1x512xf32>
    %671 = math.tanh %670 : vector<1x512xf32>
    %672 = vector.extract_strided_slice %671 {offsets = [0, 0], sizes = [1, 32], strides = [1, 1]} : vector<1x512xf32> to vector<1x32xf32>
    %cst_290 = arith.constant 5.000000e-01 : f32
    %673 = vector.broadcast %cst_290 : f32 to vector<1x32xf32>
    %674 = arith.mulf %673, %672 : vector<1x32xf32>
    %cst_291 = arith.constant 5.000000e-01 : f32
    %675 = vector.broadcast %cst_291 : f32 to vector<1x32xf32>
    %676 = arith.addf %675, %674 : vector<1x32xf32>
    %677 = vector.extract_strided_slice %671 {offsets = [0, 128], sizes = [1, 32], strides = [1, 1]} : vector<1x512xf32> to vector<1x32xf32>
    %cst_292 = arith.constant 5.000000e-01 : f32
    %678 = vector.broadcast %cst_292 : f32 to vector<1x32xf32>
    %679 = arith.mulf %678, %677 : vector<1x32xf32>
    %cst_293 = arith.constant 5.000000e-01 : f32
    %680 = vector.broadcast %cst_293 : f32 to vector<1x32xf32>
    %681 = arith.addf %680, %679 : vector<1x32xf32>
    %682 = vector.extract_strided_slice %671 {offsets = [0, 256], sizes = [1, 32], strides = [1, 1]} : vector<1x512xf32> to vector<1x32xf32>
    %683 = vector.extract_strided_slice %671 {offsets = [0, 384], sizes = [1, 32], strides = [1, 1]} : vector<1x512xf32> to vector<1x32xf32>
    %cst_294 = arith.constant 5.000000e-01 : f32
    %684 = vector.broadcast %cst_294 : f32 to vector<1x32xf32>
    %685 = arith.mulf %684, %683 : vector<1x32xf32>
    %cst_295 = arith.constant 5.000000e-01 : f32
    %686 = vector.broadcast %cst_295 : f32 to vector<1x32xf32>
    %687 = arith.addf %686, %685 : vector<1x32xf32>
    %688 = arith.mulf %681, %591 : vector<1x32xf32>
    %689 = arith.mulf %676, %682 : vector<1x32xf32>
    %690 = arith.addf %688, %689 : vector<1x32xf32>
    %691 = math.tanh %690 : vector<1x32xf32>
    %692 = arith.mulf %687, %691 : vector<1x32xf32>
    %c1_i32_296 = arith.constant 1 : i32
    %693 = arith.cmpi sge, %c6_i32, %c1_i32_296 : i32
    %694 = arith.select %693, %661, %595 : vector<1x32xf32>
    %c1_i32_297 = arith.constant 1 : i32
    %695 = arith.cmpi sge, %c6_i32, %c1_i32_297 : i32
    %696 = arith.select %695, %659, %597 : vector<1x32xf32>
    %c2_i32_298 = arith.constant 2 : i32
    %697 = arith.cmpi sge, %c6_i32, %c2_i32_298 : i32
    %698 = arith.select %697, %631, %599 : vector<1x32xf32>
    %c2_i32_299 = arith.constant 2 : i32
    %699 = arith.cmpi sge, %c6_i32, %c2_i32_299 : i32
    %700 = arith.select %699, %629, %601 : vector<1x32xf32>
    %c7_i32_300 = arith.constant 7 : i32
    %c2_301 = arith.constant 2 : index
    %c0_302 = arith.constant 0 : index
    %c0_303 = arith.constant 0 : index
    %701 = vector.load %arg3[%c2_301, %c0_302, %c0_303] : memref<4x32x512xf32, #tpu.memory_space<vmem>>, vector<1x32x512xf32>
    %702 = vector.shape_cast %701 : vector<1x32x512xf32> to vector<32x512xf32>
    %cst_304 = arith.constant dense<0.000000e+00> : vector<1x512xf32>
    %703 = tpu.matmul %694, %702, %cst_304 {dimension_numbers = #tpu.dot_dimension_numbers<[1], [0], [0], [1], [0, 0, 1, 1], [], []>} : vector<1x32xf32>, vector<32x512xf32>, vector<1x512xf32> -> vector<1x512xf32>
    %c3_305 = arith.constant 3 : index
    %c0_306 = arith.constant 0 : index
    %c0_307 = arith.constant 0 : index
    %704 = vector.load %arg3[%c3_305, %c0_306, %c0_307] : memref<4x32x512xf32, #tpu.memory_space<vmem>>, vector<1x32x512xf32>
    %705 = vector.shape_cast %704 : vector<1x32x512xf32> to vector<32x512xf32>
    %cst_308 = arith.constant dense<0.000000e+00> : vector<1x512xf32>
    %706 = tpu.matmul %698, %705, %cst_308 {dimension_numbers = #tpu.dot_dimension_numbers<[1], [0], [0], [1], [0, 0, 1, 1], [], []>} : vector<1x32xf32>, vector<32x512xf32>, vector<1x512xf32> -> vector<1x512xf32>
    %707 = arith.addf %703, %706 : vector<1x512xf32>
    %708 = arith.addf %707, %6 : vector<1x512xf32>
    %709 = math.tanh %708 : vector<1x512xf32>
    %710 = vector.extract_strided_slice %709 {offsets = [0, 0], sizes = [1, 32], strides = [1, 1]} : vector<1x512xf32> to vector<1x32xf32>
    %cst_309 = arith.constant 5.000000e-01 : f32
    %711 = vector.broadcast %cst_309 : f32 to vector<1x32xf32>
    %712 = arith.mulf %711, %710 : vector<1x32xf32>
    %cst_310 = arith.constant 5.000000e-01 : f32
    %713 = vector.broadcast %cst_310 : f32 to vector<1x32xf32>
    %714 = arith.addf %713, %712 : vector<1x32xf32>
    %715 = vector.extract_strided_slice %709 {offsets = [0, 128], sizes = [1, 32], strides = [1, 1]} : vector<1x512xf32> to vector<1x32xf32>
    %cst_311 = arith.constant 5.000000e-01 : f32
    %716 = vector.broadcast %cst_311 : f32 to vector<1x32xf32>
    %717 = arith.mulf %716, %715 : vector<1x32xf32>
    %cst_312 = arith.constant 5.000000e-01 : f32
    %718 = vector.broadcast %cst_312 : f32 to vector<1x32xf32>
    %719 = arith.addf %718, %717 : vector<1x32xf32>
    %720 = vector.extract_strided_slice %709 {offsets = [0, 256], sizes = [1, 32], strides = [1, 1]} : vector<1x512xf32> to vector<1x32xf32>
    %721 = vector.extract_strided_slice %709 {offsets = [0, 384], sizes = [1, 32], strides = [1, 1]} : vector<1x512xf32> to vector<1x32xf32>
    %cst_313 = arith.constant 5.000000e-01 : f32
    %722 = vector.broadcast %cst_313 : f32 to vector<1x32xf32>
    %723 = arith.mulf %722, %721 : vector<1x32xf32>
    %cst_314 = arith.constant 5.000000e-01 : f32
    %724 = vector.broadcast %cst_314 : f32 to vector<1x32xf32>
    %725 = arith.addf %724, %723 : vector<1x32xf32>
    %726 = arith.mulf %719, %700 : vector<1x32xf32>
    %727 = arith.mulf %714, %720 : vector<1x32xf32>
    %728 = arith.addf %726, %727 : vector<1x32xf32>
    %729 = math.tanh %728 : vector<1x32xf32>
    %730 = arith.mulf %725, %729 : vector<1x32xf32>
    %c0_315 = arith.constant 0 : index
    %c0_316 = arith.constant 0 : index
    %c0_317 = arith.constant 0 : index
    %731 = vector.load %arg3[%c0_315, %c0_316, %c0_317] : memref<4x32x512xf32, #tpu.memory_space<vmem>>, vector<1x32x512xf32>
    %732 = vector.shape_cast %731 : vector<1x32x512xf32> to vector<32x512xf32>
    %cst_318 = arith.constant dense<0.000000e+00> : vector<1x512xf32>
    %733 = tpu.matmul %692, %732, %cst_318 {dimension_numbers = #tpu.dot_dimension_numbers<[1], [0], [0], [1], [0, 0, 1, 1], [], []>} : vector<1x32xf32>, vector<32x512xf32>, vector<1x512xf32> -> vector<1x512xf32>
    %c1_319 = arith.constant 1 : index
    %c0_320 = arith.constant 0 : index
    %c0_321 = arith.constant 0 : index
    %734 = vector.load %arg3[%c1_319, %c0_320, %c0_321] : memref<4x32x512xf32, #tpu.memory_space<vmem>>, vector<1x32x512xf32>
    %735 = vector.shape_cast %734 : vector<1x32x512xf32> to vector<32x512xf32>
    %cst_322 = arith.constant dense<0.000000e+00> : vector<1x512xf32>
    %736 = tpu.matmul %694, %735, %cst_322 {dimension_numbers = #tpu.dot_dimension_numbers<[1], [0], [0], [1], [0, 0, 1, 1], [], []>} : vector<1x32xf32>, vector<32x512xf32>, vector<1x512xf32> -> vector<1x512xf32>
    %737 = arith.addf %733, %736 : vector<1x512xf32>
    %738 = arith.addf %737, %4 : vector<1x512xf32>
    %739 = math.tanh %738 : vector<1x512xf32>
    %740 = vector.extract_strided_slice %739 {offsets = [0, 0], sizes = [1, 32], strides = [1, 1]} : vector<1x512xf32> to vector<1x32xf32>
    %cst_323 = arith.constant 5.000000e-01 : f32
    %741 = vector.broadcast %cst_323 : f32 to vector<1x32xf32>
    %742 = arith.mulf %741, %740 : vector<1x32xf32>
    %cst_324 = arith.constant 5.000000e-01 : f32
    %743 = vector.broadcast %cst_324 : f32 to vector<1x32xf32>
    %744 = arith.addf %743, %742 : vector<1x32xf32>
    %745 = vector.extract_strided_slice %739 {offsets = [0, 128], sizes = [1, 32], strides = [1, 1]} : vector<1x512xf32> to vector<1x32xf32>
    %cst_325 = arith.constant 5.000000e-01 : f32
    %746 = vector.broadcast %cst_325 : f32 to vector<1x32xf32>
    %747 = arith.mulf %746, %745 : vector<1x32xf32>
    %cst_326 = arith.constant 5.000000e-01 : f32
    %748 = vector.broadcast %cst_326 : f32 to vector<1x32xf32>
    %749 = arith.addf %748, %747 : vector<1x32xf32>
    %750 = vector.extract_strided_slice %739 {offsets = [0, 256], sizes = [1, 32], strides = [1, 1]} : vector<1x512xf32> to vector<1x32xf32>
    %751 = vector.extract_strided_slice %739 {offsets = [0, 384], sizes = [1, 32], strides = [1, 1]} : vector<1x512xf32> to vector<1x32xf32>
    %cst_327 = arith.constant 5.000000e-01 : f32
    %752 = vector.broadcast %cst_327 : f32 to vector<1x32xf32>
    %753 = arith.mulf %752, %751 : vector<1x32xf32>
    %cst_328 = arith.constant 5.000000e-01 : f32
    %754 = vector.broadcast %cst_328 : f32 to vector<1x32xf32>
    %755 = arith.addf %754, %753 : vector<1x32xf32>
    %756 = arith.mulf %749, %696 : vector<1x32xf32>
    %757 = arith.mulf %744, %750 : vector<1x32xf32>
    %758 = arith.addf %756, %757 : vector<1x32xf32>
    %759 = math.tanh %758 : vector<1x32xf32>
    %760 = arith.mulf %755, %759 : vector<1x32xf32>
    %c7_i32_329 = arith.constant 7 : i32
    %761 = arith.minsi %c7_i32_300, %c7_i32_329 : i32
    %762 = arith.index_cast %761 : i32 to index
    %763 = memref.load %arg0[%762] : memref<8xf32, #tpu.memory_space<smem>>
    %764 = vector.broadcast %763 : f32 to vector<1x512xf32>
    %765 = arith.mulf %764, %0 : vector<1x512xf32>
    %c0_330 = arith.constant 0 : index
    %c0_331 = arith.constant 0 : index
    %766 = vector.load %arg2[%c0_330, %c0_331] : memref<32x512xf32, #tpu.memory_space<vmem>>, vector<32x512xf32>
    %cst_332 = arith.constant dense<0.000000e+00> : vector<1x512xf32>
    %767 = tpu.matmul %692, %766, %cst_332 {dimension_numbers = #tpu.dot_dimension_numbers<[1], [0], [0], [1], [0, 0, 1, 1], [], []>} : vector<1x32xf32>, vector<32x512xf32>, vector<1x512xf32> -> vector<1x512xf32>
    %768 = arith.addf %765, %767 : vector<1x512xf32>
    %769 = arith.addf %768, %2 : vector<1x512xf32>
    %770 = math.tanh %769 : vector<1x512xf32>
    %771 = vector.extract_strided_slice %770 {offsets = [0, 0], sizes = [1, 32], strides = [1, 1]} : vector<1x512xf32> to vector<1x32xf32>
    %cst_333 = arith.constant 5.000000e-01 : f32
    %772 = vector.broadcast %cst_333 : f32 to vector<1x32xf32>
    %773 = arith.mulf %772, %771 : vector<1x32xf32>
    %cst_334 = arith.constant 5.000000e-01 : f32
    %774 = vector.broadcast %cst_334 : f32 to vector<1x32xf32>
    %775 = arith.addf %774, %773 : vector<1x32xf32>
    %776 = vector.extract_strided_slice %770 {offsets = [0, 128], sizes = [1, 32], strides = [1, 1]} : vector<1x512xf32> to vector<1x32xf32>
    %cst_335 = arith.constant 5.000000e-01 : f32
    %777 = vector.broadcast %cst_335 : f32 to vector<1x32xf32>
    %778 = arith.mulf %777, %776 : vector<1x32xf32>
    %cst_336 = arith.constant 5.000000e-01 : f32
    %779 = vector.broadcast %cst_336 : f32 to vector<1x32xf32>
    %780 = arith.addf %779, %778 : vector<1x32xf32>
    %781 = vector.extract_strided_slice %770 {offsets = [0, 256], sizes = [1, 32], strides = [1, 1]} : vector<1x512xf32> to vector<1x32xf32>
    %782 = vector.extract_strided_slice %770 {offsets = [0, 384], sizes = [1, 32], strides = [1, 1]} : vector<1x512xf32> to vector<1x32xf32>
    %cst_337 = arith.constant 5.000000e-01 : f32
    %783 = vector.broadcast %cst_337 : f32 to vector<1x32xf32>
    %784 = arith.mulf %783, %782 : vector<1x32xf32>
    %cst_338 = arith.constant 5.000000e-01 : f32
    %785 = vector.broadcast %cst_338 : f32 to vector<1x32xf32>
    %786 = arith.addf %785, %784 : vector<1x32xf32>
    %787 = arith.mulf %780, %690 : vector<1x32xf32>
    %788 = arith.mulf %775, %781 : vector<1x32xf32>
    %789 = arith.addf %787, %788 : vector<1x32xf32>
    %790 = math.tanh %789 : vector<1x32xf32>
    %791 = arith.mulf %786, %790 : vector<1x32xf32>
    %c1_i32_339 = arith.constant 1 : i32
    %792 = arith.cmpi sge, %c7_i32_300, %c1_i32_339 : i32
    %793 = arith.select %792, %760, %694 : vector<1x32xf32>
    %c1_i32_340 = arith.constant 1 : i32
    %794 = arith.cmpi sge, %c7_i32_300, %c1_i32_340 : i32
    %795 = arith.select %794, %758, %696 : vector<1x32xf32>
    %c2_i32_341 = arith.constant 2 : i32
    %796 = arith.cmpi sge, %c7_i32_300, %c2_i32_341 : i32
    %797 = arith.select %796, %730, %698 : vector<1x32xf32>
    %c2_i32_342 = arith.constant 2 : i32
    %798 = arith.cmpi sge, %c7_i32_300, %c2_i32_342 : i32
    %799 = arith.select %798, %728, %700 : vector<1x32xf32>
    %c8_i32 = arith.constant 8 : i32
    %c2_343 = arith.constant 2 : index
    %c0_344 = arith.constant 0 : index
    %c0_345 = arith.constant 0 : index
    %800 = vector.load %arg3[%c2_343, %c0_344, %c0_345] : memref<4x32x512xf32, #tpu.memory_space<vmem>>, vector<1x32x512xf32>
    %801 = vector.shape_cast %800 : vector<1x32x512xf32> to vector<32x512xf32>
    %cst_346 = arith.constant dense<0.000000e+00> : vector<1x512xf32>
    %802 = tpu.matmul %793, %801, %cst_346 {dimension_numbers = #tpu.dot_dimension_numbers<[1], [0], [0], [1], [0, 0, 1, 1], [], []>} : vector<1x32xf32>, vector<32x512xf32>, vector<1x512xf32> -> vector<1x512xf32>
    %c3_347 = arith.constant 3 : index
    %c0_348 = arith.constant 0 : index
    %c0_349 = arith.constant 0 : index
    %803 = vector.load %arg3[%c3_347, %c0_348, %c0_349] : memref<4x32x512xf32, #tpu.memory_space<vmem>>, vector<1x32x512xf32>
    %804 = vector.shape_cast %803 : vector<1x32x512xf32> to vector<32x512xf32>
    %cst_350 = arith.constant dense<0.000000e+00> : vector<1x512xf32>
    %805 = tpu.matmul %797, %804, %cst_350 {dimension_numbers = #tpu.dot_dimension_numbers<[1], [0], [0], [1], [0, 0, 1, 1], [], []>} : vector<1x32xf32>, vector<32x512xf32>, vector<1x512xf32> -> vector<1x512xf32>
    %806 = arith.addf %802, %805 : vector<1x512xf32>
    %807 = arith.addf %806, %6 : vector<1x512xf32>
    %808 = math.tanh %807 : vector<1x512xf32>
    %809 = vector.extract_strided_slice %808 {offsets = [0, 0], sizes = [1, 32], strides = [1, 1]} : vector<1x512xf32> to vector<1x32xf32>
    %cst_351 = arith.constant 5.000000e-01 : f32
    %810 = vector.broadcast %cst_351 : f32 to vector<1x32xf32>
    %811 = arith.mulf %810, %809 : vector<1x32xf32>
    %cst_352 = arith.constant 5.000000e-01 : f32
    %812 = vector.broadcast %cst_352 : f32 to vector<1x32xf32>
    %813 = arith.addf %812, %811 : vector<1x32xf32>
    %814 = vector.extract_strided_slice %808 {offsets = [0, 128], sizes = [1, 32], strides = [1, 1]} : vector<1x512xf32> to vector<1x32xf32>
    %cst_353 = arith.constant 5.000000e-01 : f32
    %815 = vector.broadcast %cst_353 : f32 to vector<1x32xf32>
    %816 = arith.mulf %815, %814 : vector<1x32xf32>
    %cst_354 = arith.constant 5.000000e-01 : f32
    %817 = vector.broadcast %cst_354 : f32 to vector<1x32xf32>
    %818 = arith.addf %817, %816 : vector<1x32xf32>
    %819 = vector.extract_strided_slice %808 {offsets = [0, 256], sizes = [1, 32], strides = [1, 1]} : vector<1x512xf32> to vector<1x32xf32>
    %820 = vector.extract_strided_slice %808 {offsets = [0, 384], sizes = [1, 32], strides = [1, 1]} : vector<1x512xf32> to vector<1x32xf32>
    %cst_355 = arith.constant 5.000000e-01 : f32
    %821 = vector.broadcast %cst_355 : f32 to vector<1x32xf32>
    %822 = arith.mulf %821, %820 : vector<1x32xf32>
    %cst_356 = arith.constant 5.000000e-01 : f32
    %823 = vector.broadcast %cst_356 : f32 to vector<1x32xf32>
    %824 = arith.addf %823, %822 : vector<1x32xf32>
    %825 = arith.mulf %818, %799 : vector<1x32xf32>
    %826 = arith.mulf %813, %819 : vector<1x32xf32>
    %827 = arith.addf %825, %826 : vector<1x32xf32>
    %828 = math.tanh %827 : vector<1x32xf32>
    %829 = arith.mulf %824, %828 : vector<1x32xf32>
    %c0_357 = arith.constant 0 : index
    %c0_358 = arith.constant 0 : index
    %c0_359 = arith.constant 0 : index
    %830 = vector.load %arg3[%c0_357, %c0_358, %c0_359] : memref<4x32x512xf32, #tpu.memory_space<vmem>>, vector<1x32x512xf32>
    %831 = vector.shape_cast %830 : vector<1x32x512xf32> to vector<32x512xf32>
    %cst_360 = arith.constant dense<0.000000e+00> : vector<1x512xf32>
    %832 = tpu.matmul %791, %831, %cst_360 {dimension_numbers = #tpu.dot_dimension_numbers<[1], [0], [0], [1], [0, 0, 1, 1], [], []>} : vector<1x32xf32>, vector<32x512xf32>, vector<1x512xf32> -> vector<1x512xf32>
    %c1_361 = arith.constant 1 : index
    %c0_362 = arith.constant 0 : index
    %c0_363 = arith.constant 0 : index
    %833 = vector.load %arg3[%c1_361, %c0_362, %c0_363] : memref<4x32x512xf32, #tpu.memory_space<vmem>>, vector<1x32x512xf32>
    %834 = vector.shape_cast %833 : vector<1x32x512xf32> to vector<32x512xf32>
    %cst_364 = arith.constant dense<0.000000e+00> : vector<1x512xf32>
    %835 = tpu.matmul %793, %834, %cst_364 {dimension_numbers = #tpu.dot_dimension_numbers<[1], [0], [0], [1], [0, 0, 1, 1], [], []>} : vector<1x32xf32>, vector<32x512xf32>, vector<1x512xf32> -> vector<1x512xf32>
    %836 = arith.addf %832, %835 : vector<1x512xf32>
    %837 = arith.addf %836, %4 : vector<1x512xf32>
    %838 = math.tanh %837 : vector<1x512xf32>
    %839 = vector.extract_strided_slice %838 {offsets = [0, 0], sizes = [1, 32], strides = [1, 1]} : vector<1x512xf32> to vector<1x32xf32>
    %cst_365 = arith.constant 5.000000e-01 : f32
    %840 = vector.broadcast %cst_365 : f32 to vector<1x32xf32>
    %841 = arith.mulf %840, %839 : vector<1x32xf32>
    %cst_366 = arith.constant 5.000000e-01 : f32
    %842 = vector.broadcast %cst_366 : f32 to vector<1x32xf32>
    %843 = arith.addf %842, %841 : vector<1x32xf32>
    %844 = vector.extract_strided_slice %838 {offsets = [0, 128], sizes = [1, 32], strides = [1, 1]} : vector<1x512xf32> to vector<1x32xf32>
    %cst_367 = arith.constant 5.000000e-01 : f32
    %845 = vector.broadcast %cst_367 : f32 to vector<1x32xf32>
    %846 = arith.mulf %845, %844 : vector<1x32xf32>
    %cst_368 = arith.constant 5.000000e-01 : f32
    %847 = vector.broadcast %cst_368 : f32 to vector<1x32xf32>
    %848 = arith.addf %847, %846 : vector<1x32xf32>
    %849 = vector.extract_strided_slice %838 {offsets = [0, 256], sizes = [1, 32], strides = [1, 1]} : vector<1x512xf32> to vector<1x32xf32>
    %850 = vector.extract_strided_slice %838 {offsets = [0, 384], sizes = [1, 32], strides = [1, 1]} : vector<1x512xf32> to vector<1x32xf32>
    %cst_369 = arith.constant 5.000000e-01 : f32
    %851 = vector.broadcast %cst_369 : f32 to vector<1x32xf32>
    %852 = arith.mulf %851, %850 : vector<1x32xf32>
    %cst_370 = arith.constant 5.000000e-01 : f32
    %853 = vector.broadcast %cst_370 : f32 to vector<1x32xf32>
    %854 = arith.addf %853, %852 : vector<1x32xf32>
    %855 = arith.mulf %848, %795 : vector<1x32xf32>
    %856 = arith.mulf %843, %849 : vector<1x32xf32>
    %857 = arith.addf %855, %856 : vector<1x32xf32>
    %858 = math.tanh %857 : vector<1x32xf32>
    %859 = arith.mulf %854, %858 : vector<1x32xf32>
    %c7_i32_371 = arith.constant 7 : i32
    %860 = arith.minsi %c8_i32, %c7_i32_371 : i32
    %861 = arith.index_cast %860 : i32 to index
    %862 = memref.load %arg0[%861] : memref<8xf32, #tpu.memory_space<smem>>
    %863 = vector.broadcast %862 : f32 to vector<1x512xf32>
    %864 = arith.mulf %863, %0 : vector<1x512xf32>
    %c0_372 = arith.constant 0 : index
    %c0_373 = arith.constant 0 : index
    %865 = vector.load %arg2[%c0_372, %c0_373] : memref<32x512xf32, #tpu.memory_space<vmem>>, vector<32x512xf32>
    %cst_374 = arith.constant dense<0.000000e+00> : vector<1x512xf32>
    %866 = tpu.matmul %791, %865, %cst_374 {dimension_numbers = #tpu.dot_dimension_numbers<[1], [0], [0], [1], [0, 0, 1, 1], [], []>} : vector<1x32xf32>, vector<32x512xf32>, vector<1x512xf32> -> vector<1x512xf32>
    %867 = arith.addf %864, %866 : vector<1x512xf32>
    %868 = arith.addf %867, %2 : vector<1x512xf32>
    %869 = math.tanh %868 : vector<1x512xf32>
    %870 = vector.extract_strided_slice %869 {offsets = [0, 0], sizes = [1, 32], strides = [1, 1]} : vector<1x512xf32> to vector<1x32xf32>
    %cst_375 = arith.constant 5.000000e-01 : f32
    %871 = vector.broadcast %cst_375 : f32 to vector<1x32xf32>
    %872 = arith.mulf %871, %870 : vector<1x32xf32>
    %cst_376 = arith.constant 5.000000e-01 : f32
    %873 = vector.broadcast %cst_376 : f32 to vector<1x32xf32>
    %874 = arith.addf %873, %872 : vector<1x32xf32>
    %875 = vector.extract_strided_slice %869 {offsets = [0, 128], sizes = [1, 32], strides = [1, 1]} : vector<1x512xf32> to vector<1x32xf32>
    %cst_377 = arith.constant 5.000000e-01 : f32
    %876 = vector.broadcast %cst_377 : f32 to vector<1x32xf32>
    %877 = arith.mulf %876, %875 : vector<1x32xf32>
    %cst_378 = arith.constant 5.000000e-01 : f32
    %878 = vector.broadcast %cst_378 : f32 to vector<1x32xf32>
    %879 = arith.addf %878, %877 : vector<1x32xf32>
    %880 = vector.extract_strided_slice %869 {offsets = [0, 256], sizes = [1, 32], strides = [1, 1]} : vector<1x512xf32> to vector<1x32xf32>
    %881 = vector.extract_strided_slice %869 {offsets = [0, 384], sizes = [1, 32], strides = [1, 1]} : vector<1x512xf32> to vector<1x32xf32>
    %cst_379 = arith.constant 5.000000e-01 : f32
    %882 = vector.broadcast %cst_379 : f32 to vector<1x32xf32>
    %883 = arith.mulf %882, %881 : vector<1x32xf32>
    %cst_380 = arith.constant 5.000000e-01 : f32
    %884 = vector.broadcast %cst_380 : f32 to vector<1x32xf32>
    %885 = arith.addf %884, %883 : vector<1x32xf32>
    %886 = arith.mulf %879, %789 : vector<1x32xf32>
    %887 = arith.mulf %874, %880 : vector<1x32xf32>
    %888 = arith.addf %886, %887 : vector<1x32xf32>
    %889 = math.tanh %888 : vector<1x32xf32>
    %890 = arith.mulf %885, %889 : vector<1x32xf32>
    %c1_i32_381 = arith.constant 1 : i32
    %891 = arith.cmpi sge, %c8_i32, %c1_i32_381 : i32
    %892 = arith.select %891, %859, %793 : vector<1x32xf32>
    %c1_i32_382 = arith.constant 1 : i32
    %893 = arith.cmpi sge, %c8_i32, %c1_i32_382 : i32
    %894 = arith.select %893, %857, %795 : vector<1x32xf32>
    %c2_i32_383 = arith.constant 2 : i32
    %895 = arith.cmpi sge, %c8_i32, %c2_i32_383 : i32
    %896 = arith.select %895, %829, %797 : vector<1x32xf32>
    %c2_i32_384 = arith.constant 2 : i32
    %897 = arith.cmpi sge, %c8_i32, %c2_i32_384 : i32
    %898 = arith.select %897, %827, %799 : vector<1x32xf32>
    %c9_i32 = arith.constant 9 : i32
    %c2_385 = arith.constant 2 : index
    %c0_386 = arith.constant 0 : index
    %c0_387 = arith.constant 0 : index
    %899 = vector.load %arg3[%c2_385, %c0_386, %c0_387] : memref<4x32x512xf32, #tpu.memory_space<vmem>>, vector<1x32x512xf32>
    %900 = vector.shape_cast %899 : vector<1x32x512xf32> to vector<32x512xf32>
    %cst_388 = arith.constant dense<0.000000e+00> : vector<1x512xf32>
    %901 = tpu.matmul %892, %900, %cst_388 {dimension_numbers = #tpu.dot_dimension_numbers<[1], [0], [0], [1], [0, 0, 1, 1], [], []>} : vector<1x32xf32>, vector<32x512xf32>, vector<1x512xf32> -> vector<1x512xf32>
    %c3_389 = arith.constant 3 : index
    %c0_390 = arith.constant 0 : index
    %c0_391 = arith.constant 0 : index
    %902 = vector.load %arg3[%c3_389, %c0_390, %c0_391] : memref<4x32x512xf32, #tpu.memory_space<vmem>>, vector<1x32x512xf32>
    %903 = vector.shape_cast %902 : vector<1x32x512xf32> to vector<32x512xf32>
    %cst_392 = arith.constant dense<0.000000e+00> : vector<1x512xf32>
    %904 = tpu.matmul %896, %903, %cst_392 {dimension_numbers = #tpu.dot_dimension_numbers<[1], [0], [0], [1], [0, 0, 1, 1], [], []>} : vector<1x32xf32>, vector<32x512xf32>, vector<1x512xf32> -> vector<1x512xf32>
    %905 = arith.addf %901, %904 : vector<1x512xf32>
    %906 = arith.addf %905, %6 : vector<1x512xf32>
    %907 = math.tanh %906 : vector<1x512xf32>
    %908 = vector.extract_strided_slice %907 {offsets = [0, 0], sizes = [1, 32], strides = [1, 1]} : vector<1x512xf32> to vector<1x32xf32>
    %cst_393 = arith.constant 5.000000e-01 : f32
    %909 = vector.broadcast %cst_393 : f32 to vector<1x32xf32>
    %910 = arith.mulf %909, %908 : vector<1x32xf32>
    %cst_394 = arith.constant 5.000000e-01 : f32
    %911 = vector.broadcast %cst_394 : f32 to vector<1x32xf32>
    %912 = arith.addf %911, %910 : vector<1x32xf32>
    %913 = vector.extract_strided_slice %907 {offsets = [0, 128], sizes = [1, 32], strides = [1, 1]} : vector<1x512xf32> to vector<1x32xf32>
    %cst_395 = arith.constant 5.000000e-01 : f32
    %914 = vector.broadcast %cst_395 : f32 to vector<1x32xf32>
    %915 = arith.mulf %914, %913 : vector<1x32xf32>
    %cst_396 = arith.constant 5.000000e-01 : f32
    %916 = vector.broadcast %cst_396 : f32 to vector<1x32xf32>
    %917 = arith.addf %916, %915 : vector<1x32xf32>
    %918 = vector.extract_strided_slice %907 {offsets = [0, 256], sizes = [1, 32], strides = [1, 1]} : vector<1x512xf32> to vector<1x32xf32>
    %919 = vector.extract_strided_slice %907 {offsets = [0, 384], sizes = [1, 32], strides = [1, 1]} : vector<1x512xf32> to vector<1x32xf32>
    %cst_397 = arith.constant 5.000000e-01 : f32
    %920 = vector.broadcast %cst_397 : f32 to vector<1x32xf32>
    %921 = arith.mulf %920, %919 : vector<1x32xf32>
    %cst_398 = arith.constant 5.000000e-01 : f32
    %922 = vector.broadcast %cst_398 : f32 to vector<1x32xf32>
    %923 = arith.addf %922, %921 : vector<1x32xf32>
    %924 = arith.mulf %917, %898 : vector<1x32xf32>
    %925 = arith.mulf %912, %918 : vector<1x32xf32>
    %926 = arith.addf %924, %925 : vector<1x32xf32>
    %927 = math.tanh %926 : vector<1x32xf32>
    %928 = arith.mulf %923, %927 : vector<1x32xf32>
    %c0_399 = arith.constant 0 : index
    %c0_400 = arith.constant 0 : index
    %c0_401 = arith.constant 0 : index
    %929 = vector.load %arg3[%c0_399, %c0_400, %c0_401] : memref<4x32x512xf32, #tpu.memory_space<vmem>>, vector<1x32x512xf32>
    %930 = vector.shape_cast %929 : vector<1x32x512xf32> to vector<32x512xf32>
    %cst_402 = arith.constant dense<0.000000e+00> : vector<1x512xf32>
    %931 = tpu.matmul %890, %930, %cst_402 {dimension_numbers = #tpu.dot_dimension_numbers<[1], [0], [0], [1], [0, 0, 1, 1], [], []>} : vector<1x32xf32>, vector<32x512xf32>, vector<1x512xf32> -> vector<1x512xf32>
    %c1_403 = arith.constant 1 : index
    %c0_404 = arith.constant 0 : index
    %c0_405 = arith.constant 0 : index
    %932 = vector.load %arg3[%c1_403, %c0_404, %c0_405] : memref<4x32x512xf32, #tpu.memory_space<vmem>>, vector<1x32x512xf32>
    %933 = vector.shape_cast %932 : vector<1x32x512xf32> to vector<32x512xf32>
    %cst_406 = arith.constant dense<0.000000e+00> : vector<1x512xf32>
    %934 = tpu.matmul %892, %933, %cst_406 {dimension_numbers = #tpu.dot_dimension_numbers<[1], [0], [0], [1], [0, 0, 1, 1], [], []>} : vector<1x32xf32>, vector<32x512xf32>, vector<1x512xf32> -> vector<1x512xf32>
    %935 = arith.addf %931, %934 : vector<1x512xf32>
    %936 = arith.addf %935, %4 : vector<1x512xf32>
    %937 = math.tanh %936 : vector<1x512xf32>
    %938 = vector.extract_strided_slice %937 {offsets = [0, 0], sizes = [1, 32], strides = [1, 1]} : vector<1x512xf32> to vector<1x32xf32>
    %cst_407 = arith.constant 5.000000e-01 : f32
    %939 = vector.broadcast %cst_407 : f32 to vector<1x32xf32>
    %940 = arith.mulf %939, %938 : vector<1x32xf32>
    %cst_408 = arith.constant 5.000000e-01 : f32
    %941 = vector.broadcast %cst_408 : f32 to vector<1x32xf32>
    %942 = arith.addf %941, %940 : vector<1x32xf32>
    %943 = vector.extract_strided_slice %937 {offsets = [0, 128], sizes = [1, 32], strides = [1, 1]} : vector<1x512xf32> to vector<1x32xf32>
    %cst_409 = arith.constant 5.000000e-01 : f32
    %944 = vector.broadcast %cst_409 : f32 to vector<1x32xf32>
    %945 = arith.mulf %944, %943 : vector<1x32xf32>
    %cst_410 = arith.constant 5.000000e-01 : f32
    %946 = vector.broadcast %cst_410 : f32 to vector<1x32xf32>
    %947 = arith.addf %946, %945 : vector<1x32xf32>
    %948 = vector.extract_strided_slice %937 {offsets = [0, 256], sizes = [1, 32], strides = [1, 1]} : vector<1x512xf32> to vector<1x32xf32>
    %949 = vector.extract_strided_slice %937 {offsets = [0, 384], sizes = [1, 32], strides = [1, 1]} : vector<1x512xf32> to vector<1x32xf32>
    %cst_411 = arith.constant 5.000000e-01 : f32
    %950 = vector.broadcast %cst_411 : f32 to vector<1x32xf32>
    %951 = arith.mulf %950, %949 : vector<1x32xf32>
    %cst_412 = arith.constant 5.000000e-01 : f32
    %952 = vector.broadcast %cst_412 : f32 to vector<1x32xf32>
    %953 = arith.addf %952, %951 : vector<1x32xf32>
    %954 = arith.mulf %947, %894 : vector<1x32xf32>
    %955 = arith.mulf %942, %948 : vector<1x32xf32>
    %956 = arith.addf %954, %955 : vector<1x32xf32>
    %957 = math.tanh %956 : vector<1x32xf32>
    %958 = arith.mulf %953, %957 : vector<1x32xf32>
    %c7_i32_413 = arith.constant 7 : i32
    %959 = arith.minsi %c9_i32, %c7_i32_413 : i32
    %960 = arith.index_cast %959 : i32 to index
    %961 = memref.load %arg0[%960] : memref<8xf32, #tpu.memory_space<smem>>
    %962 = vector.broadcast %961 : f32 to vector<1x512xf32>
    %963 = arith.mulf %962, %0 : vector<1x512xf32>
    %c0_414 = arith.constant 0 : index
    %c0_415 = arith.constant 0 : index
    %964 = vector.load %arg2[%c0_414, %c0_415] : memref<32x512xf32, #tpu.memory_space<vmem>>, vector<32x512xf32>
    %cst_416 = arith.constant dense<0.000000e+00> : vector<1x512xf32>
    %965 = tpu.matmul %890, %964, %cst_416 {dimension_numbers = #tpu.dot_dimension_numbers<[1], [0], [0], [1], [0, 0, 1, 1], [], []>} : vector<1x32xf32>, vector<32x512xf32>, vector<1x512xf32> -> vector<1x512xf32>
    %966 = arith.addf %963, %965 : vector<1x512xf32>
    %967 = arith.addf %966, %2 : vector<1x512xf32>
    %968 = math.tanh %967 : vector<1x512xf32>
    %969 = vector.extract_strided_slice %968 {offsets = [0, 0], sizes = [1, 32], strides = [1, 1]} : vector<1x512xf32> to vector<1x32xf32>
    %cst_417 = arith.constant 5.000000e-01 : f32
    %970 = vector.broadcast %cst_417 : f32 to vector<1x32xf32>
    %971 = arith.mulf %970, %969 : vector<1x32xf32>
    %cst_418 = arith.constant 5.000000e-01 : f32
    %972 = vector.broadcast %cst_418 : f32 to vector<1x32xf32>
    %973 = arith.addf %972, %971 : vector<1x32xf32>
    %974 = vector.extract_strided_slice %968 {offsets = [0, 128], sizes = [1, 32], strides = [1, 1]} : vector<1x512xf32> to vector<1x32xf32>
    %cst_419 = arith.constant 5.000000e-01 : f32
    %975 = vector.broadcast %cst_419 : f32 to vector<1x32xf32>
    %976 = arith.mulf %975, %974 : vector<1x32xf32>
    %cst_420 = arith.constant 5.000000e-01 : f32
    %977 = vector.broadcast %cst_420 : f32 to vector<1x32xf32>
    %978 = arith.addf %977, %976 : vector<1x32xf32>
    %979 = vector.extract_strided_slice %968 {offsets = [0, 256], sizes = [1, 32], strides = [1, 1]} : vector<1x512xf32> to vector<1x32xf32>
    %980 = vector.extract_strided_slice %968 {offsets = [0, 384], sizes = [1, 32], strides = [1, 1]} : vector<1x512xf32> to vector<1x32xf32>
    %cst_421 = arith.constant 5.000000e-01 : f32
    %981 = vector.broadcast %cst_421 : f32 to vector<1x32xf32>
    %982 = arith.mulf %981, %980 : vector<1x32xf32>
    %cst_422 = arith.constant 5.000000e-01 : f32
    %983 = vector.broadcast %cst_422 : f32 to vector<1x32xf32>
    %984 = arith.addf %983, %982 : vector<1x32xf32>
    %985 = arith.mulf %978, %888 : vector<1x32xf32>
    %986 = arith.mulf %973, %979 : vector<1x32xf32>
    %987 = arith.addf %985, %986 : vector<1x32xf32>
    %988 = math.tanh %987 : vector<1x32xf32>
    %989 = arith.mulf %984, %988 : vector<1x32xf32>
    %c1_i32_423 = arith.constant 1 : i32
    %990 = arith.cmpi sge, %c9_i32, %c1_i32_423 : i32
    %991 = arith.select %990, %958, %892 : vector<1x32xf32>
    %c1_i32_424 = arith.constant 1 : i32
    %992 = arith.cmpi sge, %c9_i32, %c1_i32_424 : i32
    %993 = arith.select %992, %956, %894 : vector<1x32xf32>
    %c2_i32_425 = arith.constant 2 : i32
    %994 = arith.cmpi sge, %c9_i32, %c2_i32_425 : i32
    %995 = arith.select %994, %928, %896 : vector<1x32xf32>
    %c2_i32_426 = arith.constant 2 : i32
    %996 = arith.cmpi sge, %c9_i32, %c2_i32_426 : i32
    %997 = arith.select %996, %926, %898 : vector<1x32xf32>
    %c10_i32 = arith.constant 10 : i32
    %c0_427 = arith.constant 0 : index
    %c0_428 = arith.constant 0 : index
    %998 = vector.load %arg5[%c0_427, %c0_428] : memref<1x32xf32, #tpu.memory_space<vmem>>, vector<1x32xf32>
    %999 = arith.mulf %995, %998 : vector<1x32xf32>
    %cst_429 = arith.constant dense<0.000000e+00> : vector<1xf32>
    %1000 = vector.multi_reduction <add>, %999, %cst_429 [1] : vector<1x32xf32> to vector<1xf32>
    %1001 = vector.shape_cast %1000 : vector<1xf32> to vector<1x1xf32>
    %c0_430 = arith.constant 0 : index
    %c0_431 = arith.constant 0 : index
    %1002 = vector.load %arg6[%c0_430, %c0_431] : memref<1x1xf32, #tpu.memory_space<vmem>>, vector<1x1xf32>
    %1003 = arith.addf %1001, %1002 : vector<1x1xf32>
    %c0_432 = arith.constant 0 : index
    %c0_433 = arith.constant 0 : index
    %1004 = vector.load %arg7[%c0_432, %c0_433] : memref<1x1xf32, #tpu.memory_space<vmem>>, vector<1x1xf32>
    tpu.vector_store %arg7[%c0_432, %c0_433], %1003 {strides = array<i32>} : memref<1x1xf32, #tpu.memory_space<vmem>>, vector<1x1xf32>,
    return
  }
}

</mosaic_0001>

<llo_original>
// kernel: tpu_custom_call.1
$region0: #{tpu_custom_call.1}
  #allocation0 [shape = 'u32[]', space=smem, size = 0x4, offset = 0x4, fixed_abs, tag = 'smem constant byte address 0x4 - core index']
  #allocation1 [shape = 'u32[144,128]{1,0:T(1,128)}', space=vmem, size = 0x12000, scoped, tag = 'internal scratch']
  #allocation2 [shape = 'f32[1,1]{1,0:T(1,128)S(1)}', space=vmem, size = 0x200, scoped, tag = 'scoped memory for tpu_custom_call.1']
  %s0 = inlined_call_operand.vmem [shape: f32[8], index: 0, kind: input, shape index: {}]
  %s1 = inlined_call_operand.vmem [shape: f32[1,512], index: 1, kind: input, shape index: {}]
  %s2 = inlined_call_operand.hbm [shape: f32[32,512], index: 2, kind: input, shape index: {}]
  %s3 = inlined_call_operand.hbm [shape: f32[4,32,512], index: 3, kind: input, shape index: {}]
  %s4 = inlined_call_operand.vmem [shape: f32[3,1,512], index: 4, kind: input, shape index: {}]
  %s5 = inlined_call_operand.vmem [shape: f32[1,32], index: 5, kind: input, shape index: {}]
  %s6 = inlined_call_operand.<no memory space> [shape: f32[1,1], index: 6, kind: input, shape index: {}]
  %s7 = inlined_call_operand.hbm [shape: f32[1,1], index: 7, kind: output, shape index: {}]
  %s8 = sld [smem:[#allocation0]]
  $region50: #{tpu_custom_call.1} parent=0
    _
  %s10 = ssub.s32 1, %s8
  %s11 = scalar_select 0, %s10, %s8
  %v12 = vstv %s6
  %13 = vst [vmem:[#allocation2] sm:$0x1] %v12
  $region1: #{tpu_custom_call.1} parent=0
    #allocation3 [shape = 'u8[512]{0}', space=smem, size = 0x200, scoped, tag = 'input window, operand 0, single buffered']
    #allocation4 [shape = 's32[1]{0}', space=sflag, size = 0x4, scoped, tag = 'scoped memory for tpu_custom_call.1']
    #allocation5 [shape = 's32[1]{0}', space=sflag, size = 0x4, scoped, tag = 'scoped memory for tpu_custom_call.1']
    #allocation6 [shape = 's32[1]{0}', space=sflag, size = 0x4, scoped, tag = 'scoped memory for tpu_custom_call.1']
    #allocation7 [shape = 'u8[65536]{0}', space=vmem, size = 0x10000, scoped, tag = 'input window, operand 2, single buffered']
    #allocation8 [shape = 'u8[262144]{0}', space=vmem, size = 0x40000, scoped, tag = 'input window, operand 3, single buffered']
    #allocation9 [shape = 's32[1]{0}', space=sflag, size = 0x4, scoped, tag = 'scoped memory for tpu_custom_call.1']
    #allocation10 [shape = 'u8[512]{0}', space=vmem, size = 0x400, scoped, tag = 'output window, operand 0, single buffered']
    %14 = vsyncpa [#allocation6], 0
    %15 = vsyncpa [#allocation4], 0
    %16 = vsyncpa [#allocation9], 0
    %17 = vsyncpa [#allocation5], 0
    // Predicated region
    $region2: #{tpu_custom_call.1} parent=1 // pred_check
      _
    $region3: #{tpu_custom_call.1} parent=1 // pred_check_branch
      %19 = sbr.rel (0) target = $region5
    $region4: #{tpu_custom_call.1} parent=1 // pred_region
      %s21 = ssub.s32 16, 16
      %22 = vsyncadd [#allocation6], %s21
      %s24 = sshll.u32 %s0, 4
      %s25 = int_to_ptr.vmem [resolvable:$true] %s24
      %27 = dma.vmem_to_smem %s25, 16, [#allocation3], [#allocation6]
    $region5: #{tpu_custom_call.1} parent=1 // pred_fallthru
      _
    // Predicated region
    $region6: #{tpu_custom_call.1} parent=1 // pred_check
      _
    $region7: #{tpu_custom_call.1} parent=1 // pred_check_branch
      %29 = sbr.rel (0) target = $region9
    $region8: #{tpu_custom_call.1} parent=1 // pred_region
      _
    $region9: #{tpu_custom_call.1} parent=1 // pred_fallthru
      _
    // Predicated region
    $region10: #{tpu_custom_call.1} parent=1 // pred_check
      _
    $region11: #{tpu_custom_call.1} parent=1 // pred_check_branch
      %31 = sbr.rel (0) target = $region13
    $region12: #{tpu_custom_call.1} parent=1 // pred_region
      %s33 = ssub.s32 2048, 2048
      %34 = vsyncadd [#allocation4], %s33
      %s35 = sshll.u32 [#allocation7], 4
      %s36 = int_to_ptr.vmem [resolvable:$true] %s35
      %41 = dma.hbm_to_vmem [thread:$0]  %s2, 2048, %s36, [#allocation4], 512, 512, 32
    $region13: #{tpu_custom_call.1} parent=1 // pred_fallthru
      _
    // Predicated region
    $region14: #{tpu_custom_call.1} parent=1 // pred_check
      _
    $region15: #{tpu_custom_call.1} parent=1 // pred_check_branch
      %43 = sbr.rel (0) target = $region17
    $region16: #{tpu_custom_call.1} parent=1 // pred_region
      %s45 = ssub.s32 8192, 8192
      %46 = vsyncadd [#allocation9], %s45
      %s47 = sshll.u32 [#allocation8], 4
      %s48 = int_to_ptr.vmem [resolvable:$true] %s47
      %53 = dma.hbm_to_vmem [thread:$0]  %s3, 8192, %s48, [#allocation9], 512, 512, 32
    $region17: #{tpu_custom_call.1} parent=1 // pred_fallthru
      _
    // Predicated region
    $region18: #{tpu_custom_call.1} parent=1 // pred_check
      _
    $region19: #{tpu_custom_call.1} parent=1 // pred_check_branch
      %55 = sbr.rel (0) target = $region21
    $region20: #{tpu_custom_call.1} parent=1 // pred_region
      _
    $region21: #{tpu_custom_call.1} parent=1 // pred_fallthru
      _
    // Predicated region
    $region22: #{tpu_custom_call.1} parent=1 // pred_check
      _
    $region23: #{tpu_custom_call.1} parent=1 // pred_check_branch
      %57 = sbr.rel (0) target = $region25
    $region24: #{tpu_custom_call.1} parent=1 // pred_region
      _
    $region25: #{tpu_custom_call.1} parent=1 // pred_fallthru
      _
    // Predicated region
    $region26: #{tpu_custom_call.1} parent=1 // pred_check
      _
    $region27: #{tpu_custom_call.1} parent=1 // pred_check_branch
      %59 = sbr.rel (0) target = $region29
    $region28: #{tpu_custom_call.1} parent=1 // pred_region
      _
    $region29: #{tpu_custom_call.1} parent=1 // pred_fallthru
      _
    // Predicated region
    $region30: #{tpu_custom_call.1} parent=1 // pred_check
      _
    $region31: #{tpu_custom_call.1} parent=1 // pred_check_branch
      %61 = sbr.rel (0) target = $region33
    $region32: #{tpu_custom_call.1} parent=1 // pred_region
      %62 = dma.done [#allocation6], 16
    $region33: #{tpu_custom_call.1} parent=1 // pred_fallthru
      _
    // Predicated region
    $region34: #{tpu_custom_call.1} parent=1 // pred_check
      _
    $region35: #{tpu_custom_call.1} parent=1 // pred_check_branch
      %64 = sbr.rel (0) target = $region37
    $region36: #{tpu_custom_call.1} parent=1 // pred_region
      %65 = dma.done [#allocation4], 2048
    $region37: #{tpu_custom_call.1} parent=1 // pred_fallthru
      _
    // Predicated region
    $region38: #{tpu_custom_call.1} parent=1 // pred_check
      _
    $region39: #{tpu_custom_call.1} parent=1 // pred_check_branch
      %67 = sbr.rel (0) target = $region41
    $region40: #{tpu_custom_call.1} parent=1 // pred_region
      %68 = dma.done [#allocation9], 8192
    $region41: #{tpu_custom_call.1} parent=1 // pred_fallthru
      _
    %69 = sfence
    %v70 = vld [vmem:[%s1] sm:$0xf]
    %v71 = vld [vmem:[%s4] sm:$0xf]
    %s72 = scalar_lea.vmem %s4, 4
    %v73 = vld [vmem:[%s72] sm:$0xf]
    %s74 = scalar_lea.vmem %s4, 8
    %v75 = vld [vmem:[%s74] sm:$0xf]
    %s76 = sld [smem:[#allocation3]]
    %v77 = vstv %s76
    %v78 = vmul.f32 %v77, %v70
    %v79 = vld [vmem:[#allocation7] sm:$0xff]
    %v80 = vld [vmem:[#allocation7 + $0x8] sm:$0xff]
    %v81 = vld [vmem:[#allocation7 + $0x10] sm:$0xff]
    %v82 = vld [vmem:[#allocation7 + $0x18] sm:$0xff]
    %v83 = vld [vmem:[#allocation7 + $0x20] sm:$0xff]
    %v84 = vld [vmem:[#allocation7 + $0x28] sm:$0xff]
    %v85 = vld [vmem:[#allocation7 + $0x30] sm:$0xff]
    %v86 = vld [vmem:[#allocation7 + $0x38] sm:$0xff]
    %v87 = vld [vmem:[#allocation7 + $0x40] sm:$0xff]
    %v88 = vld [vmem:[#allocation7 + $0x48] sm:$0xff]
    %v89 = vld [vmem:[#allocation7 + $0x50] sm:$0xff]
    %v90 = vld [vmem:[#allocation7 + $0x58] sm:$0xff]
    %v91 = vld [vmem:[#allocation7 + $0x60] sm:$0xff]
    %v92 = vld [vmem:[#allocation7 + $0x68] sm:$0xff]
    %v93 = vld [vmem:[#allocation7 + $0x70] sm:$0xff]
    %v94 = vld [vmem:[#allocation7 + $0x78] sm:$0xff]
    %vm95 = vcmask 261120
    %v97 = vsel %vm95, 0.0, 0
    %99 = vmatprep.subr.mxu0 %v80
    %100 = vmatpush1.msra.mxu0 %v79
    %101 = vmatprep.subr.mxu0 %v84
    %102 = vmatpush1.msra.mxu0 %v83
    %103 = vmatprep.subr.mxu0 %v88
    %104 = vmatpush1.msra.mxu0 %v87
    %105 = vmatprep.subr.mxu0 %v92
    %106 = vmatpush1.msra.mxu0 %v91
    %107 = vmatprep.subr.mxu0 0.0
    %108 = vmatpush1.msra.mxu0 0.0
    %109 = vmatprep.subr.mxu0 0.0
    %110 = vmatpush1.msra.mxu0 0.0
    %111 = vmatprep.subr.mxu0 0.0
    %112 = vmatpush1.msra.mxu0 0.0
    %113 = vmatprep.subr.mxu0 0.0
    %114 = vmatpush1.msra.mxu0 0.0
    %115 = vmatprep.subr.mxu0 0.0
    %116 = vmatpush1.msra.mxu0 0.0
    %117 = vmatprep.subr.mxu0 0.0
    %118 = vmatpush1.msra.mxu0 0.0
    %119 = vmatprep.subr.mxu0 0.0
    %120 = vmatpush1.msra.mxu0 0.0
    %121 = vmatprep.subr.mxu0 0.0
    %122 = vmatpush1.msra.mxu0 0.0
    %123 = vmatprep.subr.mxu0 0.0
    %124 = vmatpush1.msra.mxu0 0.0
    %125 = vmatprep.subr.mxu0 0.0
    %126 = vmatpush1.msra.mxu0 0.0
    %127 = vmatprep.subr.mxu0 0.0
    %128 = vmatpush1.msra.mxu0 0.0
    %129 = vmatprep.subr.mxu0 0.0
    %130 = vmatpush1.msra.mxu0 0.0
    %131 = vmatprep.subr.mxu0 0.0
    %132 = vmatpush1.msra.mxu0 0.0
    %133 = vmatprep.subr.mxu0 0.0
    %134 = vmatpush1.msra.mxu0 0.0
    %135 = vmatprep.subr.mxu0 0.0
    %136 = vmatpush1.msra.mxu0 0.0
    %137 = vmatprep.subr.mxu0 0.0
    %138 = vmatpush1.msra.mxu0 0.0
    %139 = vmatprep.subr.mxu0 0.0
    %140 = vmatpush1.msra.mxu0 0.0
    %141 = vmatprep.subr.mxu0 0.0
    %142 = vmatpush1.msra.mxu0 0.0
    %143 = vmatprep.subr.mxu0 0.0
    %144 = vmatpush1.msra.mxu0 0.0
    %145 = vmatprep.subr.mxu0 0.0
    %146 = vmatpush1.msra.mxu0 0.0
    %147 = vmatprep.subr.mxu0 0.0
    %148 = vmatpush1.msra.mxu0 0.0
    %149 = vmatprep.subr.mxu0 0.0
    %150 = vmatpush1.msra.mxu0 0.0
    %151 = vmatprep.subr.mxu0 0.0
    %152 = vmatpush1.msra.mxu0 0.0
    %153 = vmatprep.subr.mxu0 0.0
    %154 = vmatpush1.msra.mxu0 0.0
    %155 = vmatprep.subr.mxu0 0.0
    %156 = vmatpush1.msra.mxu0 0.0
    %157 = vmatprep.subr.mxu0 0.0
    %158 = vmatpush1.msra.mxu0 0.0
    %159 = vmatprep.subr.mxu0 0.0
    %160 = vmatpush1.msra.mxu0 0.0
    %161 = vmatprep.subr.mxu0 0.0
    %162 = vmatpush1.msra.mxu0 0.0
    %163 = vmatprep.mubr.f32.mxu0 0.0
    %164 = vmatmul.mubr.f32.gmra.mrb[0].mxu0 %v97
    %v165 = vpop.f32.mrb[0].mxu0
    %v166 = vadd.f32 0.0, %v165
    %v167 = vpop.f32.mrb[0].mxu0
    %v168 = vadd.f32 0.0, %v167
    %169 = vdwg.mxu0
    %170 = vmatprep.subr.mxu0 %v82
    %171 = vmatpush1.msra.mxu0 %v81
    %172 = vmatprep.subr.mxu0 %v86
    %173 = vmatpush1.msra.mxu0 %v85
    %174 = vmatprep.subr.mxu0 %v90
    %175 = vmatpush1.msra.mxu0 %v89
    %176 = vmatprep.subr.mxu0 %v94
    %177 = vmatpush1.msra.mxu0 %v93
    %178 = vmatprep.subr.mxu0 0.0
    %179 = vmatpush1.msra.mxu0 0.0
    %180 = vmatprep.subr.mxu0 0.0
    %181 = vmatpush1.msra.mxu0 0.0
    %182 = vmatprep.subr.mxu0 0.0
    %183 = vmatpush1.msra.mxu0 0.0
    %184 = vmatprep.subr.mxu0 0.0
    %185 = vmatpush1.msra.mxu0 0.0
    %186 = vmatprep.subr.mxu0 0.0
    %187 = vmatpush1.msra.mxu0 0.0
    %188 = vmatprep.subr.mxu0 0.0
    %189 = vmatpush1.msra.mxu0 0.0
    %190 = vmatprep.subr.mxu0 0.0
    %191 = vmatpush1.msra.mxu0 0.0
    %192 = vmatprep.subr.mxu0 0.0
    %193 = vmatpush1.msra.mxu0 0.0
    %194 = vmatprep.subr.mxu0 0.0
    %195 = vmatpush1.msra.mxu0 0.0
    %196 = vmatprep.subr.mxu0 0.0
    %197 = vmatpush1.msra.mxu0 0.0
    %198 = vmatprep.subr.mxu0 0.0
    %199 = vmatpush1.msra.mxu0 0.0
    %200 = vmatprep.subr.mxu0 0.0
    %201 = vmatpush1.msra.mxu0 0.0
    %202 = vmatprep.subr.mxu0 0.0
    %203 = vmatpush1.msra.mxu0 0.0
    %204 = vmatprep.subr.mxu0 0.0
    %205 = vmatpush1.msra.mxu0 0.0
    %206 = vmatprep.subr.mxu0 0.0
    %207 = vmatpush1.msra.mxu0 0.0
    %208 = vmatprep.subr.mxu0 0.0
    %209 = vmatpush1.msra.mxu0 0.0
    %210 = vmatprep.subr.mxu0 0.0
    %211 = vmatpush1.msra.mxu0 0.0
    %212 = vmatprep.subr.mxu0 0.0
    %213 = vmatpush1.msra.mxu0 0.0
    %214 = vmatprep.subr.mxu0 0.0
    %215 = vmatpush1.msra.mxu0 0.0
    %216 = vmatprep.subr.mxu0 0.0
    %217 = vmatpush1.msra.mxu0 0.0
    %218 = vmatprep.subr.mxu0 0.0
    %219 = vmatpush1.msra.mxu0 0.0
    %220 = vmatprep.subr.mxu0 0.0
    %221 = vmatpush1.msra.mxu0 0.0
    %222 = vmatprep.subr.mxu0 0.0
    %223 = vmatpush1.msra.mxu0 0.0
    %224 = vmatprep.subr.mxu0 0.0
    %225 = vmatpush1.msra.mxu0 0.0
    %226 = vmatprep.subr.mxu0 0.0
    %227 = vmatpush1.msra.mxu0 0.0
    %228 = vmatprep.subr.mxu0 0.0
    %229 = vmatpush1.msra.mxu0 0.0
    %230 = vmatprep.subr.mxu0 0.0
    %231 = vmatpush1.msra.mxu0 0.0
    %232 = vmatprep.subr.mxu0 0.0
    %233 = vmatpush1.msra.mxu0 0.0
    %234 = vmatprep.mubr.f32.mxu0 0.0
    %235 = vmatmul.mubr.f32.gmra.mrb[0].mxu0 %v97
    %v236 = vpop.f32.mrb[0].mxu0
    %v237 = vadd.f32 0.0, %v236
    %v238 = vpop.f32.mrb[0].mxu0
    %v239 = vadd.f32 0.0, %v238
    %240 = vdwg.mxu0
    %v245 = vcombine.low %v166, %v168
    %v246 = vcombine.low %v237, %v239
    %v248 = vunpack.c.l.s4 1966171168
    %v249 = vunpack.c.0.s8 %v248
    %v250 = vlaneseq
    %v251 = vshrl.u32 %v250, 7
    %v252 = vsub.s32 %v249, %v251
    %v253 = vrot.slane %v245, %v252
    %v255 = vunpack.c.l.s4 1966171168
    %v256 = vunpack.c.0.s8 %v255
    %v257 = vlaneseq
    %v258 = vshrl.u32 %v257, 7
    %v259 = vsub.s32 %v256, %v258
    %v260 = vrot.slane %v246, %v259
    %v261 = vcombine.low %v253, %v260
    %v263 = vunpack.c.l.s4 1966171168
    %v264 = vunpack.c.0.s8 %v263
    %v265 = vlaneseq
    %v266 = vshrl.u32 %v265, 7
    %v267 = vsub.s32 %v264, %v266
    %v268 = vrot.slane %v261, %v267
    %v270 = vadd.f32 %v78, %v268
    %v271 = vadd.f32 %v270, %v71
    %v272 = vtanh.pop %v271
    %v273 = vmul.f32 %v272, 0.5
    %v274 = vadd.f32 %v273, 0.5
    %v276 = vrot.slane %v272, 1
    %v278 = vmul.f32 %v276, 0.5
    %v279 = vadd.f32 %v278, 0.5
    %v280 = vrot.slane %v272, 3
    %v282 = vmul.f32 %v280, 0.5
    %v283 = vadd.f32 %v282, 0.5
    %v284 = vmul.f32 %v279, 0.0
    %v285 = vrot.slane %v272, 2
    %v287 = vmul.f32 %v274, %v285
    %v288 = vadd.f32 %v284, %v287
    %v289 = vtanh.pop %v288
    %v290 = vmul.f32 %v283, %v289
    %v291 = vld [vmem:[#allocation8] sm:$0xff]
    %v292 = vld [vmem:[#allocation8 + $0x8] sm:$0xff]
    %v293 = vld [vmem:[#allocation8 + $0x10] sm:$0xff]
    %v294 = vld [vmem:[#allocation8 + $0x18] sm:$0xff]
    %v295 = vld [vmem:[#allocation8 + $0x20] sm:$0xff]
    %v296 = vld [vmem:[#allocation8 + $0x28] sm:$0xff]
    %v297 = vld [vmem:[#allocation8 + $0x30] sm:$0xff]
    %v298 = vld [vmem:[#allocation8 + $0x38] sm:$0xff]
    %v299 = vld [vmem:[#allocation8 + $0x40] sm:$0xff]
    %v300 = vld [vmem:[#allocation8 + $0x48] sm:$0xff]
    %v301 = vld [vmem:[#allocation8 + $0x50] sm:$0xff]
    %v302 = vld [vmem:[#allocation8 + $0x58] sm:$0xff]
    %v303 = vld [vmem:[#allocation8 + $0x60] sm:$0xff]
    %v304 = vld [vmem:[#allocation8 + $0x68] sm:$0xff]
    %v305 = vld [vmem:[#allocation8 + $0x70] sm:$0xff]
    %v306 = vld [vmem:[#allocation8 + $0x78] sm:$0xff]
    %s307 = scalar_lea.vmem [#allocation8], 128
    %v308 = vld [vmem:[%s307] sm:$0xff]
    %v309 = vld [vmem:[%s307 + $0x8] sm:$0xff]
    %v310 = vld [vmem:[%s307 + $0x10] sm:$0xff]
    %v311 = vld [vmem:[%s307 + $0x18] sm:$0xff]
    %v312 = vld [vmem:[%s307 + $0x20] sm:$0xff]
    %v313 = vld [vmem:[%s307 + $0x28] sm:$0xff]
    %v314 = vld [vmem:[%s307 + $0x30] sm:$0xff]
    %v315 = vld [vmem:[%s307 + $0x38] sm:$0xff]
    %v316 = vld [vmem:[%s307 + $0x40] sm:$0xff]
    %v317 = vld [vmem:[%s307 + $0x48] sm:$0xff]
    %v318 = vld [vmem:[%s307 + $0x50] sm:$0xff]
    %v319 = vld [vmem:[%s307 + $0x58] sm:$0xff]
    %v320 = vld [vmem:[%s307 + $0x60] sm:$0xff]
    %v321 = vld [vmem:[%s307 + $0x68] sm:$0xff]
    %v322 = vld [vmem:[%s307 + $0x70] sm:$0xff]
    %v323 = vld [vmem:[%s307 + $0x78] sm:$0xff]
    %324 = vmatprep.subr.mxu0 %v309
    %325 = vmatpush1.msra.mxu0 %v308
    %326 = vmatprep.subr.mxu0 %v313
    %327 = vmatpush1.msra.mxu0 %v312
    %328 = vmatprep.subr.mxu0 %v317
    %329 = vmatpush1.msra.mxu0 %v316
    %330 = vmatprep.subr.mxu0 %v321
    %331 = vmatpush1.msra.mxu0 %v320
    %332 = vmatprep.subr.mxu0 0.0
    %333 = vmatpush1.msra.mxu0 0.0
    %334 = vmatprep.subr.mxu0 0.0
    %335 = vmatpush1.msra.mxu0 0.0
    %336 = vmatprep.subr.mxu0 0.0
    %337 = vmatpush1.msra.mxu0 0.0
    %338 = vmatprep.subr.mxu0 0.0
    %339 = vmatpush1.msra.mxu0 0.0
    %340 = vmatprep.subr.mxu0 0.0
    %341 = vmatpush1.msra.mxu0 0.0
    %342 = vmatprep.subr.mxu0 0.0
    %343 = vmatpush1.msra.mxu0 0.0
    %344 = vmatprep.subr.mxu0 0.0
    %345 = vmatpush1.msra.mxu0 0.0
    %346 = vmatprep.subr.mxu0 0.0
    %347 = vmatpush1.msra.mxu0 0.0
    %348 = vmatprep.subr.mxu0 0.0
    %349 = vmatpush1.msra.mxu0 0.0
    %350 = vmatprep.subr.mxu0 0.0
    %351 = vmatpush1.msra.mxu0 0.0
    %352 = vmatprep.subr.mxu0 0.0
    %353 = vmatpush1.msra.mxu0 0.0
    %354 = vmatprep.subr.mxu0 0.0
    %355 = vmatpush1.msra.mxu0 0.0
    %356 = vmatprep.subr.mxu0 0.0
    %357 = vmatpush1.msra.mxu0 0.0
    %358 = vmatprep.subr.mxu0 0.0
    %359 = vmatpush1.msra.mxu0 0.0
    %360 = vmatprep.subr.mxu0 0.0
    %361 = vmatpush1.msra.mxu0 0.0
    %362 = vmatprep.subr.mxu0 0.0
    %363 = vmatpush1.msra.mxu0 0.0
    %364 = vmatprep.subr.mxu0 0.0
    %365 = vmatpush1.msra.mxu0 0.0
    %366 = vmatprep.subr.mxu0 0.0
    %367 = vmatpush1.msra.mxu0 0.0
    %368 = vmatprep.subr.mxu0 0.0
    %369 = vmatpush1.msra.mxu0 0.0
    %370 = vmatprep.subr.mxu0 0.0
    %371 = vmatpush1.msra.mxu0 0.0
    %372 = vmatprep.subr.mxu0 0.0
    %373 = vmatpush1.msra.mxu0 0.0
    %374 = vmatprep.subr.mxu0 0.0
    %375 = vmatpush1.msra.mxu0 0.0
    %376 = vmatprep.subr.mxu0 0.0
    %377 = vmatpush1.msra.mxu0 0.0
    %378 = vmatprep.subr.mxu0 0.0
    %379 = vmatpush1.msra.mxu0 0.0
    %380 = vmatprep.subr.mxu0 0.0
    %381 = vmatpush1.msra.mxu0 0.0
    %382 = vmatprep.subr.mxu0 0.0
    %383 = vmatpush1.msra.mxu0 0.0
    %384 = vmatprep.subr.mxu0 0.0
    %385 = vmatpush1.msra.mxu0 0.0
    %386 = vmatprep.subr.mxu0 0.0
    %387 = vmatpush1.msra.mxu0 0.0
    %388 = vmatprep.mubr.f32.mxu0 0.0
    %389 = vmatmul.mubr.f32.gmra.mrb[0].mxu0 %v97
    %v390 = vpop.f32.mrb[0].mxu0
    %v391 = vadd.f32 0.0, %v390
    %v392 = vpop.f32.mrb[0].mxu0
    %v393 = vadd.f32 0.0, %v392
    %394 = vdwg.mxu0
    %395 = vmatprep.subr.mxu0 %v311
    %396 = vmatpush1.msra.mxu0 %v310
    %397 = vmatprep.subr.mxu0 %v315
    %398 = vmatpush1.msra.mxu0 %v314
    %399 = vmatprep.subr.mxu0 %v319
    %400 = vmatpush1.msra.mxu0 %v318
    %401 = vmatprep.subr.mxu0 %v323
    %402 = vmatpush1.msra.mxu0 %v322
    %403 = vmatprep.subr.mxu0 0.0
    %404 = vmatpush1.msra.mxu0 0.0
    %405 = vmatprep.subr.mxu0 0.0
    %406 = vmatpush1.msra.mxu0 0.0
    %407 = vmatprep.subr.mxu0 0.0
    %408 = vmatpush1.msra.mxu0 0.0
    %409 = vmatprep.subr.mxu0 0.0
    %410 = vmatpush1.msra.mxu0 0.0
    %411 = vmatprep.subr.mxu0 0.0
    %412 = vmatpush1.msra.mxu0 0.0
    %413 = vmatprep.subr.mxu0 0.0
    %414 = vmatpush1.msra.mxu0 0.0
    %415 = vmatprep.subr.mxu0 0.0
    %416 = vmatpush1.msra.mxu0 0.0
    %417 = vmatprep.subr.mxu0 0.0
    %418 = vmatpush1.msra.mxu0 0.0
    %419 = vmatprep.subr.mxu0 0.0
    %420 = vmatpush1.msra.mxu0 0.0
    %421 = vmatprep.subr.mxu0 0.0
    %422 = vmatpush1.msra.mxu0 0.0
    %423 = vmatprep.subr.mxu0 0.0
    %424 = vmatpush1.msra.mxu0 0.0
    %425 = vmatprep.subr.mxu0 0.0
    %426 = vmatpush1.msra.mxu0 0.0
    %427 = vmatprep.subr.mxu0 0.0
    %428 = vmatpush1.msra.mxu0 0.0
    %429 = vmatprep.subr.mxu0 0.0
    %430 = vmatpush1.msra.mxu0 0.0
    %431 = vmatprep.subr.mxu0 0.0
    %432 = vmatpush1.msra.mxu0 0.0
    %433 = vmatprep.subr.mxu0 0.0
    %434 = vmatpush1.msra.mxu0 0.0
    %435 = vmatprep.subr.mxu0 0.0
    %436 = vmatpush1.msra.mxu0 0.0
    %437 = vmatprep.subr.mxu0 0.0
    %438 = vmatpush1.msra.mxu0 0.0
    %439 = vmatprep.subr.mxu0 0.0
    %440 = vmatpush1.msra.mxu0 0.0
    %441 = vmatprep.subr.mxu0 0.0
    %442 = vmatpush1.msra.mxu0 0.0
    %443 = vmatprep.subr.mxu0 0.0
    %444 = vmatpush1.msra.mxu0 0.0
    %445 = vmatprep.subr.mxu0 0.0
    %446 = vmatpush1.msra.mxu0 0.0
    %447 = vmatprep.subr.mxu0 0.0
    %448 = vmatpush1.msra.mxu0 0.0
    %449 = vmatprep.subr.mxu0 0.0
    %450 = vmatpush1.msra.mxu0 0.0
    %451 = vmatprep.subr.mxu0 0.0
    %452 = vmatpush1.msra.mxu0 0.0
    %453 = vmatprep.subr.mxu0 0.0
    %454 = vmatpush1.msra.mxu0 0.0
    %455 = vmatprep.subr.mxu0 0.0
    %456 = vmatpush1.msra.mxu0 0.0
    %457 = vmatprep.subr.mxu0 0.0
    %458 = vmatpush1.msra.mxu0 0.0
    %459 = vmatprep.mubr.f32.mxu0 0.0
    %460 = vmatmul.mubr.f32.gmra.mrb[0].mxu0 %v97
    %v461 = vpop.f32.mrb[0].mxu0
    %v462 = vadd.f32 0.0, %v461
    %v463 = vpop.f32.mrb[0].mxu0
    %v464 = vadd.f32 0.0, %v463
    %465 = vdwg.mxu0
    %v467 = vsel %vm95, %v290, 0
    %469 = vmatprep.subr.mxu0 %v292
    %470 = vmatpush1.msra.mxu0 %v291
    %471 = vmatprep.subr.mxu0 %v296
    %472 = vmatpush1.msra.mxu0 %v295
    %473 = vmatprep.subr.mxu0 %v300
    %474 = vmatpush1.msra.mxu0 %v299
    %475 = vmatprep.subr.mxu0 %v304
    %476 = vmatpush1.msra.mxu0 %v303
    %477 = vmatprep.subr.mxu0 0.0
    %478 = vmatpush1.msra.mxu0 0.0
    %479 = vmatprep.subr.mxu0 0.0
    %480 = vmatpush1.msra.mxu0 0.0
    %481 = vmatprep.subr.mxu0 0.0
    %482 = vmatpush1.msra.mxu0 0.0
    %483 = vmatprep.subr.mxu0 0.0
    %484 = vmatpush1.msra.mxu0 0.0
    %485 = vmatprep.subr.mxu0 0.0
    %486 = vmatpush1.msra.mxu0 0.0
    %487 = vmatprep.subr.mxu0 0.0
    %488 = vmatpush1.msra.mxu0 0.0
    %489 = vmatprep.subr.mxu0 0.0
    %490 = vmatpush1.msra.mxu0 0.0
    %491 = vmatprep.subr.mxu0 0.0
    %492 = vmatpush1.msra.mxu0 0.0
    %493 = vmatprep.subr.mxu0 0.0
    %494 = vmatpush1.msra.mxu0 0.0
    %495 = vmatprep.subr.mxu0 0.0
    %496 = vmatpush1.msra.mxu0 0.0
    %497 = vmatprep.subr.mxu0 0.0
    %498 = vmatpush1.msra.mxu0 0.0
    %499 = vmatprep.subr.mxu0 0.0
    %500 = vmatpush1.msra.mxu0 0.0
    %501 = vmatprep.subr.mxu0 0.0
    %502 = vmatpush1.msra.mxu0 0.0
    %503 = vmatprep.subr.mxu0 0.0
    %504 = vmatpush1.msra.mxu0 0.0
    %505 = vmatprep.subr.mxu0 0.0
    %506 = vmatpush1.msra.mxu0 0.0
    %507 = vmatprep.subr.mxu0 0.0
    %508 = vmatpush1.msra.mxu0 0.0
    %509 = vmatprep.subr.mxu0 0.0
    %510 = vmatpush1.msra.mxu0 0.0
    %511 = vmatprep.subr.mxu0 0.0
    %512 = vmatpush1.msra.mxu0 0.0
    %513 = vmatprep.subr.mxu0 0.0
    %514 = vmatpush1.msra.mxu0 0.0
    %515 = vmatprep.subr.mxu0 0.0
    %516 = vmatpush1.msra.mxu0 0.0
    %517 = vmatprep.subr.mxu0 0.0
    %518 = vmatpush1.msra.mxu0 0.0
    %519 = vmatprep.subr.mxu0 0.0
    %520 = vmatpush1.msra.mxu0 0.0
    %521 = vmatprep.subr.mxu0 0.0
    %522 = vmatpush1.msra.mxu0 0.0
    %523 = vmatprep.subr.mxu0 0.0
    %524 = vmatpush1.msra.mxu0 0.0
    %525 = vmatprep.subr.mxu0 0.0
    %526 = vmatpush1.msra.mxu0 0.0
    %527 = vmatprep.subr.mxu0 0.0
    %528 = vmatpush1.msra.mxu0 0.0
    %529 = vmatprep.subr.mxu0 0.0
    %530 = vmatpush1.msra.mxu0 0.0
    %531 = vmatprep.subr.mxu0 0.0
    %532 = vmatpush1.msra.mxu0 0.0
    %533 = vmatprep.mubr.f32.mxu0 0.0
    %534 = vmatmul.mubr.f32.gmra.mrb[0].mxu0 %v467
    %v535 = vpop.f32.mrb[0].mxu0
    %v536 = vadd.f32 %v391, %v535
    %v537 = vpop.f32.mrb[0].mxu0
    %v538 = vadd.f32 %v393, %v537
    %539 = vdwg.mxu0
    %540 = vmatprep.subr.mxu0 %v294
    %541 = vmatpush1.msra.mxu0 %v293
    %542 = vmatprep.subr.mxu0 %v298
    %543 = vmatpush1.msra.mxu0 %v297
    %544 = vmatprep.subr.mxu0 %v302
    %545 = vmatpush1.msra.mxu0 %v301
    %546 = vmatprep.subr.mxu0 %v306
    %547 = vmatpush1.msra.mxu0 %v305
    %548 = vmatprep.subr.mxu0 0.0
    %549 = vmatpush1.msra.mxu0 0.0
    %550 = vmatprep.subr.mxu0 0.0
    %551 = vmatpush1.msra.mxu0 0.0
    %552 = vmatprep.subr.mxu0 0.0
    %553 = vmatpush1.msra.mxu0 0.0
    %554 = vmatprep.subr.mxu0 0.0
    %555 = vmatpush1.msra.mxu0 0.0
    %556 = vmatprep.subr.mxu0 0.0
    %557 = vmatpush1.msra.mxu0 0.0
    %558 = vmatprep.subr.mxu0 0.0
    %559 = vmatpush1.msra.mxu0 0.0
    %560 = vmatprep.subr.mxu0 0.0
    %561 = vmatpush1.msra.mxu0 0.0
    %562 = vmatprep.subr.mxu0 0.0
    %563 = vmatpush1.msra.mxu0 0.0
    %564 = vmatprep.subr.mxu0 0.0
    %565 = vmatpush1.msra.mxu0 0.0
    %566 = vmatprep.subr.mxu0 0.0
    %567 = vmatpush1.msra.mxu0 0.0
    %568 = vmatprep.subr.mxu0 0.0
    %569 = vmatpush1.msra.mxu0 0.0
    %570 = vmatprep.subr.mxu0 0.0
    %571 = vmatpush1.msra.mxu0 0.0
    %572 = vmatprep.subr.mxu0 0.0
    %573 = vmatpush1.msra.mxu0 0.0
    %574 = vmatprep.subr.mxu0 0.0
    %575 = vmatpush1.msra.mxu0 0.0
    %576 = vmatprep.subr.mxu0 0.0
    %577 = vmatpush1.msra.mxu0 0.0
    %578 = vmatprep.subr.mxu0 0.0
    %579 = vmatpush1.msra.mxu0 0.0
    %580 = vmatprep.subr.mxu0 0.0
    %581 = vmatpush1.msra.mxu0 0.0
    %582 = vmatprep.subr.mxu0 0.0
    %583 = vmatpush1.msra.mxu0 0.0
    %584 = vmatprep.subr.mxu0 0.0
    %585 = vmatpush1.msra.mxu0 0.0
    %586 = vmatprep.subr.mxu0 0.0
    %587 = vmatpush1.msra.mxu0 0.0
    %588 = vmatprep.subr.mxu0 0.0
    %589 = vmatpush1.msra.mxu0 0.0
    %590 = vmatprep.subr.mxu0 0.0
    %591 = vmatpush1.msra.mxu0 0.0
    %592 = vmatprep.subr.mxu0 0.0
    %593 = vmatpush1.msra.mxu0 0.0
    %594 = vmatprep.subr.mxu0 0.0
    %595 = vmatpush1.msra.mxu0 0.0
    %596 = vmatprep.subr.mxu0 0.0
    %597 = vmatpush1.msra.mxu0 0.0
    %598 = vmatprep.subr.mxu0 0.0
    %599 = vmatpush1.msra.mxu0 0.0
    %600 = vmatprep.subr.mxu0 0.0
    %601 = vmatpush1.msra.mxu0 0.0
    %602 = vmatprep.subr.mxu0 0.0
    %603 = vmatpush1.msra.mxu0 0.0
    %604 = vmatprep.mubr.f32.mxu0 0.0
    %605 = vmatmul.mubr.f32.gmra.mrb[0].mxu0 %v467
    %v606 = vpop.f32.mrb[0].mxu0
    %v607 = vadd.f32 %v462, %v606
    %v608 = vpop.f32.mrb[0].mxu0
    %v609 = vadd.f32 %v464, %v608
    %610 = vdwg.mxu0
    %v612 = vlaneseq
    %v613 = vshrl.u32 %v612, 7
    %v614 = vsub.s32 0, %v613
    %v615 = vrot.slane %v73, %v614
    %v616 = vlaneseq
    %v617 = vshrl.u32 %v616, 7
    %v618 = vsub.s32 1, %v617
    %v619 = vrot.slane %v73, %v618
    %v620 = vlaneseq
    %v621 = vshrl.u32 %v620, 7
    %v622 = vsub.s32 2, %v621
    %v623 = vrot.slane %v73, %v622
    %v624 = vlaneseq
    %v625 = vshrl.u32 %v624, 7
    %v626 = vsub.s32 3, %v625
    %v627 = vrot.slane %v73, %v626
    %v632 = vadd.f32 %v536, %v615
    %v633 = vadd.f32 %v538, %v619
    %v634 = vadd.f32 %v607, %v623
    %v635 = vadd.f32 %v609, %v627
    %v636 = vtanh.pop %v632
    %v637 = vtanh.pop %v633
    %v638 = vtanh.pop %v634
    %v639 = vtanh.pop %v635
    %v640 = vmul.f32 %v636, 0.5
    %v641 = vadd.f32 %v640, 0.5
    %v642 = vmul.f32 %v637, 0.5
    %v643 = vadd.f32 %v642, 0.5
    %v644 = vmul.f32 %v639, 0.5
    %v645 = vadd.f32 %v644, 0.5
    %v646 = vmul.f32 %v643, 0.0
    %v647 = vmul.f32 %v641, %v638
    %v648 = vadd.f32 %v646, %v647
    %v649 = vtanh.pop %v648
    %v650 = vmul.f32 %v645, %v649
    %s651 = sld [smem:[#allocation3 + $0x1]]
    %v652 = vstv %s651
    %v653 = vmul.f32 %v652, %v70
    %654 = vmatprep.subr.mxu0 %v80
    %655 = vmatpush1.msra.mxu0 %v79
    %656 = vmatprep.subr.mxu0 %v84
    %657 = vmatpush1.msra.mxu0 %v83
    %658 = vmatprep.subr.mxu0 %v88
    %659 = vmatpush1.msra.mxu0 %v87
    %660 = vmatprep.subr.mxu0 %v92
    %661 = vmatpush1.msra.mxu0 %v91
    %662 = vmatprep.subr.mxu0 0.0
    %663 = vmatpush1.msra.mxu0 0.0
    %664 = vmatprep.subr.mxu0 0.0
    %665 = vmatpush1.msra.mxu0 0.0
    %666 = vmatprep.subr.mxu0 0.0
    %667 = vmatpush1.msra.mxu0 0.0
    %668 = vmatprep.subr.mxu0 0.0
    %669 = vmatpush1.msra.mxu0 0.0
    %670 = vmatprep.subr.mxu0 0.0
    %671 = vmatpush1.msra.mxu0 0.0
    %672 = vmatprep.subr.mxu0 0.0
    %673 = vmatpush1.msra.mxu0 0.0
    %674 = vmatprep.subr.mxu0 0.0
    %675 = vmatpush1.msra.mxu0 0.0
    %676 = vmatprep.subr.mxu0 0.0
    %677 = vmatpush1.msra.mxu0 0.0
    %678 = vmatprep.subr.mxu0 0.0
    %679 = vmatpush1.msra.mxu0 0.0
    %680 = vmatprep.subr.mxu0 0.0
    %681 = vmatpush1.msra.mxu0 0.0
    %682 = vmatprep.subr.mxu0 0.0
    %683 = vmatpush1.msra.mxu0 0.0
    %684 = vmatprep.subr.mxu0 0.0
    %685 = vmatpush1.msra.mxu0 0.0
    %686 = vmatprep.subr.mxu0 0.0
    %687 = vmatpush1.msra.mxu0 0.0
    %688 = vmatprep.subr.mxu0 0.0
    %689 = vmatpush1.msra.mxu0 0.0
    %690 = vmatprep.subr.mxu0 0.0
    %691 = vmatpush1.msra.mxu0 0.0
    %692 = vmatprep.subr.mxu0 0.0
    %693 = vmatpush1.msra.mxu0 0.0
    %694 = vmatprep.subr.mxu0 0.0
    %695 = vmatpush1.msra.mxu0 0.0
    %696 = vmatprep.subr.mxu0 0.0
    %697 = vmatpush1.msra.mxu0 0.0
    %698 = vmatprep.subr.mxu0 0.0
    %699 = vmatpush1.msra.mxu0 0.0
    %700 = vmatprep.subr.mxu0 0.0
    %701 = vmatpush1.msra.mxu0 0.0
    %702 = vmatprep.subr.mxu0 0.0
    %703 = vmatpush1.msra.mxu0 0.0
    %704 = vmatprep.subr.mxu0 0.0
    %705 = vmatpush1.msra.mxu0 0.0
    %706 = vmatprep.subr.mxu0 0.0
    %707 = vmatpush1.msra.mxu0 0.0
    %708 = vmatprep.subr.mxu0 0.0
    %709 = vmatpush1.msra.mxu0 0.0
    %710 = vmatprep.subr.mxu0 0.0
    %711 = vmatpush1.msra.mxu0 0.0
    %712 = vmatprep.subr.mxu0 0.0
    %713 = vmatpush1.msra.mxu0 0.0
    %714 = vmatprep.subr.mxu0 0.0
    %715 = vmatpush1.msra.mxu0 0.0
    %716 = vmatprep.subr.mxu0 0.0
    %717 = vmatpush1.msra.mxu0 0.0
    %718 = vmatprep.mubr.f32.mxu0 0.0
    %719 = vmatmul.mubr.f32.gmra.mrb[0].mxu0 %v467
    %v720 = vpop.f32.mrb[0].mxu0
    %v721 = vadd.f32 0.0, %v720
    %v722 = vpop.f32.mrb[0].mxu0
    %v723 = vadd.f32 0.0, %v722
    %724 = vdwg.mxu0
    %725 = vmatprep.subr.mxu0 %v82
    %726 = vmatpush1.msra.mxu0 %v81
    %727 = vmatprep.subr.mxu0 %v86
    %728 = vmatpush1.msra.mxu0 %v85
    %729 = vmatprep.subr.mxu0 %v90
    %730 = vmatpush1.msra.mxu0 %v89
    %731 = vmatprep.subr.mxu0 %v94
    %732 = vmatpush1.msra.mxu0 %v93
    %733 = vmatprep.subr.mxu0 0.0
    %734 = vmatpush1.msra.mxu0 0.0
    %735 = vmatprep.subr.mxu0 0.0
    %736 = vmatpush1.msra.mxu0 0.0
    %737 = vmatprep.subr.mxu0 0.0
    %738 = vmatpush1.msra.mxu0 0.0
    %739 = vmatprep.subr.mxu0 0.0
    %740 = vmatpush1.msra.mxu0 0.0
    %741 = vmatprep.subr.mxu0 0.0
    %742 = vmatpush1.msra.mxu0 0.0
    %743 = vmatprep.subr.mxu0 0.0
    %744 = vmatpush1.msra.mxu0 0.0
    %745 = vmatprep.subr.mxu0 0.0
    %746 = vmatpush1.msra.mxu0 0.0
    %747 = vmatprep.subr.mxu0 0.0
    %748 = vmatpush1.msra.mxu0 0.0
    %749 = vmatprep.subr.mxu0 0.0
    %750 = vmatpush1.msra.mxu0 0.0
    %751 = vmatprep.subr.mxu0 0.0
    %752 = vmatpush1.msra.mxu0 0.0
    %753 = vmatprep.subr.mxu0 0.0
    %754 = vmatpush1.msra.mxu0 0.0
    %755 = vmatprep.subr.mxu0 0.0
    %756 = vmatpush1.msra.mxu0 0.0
    %757 = vmatprep.subr.mxu0 0.0
    %758 = vmatpush1.msra.mxu0 0.0
    %759 = vmatprep.subr.mxu0 0.0
    %760 = vmatpush1.msra.mxu0 0.0
    %761 = vmatprep.subr.mxu0 0.0
    %762 = vmatpush1.msra.mxu0 0.0
    %763 = vmatprep.subr.mxu0 0.0
    %764 = vmatpush1.msra.mxu0 0.0
    %765 = vmatprep.subr.mxu0 0.0
    %766 = vmatpush1.msra.mxu0 0.0
    %767 = vmatprep.subr.mxu0 0.0
    %768 = vmatpush1.msra.mxu0 0.0
    %769 = vmatprep.subr.mxu0 0.0
    %770 = vmatpush1.msra.mxu0 0.0
    %771 = vmatprep.subr.mxu0 0.0
    %772 = vmatpush1.msra.mxu0 0.0
    %773 = vmatprep.subr.mxu0 0.0
    %774 = vmatpush1.msra.mxu0 0.0
    %775 = vmatprep.subr.mxu0 0.0
    %776 = vmatpush1.msra.mxu0 0.0
    %777 = vmatprep.subr.mxu0 0.0
    %778 = vmatpush1.msra.mxu0 0.0
    %779 = vmatprep.subr.mxu0 0.0
    %780 = vmatpush1.msra.mxu0 0.0
    %781 = vmatprep.subr.mxu0 0.0
    %782 = vmatpush1.msra.mxu0 0.0
    %783 = vmatprep.subr.mxu0 0.0
    %784 = vmatpush1.msra.mxu0 0.0
    %785 = vmatprep.subr.mxu0 0.0
    %786 = vmatpush1.msra.mxu0 0.0
    %787 = vmatprep.subr.mxu0 0.0
    %788 = vmatpush1.msra.mxu0 0.0
    %789 = vmatprep.mubr.f32.mxu0 0.0
    %790 = vmatmul.mubr.f32.gmra.mrb[0].mxu0 %v467
    %v791 = vpop.f32.mrb[0].mxu0
    %v792 = vadd.f32 0.0, %v791
    %v793 = vpop.f32.mrb[0].mxu0
    %v794 = vadd.f32 0.0, %v793
    %795 = vdwg.mxu0
    %v800 = vcombine.low %v721, %v723
    %v801 = vcombine.low %v792, %v794
    %v803 = vunpack.c.l.s4 1966171168
    %v804 = vunpack.c.0.s8 %v803
    %v805 = vlaneseq
    %v806 = vshrl.u32 %v805, 7
    %v807 = vsub.s32 %v804, %v806
    %v808 = vrot.slane %v800, %v807
    %v810 = vunpack.c.l.s4 1966171168
    %v811 = vunpack.c.0.s8 %v810
    %v812 = vlaneseq
    %v813 = vshrl.u32 %v812, 7
    %v814 = vsub.s32 %v811, %v813
    %v815 = vrot.slane %v801, %v814
    %v816 = vcombine.low %v808, %v815
    %v818 = vunpack.c.l.s4 1966171168
    %v819 = vunpack.c.0.s8 %v818
    %v820 = vlaneseq
    %v821 = vshrl.u32 %v820, 7
    %v822 = vsub.s32 %v819, %v821
    %v823 = vrot.slane %v816, %v822
    %v825 = vadd.f32 %v653, %v823
    %v826 = vadd.f32 %v825, %v71
    %v827 = vtanh.pop %v826
    %v828 = vmul.f32 %v827, 0.5
    %v829 = vadd.f32 %v828, 0.5
    %v831 = vrot.slane %v827, 1
    %v833 = vmul.f32 %v831, 0.5
    %v834 = vadd.f32 %v833, 0.5
    %v835 = vrot.slane %v827, 3
    %v837 = vmul.f32 %v835, 0.5
    %v838 = vadd.f32 %v837, 0.5
    %v839 = vmul.f32 %v834, %v288
    %v840 = vrot.slane %v827, 2
    %v842 = vmul.f32 %v829, %v840
    %v843 = vadd.f32 %v839, %v842
    %v844 = vtanh.pop %v843
    %v845 = vmul.f32 %v838, %v844
    %s846 = scalar_lea.vmem [#allocation8], 256
    %v847 = vld [vmem:[%s846] sm:$0xff]
    %v848 = vld [vmem:[%s846 + $0x8] sm:$0xff]
    %v849 = vld [vmem:[%s846 + $0x10] sm:$0xff]
    %v850 = vld [vmem:[%s846 + $0x18] sm:$0xff]
    %v851 = vld [vmem:[%s846 + $0x20] sm:$0xff]
    %v852 = vld [vmem:[%s846 + $0x28] sm:$0xff]
    %v853 = vld [vmem:[%s846 + $0x30] sm:$0xff]
    %v854 = vld [vmem:[%s846 + $0x38] sm:$0xff]
    %v855 = vld [vmem:[%s846 + $0x40] sm:$0xff]
    %v856 = vld [vmem:[%s846 + $0x48] sm:$0xff]
    %v857 = vld [vmem:[%s846 + $0x50] sm:$0xff]
    %v858 = vld [vmem:[%s846 + $0x58] sm:$0xff]
    %v859 = vld [vmem:[%s846 + $0x60] sm:$0xff]
    %v860 = vld [vmem:[%s846 + $0x68] sm:$0xff]
    %v861 = vld [vmem:[%s846 + $0x70] sm:$0xff]
    %v862 = vld [vmem:[%s846 + $0x78] sm:$0xff]
    %s863 = scalar_lea.vmem [#allocation8], 384
    %v864 = vld [vmem:[%s863] sm:$0xff]
    %v865 = vld [vmem:[%s863 + $0x8] sm:$0xff]
    %v866 = vld [vmem:[%s863 + $0x10] sm:$0xff]
    %v867 = vld [vmem:[%s863 + $0x18] sm:$0xff]
    %v868 = vld [vmem:[%s863 + $0x20] sm:$0xff]
    %v869 = vld [vmem:[%s863 + $0x28] sm:$0xff]
    %v870 = vld [vmem:[%s863 + $0x30] sm:$0xff]
    %v871 = vld [vmem:[%s863 + $0x38] sm:$0xff]
    %v872 = vld [vmem:[%s863 + $0x40] sm:$0xff]
    %v873 = vld [vmem:[%s863 + $0x48] sm:$0xff]
    %v874 = vld [vmem:[%s863 + $0x50] sm:$0xff]
    %v875 = vld [vmem:[%s863 + $0x58] sm:$0xff]
    %v876 = vld [vmem:[%s863 + $0x60] sm:$0xff]
    %v877 = vld [vmem:[%s863 + $0x68] sm:$0xff]
    %v878 = vld [vmem:[%s863 + $0x70] sm:$0xff]
    %v879 = vld [vmem:[%s863 + $0x78] sm:$0xff]
    %880 = vmatprep.subr.mxu0 %v865
    %881 = vmatpush1.msra.mxu0 %v864
    %882 = vmatprep.subr.mxu0 %v869
    %883 = vmatpush1.msra.mxu0 %v868
    %884 = vmatprep.subr.mxu0 %v873
    %885 = vmatpush1.msra.mxu0 %v872
    %886 = vmatprep.subr.mxu0 %v877
    %887 = vmatpush1.msra.mxu0 %v876
    %888 = vmatprep.subr.mxu0 0.0
    %889 = vmatpush1.msra.mxu0 0.0
    %890 = vmatprep.subr.mxu0 0.0
    %891 = vmatpush1.msra.mxu0 0.0
    %892 = vmatprep.subr.mxu0 0.0
    %893 = vmatpush1.msra.mxu0 0.0
    %894 = vmatprep.subr.mxu0 0.0
    %895 = vmatpush1.msra.mxu0 0.0
    %896 = vmatprep.subr.mxu0 0.0
    %897 = vmatpush1.msra.mxu0 0.0
    %898 = vmatprep.subr.mxu0 0.0
    %899 = vmatpush1.msra.mxu0 0.0
    %900 = vmatprep.subr.mxu0 0.0
    %901 = vmatpush1.msra.mxu0 0.0
    %902 = vmatprep.subr.mxu0 0.0
    %903 = vmatpush1.msra.mxu0 0.0
    %904 = vmatprep.subr.mxu0 0.0
    %905 = vmatpush1.msra.mxu0 0.0
    %906 = vmatprep.subr.mxu0 0.0
    %907 = vmatpush1.msra.mxu0 0.0
    %908 = vmatprep.subr.mxu0 0.0
    %909 = vmatpush1.msra.mxu0 0.0
    %910 = vmatprep.subr.mxu0 0.0
    %911 = vmatpush1.msra.mxu0 0.0
    %912 = vmatprep.subr.mxu0 0.0
    %913 = vmatpush1.msra.mxu0 0.0
    %914 = vmatprep.subr.mxu0 0.0
    %915 = vmatpush1.msra.mxu0 0.0
    %916 = vmatprep.subr.mxu0 0.0
    %917 = vmatpush1.msra.mxu0 0.0
    %918 = vmatprep.subr.mxu0 0.0
    %919 = vmatpush1.msra.mxu0 0.0
    %920 = vmatprep.subr.mxu0 0.0
    %921 = vmatpush1.msra.mxu0 0.0
    %922 = vmatprep.subr.mxu0 0.0
    %923 = vmatpush1.msra.mxu0 0.0
    %924 = vmatprep.subr.mxu0 0.0
    %925 = vmatpush1.msra.mxu0 0.0
    %926 = vmatprep.subr.mxu0 0.0
    %927 = vmatpush1.msra.mxu0 0.0
    %928 = vmatprep.subr.mxu0 0.0
    %929 = vmatpush1.msra.mxu0 0.0
    %930 = vmatprep.subr.mxu0 0.0
    %931 = vmatpush1.msra.mxu0 0.0
    %932 = vmatprep.subr.mxu0 0.0
    %933 = vmatpush1.msra.mxu0 0.0
    %934 = vmatprep.subr.mxu0 0.0
    %935 = vmatpush1.msra.mxu0 0.0
    %936 = vmatprep.subr.mxu0 0.0
    %937 = vmatpush1.msra.mxu0 0.0
    %938 = vmatprep.subr.mxu0 0.0
    %939 = vmatpush1.msra.mxu0 0.0
    %940 = vmatprep.subr.mxu0 0.0
    %941 = vmatpush1.msra.mxu0 0.0
    %942 = vmatprep.subr.mxu0 0.0
    %943 = vmatpush1.msra.mxu0 0.0
    %944 = vmatprep.mubr.f32.mxu0 0.0
    %945 = vmatmul.mubr.f32.gmra.mrb[0].mxu0 %v97
    %v946 = vpop.f32.mrb[0].mxu0
    %v947 = vadd.f32 0.0, %v946
    %v948 = vpop.f32.mrb[0].mxu0
    %v949 = vadd.f32 0.0, %v948
    %950 = vdwg.mxu0
    %951 = vmatprep.subr.mxu0 %v867
    %952 = vmatpush1.msra.mxu0 %v866
    %953 = vmatprep.subr.mxu0 %v871
    %954 = vmatpush1.msra.mxu0 %v870
    %955 = vmatprep.subr.mxu0 %v875
    %956 = vmatpush1.msra.mxu0 %v874
    %957 = vmatprep.subr.mxu0 %v879
    %958 = vmatpush1.msra.mxu0 %v878
    %959 = vmatprep.subr.mxu0 0.0
    %960 = vmatpush1.msra.mxu0 0.0
    %961 = vmatprep.subr.mxu0 0.0
    %962 = vmatpush1.msra.mxu0 0.0
    %963 = vmatprep.subr.mxu0 0.0
    %964 = vmatpush1.msra.mxu0 0.0
    %965 = vmatprep.subr.mxu0 0.0
    %966 = vmatpush1.msra.mxu0 0.0
    %967 = vmatprep.subr.mxu0 0.0
    %968 = vmatpush1.msra.mxu0 0.0
    %969 = vmatprep.subr.mxu0 0.0
    %970 = vmatpush1.msra.mxu0 0.0
    %971 = vmatprep.subr.mxu0 0.0
    %972 = vmatpush1.msra.mxu0 0.0
    %973 = vmatprep.subr.mxu0 0.0
    %974 = vmatpush1.msra.mxu0 0.0
    %975 = vmatprep.subr.mxu0 0.0
    %976 = vmatpush1.msra.mxu0 0.0
    %977 = vmatprep.subr.mxu0 0.0
    %978 = vmatpush1.msra.mxu0 0.0
    %979 = vmatprep.subr.mxu0 0.0
    %980 = vmatpush1.msra.mxu0 0.0
    %981 = vmatprep.subr.mxu0 0.0
    %982 = vmatpush1.msra.mxu0 0.0
    %983 = vmatprep.subr.mxu0 0.0
    %984 = vmatpush1.msra.mxu0 0.0
    %985 = vmatprep.subr.mxu0 0.0
    %986 = vmatpush1.msra.mxu0 0.0
    %987 = vmatprep.subr.mxu0 0.0
    %988 = vmatpush1.msra.mxu0 0.0
    %989 = vmatprep.subr.mxu0 0.0
    %990 = vmatpush1.msra.mxu0 0.0
    %991 = vmatprep.subr.mxu0 0.0
    %992 = vmatpush1.msra.mxu0 0.0
    %993 = vmatprep.subr.mxu0 0.0
    %994 = vmatpush1.msra.mxu0 0.0
    %995 = vmatprep.subr.mxu0 0.0
    %996 = vmatpush1.msra.mxu0 0.0
    %997 = vmatprep.subr.mxu0 0.0
    %998 = vmatpush1.msra.mxu0 0.0
    %999 = vmatprep.subr.mxu0 0.0
    %1000 = vmatpush1.msra.mxu0 0.0
    %1001 = vmatprep.subr.mxu0 0.0
    %1002 = vmatpush1.msra.mxu0 0.0
    %1003 = vmatprep.subr.mxu0 0.0
    %1004 = vmatpush1.msra.mxu0 0.0
    %1005 = vmatprep.subr.mxu0 0.0
    %1006 = vmatpush1.msra.mxu0 0.0
    %1007 = vmatprep.subr.mxu0 0.0
    %1008 = vmatpush1.msra.mxu0 0.0
    %1009 = vmatprep.subr.mxu0 0.0
    %1010 = vmatpush1.msra.mxu0 0.0
    %1011 = vmatprep.subr.mxu0 0.0
    %1012 = vmatpush1.msra.mxu0 0.0
    %1013 = vmatprep.subr.mxu0 0.0
    %1014 = vmatpush1.msra.mxu0 0.0
    %1015 = vmatprep.mubr.f32.mxu0 0.0
    %1016 = vmatmul.mubr.f32.gmra.mrb[0].mxu0 %v97
    %v1017 = vpop.f32.mrb[0].mxu0
    %v1018 = vadd.f32 0.0, %v1017
    %v1019 = vpop.f32.mrb[0].mxu0
    %v1020 = vadd.f32 0.0, %v1019
    %1021 = vdwg.mxu0
    %v1023 = vsel %vm95, %v650, 0
    %1025 = vmatprep.subr.mxu0 %v848
    %1026 = vmatpush1.msra.mxu0 %v847
    %1027 = vmatprep.subr.mxu0 %v852
    %1028 = vmatpush1.msra.mxu0 %v851
    %1029 = vmatprep.subr.mxu0 %v856
    %1030 = vmatpush1.msra.mxu0 %v855
    %1031 = vmatprep.subr.mxu0 %v860
    %1032 = vmatpush1.msra.mxu0 %v859
    %1033 = vmatprep.subr.mxu0 0.0
    %1034 = vmatpush1.msra.mxu0 0.0
    %1035 = vmatprep.subr.mxu0 0.0
    %1036 = vmatpush1.msra.mxu0 0.0
    %1037 = vmatprep.subr.mxu0 0.0
    %1038 = vmatpush1.msra.mxu0 0.0
    %1039 = vmatprep.subr.mxu0 0.0
    %1040 = vmatpush1.msra.mxu0 0.0
    %1041 = vmatprep.subr.mxu0 0.0
    %1042 = vmatpush1.msra.mxu0 0.0
    %1043 = vmatprep.subr.mxu0 0.0
    %1044 = vmatpush1.msra.mxu0 0.0
    %1045 = vmatprep.subr.mxu0 0.0
    %1046 = vmatpush1.msra.mxu0 0.0
    %1047 = vmatprep.subr.mxu0 0.0
    %1048 = vmatpush1.msra.mxu0 0.0
    %1049 = vmatprep.subr.mxu0 0.0
    %1050 = vmatpush1.msra.mxu0 0.0
    %1051 = vmatprep.subr.mxu0 0.0
    %1052 = vmatpush1.msra.mxu0 0.0
    %1053 = vmatprep.subr.mxu0 0.0
    %1054 = vmatpush1.msra.mxu0 0.0
    %1055 = vmatprep.subr.mxu0 0.0
    %1056 = vmatpush1.msra.mxu0 0.0
    %1057 = vmatprep.subr.mxu0 0.0
    %1058 = vmatpush1.msra.mxu0 0.0
    %1059 = vmatprep.subr.mxu0 0.0
    %1060 = vmatpush1.msra.mxu0 0.0
    %1061 = vmatprep.subr.mxu0 0.0
    %1062 = vmatpush1.msra.mxu0 0.0
    %1063 = vmatprep.subr.mxu0 0.0
    %1064 = vmatpush1.msra.mxu0 0.0
    %1065 = vmatprep.subr.mxu0 0.0
    %1066 = vmatpush1.msra.mxu0 0.0
    %1067 = vmatprep.subr.mxu0 0.0
    %1068 = vmatpush1.msra.mxu0 0.0
    %1069 = vmatprep.subr.mxu0 0.0
    %1070 = vmatpush1.msra.mxu0 0.0
    %1071 = vmatprep.subr.mxu0 0.0
    %1072 = vmatpush1.msra.mxu0 0.0
    %1073 = vmatprep.subr.mxu0 0.0
    %1074 = vmatpush1.msra.mxu0 0.0
    %1075 = vmatprep.subr.mxu0 0.0
    %1076 = vmatpush1.msra.mxu0 0.0
    %1077 = vmatprep.subr.mxu0 0.0
    %1078 = vmatpush1.msra.mxu0 0.0
    %1079 = vmatprep.subr.mxu0 0.0
    %1080 = vmatpush1.msra.mxu0 0.0
    %1081 = vmatprep.subr.mxu0 0.0
    %1082 = vmatpush1.msra.mxu0 0.0
    %1083 = vmatprep.subr.mxu0 0.0
    %1084 = vmatpush1.msra.mxu0 0.0
    %1085 = vmatprep.subr.mxu0 0.0
    %1086 = vmatpush1.msra.mxu0 0.0
    %1087 = vmatprep.subr.mxu0 0.0
    %1088 = vmatpush1.msra.mxu0 0.0
    %1089 = vmatprep.mubr.f32.mxu0 0.0
    %1090 = vmatmul.mubr.f32.gmra.mrb[0].mxu0 %v1023
    %v1091 = vpop.f32.mrb[0].mxu0
    %v1092 = vadd.f32 %v947, %v1091
    %v1093 = vpop.f32.mrb[0].mxu0
    %v1094 = vadd.f32 %v949, %v1093
    %1095 = vdwg.mxu0
    %1096 = vmatprep.subr.mxu0 %v850
    %1097 = vmatpush1.msra.mxu0 %v849
    %1098 = vmatprep.subr.mxu0 %v854
    %1099 = vmatpush1.msra.mxu0 %v853
    %1100 = vmatprep.subr.mxu0 %v858
    %1101 = vmatpush1.msra.mxu0 %v857
    %1102 = vmatprep.subr.mxu0 %v862
    %1103 = vmatpush1.msra.mxu0 %v861
    %1104 = vmatprep.subr.mxu0 0.0
    %1105 = vmatpush1.msra.mxu0 0.0
    %1106 = vmatprep.subr.mxu0 0.0
    %1107 = vmatpush1.msra.mxu0 0.0
    %1108 = vmatprep.subr.mxu0 0.0
    %1109 = vmatpush1.msra.mxu0 0.0
    %1110 = vmatprep.subr.mxu0 0.0
    %1111 = vmatpush1.msra.mxu0 0.0
    %1112 = vmatprep.subr.mxu0 0.0
    %1113 = vmatpush1.msra.mxu0 0.0
    %1114 = vmatprep.subr.mxu0 0.0
    %1115 = vmatpush1.msra.mxu0 0.0
    %1116 = vmatprep.subr.mxu0 0.0
    %1117 = vmatpush1.msra.mxu0 0.0
    %1118 = vmatprep.subr.mxu0 0.0
    %1119 = vmatpush1.msra.mxu0 0.0
    %1120 = vmatprep.subr.mxu0 0.0
    %1121 = vmatpush1.msra.mxu0 0.0
    %1122 = vmatprep.subr.mxu0 0.0
    %1123 = vmatpush1.msra.mxu0 0.0
    %1124 = vmatprep.subr.mxu0 0.0
    %1125 = vmatpush1.msra.mxu0 0.0
    %1126 = vmatprep.subr.mxu0 0.0
    %1127 = vmatpush1.msra.mxu0 0.0
    %1128 = vmatprep.subr.mxu0 0.0
    %1129 = vmatpush1.msra.mxu0 0.0
    %1130 = vmatprep.subr.mxu0 0.0
    %1131 = vmatpush1.msra.mxu0 0.0
    %1132 = vmatprep.subr.mxu0 0.0
    %1133 = vmatpush1.msra.mxu0 0.0
    %1134 = vmatprep.subr.mxu0 0.0
    %1135 = vmatpush1.msra.mxu0 0.0
    %1136 = vmatprep.subr.mxu0 0.0
    %1137 = vmatpush1.msra.mxu0 0.0
    %1138 = vmatprep.subr.mxu0 0.0
    %1139 = vmatpush1.msra.mxu0 0.0
    %1140 = vmatprep.subr.mxu0 0.0
    %1141 = vmatpush1.msra.mxu0 0.0
    %1142 = vmatprep.subr.mxu0 0.0
    %1143 = vmatpush1.msra.mxu0 0.0
    %1144 = vmatprep.subr.mxu0 0.0
    %1145 = vmatpush1.msra.mxu0 0.0
    %1146 = vmatprep.subr.mxu0 0.0
    %1147 = vmatpush1.msra.mxu0 0.0
    %1148 = vmatprep.subr.mxu0 0.0
    %1149 = vmatpush1.msra.mxu0 0.0
    %1150 = vmatprep.subr.mxu0 0.0
    %1151 = vmatpush1.msra.mxu0 0.0
    %1152 = vmatprep.subr.mxu0 0.0
    %1153 = vmatpush1.msra.mxu0 0.0
    %1154 = vmatprep.subr.mxu0 0.0
    %1155 = vmatpush1.msra.mxu0 0.0
    %1156 = vmatprep.subr.mxu0 0.0
    %1157 = vmatpush1.msra.mxu0 0.0
    %1158 = vmatprep.subr.mxu0 0.0
    %1159 = vmatpush1.msra.mxu0 0.0
    %1160 = vmatprep.mubr.f32.mxu0 0.0
    %1161 = vmatmul.mubr.f32.gmra.mrb[0].mxu0 %v1023
    %v1162 = vpop.f32.mrb[0].mxu0
    %v1163 = vadd.f32 %v1018, %v1162
    %v1164 = vpop.f32.mrb[0].mxu0
    %v1165 = vadd.f32 %v1020, %v1164
    %1166 = vdwg.mxu0
    %v1168 = vlaneseq
    %v1169 = vshrl.u32 %v1168, 7
    %v1170 = vsub.s32 0, %v1169
    %v1171 = vrot.slane %v75, %v1170
    %v1172 = vlaneseq
    %v1173 = vshrl.u32 %v1172, 7
    %v1174 = vsub.s32 1, %v1173
    %v1175 = vrot.slane %v75, %v1174
    %v1176 = vlaneseq
    %v1177 = vshrl.u32 %v1176, 7
    %v1178 = vsub.s32 2, %v1177
    %v1179 = vrot.slane %v75, %v1178
    %v1180 = vlaneseq
    %v1181 = vshrl.u32 %v1180, 7
    %v1182 = vsub.s32 3, %v1181
    %v1183 = vrot.slane %v75, %v1182
    %v1188 = vadd.f32 %v1092, %v1171
    %v1189 = vadd.f32 %v1094, %v1175
    %v1190 = vadd.f32 %v1163, %v1179
    %v1191 = vadd.f32 %v1165, %v1183
    %v1192 = vtanh.pop %v1188
    %v1193 = vtanh.pop %v1189
    %v1194 = vtanh.pop %v1190
    %v1195 = vtanh.pop %v1191
    %v1196 = vmul.f32 %v1192, 0.5
    %v1197 = vadd.f32 %v1196, 0.5
    %v1198 = vmul.f32 %v1193, 0.5
    %v1199 = vadd.f32 %v1198, 0.5
    %v1200 = vmul.f32 %v1195, 0.5
    %v1201 = vadd.f32 %v1200, 0.5
    %v1202 = vmul.f32 %v1199, 0.0
    %v1203 = vmul.f32 %v1197, %v1194
    %v1204 = vadd.f32 %v1202, %v1203
    %v1205 = vtanh.pop %v1204
    %v1206 = vmul.f32 %v1201, %v1205
    %1207 = vmatprep.subr.mxu0 %v309
    %1208 = vmatpush1.msra.mxu0 %v308
    %1209 = vmatprep.subr.mxu0 %v313
    %1210 = vmatpush1.msra.mxu0 %v312
    %1211 = vmatprep.subr.mxu0 %v317
    %1212 = vmatpush1.msra.mxu0 %v316
    %1213 = vmatprep.subr.mxu0 %v321
    %1214 = vmatpush1.msra.mxu0 %v320
    %1215 = vmatprep.subr.mxu0 0.0
    %1216 = vmatpush1.msra.mxu0 0.0
    %1217 = vmatprep.subr.mxu0 0.0
    %1218 = vmatpush1.msra.mxu0 0.0
    %1219 = vmatprep.subr.mxu0 0.0
    %1220 = vmatpush1.msra.mxu0 0.0
    %1221 = vmatprep.subr.mxu0 0.0
    %1222 = vmatpush1.msra.mxu0 0.0
    %1223 = vmatprep.subr.mxu0 0.0
    %1224 = vmatpush1.msra.mxu0 0.0
    %1225 = vmatprep.subr.mxu0 0.0
    %1226 = vmatpush1.msra.mxu0 0.0
    %1227 = vmatprep.subr.mxu0 0.0
    %1228 = vmatpush1.msra.mxu0 0.0
    %1229 = vmatprep.subr.mxu0 0.0
    %1230 = vmatpush1.msra.mxu0 0.0
    %1231 = vmatprep.subr.mxu0 0.0
    %1232 = vmatpush1.msra.mxu0 0.0
    %1233 = vmatprep.subr.mxu0 0.0
    %1234 = vmatpush1.msra.mxu0 0.0
    %1235 = vmatprep.subr.mxu0 0.0
    %1236 = vmatpush1.msra.mxu0 0.0
    %1237 = vmatprep.subr.mxu0 0.0
    %1238 = vmatpush1.msra.mxu0 0.0
    %1239 = vmatprep.subr.mxu0 0.0
    %1240 = vmatpush1.msra.mxu0 0.0
    %1241 = vmatprep.subr.mxu0 0.0
    %1242 = vmatpush1.msra.mxu0 0.0
    %1243 = vmatprep.subr.mxu0 0.0
    %1244 = vmatpush1.msra.mxu0 0.0
    %1245 = vmatprep.subr.mxu0 0.0
    %1246 = vmatpush1.msra.mxu0 0.0
    %1247 = vmatprep.subr.mxu0 0.0
    %1248 = vmatpush1.msra.mxu0 0.0
    %1249 = vmatprep.subr.mxu0 0.0
    %1250 = vmatpush1.msra.mxu0 0.0
    %1251 = vmatprep.subr.mxu0 0.0
    %1252 = vmatpush1.msra.mxu0 0.0
    %1253 = vmatprep.subr.mxu0 0.0
    %1254 = vmatpush1.msra.mxu0 0.0
    %1255 = vmatprep.subr.mxu0 0.0
    %1256 = vmatpush1.msra.mxu0 0.0
    %1257 = vmatprep.subr.mxu0 0.0
    %1258 = vmatpush1.msra.mxu0 0.0
    %1259 = vmatprep.subr.mxu0 0.0
    %1260 = vmatpush1.msra.mxu0 0.0
    %1261 = vmatprep.subr.mxu0 0.0
    %1262 = vmatpush1.msra.mxu0 0.0
    %1263 = vmatprep.subr.mxu0 0.0
    %1264 = vmatpush1.msra.mxu0 0.0
    %1265 = vmatprep.subr.mxu0 0.0
    %1266 = vmatpush1.msra.mxu0 0.0
    %1267 = vmatprep.subr.mxu0 0.0
    %1268 = vmatpush1.msra.mxu0 0.0
    %1269 = vmatprep.subr.mxu0 0.0
    %1270 = vmatpush1.msra.mxu0 0.0
    %1271 = vmatprep.mubr.f32.mxu0 0.0
    %1272 = vmatmul.mubr.f32.gmra.mrb[0].mxu0 %v1023
    %v1273 = vpop.f32.mrb[0].mxu0
    %v1274 = vadd.f32 0.0, %v1273
    %v1275 = vpop.f32.mrb[0].mxu0
    %v1276 = vadd.f32 0.0, %v1275
    %1277 = vdwg.mxu0
    %1278 = vmatprep.subr.mxu0 %v311
    %1279 = vmatpush1.msra.mxu0 %v310
    %1280 = vmatprep.subr.mxu0 %v315
    %1281 = vmatpush1.msra.mxu0 %v314
    %1282 = vmatprep.subr.mxu0 %v319
    %1283 = vmatpush1.msra.mxu0 %v318
    %1284 = vmatprep.subr.mxu0 %v323
    %1285 = vmatpush1.msra.mxu0 %v322
    %1286 = vmatprep.subr.mxu0 0.0
    %1287 = vmatpush1.msra.mxu0 0.0
    %1288 = vmatprep.subr.mxu0 0.0
    %1289 = vmatpush1.msra.mxu0 0.0
    %1290 = vmatprep.subr.mxu0 0.0
    %1291 = vmatpush1.msra.mxu0 0.0
    %1292 = vmatprep.subr.mxu0 0.0
    %1293 = vmatpush1.msra.mxu0 0.0
    %1294 = vmatprep.subr.mxu0 0.0
    %1295 = vmatpush1.msra.mxu0 0.0
    %1296 = vmatprep.subr.mxu0 0.0
    %1297 = vmatpush1.msra.mxu0 0.0
    %1298 = vmatprep.subr.mxu0 0.0
    %1299 = vmatpush1.msra.mxu0 0.0
    %1300 = vmatprep.subr.mxu0 0.0
    %1301 = vmatpush1.msra.mxu0 0.0
    %1302 = vmatprep.subr.mxu0 0.0
    %1303 = vmatpush1.msra.mxu0 0.0
    %1304 = vmatprep.subr.mxu0 0.0
    %1305 = vmatpush1.msra.mxu0 0.0
    %1306 = vmatprep.subr.mxu0 0.0
    %1307 = vmatpush1.msra.mxu0 0.0
    %1308 = vmatprep.subr.mxu0 0.0
    %1309 = vmatpush1.msra.mxu0 0.0
    %1310 = vmatprep.subr.mxu0 0.0
    %1311 = vmatpush1.msra.mxu0 0.0
    %1312 = vmatprep.subr.mxu0 0.0
    %1313 = vmatpush1.msra.mxu0 0.0
    %1314 = vmatprep.subr.mxu0 0.0
    %1315 = vmatpush1.msra.mxu0 0.0
    %1316 = vmatprep.subr.mxu0 0.0
    %1317 = vmatpush1.msra.mxu0 0.0
    %1318 = vmatprep.subr.mxu0 0.0
    %1319 = vmatpush1.msra.mxu0 0.0
    %1320 = vmatprep.subr.mxu0 0.0
    %1321 = vmatpush1.msra.mxu0 0.0
    %1322 = vmatprep.subr.mxu0 0.0
    %1323 = vmatpush1.msra.mxu0 0.0
    %1324 = vmatprep.subr.mxu0 0.0
    %1325 = vmatpush1.msra.mxu0 0.0
    %1326 = vmatprep.subr.mxu0 0.0
    %1327 = vmatpush1.msra.mxu0 0.0
    %1328 = vmatprep.subr.mxu0 0.0
    %1329 = vmatpush1.msra.mxu0 0.0
    %1330 = vmatprep.subr.mxu0 0.0
    %1331 = vmatpush1.msra.mxu0 0.0
    %1332 = vmatprep.subr.mxu0 0.0
    %1333 = vmatpush1.msra.mxu0 0.0
    %1334 = vmatprep.subr.mxu0 0.0
    %1335 = vmatpush1.msra.mxu0 0.0
    %1336 = vmatprep.subr.mxu0 0.0
    %1337 = vmatpush1.msra.mxu0 0.0
    %1338 = vmatprep.subr.mxu0 0.0
    %1339 = vmatpush1.msra.mxu0 0.0
    %1340 = vmatprep.subr.mxu0 0.0
    %1341 = vmatpush1.msra.mxu0 0.0
    %1342 = vmatprep.mubr.f32.mxu0 0.0
    %1343 = vmatmul.mubr.f32.gmra.mrb[0].mxu0 %v1023
    %v1344 = vpop.f32.mrb[0].mxu0
    %v1345 = vadd.f32 0.0, %v1344
    %v1346 = vpop.f32.mrb[0].mxu0
    %v1347 = vadd.f32 0.0, %v1346
    %1348 = vdwg.mxu0
    %v1350 = vsel %vm95, %v845, 0
    %1352 = vmatprep.subr.mxu0 %v292
    %1353 = vmatpush1.msra.mxu0 %v291
    %1354 = vmatprep.subr.mxu0 %v296
    %1355 = vmatpush1.msra.mxu0 %v295
    %1356 = vmatprep.subr.mxu0 %v300
    %1357 = vmatpush1.msra.mxu0 %v299
    %1358 = vmatprep.subr.mxu0 %v304
    %1359 = vmatpush1.msra.mxu0 %v303
    %1360 = vmatprep.subr.mxu0 0.0
    %1361 = vmatpush1.msra.mxu0 0.0
    %1362 = vmatprep.subr.mxu0 0.0
    %1363 = vmatpush1.msra.mxu0 0.0
    %1364 = vmatprep.subr.mxu0 0.0
    %1365 = vmatpush1.msra.mxu0 0.0
    %1366 = vmatprep.subr.mxu0 0.0
    %1367 = vmatpush1.msra.mxu0 0.0
    %1368 = vmatprep.subr.mxu0 0.0
    %1369 = vmatpush1.msra.mxu0 0.0
    %1370 = vmatprep.subr.mxu0 0.0
    %1371 = vmatpush1.msra.mxu0 0.0
    %1372 = vmatprep.subr.mxu0 0.0
    %1373 = vmatpush1.msra.mxu0 0.0
    %1374 = vmatprep.subr.mxu0 0.0
    %1375 = vmatpush1.msra.mxu0 0.0
    %1376 = vmatprep.subr.mxu0 0.0
    %1377 = vmatpush1.msra.mxu0 0.0
    %1378 = vmatprep.subr.mxu0 0.0
    %1379 = vmatpush1.msra.mxu0 0.0
    %1380 = vmatprep.subr.mxu0 0.0
    %1381 = vmatpush1.msra.mxu0 0.0
    %1382 = vmatprep.subr.mxu0 0.0
    %1383 = vmatpush1.msra.mxu0 0.0
    %1384 = vmatprep.subr.mxu0 0.0
    %1385 = vmatpush1.msra.mxu0 0.0
    %1386 = vmatprep.subr.mxu0 0.0
    %1387 = vmatpush1.msra.mxu0 0.0
    %1388 = vmatprep.subr.mxu0 0.0
    %1389 = vmatpush1.msra.mxu0 0.0
    %1390 = vmatprep.subr.mxu0 0.0
    %1391 = vmatpush1.msra.mxu0 0.0
    %1392 = vmatprep.subr.mxu0 0.0
    %1393 = vmatpush1.msra.mxu0 0.0
    %1394 = vmatprep.subr.mxu0 0.0
    %1395 = vmatpush1.msra.mxu0 0.0
    %1396 = vmatprep.subr.mxu0 0.0
    %1397 = vmatpush1.msra.mxu0 0.0
    %1398 = vmatprep.subr.mxu0 0.0
    %1399 = vmatpush1.msra.mxu0 0.0
    %1400 = vmatprep.subr.mxu0 0.0
    %1401 = vmatpush1.msra.mxu0 0.0
    %1402 = vmatprep.subr.mxu0 0.0
    %1403 = vmatpush1.msra.mxu0 0.0
    %1404 = vmatprep.subr.mxu0 0.0
    %1405 = vmatpush1.msra.mxu0 0.0
    %1406 = vmatprep.subr.mxu0 0.0
    %1407 = vmatpush1.msra.mxu0 0.0
    %1408 = vmatprep.subr.mxu0 0.0
    %1409 = vmatpush1.msra.mxu0 0.0
    %1410 = vmatprep.subr.mxu0 0.0
    %1411 = vmatpush1.msra.mxu0 0.0
    %1412 = vmatprep.subr.mxu0 0.0
    %1413 = vmatpush1.msra.mxu0 0.0
    %1414 = vmatprep.subr.mxu0 0.0
    %1415 = vmatpush1.msra.mxu0 0.0
    %1416 = vmatprep.mubr.f32.mxu0 0.0
    %1417 = vmatmul.mubr.f32.gmra.mrb[0].mxu0 %v1350
    %v1418 = vpop.f32.mrb[0].mxu0
    %v1419 = vadd.f32 %v1274, %v1418
    %v1420 = vpop.f32.mrb[0].mxu0
    %v1421 = vadd.f32 %v1276, %v1420
    %1422 = vdwg.mxu0
    %1423 = vmatprep.subr.mxu0 %v294
    %1424 = vmatpush1.msra.mxu0 %v293
    %1425 = vmatprep.subr.mxu0 %v298
    %1426 = vmatpush1.msra.mxu0 %v297
    %1427 = vmatprep.subr.mxu0 %v302
    %1428 = vmatpush1.msra.mxu0 %v301
    %1429 = vmatprep.subr.mxu0 %v306
    %1430 = vmatpush1.msra.mxu0 %v305
    %1431 = vmatprep.subr.mxu0 0.0
    %1432 = vmatpush1.msra.mxu0 0.0
    %1433 = vmatprep.subr.mxu0 0.0
    %1434 = vmatpush1.msra.mxu0 0.0
    %1435 = vmatprep.subr.mxu0 0.0
    %1436 = vmatpush1.msra.mxu0 0.0
    %1437 = vmatprep.subr.mxu0 0.0
    %1438 = vmatpush1.msra.mxu0 0.0
    %1439 = vmatprep.subr.mxu0 0.0
    %1440 = vmatpush1.msra.mxu0 0.0
    %1441 = vmatprep.subr.mxu0 0.0
    %1442 = vmatpush1.msra.mxu0 0.0
    %1443 = vmatprep.subr.mxu0 0.0
    %1444 = vmatpush1.msra.mxu0 0.0
    %1445 = vmatprep.subr.mxu0 0.0
    %1446 = vmatpush1.msra.mxu0 0.0
    %1447 = vmatprep.subr.mxu0 0.0
    %1448 = vmatpush1.msra.mxu0 0.0
    %1449 = vmatprep.subr.mxu0 0.0
    %1450 = vmatpush1.msra.mxu0 0.0
    %1451 = vmatprep.subr.mxu0 0.0
    %1452 = vmatpush1.msra.mxu0 0.0
    %1453 = vmatprep.subr.mxu0 0.0
    %1454 = vmatpush1.msra.mxu0 0.0
    %1455 = vmatprep.subr.mxu0 0.0
    %1456 = vmatpush1.msra.mxu0 0.0
    %1457 = vmatprep.subr.mxu0 0.0
    %1458 = vmatpush1.msra.mxu0 0.0
    %1459 = vmatprep.subr.mxu0 0.0
    %1460 = vmatpush1.msra.mxu0 0.0
    %1461 = vmatprep.subr.mxu0 0.0
    %1462 = vmatpush1.msra.mxu0 0.0
    %1463 = vmatprep.subr.mxu0 0.0
    %1464 = vmatpush1.msra.mxu0 0.0
    %1465 = vmatprep.subr.mxu0 0.0
    %1466 = vmatpush1.msra.mxu0 0.0
    %1467 = vmatprep.subr.mxu0 0.0
    %1468 = vmatpush1.msra.mxu0 0.0
    %1469 = vmatprep.subr.mxu0 0.0
    %1470 = vmatpush1.msra.mxu0 0.0
    %1471 = vmatprep.subr.mxu0 0.0
    %1472 = vmatpush1.msra.mxu0 0.0
    %1473 = vmatprep.subr.mxu0 0.0
    %1474 = vmatpush1.msra.mxu0 0.0
    %1475 = vmatprep.subr.mxu0 0.0
    %1476 = vmatpush1.msra.mxu0 0.0
    %1477 = vmatprep.subr.mxu0 0.0
    %1478 = vmatpush1.msra.mxu0 0.0
    %1479 = vmatprep.subr.mxu0 0.0
    %1480 = vmatpush1.msra.mxu0 0.0
    %1481 = vmatprep.subr.mxu0 0.0
    %1482 = vmatpush1.msra.mxu0 0.0
    %1483 = vmatprep.subr.mxu0 0.0
    %1484 = vmatpush1.msra.mxu0 0.0
    %1485 = vmatprep.subr.mxu0 0.0
    %1486 = vmatpush1.msra.mxu0 0.0
    %1487 = vmatprep.mubr.f32.mxu0 0.0
    %1488 = vmatmul.mubr.f32.gmra.mrb[0].mxu0 %v1350
    %v1489 = vpop.f32.mrb[0].mxu0
    %v1490 = vadd.f32 %v1345, %v1489
    %v1491 = vpop.f32.mrb[0].mxu0
    %v1492 = vadd.f32 %v1347, %v1491
    %1493 = vdwg.mxu0
    %v1494 = vadd.f32 %v1419, %v615
    %v1495 = vadd.f32 %v1421, %v619
    %v1496 = vadd.f32 %v1490, %v623
    %v1497 = vadd.f32 %v1492, %v627
    %v1498 = vtanh.pop %v1494
    %v1499 = vtanh.pop %v1495
    %v1500 = vtanh.pop %v1496
    %v1501 = vtanh.pop %v1497
    %v1502 = vmul.f32 %v1498, 0.5
    %v1503 = vadd.f32 %v1502, 0.5
    %v1504 = vmul.f32 %v1499, 0.5
    %v1505 = vadd.f32 %v1504, 0.5
    %v1506 = vmul.f32 %v1501, 0.5
    %v1507 = vadd.f32 %v1506, 0.5
    %v1508 = vmul.f32 %v1505, %v648
    %v1509 = vmul.f32 %v1503, %v1500
    %v1510 = vadd.f32 %v1508, %v1509
    %v1511 = vtanh.pop %v1510
    %v1512 = vmul.f32 %v1507, %v1511
    %s1513 = sld [smem:[#allocation3 + $0x2]]
    %v1514 = vstv %s1513
    %v1515 = vmul.f32 %v1514, %v70
    %1516 = vmatprep.subr.mxu0 %v80
    %1517 = vmatpush1.msra.mxu0 %v79
    %1518 = vmatprep.subr.mxu0 %v84
    %1519 = vmatpush1.msra.mxu0 %v83
    %1520 = vmatprep.subr.mxu0 %v88
    %1521 = vmatpush1.msra.mxu0 %v87
    %1522 = vmatprep.subr.mxu0 %v92
    %1523 = vmatpush1.msra.mxu0 %v91
    %1524 = vmatprep.subr.mxu0 0.0
    %1525 = vmatpush1.msra.mxu0 0.0
    %1526 = vmatprep.subr.mxu0 0.0
    %1527 = vmatpush1.msra.mxu0 0.0
    %1528 = vmatprep.subr.mxu0 0.0
    %1529 = vmatpush1.msra.mxu0 0.0
    %1530 = vmatprep.subr.mxu0 0.0
    %1531 = vmatpush1.msra.mxu0 0.0
    %1532 = vmatprep.subr.mxu0 0.0
    %1533 = vmatpush1.msra.mxu0 0.0
    %1534 = vmatprep.subr.mxu0 0.0
    %1535 = vmatpush1.msra.mxu0 0.0
    %1536 = vmatprep.subr.mxu0 0.0
    %1537 = vmatpush1.msra.mxu0 0.0
    %1538 = vmatprep.subr.mxu0 0.0
    %1539 = vmatpush1.msra.mxu0 0.0
    %1540 = vmatprep.subr.mxu0 0.0
    %1541 = vmatpush1.msra.mxu0 0.0
    %1542 = vmatprep.subr.mxu0 0.0
    %1543 = vmatpush1.msra.mxu0 0.0
    %1544 = vmatprep.subr.mxu0 0.0
    %1545 = vmatpush1.msra.mxu0 0.0
    %1546 = vmatprep.subr.mxu0 0.0
    %1547 = vmatpush1.msra.mxu0 0.0
    %1548 = vmatprep.subr.mxu0 0.0
    %1549 = vmatpush1.msra.mxu0 0.0
    %1550 = vmatprep.subr.mxu0 0.0
    %1551 = vmatpush1.msra.mxu0 0.0
    %1552 = vmatprep.subr.mxu0 0.0
    %1553 = vmatpush1.msra.mxu0 0.0
    %1554 = vmatprep.subr.mxu0 0.0
    %1555 = vmatpush1.msra.mxu0 0.0
    %1556 = vmatprep.subr.mxu0 0.0
    %1557 = vmatpush1.msra.mxu0 0.0
    %1558 = vmatprep.subr.mxu0 0.0
    %1559 = vmatpush1.msra.mxu0 0.0
    %1560 = vmatprep.subr.mxu0 0.0
    %1561 = vmatpush1.msra.mxu0 0.0
    %1562 = vmatprep.subr.mxu0 0.0
    %1563 = vmatpush1.msra.mxu0 0.0
    %1564 = vmatprep.subr.mxu0 0.0
    %1565 = vmatpush1.msra.mxu0 0.0
    %1566 = vmatprep.subr.mxu0 0.0
    %1567 = vmatpush1.msra.mxu0 0.0
    %1568 = vmatprep.subr.mxu0 0.0
    %1569 = vmatpush1.msra.mxu0 0.0
    %1570 = vmatprep.subr.mxu0 0.0
    %1571 = vmatpush1.msra.mxu0 0.0
    %1572 = vmatprep.subr.mxu0 0.0
    %1573 = vmatpush1.msra.mxu0 0.0
    %1574 = vmatprep.subr.mxu0 0.0
    %1575 = vmatpush1.msra.mxu0 0.0
    %1576 = vmatprep.subr.mxu0 0.0
    %1577 = vmatpush1.msra.mxu0 0.0
    %1578 = vmatprep.subr.mxu0 0.0
    %1579 = vmatpush1.msra.mxu0 0.0
    %1580 = vmatprep.mubr.f32.mxu0 0.0
    %1581 = vmatmul.mubr.f32.gmra.mrb[0].mxu0 %v1350
    %v1582 = vpop.f32.mrb[0].mxu0
    %v1583 = vadd.f32 0.0, %v1582
    %v1584 = vpop.f32.mrb[0].mxu0
    %v1585 = vadd.f32 0.0, %v1584
    %1586 = vdwg.mxu0
    %1587 = vmatprep.subr.mxu0 %v82
    %1588 = vmatpush1.msra.mxu0 %v81
    %1589 = vmatprep.subr.mxu0 %v86
    %1590 = vmatpush1.msra.mxu0 %v85
    %1591 = vmatprep.subr.mxu0 %v90
    %1592 = vmatpush1.msra.mxu0 %v89
    %1593 = vmatprep.subr.mxu0 %v94
    %1594 = vmatpush1.msra.mxu0 %v93
    %1595 = vmatprep.subr.mxu0 0.0
    %1596 = vmatpush1.msra.mxu0 0.0
    %1597 = vmatprep.subr.mxu0 0.0
    %1598 = vmatpush1.msra.mxu0 0.0
    %1599 = vmatprep.subr.mxu0 0.0
    %1600 = vmatpush1.msra.mxu0 0.0
    %1601 = vmatprep.subr.mxu0 0.0
    %1602 = vmatpush1.msra.mxu0 0.0
    %1603 = vmatprep.subr.mxu0 0.0
    %1604 = vmatpush1.msra.mxu0 0.0
    %1605 = vmatprep.subr.mxu0 0.0
    %1606 = vmatpush1.msra.mxu0 0.0
    %1607 = vmatprep.subr.mxu0 0.0
    %1608 = vmatpush1.msra.mxu0 0.0
    %1609 = vmatprep.subr.mxu0 0.0
    %1610 = vmatpush1.msra.mxu0 0.0
    %1611 = vmatprep.subr.mxu0 0.0
    %1612 = vmatpush1.msra.mxu0 0.0
    %1613 = vmatprep.subr.mxu0 0.0
    %1614 = vmatpush1.msra.mxu0 0.0
    %1615 = vmatprep.subr.mxu0 0.0
    %1616 = vmatpush1.msra.mxu0 0.0
    %1617 = vmatprep.subr.mxu0 0.0
    %1618 = vmatpush1.msra.mxu0 0.0
    %1619 = vmatprep.subr.mxu0 0.0
    %1620 = vmatpush1.msra.mxu0 0.0
    %1621 = vmatprep.subr.mxu0 0.0
    %1622 = vmatpush1.msra.mxu0 0.0
    %1623 = vmatprep.subr.mxu0 0.0
    %1624 = vmatpush1.msra.mxu0 0.0
    %1625 = vmatprep.subr.mxu0 0.0
    %1626 = vmatpush1.msra.mxu0 0.0
    %1627 = vmatprep.subr.mxu0 0.0
    %1628 = vmatpush1.msra.mxu0 0.0
    %1629 = vmatprep.subr.mxu0 0.0
    %1630 = vmatpush1.msra.mxu0 0.0
    %1631 = vmatprep.subr.mxu0 0.0
    %1632 = vmatpush1.msra.mxu0 0.0
    %1633 = vmatprep.subr.mxu0 0.0
    %1634 = vmatpush1.msra.mxu0 0.0
    %1635 = vmatprep.subr.mxu0 0.0
    %1636 = vmatpush1.msra.mxu0 0.0
    %1637 = vmatprep.subr.mxu0 0.0
    %1638 = vmatpush1.msra.mxu0 0.0
    %1639 = vmatprep.subr.mxu0 0.0
    %1640 = vmatpush1.msra.mxu0 0.0
    %1641 = vmatprep.subr.mxu0 0.0
    %1642 = vmatpush1.msra.mxu0 0.0
    %1643 = vmatprep.subr.mxu0 0.0
    %1644 = vmatpush1.msra.mxu0 0.0
    %1645 = vmatprep.subr.mxu0 0.0
    %1646 = vmatpush1.msra.mxu0 0.0
    %1647 = vmatprep.subr.mxu0 0.0
    %1648 = vmatpush1.msra.mxu0 0.0
    %1649 = vmatprep.subr.mxu0 0.0
    %1650 = vmatpush1.msra.mxu0 0.0
    %1651 = vmatprep.mubr.f32.mxu0 0.0
    %1652 = vmatmul.mubr.f32.gmra.mrb[0].mxu0 %v1350
    %v1653 = vpop.f32.mrb[0].mxu0
    %v1654 = vadd.f32 0.0, %v1653
    %v1655 = vpop.f32.mrb[0].mxu0
    %v1656 = vadd.f32 0.0, %v1655
    %1657 = vdwg.mxu0
    %v1662 = vcombine.low %v1583, %v1585
    %v1663 = vcombine.low %v1654, %v1656
    %v1665 = vunpack.c.l.s4 1966171168
    %v1666 = vunpack.c.0.s8 %v1665
    %v1667 = vlaneseq
    %v1668 = vshrl.u32 %v1667, 7
    %v1669 = vsub.s32 %v1666, %v1668
    %v1670 = vrot.slane %v1662, %v1669
    %v1672 = vunpack.c.l.s4 1966171168
    %v1673 = vunpack.c.0.s8 %v1672
    %v1674 = vlaneseq
    %v1675 = vshrl.u32 %v1674, 7
    %v1676 = vsub.s32 %v1673, %v1675
    %v1677 = vrot.slane %v1663, %v1676
    %v1678 = vcombine.low %v1670, %v1677
    %v1680 = vunpack.c.l.s4 1966171168
    %v1681 = vunpack.c.0.s8 %v1680
    %v1682 = vlaneseq
    %v1683 = vshrl.u32 %v1682, 7
    %v1684 = vsub.s32 %v1681, %v1683
    %v1685 = vrot.slane %v1678, %v1684
    %v1687 = vadd.f32 %v1515, %v1685
    %v1688 = vadd.f32 %v1687, %v71
    %v1689 = vtanh.pop %v1688
    %v1690 = vmul.f32 %v1689, 0.5
    %v1691 = vadd.f32 %v1690, 0.5
    %v1693 = vrot.slane %v1689, 1
    %v1695 = vmul.f32 %v1693, 0.5
    %v1696 = vadd.f32 %v1695, 0.5
    %v1697 = vrot.slane %v1689, 3
    %v1699 = vmul.f32 %v1697, 0.5
    %v1700 = vadd.f32 %v1699, 0.5
    %v1701 = vmul.f32 %v1696, %v843
    %v1702 = vrot.slane %v1689, 2
    %v1704 = vmul.f32 %v1691, %v1702
    %v1705 = vadd.f32 %v1701, %v1704
    %v1706 = vtanh.pop %v1705
    %v1707 = vmul.f32 %v1700, %v1706
    %v1709 = vsel %vm95, %v1206, 0
    %1711 = vmatprep.subr.mxu0 %v865
    %1712 = vmatpush1.msra.mxu0 %v864
    %1713 = vmatprep.subr.mxu0 %v869
    %1714 = vmatpush1.msra.mxu0 %v868
    %1715 = vmatprep.subr.mxu0 %v873
    %1716 = vmatpush1.msra.mxu0 %v872
    %1717 = vmatprep.subr.mxu0 %v877
    %1718 = vmatpush1.msra.mxu0 %v876
    %1719 = vmatprep.subr.mxu0 0.0
    %1720 = vmatpush1.msra.mxu0 0.0
    %1721 = vmatprep.subr.mxu0 0.0
    %1722 = vmatpush1.msra.mxu0 0.0
    %1723 = vmatprep.subr.mxu0 0.0
    %1724 = vmatpush1.msra.mxu0 0.0
    %1725 = vmatprep.subr.mxu0 0.0
    %1726 = vmatpush1.msra.mxu0 0.0
    %1727 = vmatprep.subr.mxu0 0.0
    %1728 = vmatpush1.msra.mxu0 0.0
    %1729 = vmatprep.subr.mxu0 0.0
    %1730 = vmatpush1.msra.mxu0 0.0
    %1731 = vmatprep.subr.mxu0 0.0
    %1732 = vmatpush1.msra.mxu0 0.0
    %1733 = vmatprep.subr.mxu0 0.0
    %1734 = vmatpush1.msra.mxu0 0.0
    %1735 = vmatprep.subr.mxu0 0.0
    %1736 = vmatpush1.msra.mxu0 0.0
    %1737 = vmatprep.subr.mxu0 0.0
    %1738 = vmatpush1.msra.mxu0 0.0
    %1739 = vmatprep.subr.mxu0 0.0
    %1740 = vmatpush1.msra.mxu0 0.0
    %1741 = vmatprep.subr.mxu0 0.0
    %1742 = vmatpush1.msra.mxu0 0.0
    %1743 = vmatprep.subr.mxu0 0.0
    %1744 = vmatpush1.msra.mxu0 0.0
    %1745 = vmatprep.subr.mxu0 0.0
    %1746 = vmatpush1.msra.mxu0 0.0
    %1747 = vmatprep.subr.mxu0 0.0
    %1748 = vmatpush1.msra.mxu0 0.0
    %1749 = vmatprep.subr.mxu0 0.0
    %1750 = vmatpush1.msra.mxu0 0.0
    %1751 = vmatprep.subr.mxu0 0.0
    %1752 = vmatpush1.msra.mxu0 0.0
    %1753 = vmatprep.subr.mxu0 0.0
    %1754 = vmatpush1.msra.mxu0 0.0
    %1755 = vmatprep.subr.mxu0 0.0
    %1756 = vmatpush1.msra.mxu0 0.0
    %1757 = vmatprep.subr.mxu0 0.0
    %1758 = vmatpush1.msra.mxu0 0.0
    %1759 = vmatprep.subr.mxu0 0.0
    %1760 = vmatpush1.msra.mxu0 0.0
    %1761 = vmatprep.subr.mxu0 0.0
    %1762 = vmatpush1.msra.mxu0 0.0
    %1763 = vmatprep.subr.mxu0 0.0
    %1764 = vmatpush1.msra.mxu0 0.0
    %1765 = vmatprep.subr.mxu0 0.0
    %1766 = vmatpush1.msra.mxu0 0.0
    %1767 = vmatprep.subr.mxu0 0.0
    %1768 = vmatpush1.msra.mxu0 0.0
    %1769 = vmatprep.subr.mxu0 0.0
    %1770 = vmatpush1.msra.mxu0 0.0
    %1771 = vmatprep.subr.mxu0 0.0
    %1772 = vmatpush1.msra.mxu0 0.0
    %1773 = vmatprep.subr.mxu0 0.0
    %1774 = vmatpush1.msra.mxu0 0.0
    %1775 = vmatprep.mubr.f32.mxu0 0.0
    %1776 = vmatmul.mubr.f32.gmra.mrb[0].mxu0 %v1709
    %v1777 = vpop.f32.mrb[0].mxu0
    %v1778 = vadd.f32 0.0, %v1777
    %v1779 = vpop.f32.mrb[0].mxu0
    %v1780 = vadd.f32 0.0, %v1779
    %1781 = vdwg.mxu0
    %1782 = vmatprep.subr.mxu0 %v867
    %1783 = vmatpush1.msra.mxu0 %v866
    %1784 = vmatprep.subr.mxu0 %v871
    %1785 = vmatpush1.msra.mxu0 %v870
    %1786 = vmatprep.subr.mxu0 %v875
    %1787 = vmatpush1.msra.mxu0 %v874
    %1788 = vmatprep.subr.mxu0 %v879
    %1789 = vmatpush1.msra.mxu0 %v878
    %1790 = vmatprep.subr.mxu0 0.0
    %1791 = vmatpush1.msra.mxu0 0.0
    %1792 = vmatprep.subr.mxu0 0.0
    %1793 = vmatpush1.msra.mxu0 0.0
    %1794 = vmatprep.subr.mxu0 0.0
    %1795 = vmatpush1.msra.mxu0 0.0
    %1796 = vmatprep.subr.mxu0 0.0
    %1797 = vmatpush1.msra.mxu0 0.0
    %1798 = vmatprep.subr.mxu0 0.0
    %1799 = vmatpush1.msra.mxu0 0.0
    %1800 = vmatprep.subr.mxu0 0.0
    %1801 = vmatpush1.msra.mxu0 0.0
    %1802 = vmatprep.subr.mxu0 0.0
    %1803 = vmatpush1.msra.mxu0 0.0
    %1804 = vmatprep.subr.mxu0 0.0
    %1805 = vmatpush1.msra.mxu0 0.0
    %1806 = vmatprep.subr.mxu0 0.0
    %1807 = vmatpush1.msra.mxu0 0.0
    %1808 = vmatprep.subr.mxu0 0.0
    %1809 = vmatpush1.msra.mxu0 0.0
    %1810 = vmatprep.subr.mxu0 0.0
    %1811 = vmatpush1.msra.mxu0 0.0
    %1812 = vmatprep.subr.mxu0 0.0
    %1813 = vmatpush1.msra.mxu0 0.0
    %1814 = vmatprep.subr.mxu0 0.0
    %1815 = vmatpush1.msra.mxu0 0.0
    %1816 = vmatprep.subr.mxu0 0.0
    %1817 = vmatpush1.msra.mxu0 0.0
    %1818 = vmatprep.subr.mxu0 0.0
    %1819 = vmatpush1.msra.mxu0 0.0
    %1820 = vmatprep.subr.mxu0 0.0
    %1821 = vmatpush1.msra.mxu0 0.0
    %1822 = vmatprep.subr.mxu0 0.0
    %1823 = vmatpush1.msra.mxu0 0.0
    %1824 = vmatprep.subr.mxu0 0.0
    %1825 = vmatpush1.msra.mxu0 0.0
    %1826 = vmatprep.subr.mxu0 0.0
    %1827 = vmatpush1.msra.mxu0 0.0
    %1828 = vmatprep.subr.mxu0 0.0
    %1829 = vmatpush1.msra.mxu0 0.0
    %1830 = vmatprep.subr.mxu0 0.0
    %1831 = vmatpush1.msra.mxu0 0.0
    %1832 = vmatprep.subr.mxu0 0.0
    %1833 = vmatpush1.msra.mxu0 0.0
    %1834 = vmatprep.subr.mxu0 0.0
    %1835 = vmatpush1.msra.mxu0 0.0
    %1836 = vmatprep.subr.mxu0 0.0
    %1837 = vmatpush1.msra.mxu0 0.0
    %1838 = vmatprep.subr.mxu0 0.0
    %1839 = vmatpush1.msra.mxu0 0.0
    %1840 = vmatprep.subr.mxu0 0.0
    %1841 = vmatpush1.msra.mxu0 0.0
    %1842 = vmatprep.subr.mxu0 0.0
    %1843 = vmatpush1.msra.mxu0 0.0
    %1844 = vmatprep.subr.mxu0 0.0
    %1845 = vmatpush1.msra.mxu0 0.0
    %1846 = vmatprep.mubr.f32.mxu0 0.0
    %1847 = vmatmul.mubr.f32.gmra.mrb[0].mxu0 %v1709
    %v1848 = vpop.f32.mrb[0].mxu0
    %v1849 = vadd.f32 0.0, %v1848
    %v1850 = vpop.f32.mrb[0].mxu0
    %v1851 = vadd.f32 0.0, %v1850
    %1852 = vdwg.mxu0
    %v1854 = vsel %vm95, %v1512, 0
    %1856 = vmatprep.subr.mxu0 %v848
    %1857 = vmatpush1.msra.mxu0 %v847
    %1858 = vmatprep.subr.mxu0 %v852
    %1859 = vmatpush1.msra.mxu0 %v851
    %1860 = vmatprep.subr.mxu0 %v856
    %1861 = vmatpush1.msra.mxu0 %v855
    %1862 = vmatprep.subr.mxu0 %v860
    %1863 = vmatpush1.msra.mxu0 %v859
    %1864 = vmatprep.subr.mxu0 0.0
    %1865 = vmatpush1.msra.mxu0 0.0
    %1866 = vmatprep.subr.mxu0 0.0
    %1867 = vmatpush1.msra.mxu0 0.0
    %1868 = vmatprep.subr.mxu0 0.0
    %1869 = vmatpush1.msra.mxu0 0.0
    %1870 = vmatprep.subr.mxu0 0.0
    %1871 = vmatpush1.msra.mxu0 0.0
    %1872 = vmatprep.subr.mxu0 0.0
    %1873 = vmatpush1.msra.mxu0 0.0
    %1874 = vmatprep.subr.mxu0 0.0
    %1875 = vmatpush1.msra.mxu0 0.0
    %1876 = vmatprep.subr.mxu0 0.0
    %1877 = vmatpush1.msra.mxu0 0.0
    %1878 = vmatprep.subr.mxu0 0.0
    %1879 = vmatpush1.msra.mxu0 0.0
    %1880 = vmatprep.subr.mxu0 0.0
    %1881 = vmatpush1.msra.mxu0 0.0
    %1882 = vmatprep.subr.mxu0 0.0
    %1883 = vmatpush1.msra.mxu0 0.0
    %1884 = vmatprep.subr.mxu0 0.0
    %1885 = vmatpush1.msra.mxu0 0.0
    %1886 = vmatprep.subr.mxu0 0.0
    %1887 = vmatpush1.msra.mxu0 0.0
    %1888 = vmatprep.subr.mxu0 0.0
    %1889 = vmatpush1.msra.mxu0 0.0
    %1890 = vmatprep.subr.mxu0 0.0
    %1891 = vmatpush1.msra.mxu0 0.0
    %1892 = vmatprep.subr.mxu0 0.0
    %1893 = vmatpush1.msra.mxu0 0.0
    %1894 = vmatprep.subr.mxu0 0.0
    %1895 = vmatpush1.msra.mxu0 0.0
    %1896 = vmatprep.subr.mxu0 0.0
    %1897 = vmatpush1.msra.mxu0 0.0
    %1898 = vmatprep.subr.mxu0 0.0
    %1899 = vmatpush1.msra.mxu0 0.0
    %1900 = vmatprep.subr.mxu0 0.0
    %1901 = vmatpush1.msra.mxu0 0.0
    %1902 = vmatprep.subr.mxu0 0.0
    %1903 = vmatpush1.msra.mxu0 0.0
    %1904 = vmatprep.subr.mxu0 0.0
    %1905 = vmatpush1.msra.mxu0 0.0
    %1906 = vmatprep.subr.mxu0 0.0
    %1907 = vmatpush1.msra.mxu0 0.0
    %1908 = vmatprep.subr.mxu0 0.0
    %1909 = vmatpush1.msra.mxu0 0.0
    %1910 = vmatprep.subr.mxu0 0.0
    %1911 = vmatpush1.msra.mxu0 0.0
    %1912 = vmatprep.subr.mxu0 0.0
    %1913 = vmatpush1.msra.mxu0 0.0
    %1914 = vmatprep.subr.mxu0 0.0
    %1915 = vmatpush1.msra.mxu0 0.0
    %1916 = vmatprep.subr.mxu0 0.0
    %1917 = vmatpush1.msra.mxu0 0.0
    %1918 = vmatprep.subr.mxu0 0.0
    %1919 = vmatpush1.msra.mxu0 0.0
    %1920 = vmatprep.mubr.f32.mxu0 0.0
    %1921 = vmatmul.mubr.f32.gmra.mrb[0].mxu0 %v1854
    %v1922 = vpop.f32.mrb[0].mxu0
    %v1923 = vadd.f32 %v1778, %v1922
    %v1924 = vpop.f32.mrb[0].mxu0
    %v1925 = vadd.f32 %v1780, %v1924
    %1926 = vdwg.mxu0
    %1927 = vmatprep.subr.mxu0 %v850
    %1928 = vmatpush1.msra.mxu0 %v849
    %1929 = vmatprep.subr.mxu0 %v854
    %1930 = vmatpush1.msra.mxu0 %v853
    %1931 = vmatprep.subr.mxu0 %v858
    %1932 = vmatpush1.msra.mxu0 %v857
    %1933 = vmatprep.subr.mxu0 %v862
    %1934 = vmatpush1.msra.mxu0 %v861
    %1935 = vmatprep.subr.mxu0 0.0
    %1936 = vmatpush1.msra.mxu0 0.0
    %1937 = vmatprep.subr.mxu0 0.0
    %1938 = vmatpush1.msra.mxu0 0.0
    %1939 = vmatprep.subr.mxu0 0.0
    %1940 = vmatpush1.msra.mxu0 0.0
    %1941 = vmatprep.subr.mxu0 0.0
    %1942 = vmatpush1.msra.mxu0 0.0
    %1943 = vmatprep.subr.mxu0 0.0
    %1944 = vmatpush1.msra.mxu0 0.0
    %1945 = vmatprep.subr.mxu0 0.0
    %1946 = vmatpush1.msra.mxu0 0.0
    %1947 = vmatprep.subr.mxu0 0.0
    %1948 = vmatpush1.msra.mxu0 0.0
    %1949 = vmatprep.subr.mxu0 0.0
    %1950 = vmatpush1.msra.mxu0 0.0
    %1951 = vmatprep.subr.mxu0 0.0
    %1952 = vmatpush1.msra.mxu0 0.0
    %1953 = vmatprep.subr.mxu0 0.0
    %1954 = vmatpush1.msra.mxu0 0.0
    %1955 = vmatprep.subr.mxu0 0.0
    %1956 = vmatpush1.msra.mxu0 0.0
    %1957 = vmatprep.subr.mxu0 0.0
    %1958 = vmatpush1.msra.mxu0 0.0
    %1959 = vmatprep.subr.mxu0 0.0
    %1960 = vmatpush1.msra.mxu0 0.0
    %1961 = vmatprep.subr.mxu0 0.0
    %1962 = vmatpush1.msra.mxu0 0.0
    %1963 = vmatprep.subr.mxu0 0.0
    %1964 = vmatpush1.msra.mxu0 0.0
    %1965 = vmatprep.subr.mxu0 0.0
    %1966 = vmatpush1.msra.mxu0 0.0
    %1967 = vmatprep.subr.mxu0 0.0
    %1968 = vmatpush1.msra.mxu0 0.0
    %1969 = vmatprep.subr.mxu0 0.0
    %1970 = vmatpush1.msra.mxu0 0.0
    %1971 = vmatprep.subr.mxu0 0.0
    %1972 = vmatpush1.msra.mxu0 0.0
    %1973 = vmatprep.subr.mxu0 0.0
    %1974 = vmatpush1.msra.mxu0 0.0
    %1975 = vmatprep.subr.mxu0 0.0
    %1976 = vmatpush1.msra.mxu0 0.0
    %1977 = vmatprep.subr.mxu0 0.0
    %1978 = vmatpush1.msra.mxu0 0.0
    %1979 = vmatprep.subr.mxu0 0.0
    %1980 = vmatpush1.msra.mxu0 0.0
    %1981 = vmatprep.subr.mxu0 0.0
    %1982 = vmatpush1.msra.mxu0 0.0
    %1983 = vmatprep.subr.mxu0 0.0
    %1984 = vmatpush1.msra.mxu0 0.0
    %1985 = vmatprep.subr.mxu0 0.0
    %1986 = vmatpush1.msra.mxu0 0.0
    %1987 = vmatprep.subr.mxu0 0.0
    %1988 = vmatpush1.msra.mxu0 0.0
    %1989 = vmatprep.subr.mxu0 0.0
    %1990 = vmatpush1.msra.mxu0 0.0
    %1991 = vmatprep.mubr.f32.mxu0 0.0
    %1992 = vmatmul.mubr.f32.gmra.mrb[0].mxu0 %v1854
    %v1993 = vpop.f32.mrb[0].mxu0
    %v1994 = vadd.f32 %v1849, %v1993
    %v1995 = vpop.f32.mrb[0].mxu0
    %v1996 = vadd.f32 %v1851, %v1995
    %1997 = vdwg.mxu0
    %v1998 = vadd.f32 %v1923, %v1171
    %v1999 = vadd.f32 %v1925, %v1175
    %v2000 = vadd.f32 %v1994, %v1179
    %v2001 = vadd.f32 %v1996, %v1183
    %v2002 = vtanh.pop %v1998
    %v2003 = vtanh.pop %v1999
    %v2004 = vtanh.pop %v2000
    %v2005 = vtanh.pop %v2001
    %v2006 = vmul.f32 %v2002, 0.5
    %v2007 = vadd.f32 %v2006, 0.5
    %v2008 = vmul.f32 %v2003, 0.5
    %v2009 = vadd.f32 %v2008, 0.5
    %v2010 = vmul.f32 %v2005, 0.5
    %v2011 = vadd.f32 %v2010, 0.5
    %v2012 = vmul.f32 %v2009, %v1204
    %v2013 = vmul.f32 %v2007, %v2004
    %v2014 = vadd.f32 %v2012, %v2013
    %v2015 = vtanh.pop %v2014
    %v2016 = vmul.f32 %v2011, %v2015
    %2017 = vmatprep.subr.mxu0 %v309
    %2018 = vmatpush1.msra.mxu0 %v308
    %2019 = vmatprep.subr.mxu0 %v313
    %2020 = vmatpush1.msra.mxu0 %v312
    %2021 = vmatprep.subr.mxu0 %v317
    %2022 = vmatpush1.msra.mxu0 %v316
    %2023 = vmatprep.subr.mxu0 %v321
    %2024 = vmatpush1.msra.mxu0 %v320
    %2025 = vmatprep.subr.mxu0 0.0
    %2026 = vmatpush1.msra.mxu0 0.0
    %2027 = vmatprep.subr.mxu0 0.0
    %2028 = vmatpush1.msra.mxu0 0.0
    %2029 = vmatprep.subr.mxu0 0.0
    %2030 = vmatpush1.msra.mxu0 0.0
    %2031 = vmatprep.subr.mxu0 0.0
    %2032 = vmatpush1.msra.mxu0 0.0
    %2033 = vmatprep.subr.mxu0 0.0
    %2034 = vmatpush1.msra.mxu0 0.0
    %2035 = vmatprep.subr.mxu0 0.0
    %2036 = vmatpush1.msra.mxu0 0.0
    %2037 = vmatprep.subr.mxu0 0.0
    %2038 = vmatpush1.msra.mxu0 0.0
    %2039 = vmatprep.subr.mxu0 0.0
    %2040 = vmatpush1.msra.mxu0 0.0
    %2041 = vmatprep.subr.mxu0 0.0
    %2042 = vmatpush1.msra.mxu0 0.0
    %2043 = vmatprep.subr.mxu0 0.0
    %2044 = vmatpush1.msra.mxu0 0.0
    %2045 = vmatprep.subr.mxu0 0.0
    %2046 = vmatpush1.msra.mxu0 0.0
    %2047 = vmatprep.subr.mxu0 0.0
    %2048 = vmatpush1.msra.mxu0 0.0
    %2049 = vmatprep.subr.mxu0 0.0
    %2050 = vmatpush1.msra.mxu0 0.0
    %2051 = vmatprep.subr.mxu0 0.0
    %2052 = vmatpush1.msra.mxu0 0.0
    %2053 = vmatprep.subr.mxu0 0.0
    %2054 = vmatpush1.msra.mxu0 0.0
    %2055 = vmatprep.subr.mxu0 0.0
    %2056 = vmatpush1.msra.mxu0 0.0
    %2057 = vmatprep.subr.mxu0 0.0
    %2058 = vmatpush1.msra.mxu0 0.0
    %2059 = vmatprep.subr.mxu0 0.0
    %2060 = vmatpush1.msra.mxu0 0.0
    %2061 = vmatprep.subr.mxu0 0.0
    %2062 = vmatpush1.msra.mxu0 0.0
    %2063 = vmatprep.subr.mxu0 0.0
    %2064 = vmatpush1.msra.mxu0 0.0
    %2065 = vmatprep.subr.mxu0 0.0
    %2066 = vmatpush1.msra.mxu0 0.0
    %2067 = vmatprep.subr.mxu0 0.0
    %2068 = vmatpush1.msra.mxu0 0.0
    %2069 = vmatprep.subr.mxu0 0.0
    %2070 = vmatpush1.msra.mxu0 0.0
    %2071 = vmatprep.subr.mxu0 0.0
    %2072 = vmatpush1.msra.mxu0 0.0
    %2073 = vmatprep.subr.mxu0 0.0
    %2074 = vmatpush1.msra.mxu0 0.0
    %2075 = vmatprep.subr.mxu0 0.0
    %2076 = vmatpush1.msra.mxu0 0.0
    %2077 = vmatprep.subr.mxu0 0.0
    %2078 = vmatpush1.msra.mxu0 0.0
    %2079 = vmatprep.subr.mxu0 0.0
    %2080 = vmatpush1.msra.mxu0 0.0
    %2081 = vmatprep.mubr.f32.mxu0 0.0
    %2082 = vmatmul.mubr.f32.gmra.mrb[0].mxu0 %v1854
    %v2083 = vpop.f32.mrb[0].mxu0
    %v2084 = vadd.f32 0.0, %v2083
    %v2085 = vpop.f32.mrb[0].mxu0
    %v2086 = vadd.f32 0.0, %v2085
    %2087 = vdwg.mxu0
    %2088 = vmatprep.subr.mxu0 %v311
    %2089 = vmatpush1.msra.mxu0 %v310
    %2090 = vmatprep.subr.mxu0 %v315
    %2091 = vmatpush1.msra.mxu0 %v314
    %2092 = vmatprep.subr.mxu0 %v319
    %2093 = vmatpush1.msra.mxu0 %v318
    %2094 = vmatprep.subr.mxu0 %v323
    %2095 = vmatpush1.msra.mxu0 %v322
    %2096 = vmatprep.subr.mxu0 0.0
    %2097 = vmatpush1.msra.mxu0 0.0
    %2098 = vmatprep.subr.mxu0 0.0
    %2099 = vmatpush1.msra.mxu0 0.0
    %2100 = vmatprep.subr.mxu0 0.0
    %2101 = vmatpush1.msra.mxu0 0.0
    %2102 = vmatprep.subr.mxu0 0.0
    %2103 = vmatpush1.msra.mxu0 0.0
    %2104 = vmatprep.subr.mxu0 0.0
    %2105 = vmatpush1.msra.mxu0 0.0
    %2106 = vmatprep.subr.mxu0 0.0
    %2107 = vmatpush1.msra.mxu0 0.0
    %2108 = vmatprep.subr.mxu0 0.0
    %2109 = vmatpush1.msra.mxu0 0.0
    %2110 = vmatprep.subr.mxu0 0.0
    %2111 = vmatpush1.msra.mxu0 0.0
    %2112 = vmatprep.subr.mxu0 0.0
    %2113 = vmatpush1.msra.mxu0 0.0
    %2114 = vmatprep.subr.mxu0 0.0
    %2115 = vmatpush1.msra.mxu0 0.0
    %2116 = vmatprep.subr.mxu0 0.0
    %2117 = vmatpush1.msra.mxu0 0.0
    %2118 = vmatprep.subr.mxu0 0.0
    %2119 = vmatpush1.msra.mxu0 0.0
    %2120 = vmatprep.subr.mxu0 0.0
    %2121 = vmatpush1.msra.mxu0 0.0
    %2122 = vmatprep.subr.mxu0 0.0
    %2123 = vmatpush1.msra.mxu0 0.0
    %2124 = vmatprep.subr.mxu0 0.0
    %2125 = vmatpush1.msra.mxu0 0.0
    %2126 = vmatprep.subr.mxu0 0.0
    %2127 = vmatpush1.msra.mxu0 0.0
    %2128 = vmatprep.subr.mxu0 0.0
    %2129 = vmatpush1.msra.mxu0 0.0
    %2130 = vmatprep.subr.mxu0 0.0
    %2131 = vmatpush1.msra.mxu0 0.0
    %2132 = vmatprep.subr.mxu0 0.0
    %2133 = vmatpush1.msra.mxu0 0.0
    %2134 = vmatprep.subr.mxu0 0.0
    %2135 = vmatpush1.msra.mxu0 0.0
    %2136 = vmatprep.subr.mxu0 0.0
    %2137 = vmatpush1.msra.mxu0 0.0
    %2138 = vmatprep.subr.mxu0 0.0
    %2139 = vmatpush1.msra.mxu0 0.0
    %2140 = vmatprep.subr.mxu0 0.0
    %2141 = vmatpush1.msra.mxu0 0.0
    %2142 = vmatprep.subr.mxu0 0.0
    %2143 = vmatpush1.msra.mxu0 0.0
    %2144 = vmatprep.subr.mxu0 0.0
    %2145 = vmatpush1.msra.mxu0 0.0
    %2146 = vmatprep.subr.mxu0 0.0
    %2147 = vmatpush1.msra.mxu0 0.0
    %2148 = vmatprep.subr.mxu0 0.0
    %2149 = vmatpush1.msra.mxu0 0.0
    %2150 = vmatprep.subr.mxu0 0.0
    %2151 = vmatpush1.msra.mxu0 0.0
    %2152 = vmatprep.mubr.f32.mxu0 0.0
    %2153 = vmatmul.mubr.f32.gmra.mrb[0].mxu0 %v1854
    %v2154 = vpop.f32.mrb[0].mxu0
    %v2155 = vadd.f32 0.0, %v2154
    %v2156 = vpop.f32.mrb[0].mxu0
    %v2157 = vadd.f32 0.0, %v2156
    %2158 = vdwg.mxu0
    %v2160 = vsel %vm95, %v1707, 0
    %2162 = vmatprep.subr.mxu0 %v292
    %2163 = vmatpush1.msra.mxu0 %v291
    %2164 = vmatprep.subr.mxu0 %v296
    %2165 = vmatpush1.msra.mxu0 %v295
    %2166 = vmatprep.subr.mxu0 %v300
    %2167 = vmatpush1.msra.mxu0 %v299
    %2168 = vmatprep.subr.mxu0 %v304
    %2169 = vmatpush1.msra.mxu0 %v303
    %2170 = vmatprep.subr.mxu0 0.0
    %2171 = vmatpush1.msra.mxu0 0.0
    %2172 = vmatprep.subr.mxu0 0.0
    %2173 = vmatpush1.msra.mxu0 0.0
    %2174 = vmatprep.subr.mxu0 0.0
    %2175 = vmatpush1.msra.mxu0 0.0
    %2176 = vmatprep.subr.mxu0 0.0
    %2177 = vmatpush1.msra.mxu0 0.0
    %2178 = vmatprep.subr.mxu0 0.0
    %2179 = vmatpush1.msra.mxu0 0.0
    %2180 = vmatprep.subr.mxu0 0.0
    %2181 = vmatpush1.msra.mxu0 0.0
    %2182 = vmatprep.subr.mxu0 0.0
    %2183 = vmatpush1.msra.mxu0 0.0
    %2184 = vmatprep.subr.mxu0 0.0
    %2185 = vmatpush1.msra.mxu0 0.0
    %2186 = vmatprep.subr.mxu0 0.0
    %2187 = vmatpush1.msra.mxu0 0.0
    %2188 = vmatprep.subr.mxu0 0.0
    %2189 = vmatpush1.msra.mxu0 0.0
    %2190 = vmatprep.subr.mxu0 0.0
    %2191 = vmatpush1.msra.mxu0 0.0
    %2192 = vmatprep.subr.mxu0 0.0
    %2193 = vmatpush1.msra.mxu0 0.0
    %2194 = vmatprep.subr.mxu0 0.0
    %2195 = vmatpush1.msra.mxu0 0.0
    %2196 = vmatprep.subr.mxu0 0.0
    %2197 = vmatpush1.msra.mxu0 0.0
    %2198 = vmatprep.subr.mxu0 0.0
    %2199 = vmatpush1.msra.mxu0 0.0
    %2200 = vmatprep.subr.mxu0 0.0
    %2201 = vmatpush1.msra.mxu0 0.0
    %2202 = vmatprep.subr.mxu0 0.0
    %2203 = vmatpush1.msra.mxu0 0.0
    %2204 = vmatprep.subr.mxu0 0.0
    %2205 = vmatpush1.msra.mxu0 0.0
    %2206 = vmatprep.subr.mxu0 0.0
    %2207 = vmatpush1.msra.mxu0 0.0
    %2208 = vmatprep.subr.mxu0 0.0
    %2209 = vmatpush1.msra.mxu0 0.0
    %2210 = vmatprep.subr.mxu0 0.0
    %2211 = vmatpush1.msra.mxu0 0.0
    %2212 = vmatprep.subr.mxu0 0.0
    %2213 = vmatpush1.msra.mxu0 0.0
    %2214 = vmatprep.subr.mxu0 0.0
    %2215 = vmatpush1.msra.mxu0 0.0
    %2216 = vmatprep.subr.mxu0 0.0
    %2217 = vmatpush1.msra.mxu0 0.0
    %2218 = vmatprep.subr.mxu0 0.0
    %2219 = vmatpush1.msra.mxu0 0.0
    %2220 = vmatprep.subr.mxu0 0.0
    %2221 = vmatpush1.msra.mxu0 0.0
    %2222 = vmatprep.subr.mxu0 0.0
    %2223 = vmatpush1.msra.mxu0 0.0
    %2224 = vmatprep.subr.mxu0 0.0
    %2225 = vmatpush1.msra.mxu0 0.0
    %2226 = vmatprep.mubr.f32.mxu0 0.0
    %2227 = vmatmul.mubr.f32.gmra.mrb[0].mxu0 %v2160
    %v2228 = vpop.f32.mrb[0].mxu0
    %v2229 = vadd.f32 %v2084, %v2228
    %v2230 = vpop.f32.mrb[0].mxu0
    %v2231 = vadd.f32 %v2086, %v2230
    %2232 = vdwg.mxu0
    %2233 = vmatprep.subr.mxu0 %v294
    %2234 = vmatpush1.msra.mxu0 %v293
    %2235 = vmatprep.subr.mxu0 %v298
    %2236 = vmatpush1.msra.mxu0 %v297
    %2237 = vmatprep.subr.mxu0 %v302
    %2238 = vmatpush1.msra.mxu0 %v301
    %2239 = vmatprep.subr.mxu0 %v306
    %2240 = vmatpush1.msra.mxu0 %v305
    %2241 = vmatprep.subr.mxu0 0.0
    %2242 = vmatpush1.msra.mxu0 0.0
    %2243 = vmatprep.subr.mxu0 0.0
    %2244 = vmatpush1.msra.mxu0 0.0
    %2245 = vmatprep.subr.mxu0 0.0
    %2246 = vmatpush1.msra.mxu0 0.0
    %2247 = vmatprep.subr.mxu0 0.0
    %2248 = vmatpush1.msra.mxu0 0.0
    %2249 = vmatprep.subr.mxu0 0.0
    %2250 = vmatpush1.msra.mxu0 0.0
    %2251 = vmatprep.subr.mxu0 0.0
    %2252 = vmatpush1.msra.mxu0 0.0
    %2253 = vmatprep.subr.mxu0 0.0
    %2254 = vmatpush1.msra.mxu0 0.0
    %2255 = vmatprep.subr.mxu0 0.0
    %2256 = vmatpush1.msra.mxu0 0.0
    %2257 = vmatprep.subr.mxu0 0.0
    %2258 = vmatpush1.msra.mxu0 0.0
    %2259 = vmatprep.subr.mxu0 0.0
    %2260 = vmatpush1.msra.mxu0 0.0
    %2261 = vmatprep.subr.mxu0 0.0
    %2262 = vmatpush1.msra.mxu0 0.0
    %2263 = vmatprep.subr.mxu0 0.0
    %2264 = vmatpush1.msra.mxu0 0.0
    %2265 = vmatprep.subr.mxu0 0.0
    %2266 = vmatpush1.msra.mxu0 0.0
    %2267 = vmatprep.subr.mxu0 0.0
    %2268 = vmatpush1.msra.mxu0 0.0
    %2269 = vmatprep.subr.mxu0 0.0
    %2270 = vmatpush1.msra.mxu0 0.0
    %2271 = vmatprep.subr.mxu0 0.0
    %2272 = vmatpush1.msra.mxu0 0.0
    %2273 = vmatprep.subr.mxu0 0.0
    %2274 = vmatpush1.msra.mxu0 0.0
    %2275 = vmatprep.subr.mxu0 0.0
    %2276 = vmatpush1.msra.mxu0 0.0
    %2277 = vmatprep.subr.mxu0 0.0
    %2278 = vmatpush1.msra.mxu0 0.0
    %2279 = vmatprep.subr.mxu0 0.0
    %2280 = vmatpush1.msra.mxu0 0.0
    %2281 = vmatprep.subr.mxu0 0.0
    %2282 = vmatpush1.msra.mxu0 0.0
    %2283 = vmatprep.subr.mxu0 0.0
    %2284 = vmatpush1.msra.mxu0 0.0
    %2285 = vmatprep.subr.mxu0 0.0
    %2286 = vmatpush1.msra.mxu0 0.0
    %2287 = vmatprep.subr.mxu0 0.0
    %2288 = vmatpush1.msra.mxu0 0.0
    %2289 = vmatprep.subr.mxu0 0.0
    %2290 = vmatpush1.msra.mxu0 0.0
    %2291 = vmatprep.subr.mxu0 0.0
    %2292 = vmatpush1.msra.mxu0 0.0
    %2293 = vmatprep.subr.mxu0 0.0
    %2294 = vmatpush1.msra.mxu0 0.0
    %2295 = vmatprep.subr.mxu0 0.0
    %2296 = vmatpush1.msra.mxu0 0.0
    %2297 = vmatprep.mubr.f32.mxu0 0.0
    %2298 = vmatmul.mubr.f32.gmra.mrb[0].mxu0 %v2160
    %v2299 = vpop.f32.mrb[0].mxu0
    %v2300 = vadd.f32 %v2155, %v2299
    %v2301 = vpop.f32.mrb[0].mxu0
    %v2302 = vadd.f32 %v2157, %v2301
    %2303 = vdwg.mxu0
    %v2304 = vadd.f32 %v2229, %v615
    %v2305 = vadd.f32 %v2231, %v619
    %v2306 = vadd.f32 %v2300, %v623
    %v2307 = vadd.f32 %v2302, %v627
    %v2308 = vtanh.pop %v2304
    %v2309 = vtanh.pop %v2305
    %v2310 = vtanh.pop %v2306
    %v2311 = vtanh.pop %v2307
    %v2312 = vmul.f32 %v2308, 0.5
    %v2313 = vadd.f32 %v2312, 0.5
    %v2314 = vmul.f32 %v2309, 0.5
    %v2315 = vadd.f32 %v2314, 0.5
    %v2316 = vmul.f32 %v2311, 0.5
    %v2317 = vadd.f32 %v2316, 0.5
    %v2318 = vmul.f32 %v2315, %v1510
    %v2319 = vmul.f32 %v2313, %v2310
    %v2320 = vadd.f32 %v2318, %v2319
    %v2321 = vtanh.pop %v2320
    %v2322 = vmul.f32 %v2317, %v2321
    %s2323 = sld [smem:[#allocation3 + $0x3]]
    %v2324 = vstv %s2323
    %v2325 = vmul.f32 %v2324, %v70
    %2326 = vmatprep.subr.mxu0 %v80
    %2327 = vmatpush1.msra.mxu0 %v79
    %2328 = vmatprep.subr.mxu0 %v84
    %2329 = vmatpush1.msra.mxu0 %v83
    %2330 = vmatprep.subr.mxu0 %v88
    %2331 = vmatpush1.msra.mxu0 %v87
    %2332 = vmatprep.subr.mxu0 %v92
    %2333 = vmatpush1.msra.mxu0 %v91
    %2334 = vmatprep.subr.mxu0 0.0
    %2335 = vmatpush1.msra.mxu0 0.0
    %2336 = vmatprep.subr.mxu0 0.0
    %2337 = vmatpush1.msra.mxu0 0.0
    %2338 = vmatprep.subr.mxu0 0.0
    %2339 = vmatpush1.msra.mxu0 0.0
    %2340 = vmatprep.subr.mxu0 0.0
    %2341 = vmatpush1.msra.mxu0 0.0
    %2342 = vmatprep.subr.mxu0 0.0
    %2343 = vmatpush1.msra.mxu0 0.0
    %2344 = vmatprep.subr.mxu0 0.0
    %2345 = vmatpush1.msra.mxu0 0.0
    %2346 = vmatprep.subr.mxu0 0.0
    %2347 = vmatpush1.msra.mxu0 0.0
    %2348 = vmatprep.subr.mxu0 0.0
    %2349 = vmatpush1.msra.mxu0 0.0
    %2350 = vmatprep.subr.mxu0 0.0
    %2351 = vmatpush1.msra.mxu0 0.0
    %2352 = vmatprep.subr.mxu0 0.0
    %2353 = vmatpush1.msra.mxu0 0.0
    %2354 = vmatprep.subr.mxu0 0.0
    %2355 = vmatpush1.msra.mxu0 0.0
    %2356 = vmatprep.subr.mxu0 0.0
    %2357 = vmatpush1.msra.mxu0 0.0
    %2358 = vmatprep.subr.mxu0 0.0
    %2359 = vmatpush1.msra.mxu0 0.0
    %2360 = vmatprep.subr.mxu0 0.0
    %2361 = vmatpush1.msra.mxu0 0.0
    %2362 = vmatprep.subr.mxu0 0.0
    %2363 = vmatpush1.msra.mxu0 0.0
    %2364 = vmatprep.subr.mxu0 0.0
    %2365 = vmatpush1.msra.mxu0 0.0
    %2366 = vmatprep.subr.mxu0 0.0
    %2367 = vmatpush1.msra.mxu0 0.0
    %2368 = vmatprep.subr.mxu0 0.0
    %2369 = vmatpush1.msra.mxu0 0.0
    %2370 = vmatprep.subr.mxu0 0.0
    %2371 = vmatpush1.msra.mxu0 0.0
    %2372 = vmatprep.subr.mxu0 0.0
    %2373 = vmatpush1.msra.mxu0 0.0
    %2374 = vmatprep.subr.mxu0 0.0
    %2375 = vmatpush1.msra.mxu0 0.0
    %2376 = vmatprep.subr.mxu0 0.0
    %2377 = vmatpush1.msra.mxu0 0.0
    %2378 = vmatprep.subr.mxu0 0.0
    %2379 = vmatpush1.msra.mxu0 0.0
    %2380 = vmatprep.subr.mxu0 0.0
    %2381 = vmatpush1.msra.mxu0 0.0
    %2382 = vmatprep.subr.mxu0 0.0
    %2383 = vmatpush1.msra.mxu0 0.0
    %2384 = vmatprep.subr.mxu0 0.0
    %2385 = vmatpush1.msra.mxu0 0.0
    %2386 = vmatprep.subr.mxu0 0.0
    %2387 = vmatpush1.msra.mxu0 0.0
    %2388 = vmatprep.subr.mxu0 0.0
    %2389 = vmatpush1.msra.mxu0 0.0
    %2390 = vmatprep.mubr.f32.mxu0 0.0
    %2391 = vmatmul.mubr.f32.gmra.mrb[0].mxu0 %v2160
    %v2392 = vpop.f32.mrb[0].mxu0
    %v2393 = vadd.f32 0.0, %v2392
    %v2394 = vpop.f32.mrb[0].mxu0
    %v2395 = vadd.f32 0.0, %v2394
    %2396 = vdwg.mxu0
    %2397 = vmatprep.subr.mxu0 %v82
    %2398 = vmatpush1.msra.mxu0 %v81
    %2399 = vmatprep.subr.mxu0 %v86
    %2400 = vmatpush1.msra.mxu0 %v85
    %2401 = vmatprep.subr.mxu0 %v90
    %2402 = vmatpush1.msra.mxu0 %v89
    %2403 = vmatprep.subr.mxu0 %v94
    %2404 = vmatpush1.msra.mxu0 %v93
    %2405 = vmatprep.subr.mxu0 0.0
    %2406 = vmatpush1.msra.mxu0 0.0
    %2407 = vmatprep.subr.mxu0 0.0
    %2408 = vmatpush1.msra.mxu0 0.0
    %2409 = vmatprep.subr.mxu0 0.0
    %2410 = vmatpush1.msra.mxu0 0.0
    %2411 = vmatprep.subr.mxu0 0.0
    %2412 = vmatpush1.msra.mxu0 0.0
    %2413 = vmatprep.subr.mxu0 0.0
    %2414 = vmatpush1.msra.mxu0 0.0
    %2415 = vmatprep.subr.mxu0 0.0
    %2416 = vmatpush1.msra.mxu0 0.0
    %2417 = vmatprep.subr.mxu0 0.0
    %2418 = vmatpush1.msra.mxu0 0.0
    %2419 = vmatprep.subr.mxu0 0.0
    %2420 = vmatpush1.msra.mxu0 0.0
    %2421 = vmatprep.subr.mxu0 0.0
    %2422 = vmatpush1.msra.mxu0 0.0
    %2423 = vmatprep.subr.mxu0 0.0
    %2424 = vmatpush1.msra.mxu0 0.0
    %2425 = vmatprep.subr.mxu0 0.0
    %2426 = vmatpush1.msra.mxu0 0.0
    %2427 = vmatprep.subr.mxu0 0.0
    %2428 = vmatpush1.msra.mxu0 0.0
    %2429 = vmatprep.subr.mxu0 0.0
    %2430 = vmatpush1.msra.mxu0 0.0
    %2431 = vmatprep.subr.mxu0 0.0
    %2432 = vmatpush1.msra.mxu0 0.0
    %2433 = vmatprep.subr.mxu0 0.0
    %2434 = vmatpush1.msra.mxu0 0.0
    %2435 = vmatprep.subr.mxu0 0.0
    %2436 = vmatpush1.msra.mxu0 0.0
    %2437 = vmatprep.subr.mxu0 0.0
    %2438 = vmatpush1.msra.mxu0 0.0
    %2439 = vmatprep.subr.mxu0 0.0
    %2440 = vmatpush1.msra.mxu0 0.0
    %2441 = vmatprep.subr.mxu0 0.0
    %2442 = vmatpush1.msra.mxu0 0.0
    %2443 = vmatprep.subr.mxu0 0.0
    %2444 = vmatpush1.msra.mxu0 0.0
    %2445 = vmatprep.subr.mxu0 0.0
    %2446 = vmatpush1.msra.mxu0 0.0
    %2447 = vmatprep.subr.mxu0 0.0
    %2448 = vmatpush1.msra.mxu0 0.0
    %2449 = vmatprep.subr.mxu0 0.0
    %2450 = vmatpush1.msra.mxu0 0.0
    %2451 = vmatprep.subr.mxu0 0.0
    %2452 = vmatpush1.msra.mxu0 0.0
    %2453 = vmatprep.subr.mxu0 0.0
    %2454 = vmatpush1.msra.mxu0 0.0
    %2455 = vmatprep.subr.mxu0 0.0
    %2456 = vmatpush1.msra.mxu0 0.0
    %2457 = vmatprep.subr.mxu0 0.0
    %2458 = vmatpush1.msra.mxu0 0.0
    %2459 = vmatprep.subr.mxu0 0.0
    %2460 = vmatpush1.msra.mxu0 0.0
    %2461 = vmatprep.mubr.f32.mxu0 0.0
    %2462 = vmatmul.mubr.f32.gmra.mrb[0].mxu0 %v2160
    %v2463 = vpop.f32.mrb[0].mxu0
    %v2464 = vadd.f32 0.0, %v2463
    %v2465 = vpop.f32.mrb[0].mxu0
    %v2466 = vadd.f32 0.0, %v2465
    %2467 = vdwg.mxu0
    %v2472 = vcombine.low %v2393, %v2395
    %v2473 = vcombine.low %v2464, %v2466
    %v2475 = vunpack.c.l.s4 1966171168
    %v2476 = vunpack.c.0.s8 %v2475
    %v2477 = vlaneseq
    %v2478 = vshrl.u32 %v2477, 7
    %v2479 = vsub.s32 %v2476, %v2478
    %v2480 = vrot.slane %v2472, %v2479
    %v2482 = vunpack.c.l.s4 1966171168
    %v2483 = vunpack.c.0.s8 %v2482
    %v2484 = vlaneseq
    %v2485 = vshrl.u32 %v2484, 7
    %v2486 = vsub.s32 %v2483, %v2485
    %v2487 = vrot.slane %v2473, %v2486
    %v2488 = vcombine.low %v2480, %v2487
    %v2490 = vunpack.c.l.s4 1966171168
    %v2491 = vunpack.c.0.s8 %v2490
    %v2492 = vlaneseq
    %v2493 = vshrl.u32 %v2492, 7
    %v2494 = vsub.s32 %v2491, %v2493
    %v2495 = vrot.slane %v2488, %v2494
    %v2497 = vadd.f32 %v2325, %v2495
    %v2498 = vadd.f32 %v2497, %v71
    %v2499 = vtanh.pop %v2498
    %v2500 = vmul.f32 %v2499, 0.5
    %v2501 = vadd.f32 %v2500, 0.5
    %v2503 = vrot.slane %v2499, 1
    %v2505 = vmul.f32 %v2503, 0.5
    %v2506 = vadd.f32 %v2505, 0.5
    %v2507 = vrot.slane %v2499, 3
    %v2509 = vmul.f32 %v2507, 0.5
    %v2510 = vadd.f32 %v2509, 0.5
    %v2511 = vmul.f32 %v2506, %v1705
    %v2512 = vrot.slane %v2499, 2
    %v2514 = vmul.f32 %v2501, %v2512
    %v2515 = vadd.f32 %v2511, %v2514
    %v2516 = vtanh.pop %v2515
    %v2517 = vmul.f32 %v2510, %v2516
    %v2519 = vsel %vm95, %v2016, 0
    %2521 = vmatprep.subr.mxu0 %v865
    %2522 = vmatpush1.msra.mxu0 %v864
    %2523 = vmatprep.subr.mxu0 %v869
    %2524 = vmatpush1.msra.mxu0 %v868
    %2525 = vmatprep.subr.mxu0 %v873
    %2526 = vmatpush1.msra.mxu0 %v872
    %2527 = vmatprep.subr.mxu0 %v877
    %2528 = vmatpush1.msra.mxu0 %v876
    %2529 = vmatprep.subr.mxu0 0.0
    %2530 = vmatpush1.msra.mxu0 0.0
    %2531 = vmatprep.subr.mxu0 0.0
    %2532 = vmatpush1.msra.mxu0 0.0
    %2533 = vmatprep.subr.mxu0 0.0
    %2534 = vmatpush1.msra.mxu0 0.0
    %2535 = vmatprep.subr.mxu0 0.0
    %2536 = vmatpush1.msra.mxu0 0.0
    %2537 = vmatprep.subr.mxu0 0.0
    %2538 = vmatpush1.msra.mxu0 0.0
    %2539 = vmatprep.subr.mxu0 0.0
    %2540 = vmatpush1.msra.mxu0 0.0
    %2541 = vmatprep.subr.mxu0 0.0
    %2542 = vmatpush1.msra.mxu0 0.0
    %2543 = vmatprep.subr.mxu0 0.0
    %2544 = vmatpush1.msra.mxu0 0.0
    %2545 = vmatprep.subr.mxu0 0.0
    %2546 = vmatpush1.msra.mxu0 0.0
    %2547 = vmatprep.subr.mxu0 0.0
    %2548 = vmatpush1.msra.mxu0 0.0
    %2549 = vmatprep.subr.mxu0 0.0
    %2550 = vmatpush1.msra.mxu0 0.0
    %2551 = vmatprep.subr.mxu0 0.0
    %2552 = vmatpush1.msra.mxu0 0.0
    %2553 = vmatprep.subr.mxu0 0.0
    %2554 = vmatpush1.msra.mxu0 0.0
    %2555 = vmatprep.subr.mxu0 0.0
    %2556 = vmatpush1.msra.mxu0 0.0
    %2557 = vmatprep.subr.mxu0 0.0
    %2558 = vmatpush1.msra.mxu0 0.0
    %2559 = vmatprep.subr.mxu0 0.0
    %2560 = vmatpush1.msra.mxu0 0.0
    %2561 = vmatprep.subr.mxu0 0.0
    %2562 = vmatpush1.msra.mxu0 0.0
    %2563 = vmatprep.subr.mxu0 0.0
    %2564 = vmatpush1.msra.mxu0 0.0
    %2565 = vmatprep.subr.mxu0 0.0
    %2566 = vmatpush1.msra.mxu0 0.0
    %2567 = vmatprep.subr.mxu0 0.0
    %2568 = vmatpush1.msra.mxu0 0.0
    %2569 = vmatprep.subr.mxu0 0.0
    %2570 = vmatpush1.msra.mxu0 0.0
    %2571 = vmatprep.subr.mxu0 0.0
    %2572 = vmatpush1.msra.mxu0 0.0
    %2573 = vmatprep.subr.mxu0 0.0
    %2574 = vmatpush1.msra.mxu0 0.0
    %2575 = vmatprep.subr.mxu0 0.0
    %2576 = vmatpush1.msra.mxu0 0.0
    %2577 = vmatprep.subr.mxu0 0.0
    %2578 = vmatpush1.msra.mxu0 0.0
    %2579 = vmatprep.subr.mxu0 0.0
    %2580 = vmatpush1.msra.mxu0 0.0
    %2581 = vmatprep.subr.mxu0 0.0
    %2582 = vmatpush1.msra.mxu0 0.0
    %2583 = vmatprep.subr.mxu0 0.0
    %2584 = vmatpush1.msra.mxu0 0.0
    %2585 = vmatprep.mubr.f32.mxu0 0.0
    %2586 = vmatmul.mubr.f32.gmra.mrb[0].mxu0 %v2519
    %v2587 = vpop.f32.mrb[0].mxu0
    %v2588 = vadd.f32 0.0, %v2587
    %v2589 = vpop.f32.mrb[0].mxu0
    %v2590 = vadd.f32 0.0, %v2589
    %2591 = vdwg.mxu0
    %2592 = vmatprep.subr.mxu0 %v867
    %2593 = vmatpush1.msra.mxu0 %v866
    %2594 = vmatprep.subr.mxu0 %v871
    %2595 = vmatpush1.msra.mxu0 %v870
    %2596 = vmatprep.subr.mxu0 %v875
    %2597 = vmatpush1.msra.mxu0 %v874
    %2598 = vmatprep.subr.mxu0 %v879
    %2599 = vmatpush1.msra.mxu0 %v878
    %2600 = vmatprep.subr.mxu0 0.0
    %2601 = vmatpush1.msra.mxu0 0.0
    %2602 = vmatprep.subr.mxu0 0.0
    %2603 = vmatpush1.msra.mxu0 0.0
    %2604 = vmatprep.subr.mxu0 0.0
    %2605 = vmatpush1.msra.mxu0 0.0
    %2606 = vmatprep.subr.mxu0 0.0
    %2607 = vmatpush1.msra.mxu0 0.0
    %2608 = vmatprep.subr.mxu0 0.0
    %2609 = vmatpush1.msra.mxu0 0.0
    %2610 = vmatprep.subr.mxu0 0.0
    %2611 = vmatpush1.msra.mxu0 0.0
    %2612 = vmatprep.subr.mxu0 0.0
    %2613 = vmatpush1.msra.mxu0 0.0
    %2614 = vmatprep.subr.mxu0 0.0
    %2615 = vmatpush1.msra.mxu0 0.0
    %2616 = vmatprep.subr.mxu0 0.0
    %2617 = vmatpush1.msra.mxu0 0.0
    %2618 = vmatprep.subr.mxu0 0.0
    %2619 = vmatpush1.msra.mxu0 0.0
    %2620 = vmatprep.subr.mxu0 0.0
    %2621 = vmatpush1.msra.mxu0 0.0
    %2622 = vmatprep.subr.mxu0 0.0
    %2623 = vmatpush1.msra.mxu0 0.0
    %2624 = vmatprep.subr.mxu0 0.0
    %2625 = vmatpush1.msra.mxu0 0.0
    %2626 = vmatprep.subr.mxu0 0.0
    %2627 = vmatpush1.msra.mxu0 0.0
    %2628 = vmatprep.subr.mxu0 0.0
    %2629 = vmatpush1.msra.mxu0 0.0
    %2630 = vmatprep.subr.mxu0 0.0
    %2631 = vmatpush1.msra.mxu0 0.0
    %2632 = vmatprep.subr.mxu0 0.0
    %2633 = vmatpush1.msra.mxu0 0.0
    %2634 = vmatprep.subr.mxu0 0.0
    %2635 = vmatpush1.msra.mxu0 0.0
    %2636 = vmatprep.subr.mxu0 0.0
    %2637 = vmatpush1.msra.mxu0 0.0
    %2638 = vmatprep.subr.mxu0 0.0
    %2639 = vmatpush1.msra.mxu0 0.0
    %2640 = vmatprep.subr.mxu0 0.0
    %2641 = vmatpush1.msra.mxu0 0.0
    %2642 = vmatprep.subr.mxu0 0.0
    %2643 = vmatpush1.msra.mxu0 0.0
    %2644 = vmatprep.subr.mxu0 0.0
    %2645 = vmatpush1.msra.mxu0 0.0
    %2646 = vmatprep.subr.mxu0 0.0
    %2647 = vmatpush1.msra.mxu0 0.0
    %2648 = vmatprep.subr.mxu0 0.0
    %2649 = vmatpush1.msra.mxu0 0.0
    %2650 = vmatprep.subr.mxu0 0.0
    %2651 = vmatpush1.msra.mxu0 0.0
    %2652 = vmatprep.subr.mxu0 0.0
    %2653 = vmatpush1.msra.mxu0 0.0
    %2654 = vmatprep.subr.mxu0 0.0
    %2655 = vmatpush1.msra.mxu0 0.0
    %2656 = vmatprep.mubr.f32.mxu0 0.0
    %2657 = vmatmul.mubr.f32.gmra.mrb[0].mxu0 %v2519
    %v2658 = vpop.f32.mrb[0].mxu0
    %v2659 = vadd.f32 0.0, %v2658
    %v2660 = vpop.f32.mrb[0].mxu0
    %v2661 = vadd.f32 0.0, %v2660
    %2662 = vdwg.mxu0
    %v2664 = vsel %vm95, %v2322, 0
    %2666 = vmatprep.subr.mxu0 %v848
    %2667 = vmatpush1.msra.mxu0 %v847
    %2668 = vmatprep.subr.mxu0 %v852
    %2669 = vmatpush1.msra.mxu0 %v851
    %2670 = vmatprep.subr.mxu0 %v856
    %2671 = vmatpush1.msra.mxu0 %v855
    %2672 = vmatprep.subr.mxu0 %v860
    %2673 = vmatpush1.msra.mxu0 %v859
    %2674 = vmatprep.subr.mxu0 0.0
    %2675 = vmatpush1.msra.mxu0 0.0
    %2676 = vmatprep.subr.mxu0 0.0
    %2677 = vmatpush1.msra.mxu0 0.0
    %2678 = vmatprep.subr.mxu0 0.0
    %2679 = vmatpush1.msra.mxu0 0.0
    %2680 = vmatprep.subr.mxu0 0.0
    %2681 = vmatpush1.msra.mxu0 0.0
    %2682 = vmatprep.subr.mxu0 0.0
    %2683 = vmatpush1.msra.mxu0 0.0
    %2684 = vmatprep.subr.mxu0 0.0
    %2685 = vmatpush1.msra.mxu0 0.0
    %2686 = vmatprep.subr.mxu0 0.0
    %2687 = vmatpush1.msra.mxu0 0.0
    %2688 = vmatprep.subr.mxu0 0.0
    %2689 = vmatpush1.msra.mxu0 0.0
    %2690 = vmatprep.subr.mxu0 0.0
    %2691 = vmatpush1.msra.mxu0 0.0
    %2692 = vmatprep.subr.mxu0 0.0
    %2693 = vmatpush1.msra.mxu0 0.0
    %2694 = vmatprep.subr.mxu0 0.0
    %2695 = vmatpush1.msra.mxu0 0.0
    %2696 = vmatprep.subr.mxu0 0.0
    %2697 = vmatpush1.msra.mxu0 0.0
    %2698 = vmatprep.subr.mxu0 0.0
    %2699 = vmatpush1.msra.mxu0 0.0
    %2700 = vmatprep.subr.mxu0 0.0
    %2701 = vmatpush1.msra.mxu0 0.0
    %2702 = vmatprep.subr.mxu0 0.0
    %2703 = vmatpush1.msra.mxu0 0.0
    %2704 = vmatprep.subr.mxu0 0.0
    %2705 = vmatpush1.msra.mxu0 0.0
    %2706 = vmatprep.subr.mxu0 0.0
    %2707 = vmatpush1.msra.mxu0 0.0
    %2708 = vmatprep.subr.mxu0 0.0
    %2709 = vmatpush1.msra.mxu0 0.0
    %2710 = vmatprep.subr.mxu0 0.0
    %2711 = vmatpush1.msra.mxu0 0.0
    %2712 = vmatprep.subr.mxu0 0.0
    %2713 = vmatpush1.msra.mxu0 0.0
    %2714 = vmatprep.subr.mxu0 0.0
    %2715 = vmatpush1.msra.mxu0 0.0
    %2716 = vmatprep.subr.mxu0 0.0
    %2717 = vmatpush1.msra.mxu0 0.0
    %2718 = vmatprep.subr.mxu0 0.0
    %2719 = vmatpush1.msra.mxu0 0.0
    %2720 = vmatprep.subr.mxu0 0.0
    %2721 = vmatpush1.msra.mxu0 0.0
    %2722 = vmatprep.subr.mxu0 0.0
    %2723 = vmatpush1.msra.mxu0 0.0
    %2724 = vmatprep.subr.mxu0 0.0
    %2725 = vmatpush1.msra.mxu0 0.0
    %2726 = vmatprep.subr.mxu0 0.0
    %2727 = vmatpush1.msra.mxu0 0.0
    %2728 = vmatprep.subr.mxu0 0.0
    %2729 = vmatpush1.msra.mxu0 0.0
    %2730 = vmatprep.mubr.f32.mxu0 0.0
    %2731 = vmatmul.mubr.f32.gmra.mrb[0].mxu0 %v2664
    %v2732 = vpop.f32.mrb[0].mxu0
    %v2733 = vadd.f32 %v2588, %v2732
    %v2734 = vpop.f32.mrb[0].mxu0
    %v2735 = vadd.f32 %v2590, %v2734
    %2736 = vdwg.mxu0
    %2737 = vmatprep.subr.mxu0 %v850
    %2738 = vmatpush1.msra.mxu0 %v849
    %2739 = vmatprep.subr.mxu0 %v854
    %2740 = vmatpush1.msra.mxu0 %v853
    %2741 = vmatprep.subr.mxu0 %v858
    %2742 = vmatpush1.msra.mxu0 %v857
    %2743 = vmatprep.subr.mxu0 %v862
    %2744 = vmatpush1.msra.mxu0 %v861
    %2745 = vmatprep.subr.mxu0 0.0
    %2746 = vmatpush1.msra.mxu0 0.0
    %2747 = vmatprep.subr.mxu0 0.0
    %2748 = vmatpush1.msra.mxu0 0.0
    %2749 = vmatprep.subr.mxu0 0.0
    %2750 = vmatpush1.msra.mxu0 0.0
    %2751 = vmatprep.subr.mxu0 0.0
    %2752 = vmatpush1.msra.mxu0 0.0
    %2753 = vmatprep.subr.mxu0 0.0
    %2754 = vmatpush1.msra.mxu0 0.0
    %2755 = vmatprep.subr.mxu0 0.0
    %2756 = vmatpush1.msra.mxu0 0.0
    %2757 = vmatprep.subr.mxu0 0.0
    %2758 = vmatpush1.msra.mxu0 0.0
    %2759 = vmatprep.subr.mxu0 0.0
    %2760 = vmatpush1.msra.mxu0 0.0
    %2761 = vmatprep.subr.mxu0 0.0
    %2762 = vmatpush1.msra.mxu0 0.0
    %2763 = vmatprep.subr.mxu0 0.0
    %2764 = vmatpush1.msra.mxu0 0.0
    %2765 = vmatprep.subr.mxu0 0.0
    %2766 = vmatpush1.msra.mxu0 0.0
    %2767 = vmatprep.subr.mxu0 0.0
    %2768 = vmatpush1.msra.mxu0 0.0
    %2769 = vmatprep.subr.mxu0 0.0
    %2770 = vmatpush1.msra.mxu0 0.0
    %2771 = vmatprep.subr.mxu0 0.0
    %2772 = vmatpush1.msra.mxu0 0.0
    %2773 = vmatprep.subr.mxu0 0.0
    %2774 = vmatpush1.msra.mxu0 0.0
    %2775 = vmatprep.subr.mxu0 0.0
    %2776 = vmatpush1.msra.mxu0 0.0
    %2777 = vmatprep.subr.mxu0 0.0
    %2778 = vmatpush1.msra.mxu0 0.0
    %2779 = vmatprep.subr.mxu0 0.0
    %2780 = vmatpush1.msra.mxu0 0.0
    %2781 = vmatprep.subr.mxu0 0.0
    %2782 = vmatpush1.msra.mxu0 0.0
    %2783 = vmatprep.subr.mxu0 0.0
    %2784 = vmatpush1.msra.mxu0 0.0
    %2785 = vmatprep.subr.mxu0 0.0
    %2786 = vmatpush1.msra.mxu0 0.0
    %2787 = vmatprep.subr.mxu0 0.0
    %2788 = vmatpush1.msra.mxu0 0.0
    %2789 = vmatprep.subr.mxu0 0.0
    %2790 = vmatpush1.msra.mxu0 0.0
    %2791 = vmatprep.subr.mxu0 0.0
    %2792 = vmatpush1.msra.mxu0 0.0
    %2793 = vmatprep.subr.mxu0 0.0
    %2794 = vmatpush1.msra.mxu0 0.0
    %2795 = vmatprep.subr.mxu0 0.0
    %2796 = vmatpush1.msra.mxu0 0.0
    %2797 = vmatprep.subr.mxu0 0.0
    %2798 = vmatpush1.msra.mxu0 0.0
    %2799 = vmatprep.subr.mxu0 0.0
    %2800 = vmatpush1.msra.mxu0 0.0
    %2801 = vmatprep.mubr.f32.mxu0 0.0
    %2802 = vmatmul.mubr.f32.gmra.mrb[0].mxu0 %v2664
    %v2803 = vpop.f32.mrb[0].mxu0
    %v2804 = vadd.f32 %v2659, %v2803
    %v2805 = vpop.f32.mrb[0].mxu0
    %v2806 = vadd.f32 %v2661, %v2805
    %2807 = vdwg.mxu0
    %v2808 = vadd.f32 %v2733, %v1171
    %v2809 = vadd.f32 %v2735, %v1175
    %v2810 = vadd.f32 %v2804, %v1179
    %v2811 = vadd.f32 %v2806, %v1183
    %v2812 = vtanh.pop %v2808
    %v2813 = vtanh.pop %v2809
    %v2814 = vtanh.pop %v2810
    %v2815 = vtanh.pop %v2811
    %v2816 = vmul.f32 %v2812, 0.5
    %v2817 = vadd.f32 %v2816, 0.5
    %v2818 = vmul.f32 %v2813, 0.5
    %v2819 = vadd.f32 %v2818, 0.5
    %v2820 = vmul.f32 %v2815, 0.5
    %v2821 = vadd.f32 %v2820, 0.5
    %v2822 = vmul.f32 %v2819, %v2014
    %v2823 = vmul.f32 %v2817, %v2814
    %v2824 = vadd.f32 %v2822, %v2823
    %v2825 = vtanh.pop %v2824
    %v2826 = vmul.f32 %v2821, %v2825
    %2827 = vmatprep.subr.mxu0 %v309
    %2828 = vmatpush1.msra.mxu0 %v308
    %2829 = vmatprep.subr.mxu0 %v313
    %2830 = vmatpush1.msra.mxu0 %v312
    %2831 = vmatprep.subr.mxu0 %v317
    %2832 = vmatpush1.msra.mxu0 %v316
    %2833 = vmatprep.subr.mxu0 %v321
    %2834 = vmatpush1.msra.mxu0 %v320
    %2835 = vmatprep.subr.mxu0 0.0
    %2836 = vmatpush1.msra.mxu0 0.0
    %2837 = vmatprep.subr.mxu0 0.0
    %2838 = vmatpush1.msra.mxu0 0.0
    %2839 = vmatprep.subr.mxu0 0.0
    %2840 = vmatpush1.msra.mxu0 0.0
    %2841 = vmatprep.subr.mxu0 0.0
    %2842 = vmatpush1.msra.mxu0 0.0
    %2843 = vmatprep.subr.mxu0 0.0
    %2844 = vmatpush1.msra.mxu0 0.0
    %2845 = vmatprep.subr.mxu0 0.0
    %2846 = vmatpush1.msra.mxu0 0.0
    %2847 = vmatprep.subr.mxu0 0.0
    %2848 = vmatpush1.msra.mxu0 0.0
    %2849 = vmatprep.subr.mxu0 0.0
    %2850 = vmatpush1.msra.mxu0 0.0
    %2851 = vmatprep.subr.mxu0 0.0
    %2852 = vmatpush1.msra.mxu0 0.0
    %2853 = vmatprep.subr.mxu0 0.0
    %2854 = vmatpush1.msra.mxu0 0.0
    %2855 = vmatprep.subr.mxu0 0.0
    %2856 = vmatpush1.msra.mxu0 0.0
    %2857 = vmatprep.subr.mxu0 0.0
    %2858 = vmatpush1.msra.mxu0 0.0
    %2859 = vmatprep.subr.mxu0 0.0
    %2860 = vmatpush1.msra.mxu0 0.0
    %2861 = vmatprep.subr.mxu0 0.0
    %2862 = vmatpush1.msra.mxu0 0.0
    %2863 = vmatprep.subr.mxu0 0.0
    %2864 = vmatpush1.msra.mxu0 0.0
    %2865 = vmatprep.subr.mxu0 0.0
    %2866 = vmatpush1.msra.mxu0 0.0
    %2867 = vmatprep.subr.mxu0 0.0
    %2868 = vmatpush1.msra.mxu0 0.0
    %2869 = vmatprep.subr.mxu0 0.0
    %2870 = vmatpush1.msra.mxu0 0.0
    %2871 = vmatprep.subr.mxu0 0.0
    %2872 = vmatpush1.msra.mxu0 0.0
    %2873 = vmatprep.subr.mxu0 0.0
    %2874 = vmatpush1.msra.mxu0 0.0
    %2875 = vmatprep.subr.mxu0 0.0
    %2876 = vmatpush1.msra.mxu0 0.0
    %2877 = vmatprep.subr.mxu0 0.0
    %2878 = vmatpush1.msra.mxu0 0.0
    %2879 = vmatprep.subr.mxu0 0.0
    %2880 = vmatpush1.msra.mxu0 0.0
    %2881 = vmatprep.subr.mxu0 0.0
    %2882 = vmatpush1.msra.mxu0 0.0
    %2883 = vmatprep.subr.mxu0 0.0
    %2884 = vmatpush1.msra.mxu0 0.0
    %2885 = vmatprep.subr.mxu0 0.0
    %2886 = vmatpush1.msra.mxu0 0.0
    %2887 = vmatprep.subr.mxu0 0.0
    %2888 = vmatpush1.msra.mxu0 0.0
    %2889 = vmatprep.subr.mxu0 0.0
    %2890 = vmatpush1.msra.mxu0 0.0
    %2891 = vmatprep.mubr.f32.mxu0 0.0
    %2892 = vmatmul.mubr.f32.gmra.mrb[0].mxu0 %v2664
    %v2893 = vpop.f32.mrb[0].mxu0
    %v2894 = vadd.f32 0.0, %v2893
    %v2895 = vpop.f32.mrb[0].mxu0
    %v2896 = vadd.f32 0.0, %v2895
    %2897 = vdwg.mxu0
    %2898 = vmatprep.subr.mxu0 %v311
    %2899 = vmatpush1.msra.mxu0 %v310
    %2900 = vmatprep.subr.mxu0 %v315
    %2901 = vmatpush1.msra.mxu0 %v314
    %2902 = vmatprep.subr.mxu0 %v319
    %2903 = vmatpush1.msra.mxu0 %v318
    %2904 = vmatprep.subr.mxu0 %v323
    %2905 = vmatpush1.msra.mxu0 %v322
    %2906 = vmatprep.subr.mxu0 0.0
    %2907 = vmatpush1.msra.mxu0 0.0
    %2908 = vmatprep.subr.mxu0 0.0
    %2909 = vmatpush1.msra.mxu0 0.0
    %2910 = vmatprep.subr.mxu0 0.0
    %2911 = vmatpush1.msra.mxu0 0.0
    %2912 = vmatprep.subr.mxu0 0.0
    %2913 = vmatpush1.msra.mxu0 0.0
    %2914 = vmatprep.subr.mxu0 0.0
    %2915 = vmatpush1.msra.mxu0 0.0
    %2916 = vmatprep.subr.mxu0 0.0
    %2917 = vmatpush1.msra.mxu0 0.0
    %2918 = vmatprep.subr.mxu0 0.0
    %2919 = vmatpush1.msra.mxu0 0.0
    %2920 = vmatprep.subr.mxu0 0.0
    %2921 = vmatpush1.msra.mxu0 0.0
    %2922 = vmatprep.subr.mxu0 0.0
    %2923 = vmatpush1.msra.mxu0 0.0
    %2924 = vmatprep.subr.mxu0 0.0
    %2925 = vmatpush1.msra.mxu0 0.0
    %2926 = vmatprep.subr.mxu0 0.0
    %2927 = vmatpush1.msra.mxu0 0.0
    %2928 = vmatprep.subr.mxu0 0.0
    %2929 = vmatpush1.msra.mxu0 0.0
    %2930 = vmatprep.subr.mxu0 0.0
    %2931 = vmatpush1.msra.mxu0 0.0
    %2932 = vmatprep.subr.mxu0 0.0
    %2933 = vmatpush1.msra.mxu0 0.0
    %2934 = vmatprep.subr.mxu0 0.0
    %2935 = vmatpush1.msra.mxu0 0.0
    %2936 = vmatprep.subr.mxu0 0.0
    %2937 = vmatpush1.msra.mxu0 0.0
    %2938 = vmatprep.subr.mxu0 0.0
    %2939 = vmatpush1.msra.mxu0 0.0
    %2940 = vmatprep.subr.mxu0 0.0
    %2941 = vmatpush1.msra.mxu0 0.0
    %2942 = vmatprep.subr.mxu0 0.0
    %2943 = vmatpush1.msra.mxu0 0.0
    %2944 = vmatprep.subr.mxu0 0.0
    %2945 = vmatpush1.msra.mxu0 0.0
    %2946 = vmatprep.subr.mxu0 0.0
    %2947 = vmatpush1.msra.mxu0 0.0
    %2948 = vmatprep.subr.mxu0 0.0
    %2949 = vmatpush1.msra.mxu0 0.0
    %2950 = vmatprep.subr.mxu0 0.0
    %2951 = vmatpush1.msra.mxu0 0.0
    %2952 = vmatprep.subr.mxu0 0.0
    %2953 = vmatpush1.msra.mxu0 0.0
    %2954 = vmatprep.subr.mxu0 0.0
    %2955 = vmatpush1.msra.mxu0 0.0
    %2956 = vmatprep.subr.mxu0 0.0
    %2957 = vmatpush1.msra.mxu0 0.0
    %2958 = vmatprep.subr.mxu0 0.0
    %2959 = vmatpush1.msra.mxu0 0.0
    %2960 = vmatprep.subr.mxu0 0.0
    %2961 = vmatpush1.msra.mxu0 0.0
    %2962 = vmatprep.mubr.f32.mxu0 0.0
    %2963 = vmatmul.mubr.f32.gmra.mrb[0].mxu0 %v2664
    %v2964 = vpop.f32.mrb[0].mxu0
    %v2965 = vadd.f32 0.0, %v2964
    %v2966 = vpop.f32.mrb[0].mxu0
    %v2967 = vadd.f32 0.0, %v2966
    %2968 = vdwg.mxu0
    %v2970 = vsel %vm95, %v2517, 0
    %2972 = vmatprep.subr.mxu0 %v292
    %2973 = vmatpush1.msra.mxu0 %v291
    %2974 = vmatprep.subr.mxu0 %v296
    %2975 = vmatpush1.msra.mxu0 %v295
    %2976 = vmatprep.subr.mxu0 %v300
    %2977 = vmatpush1.msra.mxu0 %v299
    %2978 = vmatprep.subr.mxu0 %v304
    %2979 = vmatpush1.msra.mxu0 %v303
    %2980 = vmatprep.subr.mxu0 0.0
    %2981 = vmatpush1.msra.mxu0 0.0
    %2982 = vmatprep.subr.mxu0 0.0
    %2983 = vmatpush1.msra.mxu0 0.0
    %2984 = vmatprep.subr.mxu0 0.0
    %2985 = vmatpush1.msra.mxu0 0.0
    %2986 = vmatprep.subr.mxu0 0.0
    %2987 = vmatpush1.msra.mxu0 0.0
    %2988 = vmatprep.subr.mxu0 0.0
    %2989 = vmatpush1.msra.mxu0 0.0
    %2990 = vmatprep.subr.mxu0 0.0
    %2991 = vmatpush1.msra.mxu0 0.0
    %2992 = vmatprep.subr.mxu0 0.0
    %2993 = vmatpush1.msra.mxu0 0.0
    %2994 = vmatprep.subr.mxu0 0.0
    %2995 = vmatpush1.msra.mxu0 0.0
    %2996 = vmatprep.subr.mxu0 0.0
    %2997 = vmatpush1.msra.mxu0 0.0
    %2998 = vmatprep.subr.mxu0 0.0
    %2999 = vmatpush1.msra.mxu0 0.0
    %3000 = vmatprep.subr.mxu0 0.0
    %3001 = vmatpush1.msra.mxu0 0.0
    %3002 = vmatprep.subr.mxu0 0.0
    %3003 = vmatpush1.msra.mxu0 0.0
    %3004 = vmatprep.subr.mxu0 0.0
    %3005 = vmatpush1.msra.mxu0 0.0
    %3006 = vmatprep.subr.mxu0 0.0
    %3007 = vmatpush1.msra.mxu0 0.0
    %3008 = vmatprep.subr.mxu0 0.0
    %3009 = vmatpush1.msra.mxu0 0.0
    %3010 = vmatprep.subr.mxu0 0.0
    %3011 = vmatpush1.msra.mxu0 0.0
    %3012 = vmatprep.subr.mxu0 0.0
    %3013 = vmatpush1.msra.mxu0 0.0
    %3014 = vmatprep.subr.mxu0 0.0
    %3015 = vmatpush1.msra.mxu0 0.0
    %3016 = vmatprep.subr.mxu0 0.0
    %3017 = vmatpush1.msra.mxu0 0.0
    %3018 = vmatprep.subr.mxu0 0.0
    %3019 = vmatpush1.msra.mxu0 0.0
    %3020 = vmatprep.subr.mxu0 0.0
    %3021 = vmatpush1.msra.mxu0 0.0
    %3022 = vmatprep.subr.mxu0 0.0
    %3023 = vmatpush1.msra.mxu0 0.0
    %3024 = vmatprep.subr.mxu0 0.0
    %3025 = vmatpush1.msra.mxu0 0.0
    %3026 = vmatprep.subr.mxu0 0.0
    %3027 = vmatpush1.msra.mxu0 0.0
    %3028 = vmatprep.subr.mxu0 0.0
    %3029 = vmatpush1.msra.mxu0 0.0
    %3030 = vmatprep.subr.mxu0 0.0
    %3031 = vmatpush1.msra.mxu0 0.0
    %3032 = vmatprep.subr.mxu0 0.0
    %3033 = vmatpush1.msra.mxu0 0.0
    %3034 = vmatprep.subr.mxu0 0.0
    %3035 = vmatpush1.msra.mxu0 0.0
    %3036 = vmatprep.mubr.f32.mxu0 0.0
    %3037 = vmatmul.mubr.f32.gmra.mrb[0].mxu0 %v2970
    %v3038 = vpop.f32.mrb[0].mxu0
    %v3039 = vadd.f32 %v2894, %v3038
    %v3040 = vpop.f32.mrb[0].mxu0
    %v3041 = vadd.f32 %v2896, %v3040
    %3042 = vdwg.mxu0
    %3043 = vmatprep.subr.mxu0 %v294
    %3044 = vmatpush1.msra.mxu0 %v293
    %3045 = vmatprep.subr.mxu0 %v298
    %3046 = vmatpush1.msra.mxu0 %v297
    %3047 = vmatprep.subr.mxu0 %v302
    %3048 = vmatpush1.msra.mxu0 %v301
    %3049 = vmatprep.subr.mxu0 %v306
    %3050 = vmatpush1.msra.mxu0 %v305
    %3051 = vmatprep.subr.mxu0 0.0
    %3052 = vmatpush1.msra.mxu0 0.0
    %3053 = vmatprep.subr.mxu0 0.0
    %3054 = vmatpush1.msra.mxu0 0.0
    %3055 = vmatprep.subr.mxu0 0.0
    %3056 = vmatpush1.msra.mxu0 0.0
    %3057 = vmatprep.subr.mxu0 0.0
    %3058 = vmatpush1.msra.mxu0 0.0
    %3059 = vmatprep.subr.mxu0 0.0
    %3060 = vmatpush1.msra.mxu0 0.0
    %3061 = vmatprep.subr.mxu0 0.0
    %3062 = vmatpush1.msra.mxu0 0.0
    %3063 = vmatprep.subr.mxu0 0.0
    %3064 = vmatpush1.msra.mxu0 0.0
    %3065 = vmatprep.subr.mxu0 0.0
    %3066 = vmatpush1.msra.mxu0 0.0
    %3067 = vmatprep.subr.mxu0 0.0
    %3068 = vmatpush1.msra.mxu0 0.0
    %3069 = vmatprep.subr.mxu0 0.0
    %3070 = vmatpush1.msra.mxu0 0.0
    %3071 = vmatprep.subr.mxu0 0.0
    %3072 = vmatpush1.msra.mxu0 0.0
    %3073 = vmatprep.subr.mxu0 0.0
    %3074 = vmatpush1.msra.mxu0 0.0
    %3075 = vmatprep.subr.mxu0 0.0
    %3076 = vmatpush1.msra.mxu0 0.0
    %3077 = vmatprep.subr.mxu0 0.0
    %3078 = vmatpush1.msra.mxu0 0.0
    %3079 = vmatprep.subr.mxu0 0.0
    %3080 = vmatpush1.msra.mxu0 0.0
    %3081 = vmatprep.subr.mxu0 0.0
    %3082 = vmatpush1.msra.mxu0 0.0
    %3083 = vmatprep.subr.mxu0 0.0
    %3084 = vmatpush1.msra.mxu0 0.0
    %3085 = vmatprep.subr.mxu0 0.0
    %3086 = vmatpush1.msra.mxu0 0.0
    %3087 = vmatprep.subr.mxu0 0.0
    %3088 = vmatpush1.msra.mxu0 0.0
    %3089 = vmatprep.subr.mxu0 0.0
    %3090 = vmatpush1.msra.mxu0 0.0
    %3091 = vmatprep.subr.mxu0 0.0
    %3092 = vmatpush1.msra.mxu0 0.0
    %3093 = vmatprep.subr.mxu0 0.0
    %3094 = vmatpush1.msra.mxu0 0.0
    %3095 = vmatprep.subr.mxu0 0.0
    %3096 = vmatpush1.msra.mxu0 0.0
    %3097 = vmatprep.subr.mxu0 0.0
    %3098 = vmatpush1.msra.mxu0 0.0
    %3099 = vmatprep.subr.mxu0 0.0
    %3100 = vmatpush1.msra.mxu0 0.0
    %3101 = vmatprep.subr.mxu0 0.0
    %3102 = vmatpush1.msra.mxu0 0.0
    %3103 = vmatprep.subr.mxu0 0.0
    %3104 = vmatpush1.msra.mxu0 0.0
    %3105 = vmatprep.subr.mxu0 0.0
    %3106 = vmatpush1.msra.mxu0 0.0
    %3107 = vmatprep.mubr.f32.mxu0 0.0
    %3108 = vmatmul.mubr.f32.gmra.mrb[0].mxu0 %v2970
    %v3109 = vpop.f32.mrb[0].mxu0
    %v3110 = vadd.f32 %v2965, %v3109
    %v3111 = vpop.f32.mrb[0].mxu0
    %v3112 = vadd.f32 %v2967, %v3111
    %3113 = vdwg.mxu0
    %v3114 = vadd.f32 %v3039, %v615
    %v3115 = vadd.f32 %v3041, %v619
    %v3116 = vadd.f32 %v3110, %v623
    %v3117 = vadd.f32 %v3112, %v627
    %v3118 = vtanh.pop %v3114
    %v3119 = vtanh.pop %v3115
    %v3120 = vtanh.pop %v3116
    %v3121 = vtanh.pop %v3117
    %v3122 = vmul.f32 %v3118, 0.5
    %v3123 = vadd.f32 %v3122, 0.5
    %v3124 = vmul.f32 %v3119, 0.5
    %v3125 = vadd.f32 %v3124, 0.5
    %v3126 = vmul.f32 %v3121, 0.5
    %v3127 = vadd.f32 %v3126, 0.5
    %v3128 = vmul.f32 %v3125, %v2320
    %v3129 = vmul.f32 %v3123, %v3120
    %v3130 = vadd.f32 %v3128, %v3129
    %v3131 = vtanh.pop %v3130
    %v3132 = vmul.f32 %v3127, %v3131
    %s3133 = sld [smem:[#allocation3 + $0x4]]
    %v3134 = vstv %s3133
    %v3135 = vmul.f32 %v3134, %v70
    %3136 = vmatprep.subr.mxu0 %v80
    %3137 = vmatpush1.msra.mxu0 %v79
    %3138 = vmatprep.subr.mxu0 %v84
    %3139 = vmatpush1.msra.mxu0 %v83
    %3140 = vmatprep.subr.mxu0 %v88
    %3141 = vmatpush1.msra.mxu0 %v87
    %3142 = vmatprep.subr.mxu0 %v92
    %3143 = vmatpush1.msra.mxu0 %v91
    %3144 = vmatprep.subr.mxu0 0.0
    %3145 = vmatpush1.msra.mxu0 0.0
    %3146 = vmatprep.subr.mxu0 0.0
    %3147 = vmatpush1.msra.mxu0 0.0
    %3148 = vmatprep.subr.mxu0 0.0
    %3149 = vmatpush1.msra.mxu0 0.0
    %3150 = vmatprep.subr.mxu0 0.0
    %3151 = vmatpush1.msra.mxu0 0.0
    %3152 = vmatprep.subr.mxu0 0.0
    %3153 = vmatpush1.msra.mxu0 0.0
    %3154 = vmatprep.subr.mxu0 0.0
    %3155 = vmatpush1.msra.mxu0 0.0
    %3156 = vmatprep.subr.mxu0 0.0
    %3157 = vmatpush1.msra.mxu0 0.0
    %3158 = vmatprep.subr.mxu0 0.0
    %3159 = vmatpush1.msra.mxu0 0.0
    %3160 = vmatprep.subr.mxu0 0.0
    %3161 = vmatpush1.msra.mxu0 0.0
    %3162 = vmatprep.subr.mxu0 0.0
    %3163 = vmatpush1.msra.mxu0 0.0
    %3164 = vmatprep.subr.mxu0 0.0
    %3165 = vmatpush1.msra.mxu0 0.0
    %3166 = vmatprep.subr.mxu0 0.0
    %3167 = vmatpush1.msra.mxu0 0.0
    %3168 = vmatprep.subr.mxu0 0.0
    %3169 = vmatpush1.msra.mxu0 0.0
    %3170 = vmatprep.subr.mxu0 0.0
    %3171 = vmatpush1.msra.mxu0 0.0
    %3172 = vmatprep.subr.mxu0 0.0
    %3173 = vmatpush1.msra.mxu0 0.0
    %3174 = vmatprep.subr.mxu0 0.0
    %3175 = vmatpush1.msra.mxu0 0.0
    %3176 = vmatprep.subr.mxu0 0.0
    %3177 = vmatpush1.msra.mxu0 0.0
    %3178 = vmatprep.subr.mxu0 0.0
    %3179 = vmatpush1.msra.mxu0 0.0
    %3180 = vmatprep.subr.mxu0 0.0
    %3181 = vmatpush1.msra.mxu0 0.0
    %3182 = vmatprep.subr.mxu0 0.0
    %3183 = vmatpush1.msra.mxu0 0.0
    %3184 = vmatprep.subr.mxu0 0.0
    %3185 = vmatpush1.msra.mxu0 0.0
    %3186 = vmatprep.subr.mxu0 0.0
    %3187 = vmatpush1.msra.mxu0 0.0
    %3188 = vmatprep.subr.mxu0 0.0
    %3189 = vmatpush1.msra.mxu0 0.0
    %3190 = vmatprep.subr.mxu0 0.0
    %3191 = vmatpush1.msra.mxu0 0.0
    %3192 = vmatprep.subr.mxu0 0.0
    %3193 = vmatpush1.msra.mxu0 0.0
    %3194 = vmatprep.subr.mxu0 0.0
    %3195 = vmatpush1.msra.mxu0 0.0
    %3196 = vmatprep.subr.mxu0 0.0
    %3197 = vmatpush1.msra.mxu0 0.0
    %3198 = vmatprep.subr.mxu0 0.0
    %3199 = vmatpush1.msra.mxu0 0.0
    %3200 = vmatprep.mubr.f32.mxu0 0.0
    %3201 = vmatmul.mubr.f32.gmra.mrb[0].mxu0 %v2970
    %v3202 = vpop.f32.mrb[0].mxu0
    %v3203 = vadd.f32 0.0, %v3202
    %v3204 = vpop.f32.mrb[0].mxu0
    %v3205 = vadd.f32 0.0, %v3204
    %3206 = vdwg.mxu0
    %3207 = vmatprep.subr.mxu0 %v82
    %3208 = vmatpush1.msra.mxu0 %v81
    %3209 = vmatprep.subr.mxu0 %v86
    %3210 = vmatpush1.msra.mxu0 %v85
    %3211 = vmatprep.subr.mxu0 %v90
    %3212 = vmatpush1.msra.mxu0 %v89
    %3213 = vmatprep.subr.mxu0 %v94
    %3214 = vmatpush1.msra.mxu0 %v93
    %3215 = vmatprep.subr.mxu0 0.0
    %3216 = vmatpush1.msra.mxu0 0.0
    %3217 = vmatprep.subr.mxu0 0.0
    %3218 = vmatpush1.msra.mxu0 0.0
    %3219 = vmatprep.subr.mxu0 0.0
    %3220 = vmatpush1.msra.mxu0 0.0
    %3221 = vmatprep.subr.mxu0 0.0
    %3222 = vmatpush1.msra.mxu0 0.0
    %3223 = vmatprep.subr.mxu0 0.0
    %3224 = vmatpush1.msra.mxu0 0.0
    %3225 = vmatprep.subr.mxu0 0.0
    %3226 = vmatpush1.msra.mxu0 0.0
    %3227 = vmatprep.subr.mxu0 0.0
    %3228 = vmatpush1.msra.mxu0 0.0
    %3229 = vmatprep.subr.mxu0 0.0
    %3230 = vmatpush1.msra.mxu0 0.0
    %3231 = vmatprep.subr.mxu0 0.0
    %3232 = vmatpush1.msra.mxu0 0.0
    %3233 = vmatprep.subr.mxu0 0.0
    %3234 = vmatpush1.msra.mxu0 0.0
    %3235 = vmatprep.subr.mxu0 0.0
    %3236 = vmatpush1.msra.mxu0 0.0
    %3237 = vmatprep.subr.mxu0 0.0
    %3238 = vmatpush1.msra.mxu0 0.0
    %3239 = vmatprep.subr.mxu0 0.0
    %3240 = vmatpush1.msra.mxu0 0.0
    %3241 = vmatprep.subr.mxu0 0.0
    %3242 = vmatpush1.msra.mxu0 0.0
    %3243 = vmatprep.subr.mxu0 0.0
    %3244 = vmatpush1.msra.mxu0 0.0
    %3245 = vmatprep.subr.mxu0 0.0
    %3246 = vmatpush1.msra.mxu0 0.0
    %3247 = vmatprep.subr.mxu0 0.0
    %3248 = vmatpush1.msra.mxu0 0.0
    %3249 = vmatprep.subr.mxu0 0.0
    %3250 = vmatpush1.msra.mxu0 0.0
    %3251 = vmatprep.subr.mxu0 0.0
    %3252 = vmatpush1.msra.mxu0 0.0
    %3253 = vmatprep.subr.mxu0 0.0
    %3254 = vmatpush1.msra.mxu0 0.0
    %3255 = vmatprep.subr.mxu0 0.0
    %3256 = vmatpush1.msra.mxu0 0.0
    %3257 = vmatprep.subr.mxu0 0.0
    %3258 = vmatpush1.msra.mxu0 0.0
    %3259 = vmatprep.subr.mxu0 0.0
    %3260 = vmatpush1.msra.mxu0 0.0
    %3261 = vmatprep.subr.mxu0 0.0
    %3262 = vmatpush1.msra.mxu0 0.0
    %3263 = vmatprep.subr.mxu0 0.0
    %3264 = vmatpush1.msra.mxu0 0.0
    %3265 = vmatprep.subr.mxu0 0.0
    %3266 = vmatpush1.msra.mxu0 0.0
    %3267 = vmatprep.subr.mxu0 0.0
    %3268 = vmatpush1.msra.mxu0 0.0
    %3269 = vmatprep.subr.mxu0 0.0
    %3270 = vmatpush1.msra.mxu0 0.0
    %3271 = vmatprep.mubr.f32.mxu0 0.0
    %3272 = vmatmul.mubr.f32.gmra.mrb[0].mxu0 %v2970
    %v3273 = vpop.f32.mrb[0].mxu0
    %v3274 = vadd.f32 0.0, %v3273
    %v3275 = vpop.f32.mrb[0].mxu0
    %v3276 = vadd.f32 0.0, %v3275
    %3277 = vdwg.mxu0
    %v3282 = vcombine.low %v3203, %v3205
    %v3283 = vcombine.low %v3274, %v3276
    %v3285 = vunpack.c.l.s4 1966171168
    %v3286 = vunpack.c.0.s8 %v3285
    %v3287 = vlaneseq
    %v3288 = vshrl.u32 %v3287, 7
    %v3289 = vsub.s32 %v3286, %v3288
    %v3290 = vrot.slane %v3282, %v3289
    %v3292 = vunpack.c.l.s4 1966171168
    %v3293 = vunpack.c.0.s8 %v3292
    %v3294 = vlaneseq
    %v3295 = vshrl.u32 %v3294, 7
    %v3296 = vsub.s32 %v3293, %v3295
    %v3297 = vrot.slane %v3283, %v3296
    %v3298 = vcombine.low %v3290, %v3297
    %v3300 = vunpack.c.l.s4 1966171168
    %v3301 = vunpack.c.0.s8 %v3300
    %v3302 = vlaneseq
    %v3303 = vshrl.u32 %v3302, 7
    %v3304 = vsub.s32 %v3301, %v3303
    %v3305 = vrot.slane %v3298, %v3304
    %v3307 = vadd.f32 %v3135, %v3305
    %v3308 = vadd.f32 %v3307, %v71
    %v3309 = vtanh.pop %v3308
    %v3310 = vmul.f32 %v3309, 0.5
    %v3311 = vadd.f32 %v3310, 0.5
    %v3313 = vrot.slane %v3309, 1
    %v3315 = vmul.f32 %v3313, 0.5
    %v3316 = vadd.f32 %v3315, 0.5
    %v3317 = vrot.slane %v3309, 3
    %v3319 = vmul.f32 %v3317, 0.5
    %v3320 = vadd.f32 %v3319, 0.5
    %v3321 = vmul.f32 %v3316, %v2515
    %v3322 = vrot.slane %v3309, 2
    %v3324 = vmul.f32 %v3311, %v3322
    %v3325 = vadd.f32 %v3321, %v3324
    %v3326 = vtanh.pop %v3325
    %v3327 = vmul.f32 %v3320, %v3326
    %v3329 = vsel %vm95, %v2826, 0
    %3331 = vmatprep.subr.mxu0 %v865
    %3332 = vmatpush1.msra.mxu0 %v864
    %3333 = vmatprep.subr.mxu0 %v869
    %3334 = vmatpush1.msra.mxu0 %v868
    %3335 = vmatprep.subr.mxu0 %v873
    %3336 = vmatpush1.msra.mxu0 %v872
    %3337 = vmatprep.subr.mxu0 %v877
    %3338 = vmatpush1.msra.mxu0 %v876
    %3339 = vmatprep.subr.mxu0 0.0
    %3340 = vmatpush1.msra.mxu0 0.0
    %3341 = vmatprep.subr.mxu0 0.0
    %3342 = vmatpush1.msra.mxu0 0.0
    %3343 = vmatprep.subr.mxu0 0.0
    %3344 = vmatpush1.msra.mxu0 0.0
    %3345 = vmatprep.subr.mxu0 0.0
    %3346 = vmatpush1.msra.mxu0 0.0
    %3347 = vmatprep.subr.mxu0 0.0
    %3348 = vmatpush1.msra.mxu0 0.0
    %3349 = vmatprep.subr.mxu0 0.0
    %3350 = vmatpush1.msra.mxu0 0.0
    %3351 = vmatprep.subr.mxu0 0.0
    %3352 = vmatpush1.msra.mxu0 0.0
    %3353 = vmatprep.subr.mxu0 0.0
    %3354 = vmatpush1.msra.mxu0 0.0
    %3355 = vmatprep.subr.mxu0 0.0
    %3356 = vmatpush1.msra.mxu0 0.0
    %3357 = vmatprep.subr.mxu0 0.0
    %3358 = vmatpush1.msra.mxu0 0.0
    %3359 = vmatprep.subr.mxu0 0.0
    %3360 = vmatpush1.msra.mxu0 0.0
    %3361 = vmatprep.subr.mxu0 0.0
    %3362 = vmatpush1.msra.mxu0 0.0
    %3363 = vmatprep.subr.mxu0 0.0
    %3364 = vmatpush1.msra.mxu0 0.0
    %3365 = vmatprep.subr.mxu0 0.0
    %3366 = vmatpush1.msra.mxu0 0.0
    %3367 = vmatprep.subr.mxu0 0.0
    %3368 = vmatpush1.msra.mxu0 0.0
    %3369 = vmatprep.subr.mxu0 0.0
    %3370 = vmatpush1.msra.mxu0 0.0
    %3371 = vmatprep.subr.mxu0 0.0
    %3372 = vmatpush1.msra.mxu0 0.0
    %3373 = vmatprep.subr.mxu0 0.0
    %3374 = vmatpush1.msra.mxu0 0.0
    %3375 = vmatprep.subr.mxu0 0.0
    %3376 = vmatpush1.msra.mxu0 0.0
    %3377 = vmatprep.subr.mxu0 0.0
    %3378 = vmatpush1.msra.mxu0 0.0
    %3379 = vmatprep.subr.mxu0 0.0
    %3380 = vmatpush1.msra.mxu0 0.0
    %3381 = vmatprep.subr.mxu0 0.0
    %3382 = vmatpush1.msra.mxu0 0.0
    %3383 = vmatprep.subr.mxu0 0.0
    %3384 = vmatpush1.msra.mxu0 0.0
    %3385 = vmatprep.subr.mxu0 0.0
    %3386 = vmatpush1.msra.mxu0 0.0
    %3387 = vmatprep.subr.mxu0 0.0
    %3388 = vmatpush1.msra.mxu0 0.0
    %3389 = vmatprep.subr.mxu0 0.0
    %3390 = vmatpush1.msra.mxu0 0.0
    %3391 = vmatprep.subr.mxu0 0.0
    %3392 = vmatpush1.msra.mxu0 0.0
    %3393 = vmatprep.subr.mxu0 0.0
    %3394 = vmatpush1.msra.mxu0 0.0
    %3395 = vmatprep.mubr.f32.mxu0 0.0
    %3396 = vmatmul.mubr.f32.gmra.mrb[0].mxu0 %v3329
    %v3397 = vpop.f32.mrb[0].mxu0
    %v3398 = vadd.f32 0.0, %v3397
    %v3399 = vpop.f32.mrb[0].mxu0
    %v3400 = vadd.f32 0.0, %v3399
    %3401 = vdwg.mxu0
    %3402 = vmatprep.subr.mxu0 %v867
    %3403 = vmatpush1.msra.mxu0 %v866
    %3404 = vmatprep.subr.mxu0 %v871
    %3405 = vmatpush1.msra.mxu0 %v870
    %3406 = vmatprep.subr.mxu0 %v875
    %3407 = vmatpush1.msra.mxu0 %v874
    %3408 = vmatprep.subr.mxu0 %v879
    %3409 = vmatpush1.msra.mxu0 %v878
    %3410 = vmatprep.subr.mxu0 0.0
    %3411 = vmatpush1.msra.mxu0 0.0
    %3412 = vmatprep.subr.mxu0 0.0
    %3413 = vmatpush1.msra.mxu0 0.0
    %3414 = vmatprep.subr.mxu0 0.0
    %3415 = vmatpush1.msra.mxu0 0.0
    %3416 = vmatprep.subr.mxu0 0.0
    %3417 = vmatpush1.msra.mxu0 0.0
    %3418 = vmatprep.subr.mxu0 0.0
    %3419 = vmatpush1.msra.mxu0 0.0
    %3420 = vmatprep.subr.mxu0 0.0
    %3421 = vmatpush1.msra.mxu0 0.0
    %3422 = vmatprep.subr.mxu0 0.0
    %3423 = vmatpush1.msra.mxu0 0.0
    %3424 = vmatprep.subr.mxu0 0.0
    %3425 = vmatpush1.msra.mxu0 0.0
    %3426 = vmatprep.subr.mxu0 0.0
    %3427 = vmatpush1.msra.mxu0 0.0
    %3428 = vmatprep.subr.mxu0 0.0
    %3429 = vmatpush1.msra.mxu0 0.0
    %3430 = vmatprep.subr.mxu0 0.0
    %3431 = vmatpush1.msra.mxu0 0.0
    %3432 = vmatprep.subr.mxu0 0.0
    %3433 = vmatpush1.msra.mxu0 0.0
    %3434 = vmatprep.subr.mxu0 0.0
    %3435 = vmatpush1.msra.mxu0 0.0
    %3436 = vmatprep.subr.mxu0 0.0
    %3437 = vmatpush1.msra.mxu0 0.0
    %3438 = vmatprep.subr.mxu0 0.0
    %3439 = vmatpush1.msra.mxu0 0.0
    %3440 = vmatprep.subr.mxu0 0.0
    %3441 = vmatpush1.msra.mxu0 0.0
    %3442 = vmatprep.subr.mxu0 0.0
    %3443 = vmatpush1.msra.mxu0 0.0
    %3444 = vmatprep.subr.mxu0 0.0
    %3445 = vmatpush1.msra.mxu0 0.0
    %3446 = vmatprep.subr.mxu0 0.0
    %3447 = vmatpush1.msra.mxu0 0.0
    %3448 = vmatprep.subr.mxu0 0.0
    %3449 = vmatpush1.msra.mxu0 0.0
    %3450 = vmatprep.subr.mxu0 0.0
    %3451 = vmatpush1.msra.mxu0 0.0
    %3452 = vmatprep.subr.mxu0 0.0
    %3453 = vmatpush1.msra.mxu0 0.0
    %3454 = vmatprep.subr.mxu0 0.0
    %3455 = vmatpush1.msra.mxu0 0.0
    %3456 = vmatprep.subr.mxu0 0.0
    %3457 = vmatpush1.msra.mxu0 0.0
    %3458 = vmatprep.subr.mxu0 0.0
    %3459 = vmatpush1.msra.mxu0 0.0
    %3460 = vmatprep.subr.mxu0 0.0
    %3461 = vmatpush1.msra.mxu0 0.0
    %3462 = vmatprep.subr.mxu0 0.0
    %3463 = vmatpush1.msra.mxu0 0.0
    %3464 = vmatprep.subr.mxu0 0.0
    %3465 = vmatpush1.msra.mxu0 0.0
    %3466 = vmatprep.mubr.f32.mxu0 0.0
    %3467 = vmatmul.mubr.f32.gmra.mrb[0].mxu0 %v3329
    %v3468 = vpop.f32.mrb[0].mxu0
    %v3469 = vadd.f32 0.0, %v3468
    %v3470 = vpop.f32.mrb[0].mxu0
    %v3471 = vadd.f32 0.0, %v3470
    %3472 = vdwg.mxu0
    %v3474 = vsel %vm95, %v3132, 0
    %3476 = vmatprep.subr.mxu0 %v848
    %3477 = vmatpush1.msra.mxu0 %v847
    %3478 = vmatprep.subr.mxu0 %v852
    %3479 = vmatpush1.msra.mxu0 %v851
    %3480 = vmatprep.subr.mxu0 %v856
    %3481 = vmatpush1.msra.mxu0 %v855
    %3482 = vmatprep.subr.mxu0 %v860
    %3483 = vmatpush1.msra.mxu0 %v859
    %3484 = vmatprep.subr.mxu0 0.0
    %3485 = vmatpush1.msra.mxu0 0.0
    %3486 = vmatprep.subr.mxu0 0.0
    %3487 = vmatpush1.msra.mxu0 0.0
    %3488 = vmatprep.subr.mxu0 0.0
    %3489 = vmatpush1.msra.mxu0 0.0
    %3490 = vmatprep.subr.mxu0 0.0
    %3491 = vmatpush1.msra.mxu0 0.0
    %3492 = vmatprep.subr.mxu0 0.0
    %3493 = vmatpush1.msra.mxu0 0.0
    %3494 = vmatprep.subr.mxu0 0.0
    %3495 = vmatpush1.msra.mxu0 0.0
    %3496 = vmatprep.subr.mxu0 0.0
    %3497 = vmatpush1.msra.mxu0 0.0
    %3498 = vmatprep.subr.mxu0 0.0
    %3499 = vmatpush1.msra.mxu0 0.0
    %3500 = vmatprep.subr.mxu0 0.0
    %3501 = vmatpush1.msra.mxu0 0.0
    %3502 = vmatprep.subr.mxu0 0.0
    %3503 = vmatpush1.msra.mxu0 0.0
    %3504 = vmatprep.subr.mxu0 0.0
    %3505 = vmatpush1.msra.mxu0 0.0
    %3506 = vmatprep.subr.mxu0 0.0
    %3507 = vmatpush1.msra.mxu0 0.0
    %3508 = vmatprep.subr.mxu0 0.0
    %3509 = vmatpush1.msra.mxu0 0.0
    %3510 = vmatprep.subr.mxu0 0.0
    %3511 = vmatpush1.msra.mxu0 0.0
    %3512 = vmatprep.subr.mxu0 0.0
    %3513 = vmatpush1.msra.mxu0 0.0
    %3514 = vmatprep.subr.mxu0 0.0
    %3515 = vmatpush1.msra.mxu0 0.0
    %3516 = vmatprep.subr.mxu0 0.0
    %3517 = vmatpush1.msra.mxu0 0.0
    %3518 = vmatprep.subr.mxu0 0.0
    %3519 = vmatpush1.msra.mxu0 0.0
    %3520 = vmatprep.subr.mxu0 0.0
    %3521 = vmatpush1.msra.mxu0 0.0
    %3522 = vmatprep.subr.mxu0 0.0
    %3523 = vmatpush1.msra.mxu0 0.0
    %3524 = vmatprep.subr.mxu0 0.0
    %3525 = vmatpush1.msra.mxu0 0.0
    %3526 = vmatprep.subr.mxu0 0.0
    %3527 = vmatpush1.msra.mxu0 0.0
    %3528 = vmatprep.subr.mxu0 0.0
    %3529 = vmatpush1.msra.mxu0 0.0
    %3530 = vmatprep.subr.mxu0 0.0
    %3531 = vmatpush1.msra.mxu0 0.0
    %3532 = vmatprep.subr.mxu0 0.0
    %3533 = vmatpush1.msra.mxu0 0.0
    %3534 = vmatprep.subr.mxu0 0.0
    %3535 = vmatpush1.msra.mxu0 0.0
    %3536 = vmatprep.subr.mxu0 0.0
    %3537 = vmatpush1.msra.mxu0 0.0
    %3538 = vmatprep.subr.mxu0 0.0
    %3539 = vmatpush1.msra.mxu0 0.0
    %3540 = vmatprep.mubr.f32.mxu0 0.0
    %3541 = vmatmul.mubr.f32.gmra.mrb[0].mxu0 %v3474
    %v3542 = vpop.f32.mrb[0].mxu0
    %v3543 = vadd.f32 %v3398, %v3542
    %v3544 = vpop.f32.mrb[0].mxu0
    %v3545 = vadd.f32 %v3400, %v3544
    %3546 = vdwg.mxu0
    %3547 = vmatprep.subr.mxu0 %v850
    %3548 = vmatpush1.msra.mxu0 %v849
    %3549 = vmatprep.subr.mxu0 %v854
    %3550 = vmatpush1.msra.mxu0 %v853
    %3551 = vmatprep.subr.mxu0 %v858
    %3552 = vmatpush1.msra.mxu0 %v857
    %3553 = vmatprep.subr.mxu0 %v862
    %3554 = vmatpush1.msra.mxu0 %v861
    %3555 = vmatprep.subr.mxu0 0.0
    %3556 = vmatpush1.msra.mxu0 0.0
    %3557 = vmatprep.subr.mxu0 0.0
    %3558 = vmatpush1.msra.mxu0 0.0
    %3559 = vmatprep.subr.mxu0 0.0
    %3560 = vmatpush1.msra.mxu0 0.0
    %3561 = vmatprep.subr.mxu0 0.0
    %3562 = vmatpush1.msra.mxu0 0.0
    %3563 = vmatprep.subr.mxu0 0.0
    %3564 = vmatpush1.msra.mxu0 0.0
    %3565 = vmatprep.subr.mxu0 0.0
    %3566 = vmatpush1.msra.mxu0 0.0
    %3567 = vmatprep.subr.mxu0 0.0
    %3568 = vmatpush1.msra.mxu0 0.0
    %3569 = vmatprep.subr.mxu0 0.0
    %3570 = vmatpush1.msra.mxu0 0.0
    %3571 = vmatprep.subr.mxu0 0.0
    %3572 = vmatpush1.msra.mxu0 0.0
    %3573 = vmatprep.subr.mxu0 0.0
    %3574 = vmatpush1.msra.mxu0 0.0
    %3575 = vmatprep.subr.mxu0 0.0
    %3576 = vmatpush1.msra.mxu0 0.0
    %3577 = vmatprep.subr.mxu0 0.0
    %3578 = vmatpush1.msra.mxu0 0.0
    %3579 = vmatprep.subr.mxu0 0.0
    %3580 = vmatpush1.msra.mxu0 0.0
    %3581 = vmatprep.subr.mxu0 0.0
    %3582 = vmatpush1.msra.mxu0 0.0
    %3583 = vmatprep.subr.mxu0 0.0
    %3584 = vmatpush1.msra.mxu0 0.0
    %3585 = vmatprep.subr.mxu0 0.0
    %3586 = vmatpush1.msra.mxu0 0.0
    %3587 = vmatprep.subr.mxu0 0.0
    %3588 = vmatpush1.msra.mxu0 0.0
    %3589 = vmatprep.subr.mxu0 0.0
    %3590 = vmatpush1.msra.mxu0 0.0
    %3591 = vmatprep.subr.mxu0 0.0
    %3592 = vmatpush1.msra.mxu0 0.0
    %3593 = vmatprep.subr.mxu0 0.0
    %3594 = vmatpush1.msra.mxu0 0.0
    %3595 = vmatprep.subr.mxu0 0.0
    %3596 = vmatpush1.msra.mxu0 0.0
    %3597 = vmatprep.subr.mxu0 0.0
    %3598 = vmatpush1.msra.mxu0 0.0
    %3599 = vmatprep.subr.mxu0 0.0
    %3600 = vmatpush1.msra.mxu0 0.0
    %3601 = vmatprep.subr.mxu0 0.0
    %3602 = vmatpush1.msra.mxu0 0.0
    %3603 = vmatprep.subr.mxu0 0.0
    %3604 = vmatpush1.msra.mxu0 0.0
    %3605 = vmatprep.subr.mxu0 0.0
    %3606 = vmatpush1.msra.mxu0 0.0
    %3607 = vmatprep.subr.mxu0 0.0
    %3608 = vmatpush1.msra.mxu0 0.0
    %3609 = vmatprep.subr.mxu0 0.0
    %3610 = vmatpush1.msra.mxu0 0.0
    %3611 = vmatprep.mubr.f32.mxu0 0.0
    %3612 = vmatmul.mubr.f32.gmra.mrb[0].mxu0 %v3474
    %v3613 = vpop.f32.mrb[0].mxu0
    %v3614 = vadd.f32 %v3469, %v3613
    %v3615 = vpop.f32.mrb[0].mxu0
    %v3616 = vadd.f32 %v3471, %v3615
    %3617 = vdwg.mxu0
    %v3618 = vadd.f32 %v3543, %v1171
    %v3619 = vadd.f32 %v3545, %v1175
    %v3620 = vadd.f32 %v3614, %v1179
    %v3621 = vadd.f32 %v3616, %v1183
    %v3622 = vtanh.pop %v3618
    %v3623 = vtanh.pop %v3619
    %v3624 = vtanh.pop %v3620
    %v3625 = vtanh.pop %v3621
    %v3626 = vmul.f32 %v3622, 0.5
    %v3627 = vadd.f32 %v3626, 0.5
    %v3628 = vmul.f32 %v3623, 0.5
    %v3629 = vadd.f32 %v3628, 0.5
    %v3630 = vmul.f32 %v3625, 0.5
    %v3631 = vadd.f32 %v3630, 0.5
    %v3632 = vmul.f32 %v3629, %v2824
    %v3633 = vmul.f32 %v3627, %v3624
    %v3634 = vadd.f32 %v3632, %v3633
    %v3635 = vtanh.pop %v3634
    %v3636 = vmul.f32 %v3631, %v3635
    %3637 = vmatprep.subr.mxu0 %v309
    %3638 = vmatpush1.msra.mxu0 %v308
    %3639 = vmatprep.subr.mxu0 %v313
    %3640 = vmatpush1.msra.mxu0 %v312
    %3641 = vmatprep.subr.mxu0 %v317
    %3642 = vmatpush1.msra.mxu0 %v316
    %3643 = vmatprep.subr.mxu0 %v321
    %3644 = vmatpush1.msra.mxu0 %v320
    %3645 = vmatprep.subr.mxu0 0.0
    %3646 = vmatpush1.msra.mxu0 0.0
    %3647 = vmatprep.subr.mxu0 0.0
    %3648 = vmatpush1.msra.mxu0 0.0
    %3649 = vmatprep.subr.mxu0 0.0
    %3650 = vmatpush1.msra.mxu0 0.0
    %3651 = vmatprep.subr.mxu0 0.0
    %3652 = vmatpush1.msra.mxu0 0.0
    %3653 = vmatprep.subr.mxu0 0.0
    %3654 = vmatpush1.msra.mxu0 0.0
    %3655 = vmatprep.subr.mxu0 0.0
    %3656 = vmatpush1.msra.mxu0 0.0
    %3657 = vmatprep.subr.mxu0 0.0
    %3658 = vmatpush1.msra.mxu0 0.0
    %3659 = vmatprep.subr.mxu0 0.0
    %3660 = vmatpush1.msra.mxu0 0.0
    %3661 = vmatprep.subr.mxu0 0.0
    %3662 = vmatpush1.msra.mxu0 0.0
    %3663 = vmatprep.subr.mxu0 0.0
    %3664 = vmatpush1.msra.mxu0 0.0
    %3665 = vmatprep.subr.mxu0 0.0
    %3666 = vmatpush1.msra.mxu0 0.0
    %3667 = vmatprep.subr.mxu0 0.0
    %3668 = vmatpush1.msra.mxu0 0.0
    %3669 = vmatprep.subr.mxu0 0.0
    %3670 = vmatpush1.msra.mxu0 0.0
    %3671 = vmatprep.subr.mxu0 0.0
    %3672 = vmatpush1.msra.mxu0 0.0
    %3673 = vmatprep.subr.mxu0 0.0
    %3674 = vmatpush1.msra.mxu0 0.0
    %3675 = vmatprep.subr.mxu0 0.0
    %3676 = vmatpush1.msra.mxu0 0.0
    %3677 = vmatprep.subr.mxu0 0.0
    %3678 = vmatpush1.msra.mxu0 0.0
    %3679 = vmatprep.subr.mxu0 0.0
    %3680 = vmatpush1.msra.mxu0 0.0
    %3681 = vmatprep.subr.mxu0 0.0
    %3682 = vmatpush1.msra.mxu0 0.0
    %3683 = vmatprep.subr.mxu0 0.0
    %3684 = vmatpush1.msra.mxu0 0.0
    %3685 = vmatprep.subr.mxu0 0.0
    %3686 = vmatpush1.msra.mxu0 0.0
    %3687 = vmatprep.subr.mxu0 0.0
    %3688 = vmatpush1.msra.mxu0 0.0
    %3689 = vmatprep.subr.mxu0 0.0
    %3690 = vmatpush1.msra.mxu0 0.0
    %3691 = vmatprep.subr.mxu0 0.0
    %3692 = vmatpush1.msra.mxu0 0.0
    %3693 = vmatprep.subr.mxu0 0.0
    %3694 = vmatpush1.msra.mxu0 0.0
    %3695 = vmatprep.subr.mxu0 0.0
    %3696 = vmatpush1.msra.mxu0 0.0
    %3697 = vmatprep.subr.mxu0 0.0
    %3698 = vmatpush1.msra.mxu0 0.0
    %3699 = vmatprep.subr.mxu0 0.0
    %3700 = vmatpush1.msra.mxu0 0.0
    %3701 = vmatprep.mubr.f32.mxu0 0.0
    %3702 = vmatmul.mubr.f32.gmra.mrb[0].mxu0 %v3474
    %v3703 = vpop.f32.mrb[0].mxu0
    %v3704 = vadd.f32 0.0, %v3703
    %v3705 = vpop.f32.mrb[0].mxu0
    %v3706 = vadd.f32 0.0, %v3705
    %3707 = vdwg.mxu0
    %3708 = vmatprep.subr.mxu0 %v311
    %3709 = vmatpush1.msra.mxu0 %v310
    %3710 = vmatprep.subr.mxu0 %v315
    %3711 = vmatpush1.msra.mxu0 %v314
    %3712 = vmatprep.subr.mxu0 %v319
    %3713 = vmatpush1.msra.mxu0 %v318
    %3714 = vmatprep.subr.mxu0 %v323
    %3715 = vmatpush1.msra.mxu0 %v322
    %3716 = vmatprep.subr.mxu0 0.0
    %3717 = vmatpush1.msra.mxu0 0.0
    %3718 = vmatprep.subr.mxu0 0.0
    %3719 = vmatpush1.msra.mxu0 0.0
    %3720 = vmatprep.subr.mxu0 0.0
    %3721 = vmatpush1.msra.mxu0 0.0
    %3722 = vmatprep.subr.mxu0 0.0
    %3723 = vmatpush1.msra.mxu0 0.0
    %3724 = vmatprep.subr.mxu0 0.0
    %3725 = vmatpush1.msra.mxu0 0.0
    %3726 = vmatprep.subr.mxu0 0.0
    %3727 = vmatpush1.msra.mxu0 0.0
    %3728 = vmatprep.subr.mxu0 0.0
    %3729 = vmatpush1.msra.mxu0 0.0
    %3730 = vmatprep.subr.mxu0 0.0
    %3731 = vmatpush1.msra.mxu0 0.0
    %3732 = vmatprep.subr.mxu0 0.0
    %3733 = vmatpush1.msra.mxu0 0.0
    %3734 = vmatprep.subr.mxu0 0.0
    %3735 = vmatpush1.msra.mxu0 0.0
    %3736 = vmatprep.subr.mxu0 0.0
    %3737 = vmatpush1.msra.mxu0 0.0
    %3738 = vmatprep.subr.mxu0 0.0
    %3739 = vmatpush1.msra.mxu0 0.0
    %3740 = vmatprep.subr.mxu0 0.0
    %3741 = vmatpush1.msra.mxu0 0.0
    %3742 = vmatprep.subr.mxu0 0.0
    %3743 = vmatpush1.msra.mxu0 0.0
    %3744 = vmatprep.subr.mxu0 0.0
    %3745 = vmatpush1.msra.mxu0 0.0
    %3746 = vmatprep.subr.mxu0 0.0
    %3747 = vmatpush1.msra.mxu0 0.0
    %3748 = vmatprep.subr.mxu0 0.0
    %3749 = vmatpush1.msra.mxu0 0.0
    %3750 = vmatprep.subr.mxu0 0.0
    %3751 = vmatpush1.msra.mxu0 0.0
    %3752 = vmatprep.subr.mxu0 0.0
    %3753 = vmatpush1.msra.mxu0 0.0
    %3754 = vmatprep.subr.mxu0 0.0
    %3755 = vmatpush1.msra.mxu0 0.0
    %3756 = vmatprep.subr.mxu0 0.0
    %3757 = vmatpush1.msra.mxu0 0.0
    %3758 = vmatprep.subr.mxu0 0.0
    %3759 = vmatpush1.msra.mxu0 0.0
    %3760 = vmatprep.subr.mxu0 0.0
    %3761 = vmatpush1.msra.mxu0 0.0
    %3762 = vmatprep.subr.mxu0 0.0
    %3763 = vmatpush1.msra.mxu0 0.0
    %3764 = vmatprep.subr.mxu0 0.0
    %3765 = vmatpush1.msra.mxu0 0.0
    %3766 = vmatprep.subr.mxu0 0.0
    %3767 = vmatpush1.msra.mxu0 0.0
    %3768 = vmatprep.subr.mxu0 0.0
    %3769 = vmatpush1.msra.mxu0 0.0
    %3770 = vmatprep.subr.mxu0 0.0
    %3771 = vmatpush1.msra.mxu0 0.0
    %3772 = vmatprep.mubr.f32.mxu0 0.0
    %3773 = vmatmul.mubr.f32.gmra.mrb[0].mxu0 %v3474
    %v3774 = vpop.f32.mrb[0].mxu0
    %v3775 = vadd.f32 0.0, %v3774
    %v3776 = vpop.f32.mrb[0].mxu0
    %v3777 = vadd.f32 0.0, %v3776
    %3778 = vdwg.mxu0
    %v3780 = vsel %vm95, %v3327, 0
    %3782 = vmatprep.subr.mxu0 %v292
    %3783 = vmatpush1.msra.mxu0 %v291
    %3784 = vmatprep.subr.mxu0 %v296
    %3785 = vmatpush1.msra.mxu0 %v295
    %3786 = vmatprep.subr.mxu0 %v300
    %3787 = vmatpush1.msra.mxu0 %v299
    %3788 = vmatprep.subr.mxu0 %v304
    %3789 = vmatpush1.msra.mxu0 %v303
    %3790 = vmatprep.subr.mxu0 0.0
    %3791 = vmatpush1.msra.mxu0 0.0
    %3792 = vmatprep.subr.mxu0 0.0
    %3793 = vmatpush1.msra.mxu0 0.0
    %3794 = vmatprep.subr.mxu0 0.0
    %3795 = vmatpush1.msra.mxu0 0.0
    %3796 = vmatprep.subr.mxu0 0.0
    %3797 = vmatpush1.msra.mxu0 0.0
    %3798 = vmatprep.subr.mxu0 0.0
    %3799 = vmatpush1.msra.mxu0 0.0
    %3800 = vmatprep.subr.mxu0 0.0
    %3801 = vmatpush1.msra.mxu0 0.0
    %3802 = vmatprep.subr.mxu0 0.0
    %3803 = vmatpush1.msra.mxu0 0.0
    %3804 = vmatprep.subr.mxu0 0.0
    %3805 = vmatpush1.msra.mxu0 0.0
    %3806 = vmatprep.subr.mxu0 0.0
    %3807 = vmatpush1.msra.mxu0 0.0
    %3808 = vmatprep.subr.mxu0 0.0
    %3809 = vmatpush1.msra.mxu0 0.0
    %3810 = vmatprep.subr.mxu0 0.0
    %3811 = vmatpush1.msra.mxu0 0.0
    %3812 = vmatprep.subr.mxu0 0.0
    %3813 = vmatpush1.msra.mxu0 0.0
    %3814 = vmatprep.subr.mxu0 0.0
    %3815 = vmatpush1.msra.mxu0 0.0
    %3816 = vmatprep.subr.mxu0 0.0
    %3817 = vmatpush1.msra.mxu0 0.0
    %3818 = vmatprep.subr.mxu0 0.0
    %3819 = vmatpush1.msra.mxu0 0.0
    %3820 = vmatprep.subr.mxu0 0.0
    %3821 = vmatpush1.msra.mxu0 0.0
    %3822 = vmatprep.subr.mxu0 0.0
    %3823 = vmatpush1.msra.mxu0 0.0
    %3824 = vmatprep.subr.mxu0 0.0
    %3825 = vmatpush1.msra.mxu0 0.0
    %3826 = vmatprep.subr.mxu0 0.0
    %3827 = vmatpush1.msra.mxu0 0.0
    %3828 = vmatprep.subr.mxu0 0.0
    %3829 = vmatpush1.msra.mxu0 0.0
    %3830 = vmatprep.subr.mxu0 0.0
    %3831 = vmatpush1.msra.mxu0 0.0
    %3832 = vmatprep.subr.mxu0 0.0
    %3833 = vmatpush1.msra.mxu0 0.0
    %3834 = vmatprep.subr.mxu0 0.0
    %3835 = vmatpush1.msra.mxu0 0.0
    %3836 = vmatprep.subr.mxu0 0.0
    %3837 = vmatpush1.msra.mxu0 0.0
    %3838 = vmatprep.subr.mxu0 0.0
    %3839 = vmatpush1.msra.mxu0 0.0
    %3840 = vmatprep.subr.mxu0 0.0
    %3841 = vmatpush1.msra.mxu0 0.0
    %3842 = vmatprep.subr.mxu0 0.0
    %3843 = vmatpush1.msra.mxu0 0.0
    %3844 = vmatprep.subr.mxu0 0.0
    %3845 = vmatpush1.msra.mxu0 0.0
    %3846 = vmatprep.mubr.f32.mxu0 0.0
    %3847 = vmatmul.mubr.f32.gmra.mrb[0].mxu0 %v3780
    %v3848 = vpop.f32.mrb[0].mxu0
    %v3849 = vadd.f32 %v3704, %v3848
    %v3850 = vpop.f32.mrb[0].mxu0
    %v3851 = vadd.f32 %v3706, %v3850
    %3852 = vdwg.mxu0
    %3853 = vmatprep.subr.mxu0 %v294
    %3854 = vmatpush1.msra.mxu0 %v293
    %3855 = vmatprep.subr.mxu0 %v298
    %3856 = vmatpush1.msra.mxu0 %v297
    %3857 = vmatprep.subr.mxu0 %v302
    %3858 = vmatpush1.msra.mxu0 %v301
    %3859 = vmatprep.subr.mxu0 %v306
    %3860 = vmatpush1.msra.mxu0 %v305
    %3861 = vmatprep.subr.mxu0 0.0
    %3862 = vmatpush1.msra.mxu0 0.0
    %3863 = vmatprep.subr.mxu0 0.0
    %3864 = vmatpush1.msra.mxu0 0.0
    %3865 = vmatprep.subr.mxu0 0.0
    %3866 = vmatpush1.msra.mxu0 0.0
    %3867 = vmatprep.subr.mxu0 0.0
    %3868 = vmatpush1.msra.mxu0 0.0
    %3869 = vmatprep.subr.mxu0 0.0
    %3870 = vmatpush1.msra.mxu0 0.0
    %3871 = vmatprep.subr.mxu0 0.0
    %3872 = vmatpush1.msra.mxu0 0.0
    %3873 = vmatprep.subr.mxu0 0.0
    %3874 = vmatpush1.msra.mxu0 0.0
    %3875 = vmatprep.subr.mxu0 0.0
    %3876 = vmatpush1.msra.mxu0 0.0
    %3877 = vmatprep.subr.mxu0 0.0
    %3878 = vmatpush1.msra.mxu0 0.0
    %3879 = vmatprep.subr.mxu0 0.0
    %3880 = vmatpush1.msra.mxu0 0.0
    %3881 = vmatprep.subr.mxu0 0.0
    %3882 = vmatpush1.msra.mxu0 0.0
    %3883 = vmatprep.subr.mxu0 0.0
    %3884 = vmatpush1.msra.mxu0 0.0
    %3885 = vmatprep.subr.mxu0 0.0
    %3886 = vmatpush1.msra.mxu0 0.0
    %3887 = vmatprep.subr.mxu0 0.0
    %3888 = vmatpush1.msra.mxu0 0.0
    %3889 = vmatprep.subr.mxu0 0.0
    %3890 = vmatpush1.msra.mxu0 0.0
    %3891 = vmatprep.subr.mxu0 0.0
    %3892 = vmatpush1.msra.mxu0 0.0
    %3893 = vmatprep.subr.mxu0 0.0
    %3894 = vmatpush1.msra.mxu0 0.0
    %3895 = vmatprep.subr.mxu0 0.0
    %3896 = vmatpush1.msra.mxu0 0.0
    %3897 = vmatprep.subr.mxu0 0.0
    %3898 = vmatpush1.msra.mxu0 0.0
    %3899 = vmatprep.subr.mxu0 0.0
    %3900 = vmatpush1.msra.mxu0 0.0
    %3901 = vmatprep.subr.mxu0 0.0
    %3902 = vmatpush1.msra.mxu0 0.0
    %3903 = vmatprep.subr.mxu0 0.0
    %3904 = vmatpush1.msra.mxu0 0.0
    %3905 = vmatprep.subr.mxu0 0.0
    %3906 = vmatpush1.msra.mxu0 0.0
    %3907 = vmatprep.subr.mxu0 0.0
    %3908 = vmatpush1.msra.mxu0 0.0
    %3909 = vmatprep.subr.mxu0 0.0
    %3910 = vmatpush1.msra.mxu0 0.0
    %3911 = vmatprep.subr.mxu0 0.0
    %3912 = vmatpush1.msra.mxu0 0.0
    %3913 = vmatprep.subr.mxu0 0.0
    %3914 = vmatpush1.msra.mxu0 0.0
    %3915 = vmatprep.subr.mxu0 0.0
    %3916 = vmatpush1.msra.mxu0 0.0
    %3917 = vmatprep.mubr.f32.mxu0 0.0
    %3918 = vmatmul.mubr.f32.gmra.mrb[0].mxu0 %v3780
    %v3919 = vpop.f32.mrb[0].mxu0
    %v3920 = vadd.f32 %v3775, %v3919
    %v3921 = vpop.f32.mrb[0].mxu0
    %v3922 = vadd.f32 %v3777, %v3921
    %3923 = vdwg.mxu0
    %v3924 = vadd.f32 %v3849, %v615
    %v3925 = vadd.f32 %v3851, %v619
    %v3926 = vadd.f32 %v3920, %v623
    %v3927 = vadd.f32 %v3922, %v627
    %v3928 = vtanh.pop %v3924
    %v3929 = vtanh.pop %v3925
    %v3930 = vtanh.pop %v3926
    %v3931 = vtanh.pop %v3927
    %v3932 = vmul.f32 %v3928, 0.5
    %v3933 = vadd.f32 %v3932, 0.5
    %v3934 = vmul.f32 %v3929, 0.5
    %v3935 = vadd.f32 %v3934, 0.5
    %v3936 = vmul.f32 %v3931, 0.5
    %v3937 = vadd.f32 %v3936, 0.5
    %v3938 = vmul.f32 %v3935, %v3130
    %v3939 = vmul.f32 %v3933, %v3930
    %v3940 = vadd.f32 %v3938, %v3939
    %v3941 = vtanh.pop %v3940
    %v3942 = vmul.f32 %v3937, %v3941
    %s3943 = sld [smem:[#allocation3 + $0x5]]
    %v3944 = vstv %s3943
    %v3945 = vmul.f32 %v3944, %v70
    %3946 = vmatprep.subr.mxu0 %v80
    %3947 = vmatpush1.msra.mxu0 %v79
    %3948 = vmatprep.subr.mxu0 %v84
    %3949 = vmatpush1.msra.mxu0 %v83
    %3950 = vmatprep.subr.mxu0 %v88
    %3951 = vmatpush1.msra.mxu0 %v87
    %3952 = vmatprep.subr.mxu0 %v92
    %3953 = vmatpush1.msra.mxu0 %v91
    %3954 = vmatprep.subr.mxu0 0.0
    %3955 = vmatpush1.msra.mxu0 0.0
    %3956 = vmatprep.subr.mxu0 0.0
    %3957 = vmatpush1.msra.mxu0 0.0
    %3958 = vmatprep.subr.mxu0 0.0
    %3959 = vmatpush1.msra.mxu0 0.0
    %3960 = vmatprep.subr.mxu0 0.0
    %3961 = vmatpush1.msra.mxu0 0.0
    %3962 = vmatprep.subr.mxu0 0.0
    %3963 = vmatpush1.msra.mxu0 0.0
    %3964 = vmatprep.subr.mxu0 0.0
    %3965 = vmatpush1.msra.mxu0 0.0
    %3966 = vmatprep.subr.mxu0 0.0
    %3967 = vmatpush1.msra.mxu0 0.0
    %3968 = vmatprep.subr.mxu0 0.0
    %3969 = vmatpush1.msra.mxu0 0.0
    %3970 = vmatprep.subr.mxu0 0.0
    %3971 = vmatpush1.msra.mxu0 0.0
    %3972 = vmatprep.subr.mxu0 0.0
    %3973 = vmatpush1.msra.mxu0 0.0
    %3974 = vmatprep.subr.mxu0 0.0
    %3975 = vmatpush1.msra.mxu0 0.0
    %3976 = vmatprep.subr.mxu0 0.0
    %3977 = vmatpush1.msra.mxu0 0.0
    %3978 = vmatprep.subr.mxu0 0.0
    %3979 = vmatpush1.msra.mxu0 0.0
    %3980 = vmatprep.subr.mxu0 0.0
    %3981 = vmatpush1.msra.mxu0 0.0
    %3982 = vmatprep.subr.mxu0 0.0
    %3983 = vmatpush1.msra.mxu0 0.0
    %3984 = vmatprep.subr.mxu0 0.0
    %3985 = vmatpush1.msra.mxu0 0.0
    %3986 = vmatprep.subr.mxu0 0.0
    %3987 = vmatpush1.msra.mxu0 0.0
    %3988 = vmatprep.subr.mxu0 0.0
    %3989 = vmatpush1.msra.mxu0 0.0
    %3990 = vmatprep.subr.mxu0 0.0
    %3991 = vmatpush1.msra.mxu0 0.0
    %3992 = vmatprep.subr.mxu0 0.0
    %3993 = vmatpush1.msra.mxu0 0.0
    %3994 = vmatprep.subr.mxu0 0.0
    %3995 = vmatpush1.msra.mxu0 0.0
    %3996 = vmatprep.subr.mxu0 0.0
    %3997 = vmatpush1.msra.mxu0 0.0
    %3998 = vmatprep.subr.mxu0 0.0
    %3999 = vmatpush1.msra.mxu0 0.0
    %4000 = vmatprep.subr.mxu0 0.0
    %4001 = vmatpush1.msra.mxu0 0.0
    %4002 = vmatprep.subr.mxu0 0.0
    %4003 = vmatpush1.msra.mxu0 0.0
    %4004 = vmatprep.subr.mxu0 0.0
    %4005 = vmatpush1.msra.mxu0 0.0
    %4006 = vmatprep.subr.mxu0 0.0
    %4007 = vmatpush1.msra.mxu0 0.0
    %4008 = vmatprep.subr.mxu0 0.0
    %4009 = vmatpush1.msra.mxu0 0.0
    %4010 = vmatprep.mubr.f32.mxu0 0.0
    %4011 = vmatmul.mubr.f32.gmra.mrb[0].mxu0 %v3780
    %v4012 = vpop.f32.mrb[0].mxu0
    %v4013 = vadd.f32 0.0, %v4012
    %v4014 = vpop.f32.mrb[0].mxu0
    %v4015 = vadd.f32 0.0, %v4014
    %4016 = vdwg.mxu0
    %4017 = vmatprep.subr.mxu0 %v82
    %4018 = vmatpush1.msra.mxu0 %v81
    %4019 = vmatprep.subr.mxu0 %v86
    %4020 = vmatpush1.msra.mxu0 %v85
    %4021 = vmatprep.subr.mxu0 %v90
    %4022 = vmatpush1.msra.mxu0 %v89
    %4023 = vmatprep.subr.mxu0 %v94
    %4024 = vmatpush1.msra.mxu0 %v93
    %4025 = vmatprep.subr.mxu0 0.0
    %4026 = vmatpush1.msra.mxu0 0.0
    %4027 = vmatprep.subr.mxu0 0.0
    %4028 = vmatpush1.msra.mxu0 0.0
    %4029 = vmatprep.subr.mxu0 0.0
    %4030 = vmatpush1.msra.mxu0 0.0
    %4031 = vmatprep.subr.mxu0 0.0
    %4032 = vmatpush1.msra.mxu0 0.0
    %4033 = vmatprep.subr.mxu0 0.0
    %4034 = vmatpush1.msra.mxu0 0.0
    %4035 = vmatprep.subr.mxu0 0.0
    %4036 = vmatpush1.msra.mxu0 0.0
    %4037 = vmatprep.subr.mxu0 0.0
    %4038 = vmatpush1.msra.mxu0 0.0
    %4039 = vmatprep.subr.mxu0 0.0
    %4040 = vmatpush1.msra.mxu0 0.0
    %4041 = vmatprep.subr.mxu0 0.0
    %4042 = vmatpush1.msra.mxu0 0.0
    %4043 = vmatprep.subr.mxu0 0.0
    %4044 = vmatpush1.msra.mxu0 0.0
    %4045 = vmatprep.subr.mxu0 0.0
    %4046 = vmatpush1.msra.mxu0 0.0
    %4047 = vmatprep.subr.mxu0 0.0
    %4048 = vmatpush1.msra.mxu0 0.0
    %4049 = vmatprep.subr.mxu0 0.0
    %4050 = vmatpush1.msra.mxu0 0.0
    %4051 = vmatprep.subr.mxu0 0.0
    %4052 = vmatpush1.msra.mxu0 0.0
    %4053 = vmatprep.subr.mxu0 0.0
    %4054 = vmatpush1.msra.mxu0 0.0
    %4055 = vmatprep.subr.mxu0 0.0
    %4056 = vmatpush1.msra.mxu0 0.0
    %4057 = vmatprep.subr.mxu0 0.0
    %4058 = vmatpush1.msra.mxu0 0.0
    %4059 = vmatprep.subr.mxu0 0.0
    %4060 = vmatpush1.msra.mxu0 0.0
    %4061 = vmatprep.subr.mxu0 0.0
    %4062 = vmatpush1.msra.mxu0 0.0
    %4063 = vmatprep.subr.mxu0 0.0
    %4064 = vmatpush1.msra.mxu0 0.0
    %4065 = vmatprep.subr.mxu0 0.0
    %4066 = vmatpush1.msra.mxu0 0.0
    %4067 = vmatprep.subr.mxu0 0.0
    %4068 = vmatpush1.msra.mxu0 0.0
    %4069 = vmatprep.subr.mxu0 0.0
    %4070 = vmatpush1.msra.mxu0 0.0
    %4071 = vmatprep.subr.mxu0 0.0
    %4072 = vmatpush1.msra.mxu0 0.0
    %4073 = vmatprep.subr.mxu0 0.0
    %4074 = vmatpush1.msra.mxu0 0.0
    %4075 = vmatprep.subr.mxu0 0.0
    %4076 = vmatpush1.msra.mxu0 0.0
    %4077 = vmatprep.subr.mxu0 0.0
    %4078 = vmatpush1.msra.mxu0 0.0
    %4079 = vmatprep.subr.mxu0 0.0
    %4080 = vmatpush1.msra.mxu0 0.0
    %4081 = vmatprep.mubr.f32.mxu0 0.0
    %4082 = vmatmul.mubr.f32.gmra.mrb[0].mxu0 %v3780
    %v4083 = vpop.f32.mrb[0].mxu0
    %v4084 = vadd.f32 0.0, %v4083
    %v4085 = vpop.f32.mrb[0].mxu0
    %v4086 = vadd.f32 0.0, %v4085
    %4087 = vdwg.mxu0
    %v4092 = vcombine.low %v4013, %v4015
    %v4093 = vcombine.low %v4084, %v4086
    %v4095 = vunpack.c.l.s4 1966171168
    %v4096 = vunpack.c.0.s8 %v4095
    %v4097 = vlaneseq
    %v4098 = vshrl.u32 %v4097, 7
    %v4099 = vsub.s32 %v4096, %v4098
    %v4100 = vrot.slane %v4092, %v4099
    %v4102 = vunpack.c.l.s4 1966171168
    %v4103 = vunpack.c.0.s8 %v4102
    %v4104 = vlaneseq
    %v4105 = vshrl.u32 %v4104, 7
    %v4106 = vsub.s32 %v4103, %v4105
    %v4107 = vrot.slane %v4093, %v4106
    %v4108 = vcombine.low %v4100, %v4107
    %v4110 = vunpack.c.l.s4 1966171168
    %v4111 = vunpack.c.0.s8 %v4110
    %v4112 = vlaneseq
    %v4113 = vshrl.u32 %v4112, 7
    %v4114 = vsub.s32 %v4111, %v4113
    %v4115 = vrot.slane %v4108, %v4114
    %v4117 = vadd.f32 %v3945, %v4115
    %v4118 = vadd.f32 %v4117, %v71
    %v4119 = vtanh.pop %v4118
    %v4120 = vmul.f32 %v4119, 0.5
    %v4121 = vadd.f32 %v4120, 0.5
    %v4123 = vrot.slane %v4119, 1
    %v4125 = vmul.f32 %v4123, 0.5
    %v4126 = vadd.f32 %v4125, 0.5
    %v4127 = vrot.slane %v4119, 3
    %v4129 = vmul.f32 %v4127, 0.5
    %v4130 = vadd.f32 %v4129, 0.5
    %v4131 = vmul.f32 %v4126, %v3325
    %v4132 = vrot.slane %v4119, 2
    %v4134 = vmul.f32 %v4121, %v4132
    %v4135 = vadd.f32 %v4131, %v4134
    %v4136 = vtanh.pop %v4135
    %v4137 = vmul.f32 %v4130, %v4136
    %v4139 = vsel %vm95, %v3636, 0
    %4141 = vmatprep.subr.mxu0 %v865
    %4142 = vmatpush1.msra.mxu0 %v864
    %4143 = vmatprep.subr.mxu0 %v869
    %4144 = vmatpush1.msra.mxu0 %v868
    %4145 = vmatprep.subr.mxu0 %v873
    %4146 = vmatpush1.msra.mxu0 %v872
    %4147 = vmatprep.subr.mxu0 %v877
    %4148 = vmatpush1.msra.mxu0 %v876
    %4149 = vmatprep.subr.mxu0 0.0
    %4150 = vmatpush1.msra.mxu0 0.0
    %4151 = vmatprep.subr.mxu0 0.0
    %4152 = vmatpush1.msra.mxu0 0.0
    %4153 = vmatprep.subr.mxu0 0.0
    %4154 = vmatpush1.msra.mxu0 0.0
    %4155 = vmatprep.subr.mxu0 0.0
    %4156 = vmatpush1.msra.mxu0 0.0
    %4157 = vmatprep.subr.mxu0 0.0
    %4158 = vmatpush1.msra.mxu0 0.0
    %4159 = vmatprep.subr.mxu0 0.0
    %4160 = vmatpush1.msra.mxu0 0.0
    %4161 = vmatprep.subr.mxu0 0.0
    %4162 = vmatpush1.msra.mxu0 0.0
    %4163 = vmatprep.subr.mxu0 0.0
    %4164 = vmatpush1.msra.mxu0 0.0
    %4165 = vmatprep.subr.mxu0 0.0
    %4166 = vmatpush1.msra.mxu0 0.0
    %4167 = vmatprep.subr.mxu0 0.0
    %4168 = vmatpush1.msra.mxu0 0.0
    %4169 = vmatprep.subr.mxu0 0.0
    %4170 = vmatpush1.msra.mxu0 0.0
    %4171 = vmatprep.subr.mxu0 0.0
    %4172 = vmatpush1.msra.mxu0 0.0
    %4173 = vmatprep.subr.mxu0 0.0
    %4174 = vmatpush1.msra.mxu0 0.0
    %4175 = vmatprep.subr.mxu0 0.0
    %4176 = vmatpush1.msra.mxu0 0.0
    %4177 = vmatprep.subr.mxu0 0.0
    %4178 = vmatpush1.msra.mxu0 0.0
    %4179 = vmatprep.subr.mxu0 0.0
    %4180 = vmatpush1.msra.mxu0 0.0
    %4181 = vmatprep.subr.mxu0 0.0
    %4182 = vmatpush1.msra.mxu0 0.0
    %4183 = vmatprep.subr.mxu0 0.0
    %4184 = vmatpush1.msra.mxu0 0.0
    %4185 = vmatprep.subr.mxu0 0.0
    %4186 = vmatpush1.msra.mxu0 0.0
    %4187 = vmatprep.subr.mxu0 0.0
    %4188 = vmatpush1.msra.mxu0 0.0
    %4189 = vmatprep.subr.mxu0 0.0
    %4190 = vmatpush1.msra.mxu0 0.0
    %4191 = vmatprep.subr.mxu0 0.0
    %4192 = vmatpush1.msra.mxu0 0.0
    %4193 = vmatprep.subr.mxu0 0.0
    %4194 = vmatpush1.msra.mxu0 0.0
    %4195 = vmatprep.subr.mxu0 0.0
    %4196 = vmatpush1.msra.mxu0 0.0
    %4197 = vmatprep.subr.mxu0 0.0
    %4198 = vmatpush1.msra.mxu0 0.0
    %4199 = vmatprep.subr.mxu0 0.0
    %4200 = vmatpush1.msra.mxu0 0.0
    %4201 = vmatprep.subr.mxu0 0.0
    %4202 = vmatpush1.msra.mxu0 0.0
    %4203 = vmatprep.subr.mxu0 0.0
    %4204 = vmatpush1.msra.mxu0 0.0
    %4205 = vmatprep.mubr.f32.mxu0 0.0
    %4206 = vmatmul.mubr.f32.gmra.mrb[0].mxu0 %v4139
    %v4207 = vpop.f32.mrb[0].mxu0
    %v4208 = vadd.f32 0.0, %v4207
    %v4209 = vpop.f32.mrb[0].mxu0
    %v4210 = vadd.f32 0.0, %v4209
    %4211 = vdwg.mxu0
    %4212 = vmatprep.subr.mxu0 %v867
    %4213 = vmatpush1.msra.mxu0 %v866
    %4214 = vmatprep.subr.mxu0 %v871
    %4215 = vmatpush1.msra.mxu0 %v870
    %4216 = vmatprep.subr.mxu0 %v875
    %4217 = vmatpush1.msra.mxu0 %v874
    %4218 = vmatprep.subr.mxu0 %v879
    %4219 = vmatpush1.msra.mxu0 %v878
    %4220 = vmatprep.subr.mxu0 0.0
    %4221 = vmatpush1.msra.mxu0 0.0
    %4222 = vmatprep.subr.mxu0 0.0
    %4223 = vmatpush1.msra.mxu0 0.0
    %4224 = vmatprep.subr.mxu0 0.0
    %4225 = vmatpush1.msra.mxu0 0.0
    %4226 = vmatprep.subr.mxu0 0.0
    %4227 = vmatpush1.msra.mxu0 0.0
    %4228 = vmatprep.subr.mxu0 0.0
    %4229 = vmatpush1.msra.mxu0 0.0
    %4230 = vmatprep.subr.mxu0 0.0
    %4231 = vmatpush1.msra.mxu0 0.0
    %4232 = vmatprep.subr.mxu0 0.0
    %4233 = vmatpush1.msra.mxu0 0.0
    %4234 = vmatprep.subr.mxu0 0.0
    %4235 = vmatpush1.msra.mxu0 0.0
    %4236 = vmatprep.subr.mxu0 0.0
    %4237 = vmatpush1.msra.mxu0 0.0
    %4238 = vmatprep.subr.mxu0 0.0
    %4239 = vmatpush1.msra.mxu0 0.0
    %4240 = vmatprep.subr.mxu0 0.0
    %4241 = vmatpush1.msra.mxu0 0.0
    %4242 = vmatprep.subr.mxu0 0.0
    %4243 = vmatpush1.msra.mxu0 0.0
    %4244 = vmatprep.subr.mxu0 0.0
    %4245 = vmatpush1.msra.mxu0 0.0
    %4246 = vmatprep.subr.mxu0 0.0
    %4247 = vmatpush1.msra.mxu0 0.0
    %4248 = vmatprep.subr.mxu0 0.0
    %4249 = vmatpush1.msra.mxu0 0.0
    %4250 = vmatprep.subr.mxu0 0.0
    %4251 = vmatpush1.msra.mxu0 0.0
    %4252 = vmatprep.subr.mxu0 0.0
    %4253 = vmatpush1.msra.mxu0 0.0
    %4254 = vmatprep.subr.mxu0 0.0
    %4255 = vmatpush1.msra.mxu0 0.0
    %4256 = vmatprep.subr.mxu0 0.0
    %4257 = vmatpush1.msra.mxu0 0.0
    %4258 = vmatprep.subr.mxu0 0.0
    %4259 = vmatpush1.msra.mxu0 0.0
    %4260 = vmatprep.subr.mxu0 0.0
    %4261 = vmatpush1.msra.mxu0 0.0
    %4262 = vmatprep.subr.mxu0 0.0
    %4263 = vmatpush1.msra.mxu0 0.0
    %4264 = vmatprep.subr.mxu0 0.0
    %4265 = vmatpush1.msra.mxu0 0.0
    %4266 = vmatprep.subr.mxu0 0.0
    %4267 = vmatpush1.msra.mxu0 0.0
    %4268 = vmatprep.subr.mxu0 0.0
    %4269 = vmatpush1.msra.mxu0 0.0
    %4270 = vmatprep.subr.mxu0 0.0
    %4271 = vmatpush1.msra.mxu0 0.0
    %4272 = vmatprep.subr.mxu0 0.0
    %4273 = vmatpush1.msra.mxu0 0.0
    %4274 = vmatprep.subr.mxu0 0.0
    %4275 = vmatpush1.msra.mxu0 0.0
    %4276 = vmatprep.mubr.f32.mxu0 0.0
    %4277 = vmatmul.mubr.f32.gmra.mrb[0].mxu0 %v4139
    %v4278 = vpop.f32.mrb[0].mxu0
    %v4279 = vadd.f32 0.0, %v4278
    %v4280 = vpop.f32.mrb[0].mxu0
    %v4281 = vadd.f32 0.0, %v4280
    %4282 = vdwg.mxu0
    %v4284 = vsel %vm95, %v3942, 0
    %4286 = vmatprep.subr.mxu0 %v848
    %4287 = vmatpush1.msra.mxu0 %v847
    %4288 = vmatprep.subr.mxu0 %v852
    %4289 = vmatpush1.msra.mxu0 %v851
    %4290 = vmatprep.subr.mxu0 %v856
    %4291 = vmatpush1.msra.mxu0 %v855
    %4292 = vmatprep.subr.mxu0 %v860
    %4293 = vmatpush1.msra.mxu0 %v859
    %4294 = vmatprep.subr.mxu0 0.0
    %4295 = vmatpush1.msra.mxu0 0.0
    %4296 = vmatprep.subr.mxu0 0.0
    %4297 = vmatpush1.msra.mxu0 0.0
    %4298 = vmatprep.subr.mxu0 0.0
    %4299 = vmatpush1.msra.mxu0 0.0
    %4300 = vmatprep.subr.mxu0 0.0
    %4301 = vmatpush1.msra.mxu0 0.0
    %4302 = vmatprep.subr.mxu0 0.0
    %4303 = vmatpush1.msra.mxu0 0.0
    %4304 = vmatprep.subr.mxu0 0.0
    %4305 = vmatpush1.msra.mxu0 0.0
    %4306 = vmatprep.subr.mxu0 0.0
    %4307 = vmatpush1.msra.mxu0 0.0
    %4308 = vmatprep.subr.mxu0 0.0
    %4309 = vmatpush1.msra.mxu0 0.0
    %4310 = vmatprep.subr.mxu0 0.0
    %4311 = vmatpush1.msra.mxu0 0.0
    %4312 = vmatprep.subr.mxu0 0.0
    %4313 = vmatpush1.msra.mxu0 0.0
    %4314 = vmatprep.subr.mxu0 0.0
    %4315 = vmatpush1.msra.mxu0 0.0
    %4316 = vmatprep.subr.mxu0 0.0
    %4317 = vmatpush1.msra.mxu0 0.0
    %4318 = vmatprep.subr.mxu0 0.0
    %4319 = vmatpush1.msra.mxu0 0.0
    %4320 = vmatprep.subr.mxu0 0.0
    %4321 = vmatpush1.msra.mxu0 0.0
    %4322 = vmatprep.subr.mxu0 0.0
    %4323 = vmatpush1.msra.mxu0 0.0
    %4324 = vmatprep.subr.mxu0 0.0
    %4325 = vmatpush1.msra.mxu0 0.0
    %4326 = vmatprep.subr.mxu0 0.0
    %4327 = vmatpush1.msra.mxu0 0.0
    %4328 = vmatprep.subr.mxu0 0.0
    %4329 = vmatpush1.msra.mxu0 0.0
    %4330 = vmatprep.subr.mxu0 0.0
    %4331 = vmatpush1.msra.mxu0 0.0
    %4332 = vmatprep.subr.mxu0 0.0
    %4333 = vmatpush1.msra.mxu0 0.0
    %4334 = vmatprep.subr.mxu0 0.0
    %4335 = vmatpush1.msra.mxu0 0.0
    %4336 = vmatprep.subr.mxu0 0.0
    %4337 = vmatpush1.msra.mxu0 0.0
    %4338 = vmatprep.subr.mxu0 0.0
    %4339 = vmatpush1.msra.mxu0 0.0
    %4340 = vmatprep.subr.mxu0 0.0
    %4341 = vmatpush1.msra.mxu0 0.0
    %4342 = vmatprep.subr.mxu0 0.0
    %4343 = vmatpush1.msra.mxu0 0.0
    %4344 = vmatprep.subr.mxu0 0.0
    %4345 = vmatpush1.msra.mxu0 0.0
    %4346 = vmatprep.subr.mxu0 0.0
    %4347 = vmatpush1.msra.mxu0 0.0
    %4348 = vmatprep.subr.mxu0 0.0
    %4349 = vmatpush1.msra.mxu0 0.0
    %4350 = vmatprep.mubr.f32.mxu0 0.0
    %4351 = vmatmul.mubr.f32.gmra.mrb[0].mxu0 %v4284
    %v4352 = vpop.f32.mrb[0].mxu0
    %v4353 = vadd.f32 %v4208, %v4352
    %v4354 = vpop.f32.mrb[0].mxu0
    %v4355 = vadd.f32 %v4210, %v4354
    %4356 = vdwg.mxu0
    %4357 = vmatprep.subr.mxu0 %v850
    %4358 = vmatpush1.msra.mxu0 %v849
    %4359 = vmatprep.subr.mxu0 %v854
    %4360 = vmatpush1.msra.mxu0 %v853
    %4361 = vmatprep.subr.mxu0 %v858
    %4362 = vmatpush1.msra.mxu0 %v857
    %4363 = vmatprep.subr.mxu0 %v862
    %4364 = vmatpush1.msra.mxu0 %v861
    %4365 = vmatprep.subr.mxu0 0.0
    %4366 = vmatpush1.msra.mxu0 0.0
    %4367 = vmatprep.subr.mxu0 0.0
    %4368 = vmatpush1.msra.mxu0 0.0
    %4369 = vmatprep.subr.mxu0 0.0
    %4370 = vmatpush1.msra.mxu0 0.0
    %4371 = vmatprep.subr.mxu0 0.0
    %4372 = vmatpush1.msra.mxu0 0.0
    %4373 = vmatprep.subr.mxu0 0.0
    %4374 = vmatpush1.msra.mxu0 0.0
    %4375 = vmatprep.subr.mxu0 0.0
    %4376 = vmatpush1.msra.mxu0 0.0
    %4377 = vmatprep.subr.mxu0 0.0
    %4378 = vmatpush1.msra.mxu0 0.0
    %4379 = vmatprep.subr.mxu0 0.0
    %4380 = vmatpush1.msra.mxu0 0.0
    %4381 = vmatprep.subr.mxu0 0.0
    %4382 = vmatpush1.msra.mxu0 0.0
    %4383 = vmatprep.subr.mxu0 0.0
    %4384 = vmatpush1.msra.mxu0 0.0
    %4385 = vmatprep.subr.mxu0 0.0
    %4386 = vmatpush1.msra.mxu0 0.0
    %4387 = vmatprep.subr.mxu0 0.0
    %4388 = vmatpush1.msra.mxu0 0.0
    %4389 = vmatprep.subr.mxu0 0.0
    %4390 = vmatpush1.msra.mxu0 0.0
    %4391 = vmatprep.subr.mxu0 0.0
    %4392 = vmatpush1.msra.mxu0 0.0
    %4393 = vmatprep.subr.mxu0 0.0
    %4394 = vmatpush1.msra.mxu0 0.0
    %4395 = vmatprep.subr.mxu0 0.0
    %4396 = vmatpush1.msra.mxu0 0.0
    %4397 = vmatprep.subr.mxu0 0.0
    %4398 = vmatpush1.msra.mxu0 0.0
    %4399 = vmatprep.subr.mxu0 0.0
    %4400 = vmatpush1.msra.mxu0 0.0
    %4401 = vmatprep.subr.mxu0 0.0
    %4402 = vmatpush1.msra.mxu0 0.0
    %4403 = vmatprep.subr.mxu0 0.0
    %4404 = vmatpush1.msra.mxu0 0.0
    %4405 = vmatprep.subr.mxu0 0.0
    %4406 = vmatpush1.msra.mxu0 0.0
    %4407 = vmatprep.subr.mxu0 0.0
    %4408 = vmatpush1.msra.mxu0 0.0
    %4409 = vmatprep.subr.mxu0 0.0
    %4410 = vmatpush1.msra.mxu0 0.0
    %4411 = vmatprep.subr.mxu0 0.0
    %4412 = vmatpush1.msra.mxu0 0.0
    %4413 = vmatprep.subr.mxu0 0.0
    %4414 = vmatpush1.msra.mxu0 0.0
    %4415 = vmatprep.subr.mxu0 0.0
    %4416 = vmatpush1.msra.mxu0 0.0
    %4417 = vmatprep.subr.mxu0 0.0
    %4418 = vmatpush1.msra.mxu0 0.0
    %4419 = vmatprep.subr.mxu0 0.0
    %4420 = vmatpush1.msra.mxu0 0.0
    %4421 = vmatprep.mubr.f32.mxu0 0.0
    %4422 = vmatmul.mubr.f32.gmra.mrb[0].mxu0 %v4284
    %v4423 = vpop.f32.mrb[0].mxu0
    %v4424 = vadd.f32 %v4279, %v4423
    %v4425 = vpop.f32.mrb[0].mxu0
    %v4426 = vadd.f32 %v4281, %v4425
    %4427 = vdwg.mxu0
    %v4428 = vadd.f32 %v4353, %v1171
    %v4429 = vadd.f32 %v4355, %v1175
    %v4430 = vadd.f32 %v4424, %v1179
    %v4431 = vadd.f32 %v4426, %v1183
    %v4432 = vtanh.pop %v4428
    %v4433 = vtanh.pop %v4429
    %v4434 = vtanh.pop %v4430
    %v4435 = vtanh.pop %v4431
    %v4436 = vmul.f32 %v4432, 0.5
    %v4437 = vadd.f32 %v4436, 0.5
    %v4438 = vmul.f32 %v4433, 0.5
    %v4439 = vadd.f32 %v4438, 0.5
    %v4440 = vmul.f32 %v4435, 0.5
    %v4441 = vadd.f32 %v4440, 0.5
    %v4442 = vmul.f32 %v4439, %v3634
    %v4443 = vmul.f32 %v4437, %v4434
    %v4444 = vadd.f32 %v4442, %v4443
    %v4445 = vtanh.pop %v4444
    %v4446 = vmul.f32 %v4441, %v4445
    %4447 = vmatprep.subr.mxu0 %v309
    %4448 = vmatpush1.msra.mxu0 %v308
    %4449 = vmatprep.subr.mxu0 %v313
    %4450 = vmatpush1.msra.mxu0 %v312
    %4451 = vmatprep.subr.mxu0 %v317
    %4452 = vmatpush1.msra.mxu0 %v316
    %4453 = vmatprep.subr.mxu0 %v321
    %4454 = vmatpush1.msra.mxu0 %v320
    %4455 = vmatprep.subr.mxu0 0.0
    %4456 = vmatpush1.msra.mxu0 0.0
    %4457 = vmatprep.subr.mxu0 0.0
    %4458 = vmatpush1.msra.mxu0 0.0
    %4459 = vmatprep.subr.mxu0 0.0
    %4460 = vmatpush1.msra.mxu0 0.0
    %4461 = vmatprep.subr.mxu0 0.0
    %4462 = vmatpush1.msra.mxu0 0.0
    %4463 = vmatprep.subr.mxu0 0.0
    %4464 = vmatpush1.msra.mxu0 0.0
    %4465 = vmatprep.subr.mxu0 0.0
    %4466 = vmatpush1.msra.mxu0 0.0
    %4467 = vmatprep.subr.mxu0 0.0
    %4468 = vmatpush1.msra.mxu0 0.0
    %4469 = vmatprep.subr.mxu0 0.0
    %4470 = vmatpush1.msra.mxu0 0.0
    %4471 = vmatprep.subr.mxu0 0.0
    %4472 = vmatpush1.msra.mxu0 0.0
    %4473 = vmatprep.subr.mxu0 0.0
    %4474 = vmatpush1.msra.mxu0 0.0
    %4475 = vmatprep.subr.mxu0 0.0
    %4476 = vmatpush1.msra.mxu0 0.0
    %4477 = vmatprep.subr.mxu0 0.0
    %4478 = vmatpush1.msra.mxu0 0.0
    %4479 = vmatprep.subr.mxu0 0.0
    %4480 = vmatpush1.msra.mxu0 0.0
    %4481 = vmatprep.subr.mxu0 0.0
    %4482 = vmatpush1.msra.mxu0 0.0
    %4483 = vmatprep.subr.mxu0 0.0
    %4484 = vmatpush1.msra.mxu0 0.0
    %4485 = vmatprep.subr.mxu0 0.0
    %4486 = vmatpush1.msra.mxu0 0.0
    %4487 = vmatprep.subr.mxu0 0.0
    %4488 = vmatpush1.msra.mxu0 0.0
    %4489 = vmatprep.subr.mxu0 0.0
    %4490 = vmatpush1.msra.mxu0 0.0
    %4491 = vmatprep.subr.mxu0 0.0
    %4492 = vmatpush1.msra.mxu0 0.0
    %4493 = vmatprep.subr.mxu0 0.0
    %4494 = vmatpush1.msra.mxu0 0.0
    %4495 = vmatprep.subr.mxu0 0.0
    %4496 = vmatpush1.msra.mxu0 0.0
    %4497 = vmatprep.subr.mxu0 0.0
    %4498 = vmatpush1.msra.mxu0 0.0
    %4499 = vmatprep.subr.mxu0 0.0
    %4500 = vmatpush1.msra.mxu0 0.0
    %4501 = vmatprep.subr.mxu0 0.0
    %4502 = vmatpush1.msra.mxu0 0.0
    %4503 = vmatprep.subr.mxu0 0.0
    %4504 = vmatpush1.msra.mxu0 0.0
    %4505 = vmatprep.subr.mxu0 0.0
    %4506 = vmatpush1.msra.mxu0 0.0
    %4507 = vmatprep.subr.mxu0 0.0
    %4508 = vmatpush1.msra.mxu0 0.0
    %4509 = vmatprep.subr.mxu0 0.0
    %4510 = vmatpush1.msra.mxu0 0.0
    %4511 = vmatprep.mubr.f32.mxu0 0.0
    %4512 = vmatmul.mubr.f32.gmra.mrb[0].mxu0 %v4284
    %v4513 = vpop.f32.mrb[0].mxu0
    %v4514 = vadd.f32 0.0, %v4513
    %v4515 = vpop.f32.mrb[0].mxu0
    %v4516 = vadd.f32 0.0, %v4515
    %4517 = vdwg.mxu0
    %4518 = vmatprep.subr.mxu0 %v311
    %4519 = vmatpush1.msra.mxu0 %v310
    %4520 = vmatprep.subr.mxu0 %v315
    %4521 = vmatpush1.msra.mxu0 %v314
    %4522 = vmatprep.subr.mxu0 %v319
    %4523 = vmatpush1.msra.mxu0 %v318
    %4524 = vmatprep.subr.mxu0 %v323
    %4525 = vmatpush1.msra.mxu0 %v322
    %4526 = vmatprep.subr.mxu0 0.0
    %4527 = vmatpush1.msra.mxu0 0.0
    %4528 = vmatprep.subr.mxu0 0.0
    %4529 = vmatpush1.msra.mxu0 0.0
    %4530 = vmatprep.subr.mxu0 0.0
    %4531 = vmatpush1.msra.mxu0 0.0
    %4532 = vmatprep.subr.mxu0 0.0
    %4533 = vmatpush1.msra.mxu0 0.0
    %4534 = vmatprep.subr.mxu0 0.0
    %4535 = vmatpush1.msra.mxu0 0.0
    %4536 = vmatprep.subr.mxu0 0.0
    %4537 = vmatpush1.msra.mxu0 0.0
    %4538 = vmatprep.subr.mxu0 0.0
    %4539 = vmatpush1.msra.mxu0 0.0
    %4540 = vmatprep.subr.mxu0 0.0
    %4541 = vmatpush1.msra.mxu0 0.0
    %4542 = vmatprep.subr.mxu0 0.0
    %4543 = vmatpush1.msra.mxu0 0.0
    %4544 = vmatprep.subr.mxu0 0.0
    %4545 = vmatpush1.msra.mxu0 0.0
    %4546 = vmatprep.subr.mxu0 0.0
    %4547 = vmatpush1.msra.mxu0 0.0
    %4548 = vmatprep.subr.mxu0 0.0
    %4549 = vmatpush1.msra.mxu0 0.0
    %4550 = vmatprep.subr.mxu0 0.0
    %4551 = vmatpush1.msra.mxu0 0.0
    %4552 = vmatprep.subr.mxu0 0.0
    %4553 = vmatpush1.msra.mxu0 0.0
    %4554 = vmatprep.subr.mxu0 0.0
    %4555 = vmatpush1.msra.mxu0 0.0
    %4556 = vmatprep.subr.mxu0 0.0
    %4557 = vmatpush1.msra.mxu0 0.0
    %4558 = vmatprep.subr.mxu0 0.0
    %4559 = vmatpush1.msra.mxu0 0.0
    %4560 = vmatprep.subr.mxu0 0.0
    %4561 = vmatpush1.msra.mxu0 0.0
    %4562 = vmatprep.subr.mxu0 0.0
    %4563 = vmatpush1.msra.mxu0 0.0
    %4564 = vmatprep.subr.mxu0 0.0
    %4565 = vmatpush1.msra.mxu0 0.0
    %4566 = vmatprep.subr.mxu0 0.0
    %4567 = vmatpush1.msra.mxu0 0.0
    %4568 = vmatprep.subr.mxu0 0.0
    %4569 = vmatpush1.msra.mxu0 0.0
    %4570 = vmatprep.subr.mxu0 0.0
    %4571 = vmatpush1.msra.mxu0 0.0
    %4572 = vmatprep.subr.mxu0 0.0
    %4573 = vmatpush1.msra.mxu0 0.0
    %4574 = vmatprep.subr.mxu0 0.0
    %4575 = vmatpush1.msra.mxu0 0.0
    %4576 = vmatprep.subr.mxu0 0.0
    %4577 = vmatpush1.msra.mxu0 0.0
    %4578 = vmatprep.subr.mxu0 0.0
    %4579 = vmatpush1.msra.mxu0 0.0
    %4580 = vmatprep.subr.mxu0 0.0
    %4581 = vmatpush1.msra.mxu0 0.0
    %4582 = vmatprep.mubr.f32.mxu0 0.0
    %4583 = vmatmul.mubr.f32.gmra.mrb[0].mxu0 %v4284
    %v4584 = vpop.f32.mrb[0].mxu0
    %v4585 = vadd.f32 0.0, %v4584
    %v4586 = vpop.f32.mrb[0].mxu0
    %v4587 = vadd.f32 0.0, %v4586
    %4588 = vdwg.mxu0
    %v4590 = vsel %vm95, %v4137, 0
    %4592 = vmatprep.subr.mxu0 %v292
    %4593 = vmatpush1.msra.mxu0 %v291
    %4594 = vmatprep.subr.mxu0 %v296
    %4595 = vmatpush1.msra.mxu0 %v295
    %4596 = vmatprep.subr.mxu0 %v300
    %4597 = vmatpush1.msra.mxu0 %v299
    %4598 = vmatprep.subr.mxu0 %v304
    %4599 = vmatpush1.msra.mxu0 %v303
    %4600 = vmatprep.subr.mxu0 0.0
    %4601 = vmatpush1.msra.mxu0 0.0
    %4602 = vmatprep.subr.mxu0 0.0
    %4603 = vmatpush1.msra.mxu0 0.0
    %4604 = vmatprep.subr.mxu0 0.0
    %4605 = vmatpush1.msra.mxu0 0.0
    %4606 = vmatprep.subr.mxu0 0.0
    %4607 = vmatpush1.msra.mxu0 0.0
    %4608 = vmatprep.subr.mxu0 0.0
    %4609 = vmatpush1.msra.mxu0 0.0
    %4610 = vmatprep.subr.mxu0 0.0
    %4611 = vmatpush1.msra.mxu0 0.0
    %4612 = vmatprep.subr.mxu0 0.0
    %4613 = vmatpush1.msra.mxu0 0.0
    %4614 = vmatprep.subr.mxu0 0.0
    %4615 = vmatpush1.msra.mxu0 0.0
    %4616 = vmatprep.subr.mxu0 0.0
    %4617 = vmatpush1.msra.mxu0 0.0
    %4618 = vmatprep.subr.mxu0 0.0
    %4619 = vmatpush1.msra.mxu0 0.0
    %4620 = vmatprep.subr.mxu0 0.0
    %4621 = vmatpush1.msra.mxu0 0.0
    %4622 = vmatprep.subr.mxu0 0.0
    %4623 = vmatpush1.msra.mxu0 0.0
    %4624 = vmatprep.subr.mxu0 0.0
    %4625 = vmatpush1.msra.mxu0 0.0
    %4626 = vmatprep.subr.mxu0 0.0
    %4627 = vmatpush1.msra.mxu0 0.0
    %4628 = vmatprep.subr.mxu0 0.0
    %4629 = vmatpush1.msra.mxu0 0.0
    %4630 = vmatprep.subr.mxu0 0.0
    %4631 = vmatpush1.msra.mxu0 0.0
    %4632 = vmatprep.subr.mxu0 0.0
    %4633 = vmatpush1.msra.mxu0 0.0
    %4634 = vmatprep.subr.mxu0 0.0
    %4635 = vmatpush1.msra.mxu0 0.0
    %4636 = vmatprep.subr.mxu0 0.0
    %4637 = vmatpush1.msra.mxu0 0.0
    %4638 = vmatprep.subr.mxu0 0.0
    %4639 = vmatpush1.msra.mxu0 0.0
    %4640 = vmatprep.subr.mxu0 0.0
    %4641 = vmatpush1.msra.mxu0 0.0
    %4642 = vmatprep.subr.mxu0 0.0
    %4643 = vmatpush1.msra.mxu0 0.0
    %4644 = vmatprep.subr.mxu0 0.0
    %4645 = vmatpush1.msra.mxu0 0.0
    %4646 = vmatprep.subr.mxu0 0.0
    %4647 = vmatpush1.msra.mxu0 0.0
    %4648 = vmatprep.subr.mxu0 0.0
    %4649 = vmatpush1.msra.mxu0 0.0
    %4650 = vmatprep.subr.mxu0 0.0
    %4651 = vmatpush1.msra.mxu0 0.0
    %4652 = vmatprep.subr.mxu0 0.0
    %4653 = vmatpush1.msra.mxu0 0.0
    %4654 = vmatprep.subr.mxu0 0.0
    %4655 = vmatpush1.msra.mxu0 0.0
    %4656 = vmatprep.mubr.f32.mxu0 0.0
    %4657 = vmatmul.mubr.f32.gmra.mrb[0].mxu0 %v4590
    %v4658 = vpop.f32.mrb[0].mxu0
    %v4659 = vadd.f32 %v4514, %v4658
    %v4660 = vpop.f32.mrb[0].mxu0
    %v4661 = vadd.f32 %v4516, %v4660
    %4662 = vdwg.mxu0
    %4663 = vmatprep.subr.mxu0 %v294
    %4664 = vmatpush1.msra.mxu0 %v293
    %4665 = vmatprep.subr.mxu0 %v298
    %4666 = vmatpush1.msra.mxu0 %v297
    %4667 = vmatprep.subr.mxu0 %v302
    %4668 = vmatpush1.msra.mxu0 %v301
    %4669 = vmatprep.subr.mxu0 %v306
    %4670 = vmatpush1.msra.mxu0 %v305
    %4671 = vmatprep.subr.mxu0 0.0
    %4672 = vmatpush1.msra.mxu0 0.0
    %4673 = vmatprep.subr.mxu0 0.0
    %4674 = vmatpush1.msra.mxu0 0.0
    %4675 = vmatprep.subr.mxu0 0.0
    %4676 = vmatpush1.msra.mxu0 0.0
    %4677 = vmatprep.subr.mxu0 0.0
    %4678 = vmatpush1.msra.mxu0 0.0
    %4679 = vmatprep.subr.mxu0 0.0
    %4680 = vmatpush1.msra.mxu0 0.0
    %4681 = vmatprep.subr.mxu0 0.0
    %4682 = vmatpush1.msra.mxu0 0.0
    %4683 = vmatprep.subr.mxu0 0.0
    %4684 = vmatpush1.msra.mxu0 0.0
    %4685 = vmatprep.subr.mxu0 0.0
    %4686 = vmatpush1.msra.mxu0 0.0
    %4687 = vmatprep.subr.mxu0 0.0
    %4688 = vmatpush1.msra.mxu0 0.0
    %4689 = vmatprep.subr.mxu0 0.0
    %4690 = vmatpush1.msra.mxu0 0.0
    %4691 = vmatprep.subr.mxu0 0.0
    %4692 = vmatpush1.msra.mxu0 0.0
    %4693 = vmatprep.subr.mxu0 0.0
    %4694 = vmatpush1.msra.mxu0 0.0
    %4695 = vmatprep.subr.mxu0 0.0
    %4696 = vmatpush1.msra.mxu0 0.0
    %4697 = vmatprep.subr.mxu0 0.0
    %4698 = vmatpush1.msra.mxu0 0.0
    %4699 = vmatprep.subr.mxu0 0.0
    %4700 = vmatpush1.msra.mxu0 0.0
    %4701 = vmatprep.subr.mxu0 0.0
    %4702 = vmatpush1.msra.mxu0 0.0
    %4703 = vmatprep.subr.mxu0 0.0
    %4704 = vmatpush1.msra.mxu0 0.0
    %4705 = vmatprep.subr.mxu0 0.0
    %4706 = vmatpush1.msra.mxu0 0.0
    %4707 = vmatprep.subr.mxu0 0.0
    %4708 = vmatpush1.msra.mxu0 0.0
    %4709 = vmatprep.subr.mxu0 0.0
    %4710 = vmatpush1.msra.mxu0 0.0
    %4711 = vmatprep.subr.mxu0 0.0
    %4712 = vmatpush1.msra.mxu0 0.0
    %4713 = vmatprep.subr.mxu0 0.0
    %4714 = vmatpush1.msra.mxu0 0.0
    %4715 = vmatprep.subr.mxu0 0.0
    %4716 = vmatpush1.msra.mxu0 0.0
    %4717 = vmatprep.subr.mxu0 0.0
    %4718 = vmatpush1.msra.mxu0 0.0
    %4719 = vmatprep.subr.mxu0 0.0
    %4720 = vmatpush1.msra.mxu0 0.0
    %4721 = vmatprep.subr.mxu0 0.0
    %4722 = vmatpush1.msra.mxu0 0.0
    %4723 = vmatprep.subr.mxu0 0.0
    %4724 = vmatpush1.msra.mxu0 0.0
    %4725 = vmatprep.subr.mxu0 0.0
    %4726 = vmatpush1.msra.mxu0 0.0
    %4727 = vmatprep.mubr.f32.mxu0 0.0
    %4728 = vmatmul.mubr.f32.gmra.mrb[0].mxu0 %v4590
    %v4729 = vpop.f32.mrb[0].mxu0
    %v4730 = vadd.f32 %v4585, %v4729
    %v4731 = vpop.f32.mrb[0].mxu0
    %v4732 = vadd.f32 %v4587, %v4731
    %4733 = vdwg.mxu0
    %v4734 = vadd.f32 %v4659, %v615
    %v4735 = vadd.f32 %v4661, %v619
    %v4736 = vadd.f32 %v4730, %v623
    %v4737 = vadd.f32 %v4732, %v627
    %v4738 = vtanh.pop %v4734
    %v4739 = vtanh.pop %v4735
    %v4740 = vtanh.pop %v4736
    %v4741 = vtanh.pop %v4737
    %v4742 = vmul.f32 %v4738, 0.5
    %v4743 = vadd.f32 %v4742, 0.5
    %v4744 = vmul.f32 %v4739, 0.5
    %v4745 = vadd.f32 %v4744, 0.5
    %v4746 = vmul.f32 %v4741, 0.5
    %v4747 = vadd.f32 %v4746, 0.5
    %v4748 = vmul.f32 %v4745, %v3940
    %v4749 = vmul.f32 %v4743, %v4740
    %v4750 = vadd.f32 %v4748, %v4749
    %v4751 = vtanh.pop %v4750
    %v4752 = vmul.f32 %v4747, %v4751
    %s4753 = sld [smem:[#allocation3 + $0x6]]
    %v4754 = vstv %s4753
    %v4755 = vmul.f32 %v4754, %v70
    %4756 = vmatprep.subr.mxu0 %v80
    %4757 = vmatpush1.msra.mxu0 %v79
    %4758 = vmatprep.subr.mxu0 %v84
    %4759 = vmatpush1.msra.mxu0 %v83
    %4760 = vmatprep.subr.mxu0 %v88
    %4761 = vmatpush1.msra.mxu0 %v87
    %4762 = vmatprep.subr.mxu0 %v92
    %4763 = vmatpush1.msra.mxu0 %v91
    %4764 = vmatprep.subr.mxu0 0.0
    %4765 = vmatpush1.msra.mxu0 0.0
    %4766 = vmatprep.subr.mxu0 0.0
    %4767 = vmatpush1.msra.mxu0 0.0
    %4768 = vmatprep.subr.mxu0 0.0
    %4769 = vmatpush1.msra.mxu0 0.0
    %4770 = vmatprep.subr.mxu0 0.0
    %4771 = vmatpush1.msra.mxu0 0.0
    %4772 = vmatprep.subr.mxu0 0.0
    %4773 = vmatpush1.msra.mxu0 0.0
    %4774 = vmatprep.subr.mxu0 0.0
    %4775 = vmatpush1.msra.mxu0 0.0
    %4776 = vmatprep.subr.mxu0 0.0
    %4777 = vmatpush1.msra.mxu0 0.0
    %4778 = vmatprep.subr.mxu0 0.0
    %4779 = vmatpush1.msra.mxu0 0.0
    %4780 = vmatprep.subr.mxu0 0.0
    %4781 = vmatpush1.msra.mxu0 0.0
    %4782 = vmatprep.subr.mxu0 0.0
    %4783 = vmatpush1.msra.mxu0 0.0
    %4784 = vmatprep.subr.mxu0 0.0
    %4785 = vmatpush1.msra.mxu0 0.0
    %4786 = vmatprep.subr.mxu0 0.0
    %4787 = vmatpush1.msra.mxu0 0.0
    %4788 = vmatprep.subr.mxu0 0.0
    %4789 = vmatpush1.msra.mxu0 0.0
    %4790 = vmatprep.subr.mxu0 0.0
    %4791 = vmatpush1.msra.mxu0 0.0
    %4792 = vmatprep.subr.mxu0 0.0
    %4793 = vmatpush1.msra.mxu0 0.0
    %4794 = vmatprep.subr.mxu0 0.0
    %4795 = vmatpush1.msra.mxu0 0.0
    %4796 = vmatprep.subr.mxu0 0.0
    %4797 = vmatpush1.msra.mxu0 0.0
    %4798 = vmatprep.subr.mxu0 0.0
    %4799 = vmatpush1.msra.mxu0 0.0
    %4800 = vmatprep.subr.mxu0 0.0
    %4801 = vmatpush1.msra.mxu0 0.0
    %4802 = vmatprep.subr.mxu0 0.0
    %4803 = vmatpush1.msra.mxu0 0.0
    %4804 = vmatprep.subr.mxu0 0.0
    %4805 = vmatpush1.msra.mxu0 0.0
    %4806 = vmatprep.subr.mxu0 0.0
    %4807 = vmatpush1.msra.mxu0 0.0
    %4808 = vmatprep.subr.mxu0 0.0
    %4809 = vmatpush1.msra.mxu0 0.0
    %4810 = vmatprep.subr.mxu0 0.0
    %4811 = vmatpush1.msra.mxu0 0.0
    %4812 = vmatprep.subr.mxu0 0.0
    %4813 = vmatpush1.msra.mxu0 0.0
    %4814 = vmatprep.subr.mxu0 0.0
    %4815 = vmatpush1.msra.mxu0 0.0
    %4816 = vmatprep.subr.mxu0 0.0
    %4817 = vmatpush1.msra.mxu0 0.0
    %4818 = vmatprep.subr.mxu0 0.0
    %4819 = vmatpush1.msra.mxu0 0.0
    %4820 = vmatprep.mubr.f32.mxu0 0.0
    %4821 = vmatmul.mubr.f32.gmra.mrb[0].mxu0 %v4590
    %v4822 = vpop.f32.mrb[0].mxu0
    %v4823 = vadd.f32 0.0, %v4822
    %v4824 = vpop.f32.mrb[0].mxu0
    %v4825 = vadd.f32 0.0, %v4824
    %4826 = vdwg.mxu0
    %4827 = vmatprep.subr.mxu0 %v82
    %4828 = vmatpush1.msra.mxu0 %v81
    %4829 = vmatprep.subr.mxu0 %v86
    %4830 = vmatpush1.msra.mxu0 %v85
    %4831 = vmatprep.subr.mxu0 %v90
    %4832 = vmatpush1.msra.mxu0 %v89
    %4833 = vmatprep.subr.mxu0 %v94
    %4834 = vmatpush1.msra.mxu0 %v93
    %4835 = vmatprep.subr.mxu0 0.0
    %4836 = vmatpush1.msra.mxu0 0.0
    %4837 = vmatprep.subr.mxu0 0.0
    %4838 = vmatpush1.msra.mxu0 0.0
    %4839 = vmatprep.subr.mxu0 0.0
    %4840 = vmatpush1.msra.mxu0 0.0
    %4841 = vmatprep.subr.mxu0 0.0
    %4842 = vmatpush1.msra.mxu0 0.0
    %4843 = vmatprep.subr.mxu0 0.0
    %4844 = vmatpush1.msra.mxu0 0.0
    %4845 = vmatprep.subr.mxu0 0.0
    %4846 = vmatpush1.msra.mxu0 0.0
    %4847 = vmatprep.subr.mxu0 0.0
    %4848 = vmatpush1.msra.mxu0 0.0
    %4849 = vmatprep.subr.mxu0 0.0
    %4850 = vmatpush1.msra.mxu0 0.0
    %4851 = vmatprep.subr.mxu0 0.0
    %4852 = vmatpush1.msra.mxu0 0.0
    %4853 = vmatprep.subr.mxu0 0.0
    %4854 = vmatpush1.msra.mxu0 0.0
    %4855 = vmatprep.subr.mxu0 0.0
    %4856 = vmatpush1.msra.mxu0 0.0
    %4857 = vmatprep.subr.mxu0 0.0
    %4858 = vmatpush1.msra.mxu0 0.0
    %4859 = vmatprep.subr.mxu0 0.0
    %4860 = vmatpush1.msra.mxu0 0.0
    %4861 = vmatprep.subr.mxu0 0.0
    %4862 = vmatpush1.msra.mxu0 0.0
    %4863 = vmatprep.subr.mxu0 0.0
    %4864 = vmatpush1.msra.mxu0 0.0
    %4865 = vmatprep.subr.mxu0 0.0
    %4866 = vmatpush1.msra.mxu0 0.0
    %4867 = vmatprep.subr.mxu0 0.0
    %4868 = vmatpush1.msra.mxu0 0.0
    %4869 = vmatprep.subr.mxu0 0.0
    %4870 = vmatpush1.msra.mxu0 0.0
    %4871 = vmatprep.subr.mxu0 0.0
    %4872 = vmatpush1.msra.mxu0 0.0
    %4873 = vmatprep.subr.mxu0 0.0
    %4874 = vmatpush1.msra.mxu0 0.0
    %4875 = vmatprep.subr.mxu0 0.0
    %4876 = vmatpush1.msra.mxu0 0.0
    %4877 = vmatprep.subr.mxu0 0.0
    %4878 = vmatpush1.msra.mxu0 0.0
    %4879 = vmatprep.subr.mxu0 0.0
    %4880 = vmatpush1.msra.mxu0 0.0
    %4881 = vmatprep.subr.mxu0 0.0
    %4882 = vmatpush1.msra.mxu0 0.0
    %4883 = vmatprep.subr.mxu0 0.0
    %4884 = vmatpush1.msra.mxu0 0.0
    %4885 = vmatprep.subr.mxu0 0.0
    %4886 = vmatpush1.msra.mxu0 0.0
    %4887 = vmatprep.subr.mxu0 0.0
    %4888 = vmatpush1.msra.mxu0 0.0
    %4889 = vmatprep.subr.mxu0 0.0
    %4890 = vmatpush1.msra.mxu0 0.0
    %4891 = vmatprep.mubr.f32.mxu0 0.0
    %4892 = vmatmul.mubr.f32.gmra.mrb[0].mxu0 %v4590
    %v4893 = vpop.f32.mrb[0].mxu0
    %v4894 = vadd.f32 0.0, %v4893
    %v4895 = vpop.f32.mrb[0].mxu0
    %v4896 = vadd.f32 0.0, %v4895
    %4897 = vdwg.mxu0
    %v4902 = vcombine.low %v4823, %v4825
    %v4903 = vcombine.low %v4894, %v4896
    %v4905 = vunpack.c.l.s4 1966171168
    %v4906 = vunpack.c.0.s8 %v4905
    %v4907 = vlaneseq
    %v4908 = vshrl.u32 %v4907, 7
    %v4909 = vsub.s32 %v4906, %v4908
    %v4910 = vrot.slane %v4902, %v4909
    %v4912 = vunpack.c.l.s4 1966171168
    %v4913 = vunpack.c.0.s8 %v4912
    %v4914 = vlaneseq
    %v4915 = vshrl.u32 %v4914, 7
    %v4916 = vsub.s32 %v4913, %v4915
    %v4917 = vrot.slane %v4903, %v4916
    %v4918 = vcombine.low %v4910, %v4917
    %v4920 = vunpack.c.l.s4 1966171168
    %v4921 = vunpack.c.0.s8 %v4920
    %v4922 = vlaneseq
    %v4923 = vshrl.u32 %v4922, 7
    %v4924 = vsub.s32 %v4921, %v4923
    %v4925 = vrot.slane %v4918, %v4924
    %v4927 = vadd.f32 %v4755, %v4925
    %v4928 = vadd.f32 %v4927, %v71
    %v4929 = vtanh.pop %v4928
    %v4930 = vmul.f32 %v4929, 0.5
    %v4931 = vadd.f32 %v4930, 0.5
    %v4933 = vrot.slane %v4929, 1
    %v4935 = vmul.f32 %v4933, 0.5
    %v4936 = vadd.f32 %v4935, 0.5
    %v4937 = vrot.slane %v4929, 3
    %v4939 = vmul.f32 %v4937, 0.5
    %v4940 = vadd.f32 %v4939, 0.5
    %v4941 = vmul.f32 %v4936, %v4135
    %v4942 = vrot.slane %v4929, 2
    %v4944 = vmul.f32 %v4931, %v4942
    %v4945 = vadd.f32 %v4941, %v4944
    %v4946 = vtanh.pop %v4945
    %v4947 = vmul.f32 %v4940, %v4946
    %v4949 = vsel %vm95, %v4446, 0
    %4951 = vmatprep.subr.mxu0 %v865
    %4952 = vmatpush1.msra.mxu0 %v864
    %4953 = vmatprep.subr.mxu0 %v869
    %4954 = vmatpush1.msra.mxu0 %v868
    %4955 = vmatprep.subr.mxu0 %v873
    %4956 = vmatpush1.msra.mxu0 %v872
    %4957 = vmatprep.subr.mxu0 %v877
    %4958 = vmatpush1.msra.mxu0 %v876
    %4959 = vmatprep.subr.mxu0 0.0
    %4960 = vmatpush1.msra.mxu0 0.0
    %4961 = vmatprep.subr.mxu0 0.0
    %4962 = vmatpush1.msra.mxu0 0.0
    %4963 = vmatprep.subr.mxu0 0.0
    %4964 = vmatpush1.msra.mxu0 0.0
    %4965 = vmatprep.subr.mxu0 0.0
    %4966 = vmatpush1.msra.mxu0 0.0
    %4967 = vmatprep.subr.mxu0 0.0
    %4968 = vmatpush1.msra.mxu0 0.0
    %4969 = vmatprep.subr.mxu0 0.0
    %4970 = vmatpush1.msra.mxu0 0.0
    %4971 = vmatprep.subr.mxu0 0.0
    %4972 = vmatpush1.msra.mxu0 0.0
    %4973 = vmatprep.subr.mxu0 0.0
    %4974 = vmatpush1.msra.mxu0 0.0
    %4975 = vmatprep.subr.mxu0 0.0
    %4976 = vmatpush1.msra.mxu0 0.0
    %4977 = vmatprep.subr.mxu0 0.0
    %4978 = vmatpush1.msra.mxu0 0.0
    %4979 = vmatprep.subr.mxu0 0.0
    %4980 = vmatpush1.msra.mxu0 0.0
    %4981 = vmatprep.subr.mxu0 0.0
    %4982 = vmatpush1.msra.mxu0 0.0
    %4983 = vmatprep.subr.mxu0 0.0
    %4984 = vmatpush1.msra.mxu0 0.0
    %4985 = vmatprep.subr.mxu0 0.0
    %4986 = vmatpush1.msra.mxu0 0.0
    %4987 = vmatprep.subr.mxu0 0.0
    %4988 = vmatpush1.msra.mxu0 0.0
    %4989 = vmatprep.subr.mxu0 0.0
    %4990 = vmatpush1.msra.mxu0 0.0
    %4991 = vmatprep.subr.mxu0 0.0
    %4992 = vmatpush1.msra.mxu0 0.0
    %4993 = vmatprep.subr.mxu0 0.0
    %4994 = vmatpush1.msra.mxu0 0.0
    %4995 = vmatprep.subr.mxu0 0.0
    %4996 = vmatpush1.msra.mxu0 0.0
    %4997 = vmatprep.subr.mxu0 0.0
    %4998 = vmatpush1.msra.mxu0 0.0
    %4999 = vmatprep.subr.mxu0 0.0
    %5000 = vmatpush1.msra.mxu0 0.0
    %5001 = vmatprep.subr.mxu0 0.0
    %5002 = vmatpush1.msra.mxu0 0.0
    %5003 = vmatprep.subr.mxu0 0.0
    %5004 = vmatpush1.msra.mxu0 0.0
    %5005 = vmatprep.subr.mxu0 0.0
    %5006 = vmatpush1.msra.mxu0 0.0
    %5007 = vmatprep.subr.mxu0 0.0
    %5008 = vmatpush1.msra.mxu0 0.0
    %5009 = vmatprep.subr.mxu0 0.0
    %5010 = vmatpush1.msra.mxu0 0.0
    %5011 = vmatprep.subr.mxu0 0.0
    %5012 = vmatpush1.msra.mxu0 0.0
    %5013 = vmatprep.subr.mxu0 0.0
    %5014 = vmatpush1.msra.mxu0 0.0
    %5015 = vmatprep.mubr.f32.mxu0 0.0
    %5016 = vmatmul.mubr.f32.gmra.mrb[0].mxu0 %v4949
    %v5017 = vpop.f32.mrb[0].mxu0
    %v5018 = vadd.f32 0.0, %v5017
    %v5019 = vpop.f32.mrb[0].mxu0
    %v5020 = vadd.f32 0.0, %v5019
    %5021 = vdwg.mxu0
    %5022 = vmatprep.subr.mxu0 %v867
    %5023 = vmatpush1.msra.mxu0 %v866
    %5024 = vmatprep.subr.mxu0 %v871
    %5025 = vmatpush1.msra.mxu0 %v870
    %5026 = vmatprep.subr.mxu0 %v875
    %5027 = vmatpush1.msra.mxu0 %v874
    %5028 = vmatprep.subr.mxu0 %v879
    %5029 = vmatpush1.msra.mxu0 %v878
    %5030 = vmatprep.subr.mxu0 0.0
    %5031 = vmatpush1.msra.mxu0 0.0
    %5032 = vmatprep.subr.mxu0 0.0
    %5033 = vmatpush1.msra.mxu0 0.0
    %5034 = vmatprep.subr.mxu0 0.0
    %5035 = vmatpush1.msra.mxu0 0.0
    %5036 = vmatprep.subr.mxu0 0.0
    %5037 = vmatpush1.msra.mxu0 0.0
    %5038 = vmatprep.subr.mxu0 0.0
    %5039 = vmatpush1.msra.mxu0 0.0
    %5040 = vmatprep.subr.mxu0 0.0
    %5041 = vmatpush1.msra.mxu0 0.0
    %5042 = vmatprep.subr.mxu0 0.0
    %5043 = vmatpush1.msra.mxu0 0.0
    %5044 = vmatprep.subr.mxu0 0.0
    %5045 = vmatpush1.msra.mxu0 0.0
    %5046 = vmatprep.subr.mxu0 0.0
    %5047 = vmatpush1.msra.mxu0 0.0
    %5048 = vmatprep.subr.mxu0 0.0
    %5049 = vmatpush1.msra.mxu0 0.0
    %5050 = vmatprep.subr.mxu0 0.0
    %5051 = vmatpush1.msra.mxu0 0.0
    %5052 = vmatprep.subr.mxu0 0.0
    %5053 = vmatpush1.msra.mxu0 0.0
    %5054 = vmatprep.subr.mxu0 0.0
    %5055 = vmatpush1.msra.mxu0 0.0
    %5056 = vmatprep.subr.mxu0 0.0
    %5057 = vmatpush1.msra.mxu0 0.0
    %5058 = vmatprep.subr.mxu0 0.0
    %5059 = vmatpush1.msra.mxu0 0.0
    %5060 = vmatprep.subr.mxu0 0.0
    %5061 = vmatpush1.msra.mxu0 0.0
    %5062 = vmatprep.subr.mxu0 0.0
    %5063 = vmatpush1.msra.mxu0 0.0
    %5064 = vmatprep.subr.mxu0 0.0
    %5065 = vmatpush1.msra.mxu0 0.0
    %5066 = vmatprep.subr.mxu0 0.0
    %5067 = vmatpush1.msra.mxu0 0.0
    %5068 = vmatprep.subr.mxu0 0.0
    %5069 = vmatpush1.msra.mxu0 0.0
    %5070 = vmatprep.subr.mxu0 0.0
    %5071 = vmatpush1.msra.mxu0 0.0
    %5072 = vmatprep.subr.mxu0 0.0
    %5073 = vmatpush1.msra.mxu0 0.0
    %5074 = vmatprep.subr.mxu0 0.0
    %5075 = vmatpush1.msra.mxu0 0.0
    %5076 = vmatprep.subr.mxu0 0.0
    %5077 = vmatpush1.msra.mxu0 0.0
    %5078 = vmatprep.subr.mxu0 0.0
    %5079 = vmatpush1.msra.mxu0 0.0
    %5080 = vmatprep.subr.mxu0 0.0
    %5081 = vmatpush1.msra.mxu0 0.0
    %5082 = vmatprep.subr.mxu0 0.0
    %5083 = vmatpush1.msra.mxu0 0.0
    %5084 = vmatprep.subr.mxu0 0.0
    %5085 = vmatpush1.msra.mxu0 0.0
    %5086 = vmatprep.mubr.f32.mxu0 0.0
    %5087 = vmatmul.mubr.f32.gmra.mrb[0].mxu0 %v4949
    %v5088 = vpop.f32.mrb[0].mxu0
    %v5089 = vadd.f32 0.0, %v5088
    %v5090 = vpop.f32.mrb[0].mxu0
    %v5091 = vadd.f32 0.0, %v5090
    %5092 = vdwg.mxu0
    %v5094 = vsel %vm95, %v4752, 0
    %5096 = vmatprep.subr.mxu0 %v848
    %5097 = vmatpush1.msra.mxu0 %v847
    %5098 = vmatprep.subr.mxu0 %v852
    %5099 = vmatpush1.msra.mxu0 %v851
    %5100 = vmatprep.subr.mxu0 %v856
    %5101 = vmatpush1.msra.mxu0 %v855
    %5102 = vmatprep.subr.mxu0 %v860
    %5103 = vmatpush1.msra.mxu0 %v859
    %5104 = vmatprep.subr.mxu0 0.0
    %5105 = vmatpush1.msra.mxu0 0.0
    %5106 = vmatprep.subr.mxu0 0.0
    %5107 = vmatpush1.msra.mxu0 0.0
    %5108 = vmatprep.subr.mxu0 0.0
    %5109 = vmatpush1.msra.mxu0 0.0
    %5110 = vmatprep.subr.mxu0 0.0
    %5111 = vmatpush1.msra.mxu0 0.0
    %5112 = vmatprep.subr.mxu0 0.0
    %5113 = vmatpush1.msra.mxu0 0.0
    %5114 = vmatprep.subr.mxu0 0.0
    %5115 = vmatpush1.msra.mxu0 0.0
    %5116 = vmatprep.subr.mxu0 0.0
    %5117 = vmatpush1.msra.mxu0 0.0
    %5118 = vmatprep.subr.mxu0 0.0
    %5119 = vmatpush1.msra.mxu0 0.0
    %5120 = vmatprep.subr.mxu0 0.0
    %5121 = vmatpush1.msra.mxu0 0.0
    %5122 = vmatprep.subr.mxu0 0.0
    %5123 = vmatpush1.msra.mxu0 0.0
    %5124 = vmatprep.subr.mxu0 0.0
    %5125 = vmatpush1.msra.mxu0 0.0
    %5126 = vmatprep.subr.mxu0 0.0
    %5127 = vmatpush1.msra.mxu0 0.0
    %5128 = vmatprep.subr.mxu0 0.0
    %5129 = vmatpush1.msra.mxu0 0.0
    %5130 = vmatprep.subr.mxu0 0.0
    %5131 = vmatpush1.msra.mxu0 0.0
    %5132 = vmatprep.subr.mxu0 0.0
    %5133 = vmatpush1.msra.mxu0 0.0
    %5134 = vmatprep.subr.mxu0 0.0
    %5135 = vmatpush1.msra.mxu0 0.0
    %5136 = vmatprep.subr.mxu0 0.0
    %5137 = vmatpush1.msra.mxu0 0.0
    %5138 = vmatprep.subr.mxu0 0.0
    %5139 = vmatpush1.msra.mxu0 0.0
    %5140 = vmatprep.subr.mxu0 0.0
    %5141 = vmatpush1.msra.mxu0 0.0
    %5142 = vmatprep.subr.mxu0 0.0
    %5143 = vmatpush1.msra.mxu0 0.0
    %5144 = vmatprep.subr.mxu0 0.0
    %5145 = vmatpush1.msra.mxu0 0.0
    %5146 = vmatprep.subr.mxu0 0.0
    %5147 = vmatpush1.msra.mxu0 0.0
    %5148 = vmatprep.subr.mxu0 0.0
    %5149 = vmatpush1.msra.mxu0 0.0
    %5150 = vmatprep.subr.mxu0 0.0
    %5151 = vmatpush1.msra.mxu0 0.0
    %5152 = vmatprep.subr.mxu0 0.0
    %5153 = vmatpush1.msra.mxu0 0.0
    %5154 = vmatprep.subr.mxu0 0.0
    %5155 = vmatpush1.msra.mxu0 0.0
    %5156 = vmatprep.subr.mxu0 0.0
    %5157 = vmatpush1.msra.mxu0 0.0
    %5158 = vmatprep.subr.mxu0 0.0
    %5159 = vmatpush1.msra.mxu0 0.0
    %5160 = vmatprep.mubr.f32.mxu0 0.0
    %5161 = vmatmul.mubr.f32.gmra.mrb[0].mxu0 %v5094
    %v5162 = vpop.f32.mrb[0].mxu0
    %v5163 = vadd.f32 %v5018, %v5162
    %v5164 = vpop.f32.mrb[0].mxu0
    %v5165 = vadd.f32 %v5020, %v5164
    %5166 = vdwg.mxu0
    %5167 = vmatprep.subr.mxu0 %v850
    %5168 = vmatpush1.msra.mxu0 %v849
    %5169 = vmatprep.subr.mxu0 %v854
    %5170 = vmatpush1.msra.mxu0 %v853
    %5171 = vmatprep.subr.mxu0 %v858
    %5172 = vmatpush1.msra.mxu0 %v857
    %5173 = vmatprep.subr.mxu0 %v862
    %5174 = vmatpush1.msra.mxu0 %v861
    %5175 = vmatprep.subr.mxu0 0.0
    %5176 = vmatpush1.msra.mxu0 0.0
    %5177 = vmatprep.subr.mxu0 0.0
    %5178 = vmatpush1.msra.mxu0 0.0
    %5179 = vmatprep.subr.mxu0 0.0
    %5180 = vmatpush1.msra.mxu0 0.0
    %5181 = vmatprep.subr.mxu0 0.0
    %5182 = vmatpush1.msra.mxu0 0.0
    %5183 = vmatprep.subr.mxu0 0.0
    %5184 = vmatpush1.msra.mxu0 0.0
    %5185 = vmatprep.subr.mxu0 0.0
    %5186 = vmatpush1.msra.mxu0 0.0
    %5187 = vmatprep.subr.mxu0 0.0
    %5188 = vmatpush1.msra.mxu0 0.0
    %5189 = vmatprep.subr.mxu0 0.0
    %5190 = vmatpush1.msra.mxu0 0.0
    %5191 = vmatprep.subr.mxu0 0.0
    %5192 = vmatpush1.msra.mxu0 0.0
    %5193 = vmatprep.subr.mxu0 0.0
    %5194 = vmatpush1.msra.mxu0 0.0
    %5195 = vmatprep.subr.mxu0 0.0
    %5196 = vmatpush1.msra.mxu0 0.0
    %5197 = vmatprep.subr.mxu0 0.0
    %5198 = vmatpush1.msra.mxu0 0.0
    %5199 = vmatprep.subr.mxu0 0.0
    %5200 = vmatpush1.msra.mxu0 0.0
    %5201 = vmatprep.subr.mxu0 0.0
    %5202 = vmatpush1.msra.mxu0 0.0
    %5203 = vmatprep.subr.mxu0 0.0
    %5204 = vmatpush1.msra.mxu0 0.0
    %5205 = vmatprep.subr.mxu0 0.0
    %5206 = vmatpush1.msra.mxu0 0.0
    %5207 = vmatprep.subr.mxu0 0.0
    %5208 = vmatpush1.msra.mxu0 0.0
    %5209 = vmatprep.subr.mxu0 0.0
    %5210 = vmatpush1.msra.mxu0 0.0
    %5211 = vmatprep.subr.mxu0 0.0
    %5212 = vmatpush1.msra.mxu0 0.0
    %5213 = vmatprep.subr.mxu0 0.0
    %5214 = vmatpush1.msra.mxu0 0.0
    %5215 = vmatprep.subr.mxu0 0.0
    %5216 = vmatpush1.msra.mxu0 0.0
    %5217 = vmatprep.subr.mxu0 0.0
    %5218 = vmatpush1.msra.mxu0 0.0
    %5219 = vmatprep.subr.mxu0 0.0
    %5220 = vmatpush1.msra.mxu0 0.0
    %5221 = vmatprep.subr.mxu0 0.0
    %5222 = vmatpush1.msra.mxu0 0.0
    %5223 = vmatprep.subr.mxu0 0.0
    %5224 = vmatpush1.msra.mxu0 0.0
    %5225 = vmatprep.subr.mxu0 0.0
    %5226 = vmatpush1.msra.mxu0 0.0
    %5227 = vmatprep.subr.mxu0 0.0
    %5228 = vmatpush1.msra.mxu0 0.0
    %5229 = vmatprep.subr.mxu0 0.0
    %5230 = vmatpush1.msra.mxu0 0.0
    %5231 = vmatprep.mubr.f32.mxu0 0.0
    %5232 = vmatmul.mubr.f32.gmra.mrb[0].mxu0 %v5094
    %v5233 = vpop.f32.mrb[0].mxu0
    %v5234 = vadd.f32 %v5089, %v5233
    %v5235 = vpop.f32.mrb[0].mxu0
    %v5236 = vadd.f32 %v5091, %v5235
    %5237 = vdwg.mxu0
    %v5238 = vadd.f32 %v5163, %v1171
    %v5239 = vadd.f32 %v5165, %v1175
    %v5240 = vadd.f32 %v5234, %v1179
    %v5241 = vadd.f32 %v5236, %v1183
    %v5242 = vtanh.pop %v5238
    %v5243 = vtanh.pop %v5239
    %v5244 = vtanh.pop %v5240
    %v5245 = vtanh.pop %v5241
    %v5246 = vmul.f32 %v5242, 0.5
    %v5247 = vadd.f32 %v5246, 0.5
    %v5248 = vmul.f32 %v5243, 0.5
    %v5249 = vadd.f32 %v5248, 0.5
    %v5250 = vmul.f32 %v5245, 0.5
    %v5251 = vadd.f32 %v5250, 0.5
    %v5252 = vmul.f32 %v5249, %v4444
    %v5253 = vmul.f32 %v5247, %v5244
    %v5254 = vadd.f32 %v5252, %v5253
    %v5255 = vtanh.pop %v5254
    %v5256 = vmul.f32 %v5251, %v5255
    %5257 = vmatprep.subr.mxu0 %v309
    %5258 = vmatpush1.msra.mxu0 %v308
    %5259 = vmatprep.subr.mxu0 %v313
    %5260 = vmatpush1.msra.mxu0 %v312
    %5261 = vmatprep.subr.mxu0 %v317
    %5262 = vmatpush1.msra.mxu0 %v316
    %5263 = vmatprep.subr.mxu0 %v321
    %5264 = vmatpush1.msra.mxu0 %v320
    %5265 = vmatprep.subr.mxu0 0.0
    %5266 = vmatpush1.msra.mxu0 0.0
    %5267 = vmatprep.subr.mxu0 0.0
    %5268 = vmatpush1.msra.mxu0 0.0
    %5269 = vmatprep.subr.mxu0 0.0
    %5270 = vmatpush1.msra.mxu0 0.0
    %5271 = vmatprep.subr.mxu0 0.0
    %5272 = vmatpush1.msra.mxu0 0.0
    %5273 = vmatprep.subr.mxu0 0.0
    %5274 = vmatpush1.msra.mxu0 0.0
    %5275 = vmatprep.subr.mxu0 0.0
    %5276 = vmatpush1.msra.mxu0 0.0
    %5277 = vmatprep.subr.mxu0 0.0
    %5278 = vmatpush1.msra.mxu0 0.0
    %5279 = vmatprep.subr.mxu0 0.0
    %5280 = vmatpush1.msra.mxu0 0.0
    %5281 = vmatprep.subr.mxu0 0.0
    %5282 = vmatpush1.msra.mxu0 0.0
    %5283 = vmatprep.subr.mxu0 0.0
    %5284 = vmatpush1.msra.mxu0 0.0
    %5285 = vmatprep.subr.mxu0 0.0
    %5286 = vmatpush1.msra.mxu0 0.0
    %5287 = vmatprep.subr.mxu0 0.0
    %5288 = vmatpush1.msra.mxu0 0.0
    %5289 = vmatprep.subr.mxu0 0.0
    %5290 = vmatpush1.msra.mxu0 0.0
    %5291 = vmatprep.subr.mxu0 0.0
    %5292 = vmatpush1.msra.mxu0 0.0
    %5293 = vmatprep.subr.mxu0 0.0
    %5294 = vmatpush1.msra.mxu0 0.0
    %5295 = vmatprep.subr.mxu0 0.0
    %5296 = vmatpush1.msra.mxu0 0.0
    %5297 = vmatprep.subr.mxu0 0.0
    %5298 = vmatpush1.msra.mxu0 0.0
    %5299 = vmatprep.subr.mxu0 0.0
    %5300 = vmatpush1.msra.mxu0 0.0
    %5301 = vmatprep.subr.mxu0 0.0
    %5302 = vmatpush1.msra.mxu0 0.0
    %5303 = vmatprep.subr.mxu0 0.0
    %5304 = vmatpush1.msra.mxu0 0.0
    %5305 = vmatprep.subr.mxu0 0.0
    %5306 = vmatpush1.msra.mxu0 0.0
    %5307 = vmatprep.subr.mxu0 0.0
    %5308 = vmatpush1.msra.mxu0 0.0
    %5309 = vmatprep.subr.mxu0 0.0
    %5310 = vmatpush1.msra.mxu0 0.0
    %5311 = vmatprep.subr.mxu0 0.0
    %5312 = vmatpush1.msra.mxu0 0.0
    %5313 = vmatprep.subr.mxu0 0.0
    %5314 = vmatpush1.msra.mxu0 0.0
    %5315 = vmatprep.subr.mxu0 0.0
    %5316 = vmatpush1.msra.mxu0 0.0
    %5317 = vmatprep.subr.mxu0 0.0
    %5318 = vmatpush1.msra.mxu0 0.0
    %5319 = vmatprep.subr.mxu0 0.0
    %5320 = vmatpush1.msra.mxu0 0.0
    %5321 = vmatprep.mubr.f32.mxu0 0.0
    %5322 = vmatmul.mubr.f32.gmra.mrb[0].mxu0 %v5094
    %v5323 = vpop.f32.mrb[0].mxu0
    %v5324 = vadd.f32 0.0, %v5323
    %v5325 = vpop.f32.mrb[0].mxu0
    %v5326 = vadd.f32 0.0, %v5325
    %5327 = vdwg.mxu0
    %5328 = vmatprep.subr.mxu0 %v311
    %5329 = vmatpush1.msra.mxu0 %v310
    %5330 = vmatprep.subr.mxu0 %v315
    %5331 = vmatpush1.msra.mxu0 %v314
    %5332 = vmatprep.subr.mxu0 %v319
    %5333 = vmatpush1.msra.mxu0 %v318
    %5334 = vmatprep.subr.mxu0 %v323
    %5335 = vmatpush1.msra.mxu0 %v322
    %5336 = vmatprep.subr.mxu0 0.0
    %5337 = vmatpush1.msra.mxu0 0.0
    %5338 = vmatprep.subr.mxu0 0.0
    %5339 = vmatpush1.msra.mxu0 0.0
    %5340 = vmatprep.subr.mxu0 0.0
    %5341 = vmatpush1.msra.mxu0 0.0
    %5342 = vmatprep.subr.mxu0 0.0
    %5343 = vmatpush1.msra.mxu0 0.0
    %5344 = vmatprep.subr.mxu0 0.0
    %5345 = vmatpush1.msra.mxu0 0.0
    %5346 = vmatprep.subr.mxu0 0.0
    %5347 = vmatpush1.msra.mxu0 0.0
    %5348 = vmatprep.subr.mxu0 0.0
    %5349 = vmatpush1.msra.mxu0 0.0
    %5350 = vmatprep.subr.mxu0 0.0
    %5351 = vmatpush1.msra.mxu0 0.0
    %5352 = vmatprep.subr.mxu0 0.0
    %5353 = vmatpush1.msra.mxu0 0.0
    %5354 = vmatprep.subr.mxu0 0.0
    %5355 = vmatpush1.msra.mxu0 0.0
    %5356 = vmatprep.subr.mxu0 0.0
    %5357 = vmatpush1.msra.mxu0 0.0
    %5358 = vmatprep.subr.mxu0 0.0
    %5359 = vmatpush1.msra.mxu0 0.0
    %5360 = vmatprep.subr.mxu0 0.0
    %5361 = vmatpush1.msra.mxu0 0.0
    %5362 = vmatprep.subr.mxu0 0.0
    %5363 = vmatpush1.msra.mxu0 0.0
    %5364 = vmatprep.subr.mxu0 0.0
    %5365 = vmatpush1.msra.mxu0 0.0
    %5366 = vmatprep.subr.mxu0 0.0
    %5367 = vmatpush1.msra.mxu0 0.0
    %5368 = vmatprep.subr.mxu0 0.0
    %5369 = vmatpush1.msra.mxu0 0.0
    %5370 = vmatprep.subr.mxu0 0.0
    %5371 = vmatpush1.msra.mxu0 0.0
    %5372 = vmatprep.subr.mxu0 0.0
    %5373 = vmatpush1.msra.mxu0 0.0
    %5374 = vmatprep.subr.mxu0 0.0
    %5375 = vmatpush1.msra.mxu0 0.0
    %5376 = vmatprep.subr.mxu0 0.0
    %5377 = vmatpush1.msra.mxu0 0.0
    %5378 = vmatprep.subr.mxu0 0.0
    %5379 = vmatpush1.msra.mxu0 0.0
    %5380 = vmatprep.subr.mxu0 0.0
    %5381 = vmatpush1.msra.mxu0 0.0
    %5382 = vmatprep.subr.mxu0 0.0
    %5383 = vmatpush1.msra.mxu0 0.0
    %5384 = vmatprep.subr.mxu0 0.0
    %5385 = vmatpush1.msra.mxu0 0.0
    %5386 = vmatprep.subr.mxu0 0.0
    %5387 = vmatpush1.msra.mxu0 0.0
    %5388 = vmatprep.subr.mxu0 0.0
    %5389 = vmatpush1.msra.mxu0 0.0
    %5390 = vmatprep.subr.mxu0 0.0
    %5391 = vmatpush1.msra.mxu0 0.0
    %5392 = vmatprep.mubr.f32.mxu0 0.0
    %5393 = vmatmul.mubr.f32.gmra.mrb[0].mxu0 %v5094
    %v5394 = vpop.f32.mrb[0].mxu0
    %v5395 = vadd.f32 0.0, %v5394
    %v5396 = vpop.f32.mrb[0].mxu0
    %v5397 = vadd.f32 0.0, %v5396
    %5398 = vdwg.mxu0
    %v5400 = vsel %vm95, %v4947, 0
    %5402 = vmatprep.subr.mxu0 %v292
    %5403 = vmatpush1.msra.mxu0 %v291
    %5404 = vmatprep.subr.mxu0 %v296
    %5405 = vmatpush1.msra.mxu0 %v295
    %5406 = vmatprep.subr.mxu0 %v300
    %5407 = vmatpush1.msra.mxu0 %v299
    %5408 = vmatprep.subr.mxu0 %v304
    %5409 = vmatpush1.msra.mxu0 %v303
    %5410 = vmatprep.subr.mxu0 0.0
    %5411 = vmatpush1.msra.mxu0 0.0
    %5412 = vmatprep.subr.mxu0 0.0
    %5413 = vmatpush1.msra.mxu0 0.0
    %5414 = vmatprep.subr.mxu0 0.0
    %5415 = vmatpush1.msra.mxu0 0.0
    %5416 = vmatprep.subr.mxu0 0.0
    %5417 = vmatpush1.msra.mxu0 0.0
    %5418 = vmatprep.subr.mxu0 0.0
    %5419 = vmatpush1.msra.mxu0 0.0
    %5420 = vmatprep.subr.mxu0 0.0
    %5421 = vmatpush1.msra.mxu0 0.0
    %5422 = vmatprep.subr.mxu0 0.0
    %5423 = vmatpush1.msra.mxu0 0.0
    %5424 = vmatprep.subr.mxu0 0.0
    %5425 = vmatpush1.msra.mxu0 0.0
    %5426 = vmatprep.subr.mxu0 0.0
    %5427 = vmatpush1.msra.mxu0 0.0
    %5428 = vmatprep.subr.mxu0 0.0
    %5429 = vmatpush1.msra.mxu0 0.0
    %5430 = vmatprep.subr.mxu0 0.0
    %5431 = vmatpush1.msra.mxu0 0.0
    %5432 = vmatprep.subr.mxu0 0.0
    %5433 = vmatpush1.msra.mxu0 0.0
    %5434 = vmatprep.subr.mxu0 0.0
    %5435 = vmatpush1.msra.mxu0 0.0
    %5436 = vmatprep.subr.mxu0 0.0
    %5437 = vmatpush1.msra.mxu0 0.0
    %5438 = vmatprep.subr.mxu0 0.0
    %5439 = vmatpush1.msra.mxu0 0.0
    %5440 = vmatprep.subr.mxu0 0.0
    %5441 = vmatpush1.msra.mxu0 0.0
    %5442 = vmatprep.subr.mxu0 0.0
    %5443 = vmatpush1.msra.mxu0 0.0
    %5444 = vmatprep.subr.mxu0 0.0
    %5445 = vmatpush1.msra.mxu0 0.0
    %5446 = vmatprep.subr.mxu0 0.0
    %5447 = vmatpush1.msra.mxu0 0.0
    %5448 = vmatprep.subr.mxu0 0.0
    %5449 = vmatpush1.msra.mxu0 0.0
    %5450 = vmatprep.subr.mxu0 0.0
    %5451 = vmatpush1.msra.mxu0 0.0
    %5452 = vmatprep.subr.mxu0 0.0
    %5453 = vmatpush1.msra.mxu0 0.0
    %5454 = vmatprep.subr.mxu0 0.0
    %5455 = vmatpush1.msra.mxu0 0.0
    %5456 = vmatprep.subr.mxu0 0.0
    %5457 = vmatpush1.msra.mxu0 0.0
    %5458 = vmatprep.subr.mxu0 0.0
    %5459 = vmatpush1.msra.mxu0 0.0
    %5460 = vmatprep.subr.mxu0 0.0
    %5461 = vmatpush1.msra.mxu0 0.0
    %5462 = vmatprep.subr.mxu0 0.0
    %5463 = vmatpush1.msra.mxu0 0.0
    %5464 = vmatprep.subr.mxu0 0.0
    %5465 = vmatpush1.msra.mxu0 0.0
    %5466 = vmatprep.mubr.f32.mxu0 0.0
    %5467 = vmatmul.mubr.f32.gmra.mrb[0].mxu0 %v5400
    %v5468 = vpop.f32.mrb[0].mxu0
    %v5469 = vadd.f32 %v5324, %v5468
    %v5470 = vpop.f32.mrb[0].mxu0
    %v5471 = vadd.f32 %v5326, %v5470
    %5472 = vdwg.mxu0
    %5473 = vmatprep.subr.mxu0 %v294
    %5474 = vmatpush1.msra.mxu0 %v293
    %5475 = vmatprep.subr.mxu0 %v298
    %5476 = vmatpush1.msra.mxu0 %v297
    %5477 = vmatprep.subr.mxu0 %v302
    %5478 = vmatpush1.msra.mxu0 %v301
    %5479 = vmatprep.subr.mxu0 %v306
    %5480 = vmatpush1.msra.mxu0 %v305
    %5481 = vmatprep.subr.mxu0 0.0
    %5482 = vmatpush1.msra.mxu0 0.0
    %5483 = vmatprep.subr.mxu0 0.0
    %5484 = vmatpush1.msra.mxu0 0.0
    %5485 = vmatprep.subr.mxu0 0.0
    %5486 = vmatpush1.msra.mxu0 0.0
    %5487 = vmatprep.subr.mxu0 0.0
    %5488 = vmatpush1.msra.mxu0 0.0
    %5489 = vmatprep.subr.mxu0 0.0
    %5490 = vmatpush1.msra.mxu0 0.0
    %5491 = vmatprep.subr.mxu0 0.0
    %5492 = vmatpush1.msra.mxu0 0.0
    %5493 = vmatprep.subr.mxu0 0.0
    %5494 = vmatpush1.msra.mxu0 0.0
    %5495 = vmatprep.subr.mxu0 0.0
    %5496 = vmatpush1.msra.mxu0 0.0
    %5497 = vmatprep.subr.mxu0 0.0
    %5498 = vmatpush1.msra.mxu0 0.0
    %5499 = vmatprep.subr.mxu0 0.0
    %5500 = vmatpush1.msra.mxu0 0.0
    %5501 = vmatprep.subr.mxu0 0.0
    %5502 = vmatpush1.msra.mxu0 0.0
    %5503 = vmatprep.subr.mxu0 0.0
    %5504 = vmatpush1.msra.mxu0 0.0
    %5505 = vmatprep.subr.mxu0 0.0
    %5506 = vmatpush1.msra.mxu0 0.0
    %5507 = vmatprep.subr.mxu0 0.0
    %5508 = vmatpush1.msra.mxu0 0.0
    %5509 = vmatprep.subr.mxu0 0.0
    %5510 = vmatpush1.msra.mxu0 0.0
    %5511 = vmatprep.subr.mxu0 0.0
    %5512 = vmatpush1.msra.mxu0 0.0
    %5513 = vmatprep.subr.mxu0 0.0
    %5514 = vmatpush1.msra.mxu0 0.0
    %5515 = vmatprep.subr.mxu0 0.0
    %5516 = vmatpush1.msra.mxu0 0.0
    %5517 = vmatprep.subr.mxu0 0.0
    %5518 = vmatpush1.msra.mxu0 0.0
    %5519 = vmatprep.subr.mxu0 0.0
    %5520 = vmatpush1.msra.mxu0 0.0
    %5521 = vmatprep.subr.mxu0 0.0
    %5522 = vmatpush1.msra.mxu0 0.0
    %5523 = vmatprep.subr.mxu0 0.0
    %5524 = vmatpush1.msra.mxu0 0.0
    %5525 = vmatprep.subr.mxu0 0.0
    %5526 = vmatpush1.msra.mxu0 0.0
    %5527 = vmatprep.subr.mxu0 0.0
    %5528 = vmatpush1.msra.mxu0 0.0
    %5529 = vmatprep.subr.mxu0 0.0
    %5530 = vmatpush1.msra.mxu0 0.0
    %5531 = vmatprep.subr.mxu0 0.0
    %5532 = vmatpush1.msra.mxu0 0.0
    %5533 = vmatprep.subr.mxu0 0.0
    %5534 = vmatpush1.msra.mxu0 0.0
    %5535 = vmatprep.subr.mxu0 0.0
    %5536 = vmatpush1.msra.mxu0 0.0
    %5537 = vmatprep.mubr.f32.mxu0 0.0
    %5538 = vmatmul.mubr.f32.gmra.mrb[0].mxu0 %v5400
    %v5539 = vpop.f32.mrb[0].mxu0
    %v5540 = vadd.f32 %v5395, %v5539
    %v5541 = vpop.f32.mrb[0].mxu0
    %v5542 = vadd.f32 %v5397, %v5541
    %5543 = vdwg.mxu0
    %v5544 = vadd.f32 %v5469, %v615
    %v5545 = vadd.f32 %v5471, %v619
    %v5546 = vadd.f32 %v5540, %v623
    %v5547 = vadd.f32 %v5542, %v627
    %v5548 = vtanh.pop %v5544
    %v5549 = vtanh.pop %v5545
    %v5550 = vtanh.pop %v5546
    %v5551 = vtanh.pop %v5547
    %v5552 = vmul.f32 %v5548, 0.5
    %v5553 = vadd.f32 %v5552, 0.5
    %v5554 = vmul.f32 %v5549, 0.5
    %v5555 = vadd.f32 %v5554, 0.5
    %v5556 = vmul.f32 %v5551, 0.5
    %v5557 = vadd.f32 %v5556, 0.5
    %v5558 = vmul.f32 %v5555, %v4750
    %v5559 = vmul.f32 %v5553, %v5550
    %v5560 = vadd.f32 %v5558, %v5559
    %v5561 = vtanh.pop %v5560
    %v5562 = vmul.f32 %v5557, %v5561
    %s5563 = sld [smem:[#allocation3 + $0x7]]
    %v5564 = vstv %s5563
    %v5565 = vmul.f32 %v5564, %v70
    %5566 = vmatprep.subr.mxu0 %v80
    %5567 = vmatpush1.msra.mxu0 %v79
    %5568 = vmatprep.subr.mxu0 %v84
    %5569 = vmatpush1.msra.mxu0 %v83
    %5570 = vmatprep.subr.mxu0 %v88
    %5571 = vmatpush1.msra.mxu0 %v87
    %5572 = vmatprep.subr.mxu0 %v92
    %5573 = vmatpush1.msra.mxu0 %v91
    %5574 = vmatprep.subr.mxu0 0.0
    %5575 = vmatpush1.msra.mxu0 0.0
    %5576 = vmatprep.subr.mxu0 0.0
    %5577 = vmatpush1.msra.mxu0 0.0
    %5578 = vmatprep.subr.mxu0 0.0
    %5579 = vmatpush1.msra.mxu0 0.0
    %5580 = vmatprep.subr.mxu0 0.0
    %5581 = vmatpush1.msra.mxu0 0.0
    %5582 = vmatprep.subr.mxu0 0.0
    %5583 = vmatpush1.msra.mxu0 0.0
    %5584 = vmatprep.subr.mxu0 0.0
    %5585 = vmatpush1.msra.mxu0 0.0
    %5586 = vmatprep.subr.mxu0 0.0
    %5587 = vmatpush1.msra.mxu0 0.0
    %5588 = vmatprep.subr.mxu0 0.0
    %5589 = vmatpush1.msra.mxu0 0.0
    %5590 = vmatprep.subr.mxu0 0.0
    %5591 = vmatpush1.msra.mxu0 0.0
    %5592 = vmatprep.subr.mxu0 0.0
    %5593 = vmatpush1.msra.mxu0 0.0
    %5594 = vmatprep.subr.mxu0 0.0
    %5595 = vmatpush1.msra.mxu0 0.0
    %5596 = vmatprep.subr.mxu0 0.0
    %5597 = vmatpush1.msra.mxu0 0.0
    %5598 = vmatprep.subr.mxu0 0.0
    %5599 = vmatpush1.msra.mxu0 0.0
    %5600 = vmatprep.subr.mxu0 0.0
    %5601 = vmatpush1.msra.mxu0 0.0
    %5602 = vmatprep.subr.mxu0 0.0
    %5603 = vmatpush1.msra.mxu0 0.0
    %5604 = vmatprep.subr.mxu0 0.0
    %5605 = vmatpush1.msra.mxu0 0.0
    %5606 = vmatprep.subr.mxu0 0.0
    %5607 = vmatpush1.msra.mxu0 0.0
    %5608 = vmatprep.subr.mxu0 0.0
    %5609 = vmatpush1.msra.mxu0 0.0
    %5610 = vmatprep.subr.mxu0 0.0
    %5611 = vmatpush1.msra.mxu0 0.0
    %5612 = vmatprep.subr.mxu0 0.0
    %5613 = vmatpush1.msra.mxu0 0.0
    %5614 = vmatprep.subr.mxu0 0.0
    %5615 = vmatpush1.msra.mxu0 0.0
    %5616 = vmatprep.subr.mxu0 0.0
    %5617 = vmatpush1.msra.mxu0 0.0
    %5618 = vmatprep.subr.mxu0 0.0
    %5619 = vmatpush1.msra.mxu0 0.0
    %5620 = vmatprep.subr.mxu0 0.0
    %5621 = vmatpush1.msra.mxu0 0.0
    %5622 = vmatprep.subr.mxu0 0.0
    %5623 = vmatpush1.msra.mxu0 0.0
    %5624 = vmatprep.subr.mxu0 0.0
    %5625 = vmatpush1.msra.mxu0 0.0
    %5626 = vmatprep.subr.mxu0 0.0
    %5627 = vmatpush1.msra.mxu0 0.0
    %5628 = vmatprep.subr.mxu0 0.0
    %5629 = vmatpush1.msra.mxu0 0.0
    %5630 = vmatprep.mubr.f32.mxu0 0.0
    %5631 = vmatmul.mubr.f32.gmra.mrb[0].mxu0 %v5400
    %v5632 = vpop.f32.mrb[0].mxu0
    %v5633 = vadd.f32 0.0, %v5632
    %v5634 = vpop.f32.mrb[0].mxu0
    %v5635 = vadd.f32 0.0, %v5634
    %5636 = vdwg.mxu0
    %5637 = vmatprep.subr.mxu0 %v82
    %5638 = vmatpush1.msra.mxu0 %v81
    %5639 = vmatprep.subr.mxu0 %v86
    %5640 = vmatpush1.msra.mxu0 %v85
    %5641 = vmatprep.subr.mxu0 %v90
    %5642 = vmatpush1.msra.mxu0 %v89
    %5643 = vmatprep.subr.mxu0 %v94
    %5644 = vmatpush1.msra.mxu0 %v93
    %5645 = vmatprep.subr.mxu0 0.0
    %5646 = vmatpush1.msra.mxu0 0.0
    %5647 = vmatprep.subr.mxu0 0.0
    %5648 = vmatpush1.msra.mxu0 0.0
    %5649 = vmatprep.subr.mxu0 0.0
    %5650 = vmatpush1.msra.mxu0 0.0
    %5651 = vmatprep.subr.mxu0 0.0
    %5652 = vmatpush1.msra.mxu0 0.0
    %5653 = vmatprep.subr.mxu0 0.0
    %5654 = vmatpush1.msra.mxu0 0.0
    %5655 = vmatprep.subr.mxu0 0.0
    %5656 = vmatpush1.msra.mxu0 0.0
    %5657 = vmatprep.subr.mxu0 0.0
    %5658 = vmatpush1.msra.mxu0 0.0
    %5659 = vmatprep.subr.mxu0 0.0
    %5660 = vmatpush1.msra.mxu0 0.0
    %5661 = vmatprep.subr.mxu0 0.0
    %5662 = vmatpush1.msra.mxu0 0.0
    %5663 = vmatprep.subr.mxu0 0.0
    %5664 = vmatpush1.msra.mxu0 0.0
    %5665 = vmatprep.subr.mxu0 0.0
    %5666 = vmatpush1.msra.mxu0 0.0
    %5667 = vmatprep.subr.mxu0 0.0
    %5668 = vmatpush1.msra.mxu0 0.0
    %5669 = vmatprep.subr.mxu0 0.0
    %5670 = vmatpush1.msra.mxu0 0.0
    %5671 = vmatprep.subr.mxu0 0.0
    %5672 = vmatpush1.msra.mxu0 0.0
    %5673 = vmatprep.subr.mxu0 0.0
    %5674 = vmatpush1.msra.mxu0 0.0
    %5675 = vmatprep.subr.mxu0 0.0
    %5676 = vmatpush1.msra.mxu0 0.0
    %5677 = vmatprep.subr.mxu0 0.0
    %5678 = vmatpush1.msra.mxu0 0.0
    %5679 = vmatprep.subr.mxu0 0.0
    %5680 = vmatpush1.msra.mxu0 0.0
    %5681 = vmatprep.subr.mxu0 0.0
    %5682 = vmatpush1.msra.mxu0 0.0
    %5683 = vmatprep.subr.mxu0 0.0
    %5684 = vmatpush1.msra.mxu0 0.0
    %5685 = vmatprep.subr.mxu0 0.0
    %5686 = vmatpush1.msra.mxu0 0.0
    %5687 = vmatprep.subr.mxu0 0.0
    %5688 = vmatpush1.msra.mxu0 0.0
    %5689 = vmatprep.subr.mxu0 0.0
    %5690 = vmatpush1.msra.mxu0 0.0
    %5691 = vmatprep.subr.mxu0 0.0
    %5692 = vmatpush1.msra.mxu0 0.0
    %5693 = vmatprep.subr.mxu0 0.0
    %5694 = vmatpush1.msra.mxu0 0.0
    %5695 = vmatprep.subr.mxu0 0.0
    %5696 = vmatpush1.msra.mxu0 0.0
    %5697 = vmatprep.subr.mxu0 0.0
    %5698 = vmatpush1.msra.mxu0 0.0
    %5699 = vmatprep.subr.mxu0 0.0
    %5700 = vmatpush1.msra.mxu0 0.0
    %5701 = vmatprep.mubr.f32.mxu0 0.0
    %5702 = vmatmul.mubr.f32.gmra.mrb[0].mxu0 %v5400
    %v5703 = vpop.f32.mrb[0].mxu0
    %v5704 = vadd.f32 0.0, %v5703
    %v5705 = vpop.f32.mrb[0].mxu0
    %v5706 = vadd.f32 0.0, %v5705
    %5707 = vdwg.mxu0
    %v5712 = vcombine.low %v5633, %v5635
    %v5713 = vcombine.low %v5704, %v5706
    %v5715 = vunpack.c.l.s4 1966171168
    %v5716 = vunpack.c.0.s8 %v5715
    %v5717 = vlaneseq
    %v5718 = vshrl.u32 %v5717, 7
    %v5719 = vsub.s32 %v5716, %v5718
    %v5720 = vrot.slane %v5712, %v5719
    %v5722 = vunpack.c.l.s4 1966171168
    %v5723 = vunpack.c.0.s8 %v5722
    %v5724 = vlaneseq
    %v5725 = vshrl.u32 %v5724, 7
    %v5726 = vsub.s32 %v5723, %v5725
    %v5727 = vrot.slane %v5713, %v5726
    %v5728 = vcombine.low %v5720, %v5727
    %v5730 = vunpack.c.l.s4 1966171168
    %v5731 = vunpack.c.0.s8 %v5730
    %v5732 = vlaneseq
    %v5733 = vshrl.u32 %v5732, 7
    %v5734 = vsub.s32 %v5731, %v5733
    %v5735 = vrot.slane %v5728, %v5734
    %v5737 = vadd.f32 %v5565, %v5735
    %v5738 = vadd.f32 %v5737, %v71
    %v5739 = vtanh.pop %v5738
    %v5740 = vmul.f32 %v5739, 0.5
    %v5741 = vadd.f32 %v5740, 0.5
    %v5743 = vrot.slane %v5739, 1
    %v5745 = vmul.f32 %v5743, 0.5
    %v5746 = vadd.f32 %v5745, 0.5
    %v5747 = vrot.slane %v5739, 3
    %v5749 = vmul.f32 %v5747, 0.5
    %v5750 = vadd.f32 %v5749, 0.5
    %v5751 = vmul.f32 %v5746, %v4945
    %v5752 = vrot.slane %v5739, 2
    %v5754 = vmul.f32 %v5741, %v5752
    %v5755 = vadd.f32 %v5751, %v5754
    %v5756 = vtanh.pop %v5755
    %v5757 = vmul.f32 %v5750, %v5756
    %v5759 = vsel %vm95, %v5256, 0
    %5761 = vmatprep.subr.mxu0 %v865
    %5762 = vmatpush1.msra.mxu0 %v864
    %5763 = vmatprep.subr.mxu0 %v869
    %5764 = vmatpush1.msra.mxu0 %v868
    %5765 = vmatprep.subr.mxu0 %v873
    %5766 = vmatpush1.msra.mxu0 %v872
    %5767 = vmatprep.subr.mxu0 %v877
    %5768 = vmatpush1.msra.mxu0 %v876
    %5769 = vmatprep.subr.mxu0 0.0
    %5770 = vmatpush1.msra.mxu0 0.0
    %5771 = vmatprep.subr.mxu0 0.0
    %5772 = vmatpush1.msra.mxu0 0.0
    %5773 = vmatprep.subr.mxu0 0.0
    %5774 = vmatpush1.msra.mxu0 0.0
    %5775 = vmatprep.subr.mxu0 0.0
    %5776 = vmatpush1.msra.mxu0 0.0
    %5777 = vmatprep.subr.mxu0 0.0
    %5778 = vmatpush1.msra.mxu0 0.0
    %5779 = vmatprep.subr.mxu0 0.0
    %5780 = vmatpush1.msra.mxu0 0.0
    %5781 = vmatprep.subr.mxu0 0.0
    %5782 = vmatpush1.msra.mxu0 0.0
    %5783 = vmatprep.subr.mxu0 0.0
    %5784 = vmatpush1.msra.mxu0 0.0
    %5785 = vmatprep.subr.mxu0 0.0
    %5786 = vmatpush1.msra.mxu0 0.0
    %5787 = vmatprep.subr.mxu0 0.0
    %5788 = vmatpush1.msra.mxu0 0.0
    %5789 = vmatprep.subr.mxu0 0.0
    %5790 = vmatpush1.msra.mxu0 0.0
    %5791 = vmatprep.subr.mxu0 0.0
    %5792 = vmatpush1.msra.mxu0 0.0
    %5793 = vmatprep.subr.mxu0 0.0
    %5794 = vmatpush1.msra.mxu0 0.0
    %5795 = vmatprep.subr.mxu0 0.0
    %5796 = vmatpush1.msra.mxu0 0.0
    %5797 = vmatprep.subr.mxu0 0.0
    %5798 = vmatpush1.msra.mxu0 0.0
    %5799 = vmatprep.subr.mxu0 0.0
    %5800 = vmatpush1.msra.mxu0 0.0
    %5801 = vmatprep.subr.mxu0 0.0
    %5802 = vmatpush1.msra.mxu0 0.0
    %5803 = vmatprep.subr.mxu0 0.0
    %5804 = vmatpush1.msra.mxu0 0.0
    %5805 = vmatprep.subr.mxu0 0.0
    %5806 = vmatpush1.msra.mxu0 0.0
    %5807 = vmatprep.subr.mxu0 0.0
    %5808 = vmatpush1.msra.mxu0 0.0
    %5809 = vmatprep.subr.mxu0 0.0
    %5810 = vmatpush1.msra.mxu0 0.0
    %5811 = vmatprep.subr.mxu0 0.0
    %5812 = vmatpush1.msra.mxu0 0.0
    %5813 = vmatprep.subr.mxu0 0.0
    %5814 = vmatpush1.msra.mxu0 0.0
    %5815 = vmatprep.subr.mxu0 0.0
    %5816 = vmatpush1.msra.mxu0 0.0
    %5817 = vmatprep.subr.mxu0 0.0
    %5818 = vmatpush1.msra.mxu0 0.0
    %5819 = vmatprep.subr.mxu0 0.0
    %5820 = vmatpush1.msra.mxu0 0.0
    %5821 = vmatprep.subr.mxu0 0.0
    %5822 = vmatpush1.msra.mxu0 0.0
    %5823 = vmatprep.subr.mxu0 0.0
    %5824 = vmatpush1.msra.mxu0 0.0
    %5825 = vmatprep.mubr.f32.mxu0 0.0
    %5826 = vmatmul.mubr.f32.gmra.mrb[0].mxu0 %v5759
    %v5827 = vpop.f32.mrb[0].mxu0
    %v5828 = vadd.f32 0.0, %v5827
    %v5829 = vpop.f32.mrb[0].mxu0
    %v5830 = vadd.f32 0.0, %v5829
    %5831 = vdwg.mxu0
    %5832 = vmatprep.subr.mxu0 %v867
    %5833 = vmatpush1.msra.mxu0 %v866
    %5834 = vmatprep.subr.mxu0 %v871
    %5835 = vmatpush1.msra.mxu0 %v870
    %5836 = vmatprep.subr.mxu0 %v875
    %5837 = vmatpush1.msra.mxu0 %v874
    %5838 = vmatprep.subr.mxu0 %v879
    %5839 = vmatpush1.msra.mxu0 %v878
    %5840 = vmatprep.subr.mxu0 0.0
    %5841 = vmatpush1.msra.mxu0 0.0
    %5842 = vmatprep.subr.mxu0 0.0
    %5843 = vmatpush1.msra.mxu0 0.0
    %5844 = vmatprep.subr.mxu0 0.0
    %5845 = vmatpush1.msra.mxu0 0.0
    %5846 = vmatprep.subr.mxu0 0.0
    %5847 = vmatpush1.msra.mxu0 0.0
    %5848 = vmatprep.subr.mxu0 0.0
    %5849 = vmatpush1.msra.mxu0 0.0
    %5850 = vmatprep.subr.mxu0 0.0
    %5851 = vmatpush1.msra.mxu0 0.0
    %5852 = vmatprep.subr.mxu0 0.0
    %5853 = vmatpush1.msra.mxu0 0.0
    %5854 = vmatprep.subr.mxu0 0.0
    %5855 = vmatpush1.msra.mxu0 0.0
    %5856 = vmatprep.subr.mxu0 0.0
    %5857 = vmatpush1.msra.mxu0 0.0
    %5858 = vmatprep.subr.mxu0 0.0
    %5859 = vmatpush1.msra.mxu0 0.0
    %5860 = vmatprep.subr.mxu0 0.0
    %5861 = vmatpush1.msra.mxu0 0.0
    %5862 = vmatprep.subr.mxu0 0.0
    %5863 = vmatpush1.msra.mxu0 0.0
    %5864 = vmatprep.subr.mxu0 0.0
    %5865 = vmatpush1.msra.mxu0 0.0
    %5866 = vmatprep.subr.mxu0 0.0
    %5867 = vmatpush1.msra.mxu0 0.0
    %5868 = vmatprep.subr.mxu0 0.0
    %5869 = vmatpush1.msra.mxu0 0.0
    %5870 = vmatprep.subr.mxu0 0.0
    %5871 = vmatpush1.msra.mxu0 0.0
    %5872 = vmatprep.subr.mxu0 0.0
    %5873 = vmatpush1.msra.mxu0 0.0
    %5874 = vmatprep.subr.mxu0 0.0
    %5875 = vmatpush1.msra.mxu0 0.0
    %5876 = vmatprep.subr.mxu0 0.0
    %5877 = vmatpush1.msra.mxu0 0.0
    %5878 = vmatprep.subr.mxu0 0.0
    %5879 = vmatpush1.msra.mxu0 0.0
    %5880 = vmatprep.subr.mxu0 0.0
    %5881 = vmatpush1.msra.mxu0 0.0
    %5882 = vmatprep.subr.mxu0 0.0
    %5883 = vmatpush1.msra.mxu0 0.0
    %5884 = vmatprep.subr.mxu0 0.0
    %5885 = vmatpush1.msra.mxu0 0.0
    %5886 = vmatprep.subr.mxu0 0.0
    %5887 = vmatpush1.msra.mxu0 0.0
    %5888 = vmatprep.subr.mxu0 0.0
    %5889 = vmatpush1.msra.mxu0 0.0
    %5890 = vmatprep.subr.mxu0 0.0
    %5891 = vmatpush1.msra.mxu0 0.0
    %5892 = vmatprep.subr.mxu0 0.0
    %5893 = vmatpush1.msra.mxu0 0.0
    %5894 = vmatprep.subr.mxu0 0.0
    %5895 = vmatpush1.msra.mxu0 0.0
    %5896 = vmatprep.mubr.f32.mxu0 0.0
    %5897 = vmatmul.mubr.f32.gmra.mrb[0].mxu0 %v5759
    %v5898 = vpop.f32.mrb[0].mxu0
    %v5899 = vadd.f32 0.0, %v5898
    %v5900 = vpop.f32.mrb[0].mxu0
    %v5901 = vadd.f32 0.0, %v5900
    %5902 = vdwg.mxu0
    %v5904 = vsel %vm95, %v5562, 0
    %5906 = vmatprep.subr.mxu0 %v848
    %5907 = vmatpush1.msra.mxu0 %v847
    %5908 = vmatprep.subr.mxu0 %v852
    %5909 = vmatpush1.msra.mxu0 %v851
    %5910 = vmatprep.subr.mxu0 %v856
    %5911 = vmatpush1.msra.mxu0 %v855
    %5912 = vmatprep.subr.mxu0 %v860
    %5913 = vmatpush1.msra.mxu0 %v859
    %5914 = vmatprep.subr.mxu0 0.0
    %5915 = vmatpush1.msra.mxu0 0.0
    %5916 = vmatprep.subr.mxu0 0.0
    %5917 = vmatpush1.msra.mxu0 0.0
    %5918 = vmatprep.subr.mxu0 0.0
    %5919 = vmatpush1.msra.mxu0 0.0
    %5920 = vmatprep.subr.mxu0 0.0
    %5921 = vmatpush1.msra.mxu0 0.0
    %5922 = vmatprep.subr.mxu0 0.0
    %5923 = vmatpush1.msra.mxu0 0.0
    %5924 = vmatprep.subr.mxu0 0.0
    %5925 = vmatpush1.msra.mxu0 0.0
    %5926 = vmatprep.subr.mxu0 0.0
    %5927 = vmatpush1.msra.mxu0 0.0
    %5928 = vmatprep.subr.mxu0 0.0
    %5929 = vmatpush1.msra.mxu0 0.0
    %5930 = vmatprep.subr.mxu0 0.0
    %5931 = vmatpush1.msra.mxu0 0.0
    %5932 = vmatprep.subr.mxu0 0.0
    %5933 = vmatpush1.msra.mxu0 0.0
    %5934 = vmatprep.subr.mxu0 0.0
    %5935 = vmatpush1.msra.mxu0 0.0
    %5936 = vmatprep.subr.mxu0 0.0
    %5937 = vmatpush1.msra.mxu0 0.0
    %5938 = vmatprep.subr.mxu0 0.0
    %5939 = vmatpush1.msra.mxu0 0.0
    %5940 = vmatprep.subr.mxu0 0.0
    %5941 = vmatpush1.msra.mxu0 0.0
    %5942 = vmatprep.subr.mxu0 0.0
    %5943 = vmatpush1.msra.mxu0 0.0
    %5944 = vmatprep.subr.mxu0 0.0
    %5945 = vmatpush1.msra.mxu0 0.0
    %5946 = vmatprep.subr.mxu0 0.0
    %5947 = vmatpush1.msra.mxu0 0.0
    %5948 = vmatprep.subr.mxu0 0.0
    %5949 = vmatpush1.msra.mxu0 0.0
    %5950 = vmatprep.subr.mxu0 0.0
    %5951 = vmatpush1.msra.mxu0 0.0
    %5952 = vmatprep.subr.mxu0 0.0
    %5953 = vmatpush1.msra.mxu0 0.0
    %5954 = vmatprep.subr.mxu0 0.0
    %5955 = vmatpush1.msra.mxu0 0.0
    %5956 = vmatprep.subr.mxu0 0.0
    %5957 = vmatpush1.msra.mxu0 0.0
    %5958 = vmatprep.subr.mxu0 0.0
    %5959 = vmatpush1.msra.mxu0 0.0
    %5960 = vmatprep.subr.mxu0 0.0
    %5961 = vmatpush1.msra.mxu0 0.0
    %5962 = vmatprep.subr.mxu0 0.0
    %5963 = vmatpush1.msra.mxu0 0.0
    %5964 = vmatprep.subr.mxu0 0.0
    %5965 = vmatpush1.msra.mxu0 0.0
    %5966 = vmatprep.subr.mxu0 0.0
    %5967 = vmatpush1.msra.mxu0 0.0
    %5968 = vmatprep.subr.mxu0 0.0
    %5969 = vmatpush1.msra.mxu0 0.0
    %5970 = vmatprep.mubr.f32.mxu0 0.0
    %5971 = vmatmul.mubr.f32.gmra.mrb[0].mxu0 %v5904
    %v5972 = vpop.f32.mrb[0].mxu0
    %v5973 = vadd.f32 %v5828, %v5972
    %v5974 = vpop.f32.mrb[0].mxu0
    %v5975 = vadd.f32 %v5830, %v5974
    %5976 = vdwg.mxu0
    %5977 = vmatprep.subr.mxu0 %v850
    %5978 = vmatpush1.msra.mxu0 %v849
    %5979 = vmatprep.subr.mxu0 %v854
    %5980 = vmatpush1.msra.mxu0 %v853
    %5981 = vmatprep.subr.mxu0 %v858
    %5982 = vmatpush1.msra.mxu0 %v857
    %5983 = vmatprep.subr.mxu0 %v862
    %5984 = vmatpush1.msra.mxu0 %v861
    %5985 = vmatprep.subr.mxu0 0.0
    %5986 = vmatpush1.msra.mxu0 0.0
    %5987 = vmatprep.subr.mxu0 0.0
    %5988 = vmatpush1.msra.mxu0 0.0
    %5989 = vmatprep.subr.mxu0 0.0
    %5990 = vmatpush1.msra.mxu0 0.0
    %5991 = vmatprep.subr.mxu0 0.0
    %5992 = vmatpush1.msra.mxu0 0.0
    %5993 = vmatprep.subr.mxu0 0.0
    %5994 = vmatpush1.msra.mxu0 0.0
    %5995 = vmatprep.subr.mxu0 0.0
    %5996 = vmatpush1.msra.mxu0 0.0
    %5997 = vmatprep.subr.mxu0 0.0
    %5998 = vmatpush1.msra.mxu0 0.0
    %5999 = vmatprep.subr.mxu0 0.0
    %6000 = vmatpush1.msra.mxu0 0.0
    %6001 = vmatprep.subr.mxu0 0.0
    %6002 = vmatpush1.msra.mxu0 0.0
    %6003 = vmatprep.subr.mxu0 0.0
    %6004 = vmatpush1.msra.mxu0 0.0
    %6005 = vmatprep.subr.mxu0 0.0
    %6006 = vmatpush1.msra.mxu0 0.0
    %6007 = vmatprep.subr.mxu0 0.0
    %6008 = vmatpush1.msra.mxu0 0.0
    %6009 = vmatprep.subr.mxu0 0.0
    %6010 = vmatpush1.msra.mxu0 0.0
    %6011 = vmatprep.subr.mxu0 0.0
    %6012 = vmatpush1.msra.mxu0 0.0
    %6013 = vmatprep.subr.mxu0 0.0
    %6014 = vmatpush1.msra.mxu0 0.0
    %6015 = vmatprep.subr.mxu0 0.0
    %6016 = vmatpush1.msra.mxu0 0.0
    %6017 = vmatprep.subr.mxu0 0.0
    %6018 = vmatpush1.msra.mxu0 0.0
    %6019 = vmatprep.subr.mxu0 0.0
    %6020 = vmatpush1.msra.mxu0 0.0
    %6021 = vmatprep.subr.mxu0 0.0
    %6022 = vmatpush1.msra.mxu0 0.0
    %6023 = vmatprep.subr.mxu0 0.0
    %6024 = vmatpush1.msra.mxu0 0.0
    %6025 = vmatprep.subr.mxu0 0.0
    %6026 = vmatpush1.msra.mxu0 0.0
    %6027 = vmatprep.subr.mxu0 0.0
    %6028 = vmatpush1.msra.mxu0 0.0
    %6029 = vmatprep.subr.mxu0 0.0
    %6030 = vmatpush1.msra.mxu0 0.0
    %6031 = vmatprep.subr.mxu0 0.0
    %6032 = vmatpush1.msra.mxu0 0.0
    %6033 = vmatprep.subr.mxu0 0.0
    %6034 = vmatpush1.msra.mxu0 0.0
    %6035 = vmatprep.subr.mxu0 0.0
    %6036 = vmatpush1.msra.mxu0 0.0
    %6037 = vmatprep.subr.mxu0 0.0
    %6038 = vmatpush1.msra.mxu0 0.0
    %6039 = vmatprep.subr.mxu0 0.0
    %6040 = vmatpush1.msra.mxu0 0.0
    %6041 = vmatprep.mubr.f32.mxu0 0.0
    %6042 = vmatmul.mubr.f32.gmra.mrb[0].mxu0 %v5904
    %v6043 = vpop.f32.mrb[0].mxu0
    %v6044 = vadd.f32 %v5899, %v6043
    %v6045 = vpop.f32.mrb[0].mxu0
    %v6046 = vadd.f32 %v5901, %v6045
    %6047 = vdwg.mxu0
    %v6048 = vadd.f32 %v5973, %v1171
    %v6049 = vadd.f32 %v5975, %v1175
    %v6050 = vadd.f32 %v6044, %v1179
    %v6051 = vadd.f32 %v6046, %v1183
    %v6052 = vtanh.pop %v6048
    %v6053 = vtanh.pop %v6049
    %v6054 = vtanh.pop %v6050
    %v6055 = vtanh.pop %v6051
    %v6056 = vmul.f32 %v6052, 0.5
    %v6057 = vadd.f32 %v6056, 0.5
    %v6058 = vmul.f32 %v6053, 0.5
    %v6059 = vadd.f32 %v6058, 0.5
    %v6060 = vmul.f32 %v6055, 0.5
    %v6061 = vadd.f32 %v6060, 0.5
    %v6062 = vmul.f32 %v6059, %v5254
    %v6063 = vmul.f32 %v6057, %v6054
    %v6064 = vadd.f32 %v6062, %v6063
    %v6065 = vtanh.pop %v6064
    %v6066 = vmul.f32 %v6061, %v6065
    %6067 = vmatprep.subr.mxu0 %v309
    %6068 = vmatpush1.msra.mxu0 %v308
    %6069 = vmatprep.subr.mxu0 %v313
    %6070 = vmatpush1.msra.mxu0 %v312
    %6071 = vmatprep.subr.mxu0 %v317
    %6072 = vmatpush1.msra.mxu0 %v316
    %6073 = vmatprep.subr.mxu0 %v321
    %6074 = vmatpush1.msra.mxu0 %v320
    %6075 = vmatprep.subr.mxu0 0.0
    %6076 = vmatpush1.msra.mxu0 0.0
    %6077 = vmatprep.subr.mxu0 0.0
    %6078 = vmatpush1.msra.mxu0 0.0
    %6079 = vmatprep.subr.mxu0 0.0
    %6080 = vmatpush1.msra.mxu0 0.0
    %6081 = vmatprep.subr.mxu0 0.0
    %6082 = vmatpush1.msra.mxu0 0.0
    %6083 = vmatprep.subr.mxu0 0.0
    %6084 = vmatpush1.msra.mxu0 0.0
    %6085 = vmatprep.subr.mxu0 0.0
    %6086 = vmatpush1.msra.mxu0 0.0
    %6087 = vmatprep.subr.mxu0 0.0
    %6088 = vmatpush1.msra.mxu0 0.0
    %6089 = vmatprep.subr.mxu0 0.0
    %6090 = vmatpush1.msra.mxu0 0.0
    %6091 = vmatprep.subr.mxu0 0.0
    %6092 = vmatpush1.msra.mxu0 0.0
    %6093 = vmatprep.subr.mxu0 0.0
    %6094 = vmatpush1.msra.mxu0 0.0
    %6095 = vmatprep.subr.mxu0 0.0
    %6096 = vmatpush1.msra.mxu0 0.0
    %6097 = vmatprep.subr.mxu0 0.0
    %6098 = vmatpush1.msra.mxu0 0.0
    %6099 = vmatprep.subr.mxu0 0.0
    %6100 = vmatpush1.msra.mxu0 0.0
    %6101 = vmatprep.subr.mxu0 0.0
    %6102 = vmatpush1.msra.mxu0 0.0
    %6103 = vmatprep.subr.mxu0 0.0
    %6104 = vmatpush1.msra.mxu0 0.0
    %6105 = vmatprep.subr.mxu0 0.0
    %6106 = vmatpush1.msra.mxu0 0.0
    %6107 = vmatprep.subr.mxu0 0.0
    %6108 = vmatpush1.msra.mxu0 0.0
    %6109 = vmatprep.subr.mxu0 0.0
    %6110 = vmatpush1.msra.mxu0 0.0
    %6111 = vmatprep.subr.mxu0 0.0
    %6112 = vmatpush1.msra.mxu0 0.0
    %6113 = vmatprep.subr.mxu0 0.0
    %6114 = vmatpush1.msra.mxu0 0.0
    %6115 = vmatprep.subr.mxu0 0.0
    %6116 = vmatpush1.msra.mxu0 0.0
    %6117 = vmatprep.subr.mxu0 0.0
    %6118 = vmatpush1.msra.mxu0 0.0
    %6119 = vmatprep.subr.mxu0 0.0
    %6120 = vmatpush1.msra.mxu0 0.0
    %6121 = vmatprep.subr.mxu0 0.0
    %6122 = vmatpush1.msra.mxu0 0.0
    %6123 = vmatprep.subr.mxu0 0.0
    %6124 = vmatpush1.msra.mxu0 0.0
    %6125 = vmatprep.subr.mxu0 0.0
    %6126 = vmatpush1.msra.mxu0 0.0
    %6127 = vmatprep.subr.mxu0 0.0
    %6128 = vmatpush1.msra.mxu0 0.0
    %6129 = vmatprep.subr.mxu0 0.0
    %6130 = vmatpush1.msra.mxu0 0.0
    %6131 = vmatprep.mubr.f32.mxu0 0.0
    %6132 = vmatmul.mubr.f32.gmra.mrb[0].mxu0 %v5904
    %v6133 = vpop.f32.mrb[0].mxu0
    %v6134 = vadd.f32 0.0, %v6133
    %v6135 = vpop.f32.mrb[0].mxu0
    %v6136 = vadd.f32 0.0, %v6135
    %6137 = vdwg.mxu0
    %6138 = vmatprep.subr.mxu0 %v311
    %6139 = vmatpush1.msra.mxu0 %v310
    %6140 = vmatprep.subr.mxu0 %v315
    %6141 = vmatpush1.msra.mxu0 %v314
    %6142 = vmatprep.subr.mxu0 %v319
    %6143 = vmatpush1.msra.mxu0 %v318
    %6144 = vmatprep.subr.mxu0 %v323
    %6145 = vmatpush1.msra.mxu0 %v322
    %6146 = vmatprep.subr.mxu0 0.0
    %6147 = vmatpush1.msra.mxu0 0.0
    %6148 = vmatprep.subr.mxu0 0.0
    %6149 = vmatpush1.msra.mxu0 0.0
    %6150 = vmatprep.subr.mxu0 0.0
    %6151 = vmatpush1.msra.mxu0 0.0
    %6152 = vmatprep.subr.mxu0 0.0
    %6153 = vmatpush1.msra.mxu0 0.0
    %6154 = vmatprep.subr.mxu0 0.0
    %6155 = vmatpush1.msra.mxu0 0.0
    %6156 = vmatprep.subr.mxu0 0.0
    %6157 = vmatpush1.msra.mxu0 0.0
    %6158 = vmatprep.subr.mxu0 0.0
    %6159 = vmatpush1.msra.mxu0 0.0
    %6160 = vmatprep.subr.mxu0 0.0
    %6161 = vmatpush1.msra.mxu0 0.0
    %6162 = vmatprep.subr.mxu0 0.0
    %6163 = vmatpush1.msra.mxu0 0.0
    %6164 = vmatprep.subr.mxu0 0.0
    %6165 = vmatpush1.msra.mxu0 0.0
    %6166 = vmatprep.subr.mxu0 0.0
    %6167 = vmatpush1.msra.mxu0 0.0
    %6168 = vmatprep.subr.mxu0 0.0
    %6169 = vmatpush1.msra.mxu0 0.0
    %6170 = vmatprep.subr.mxu0 0.0
    %6171 = vmatpush1.msra.mxu0 0.0
    %6172 = vmatprep.subr.mxu0 0.0
    %6173 = vmatpush1.msra.mxu0 0.0
    %6174 = vmatprep.subr.mxu0 0.0
    %6175 = vmatpush1.msra.mxu0 0.0
    %6176 = vmatprep.subr.mxu0 0.0
    %6177 = vmatpush1.msra.mxu0 0.0
    %6178 = vmatprep.subr.mxu0 0.0
    %6179 = vmatpush1.msra.mxu0 0.0
    %6180 = vmatprep.subr.mxu0 0.0
    %6181 = vmatpush1.msra.mxu0 0.0
    %6182 = vmatprep.subr.mxu0 0.0
    %6183 = vmatpush1.msra.mxu0 0.0
    %6184 = vmatprep.subr.mxu0 0.0
    %6185 = vmatpush1.msra.mxu0 0.0
    %6186 = vmatprep.subr.mxu0 0.0
    %6187 = vmatpush1.msra.mxu0 0.0
    %6188 = vmatprep.subr.mxu0 0.0
    %6189 = vmatpush1.msra.mxu0 0.0
    %6190 = vmatprep.subr.mxu0 0.0
    %6191 = vmatpush1.msra.mxu0 0.0
    %6192 = vmatprep.subr.mxu0 0.0
    %6193 = vmatpush1.msra.mxu0 0.0
    %6194 = vmatprep.subr.mxu0 0.0
    %6195 = vmatpush1.msra.mxu0 0.0
    %6196 = vmatprep.subr.mxu0 0.0
    %6197 = vmatpush1.msra.mxu0 0.0
    %6198 = vmatprep.subr.mxu0 0.0
    %6199 = vmatpush1.msra.mxu0 0.0
    %6200 = vmatprep.subr.mxu0 0.0
    %6201 = vmatpush1.msra.mxu0 0.0
    %6202 = vmatprep.mubr.f32.mxu0 0.0
    %6203 = vmatmul.mubr.f32.gmra.mrb[0].mxu0 %v5904
    %v6204 = vpop.f32.mrb[0].mxu0
    %v6205 = vadd.f32 0.0, %v6204
    %v6206 = vpop.f32.mrb[0].mxu0
    %v6207 = vadd.f32 0.0, %v6206
    %6208 = vdwg.mxu0
    %v6210 = vsel %vm95, %v5757, 0
    %6212 = vmatprep.subr.mxu0 %v292
    %6213 = vmatpush1.msra.mxu0 %v291
    %6214 = vmatprep.subr.mxu0 %v296
    %6215 = vmatpush1.msra.mxu0 %v295
    %6216 = vmatprep.subr.mxu0 %v300
    %6217 = vmatpush1.msra.mxu0 %v299
    %6218 = vmatprep.subr.mxu0 %v304
    %6219 = vmatpush1.msra.mxu0 %v303
    %6220 = vmatprep.subr.mxu0 0.0
    %6221 = vmatpush1.msra.mxu0 0.0
    %6222 = vmatprep.subr.mxu0 0.0
    %6223 = vmatpush1.msra.mxu0 0.0
    %6224 = vmatprep.subr.mxu0 0.0
    %6225 = vmatpush1.msra.mxu0 0.0
    %6226 = vmatprep.subr.mxu0 0.0
    %6227 = vmatpush1.msra.mxu0 0.0
    %6228 = vmatprep.subr.mxu0 0.0
    %6229 = vmatpush1.msra.mxu0 0.0
    %6230 = vmatprep.subr.mxu0 0.0
    %6231 = vmatpush1.msra.mxu0 0.0
    %6232 = vmatprep.subr.mxu0 0.0
    %6233 = vmatpush1.msra.mxu0 0.0
    %6234 = vmatprep.subr.mxu0 0.0
    %6235 = vmatpush1.msra.mxu0 0.0
    %6236 = vmatprep.subr.mxu0 0.0
    %6237 = vmatpush1.msra.mxu0 0.0
    %6238 = vmatprep.subr.mxu0 0.0
    %6239 = vmatpush1.msra.mxu0 0.0
    %6240 = vmatprep.subr.mxu0 0.0
    %6241 = vmatpush1.msra.mxu0 0.0
    %6242 = vmatprep.subr.mxu0 0.0
    %6243 = vmatpush1.msra.mxu0 0.0
    %6244 = vmatprep.subr.mxu0 0.0
    %6245 = vmatpush1.msra.mxu0 0.0
    %6246 = vmatprep.subr.mxu0 0.0
    %6247 = vmatpush1.msra.mxu0 0.0
    %6248 = vmatprep.subr.mxu0 0.0
    %6249 = vmatpush1.msra.mxu0 0.0
    %6250 = vmatprep.subr.mxu0 0.0
    %6251 = vmatpush1.msra.mxu0 0.0
    %6252 = vmatprep.subr.mxu0 0.0
    %6253 = vmatpush1.msra.mxu0 0.0
    %6254 = vmatprep.subr.mxu0 0.0
    %6255 = vmatpush1.msra.mxu0 0.0
    %6256 = vmatprep.subr.mxu0 0.0
    %6257 = vmatpush1.msra.mxu0 0.0
    %6258 = vmatprep.subr.mxu0 0.0
    %6259 = vmatpush1.msra.mxu0 0.0
    %6260 = vmatprep.subr.mxu0 0.0
    %6261 = vmatpush1.msra.mxu0 0.0
    %6262 = vmatprep.subr.mxu0 0.0
    %6263 = vmatpush1.msra.mxu0 0.0
    %6264 = vmatprep.subr.mxu0 0.0
    %6265 = vmatpush1.msra.mxu0 0.0
    %6266 = vmatprep.subr.mxu0 0.0
    %6267 = vmatpush1.msra.mxu0 0.0
    %6268 = vmatprep.subr.mxu0 0.0
    %6269 = vmatpush1.msra.mxu0 0.0
    %6270 = vmatprep.subr.mxu0 0.0
    %6271 = vmatpush1.msra.mxu0 0.0
    %6272 = vmatprep.subr.mxu0 0.0
    %6273 = vmatpush1.msra.mxu0 0.0
    %6274 = vmatprep.subr.mxu0 0.0
    %6275 = vmatpush1.msra.mxu0 0.0
    %6276 = vmatprep.mubr.f32.mxu0 0.0
    %6277 = vmatmul.mubr.f32.gmra.mrb[0].mxu0 %v6210
    %v6278 = vpop.f32.mrb[0].mxu0
    %v6279 = vadd.f32 %v6134, %v6278
    %v6280 = vpop.f32.mrb[0].mxu0
    %v6281 = vadd.f32 %v6136, %v6280
    %6282 = vdwg.mxu0
    %6283 = vmatprep.subr.mxu0 %v294
    %6284 = vmatpush1.msra.mxu0 %v293
    %6285 = vmatprep.subr.mxu0 %v298
    %6286 = vmatpush1.msra.mxu0 %v297
    %6287 = vmatprep.subr.mxu0 %v302
    %6288 = vmatpush1.msra.mxu0 %v301
    %6289 = vmatprep.subr.mxu0 %v306
    %6290 = vmatpush1.msra.mxu0 %v305
    %6291 = vmatprep.subr.mxu0 0.0
    %6292 = vmatpush1.msra.mxu0 0.0
    %6293 = vmatprep.subr.mxu0 0.0
    %6294 = vmatpush1.msra.mxu0 0.0
    %6295 = vmatprep.subr.mxu0 0.0
    %6296 = vmatpush1.msra.mxu0 0.0
    %6297 = vmatprep.subr.mxu0 0.0
    %6298 = vmatpush1.msra.mxu0 0.0
    %6299 = vmatprep.subr.mxu0 0.0
    %6300 = vmatpush1.msra.mxu0 0.0
    %6301 = vmatprep.subr.mxu0 0.0
    %6302 = vmatpush1.msra.mxu0 0.0
    %6303 = vmatprep.subr.mxu0 0.0
    %6304 = vmatpush1.msra.mxu0 0.0
    %6305 = vmatprep.subr.mxu0 0.0
    %6306 = vmatpush1.msra.mxu0 0.0
    %6307 = vmatprep.subr.mxu0 0.0
    %6308 = vmatpush1.msra.mxu0 0.0
    %6309 = vmatprep.subr.mxu0 0.0
    %6310 = vmatpush1.msra.mxu0 0.0
    %6311 = vmatprep.subr.mxu0 0.0
    %6312 = vmatpush1.msra.mxu0 0.0
    %6313 = vmatprep.subr.mxu0 0.0
    %6314 = vmatpush1.msra.mxu0 0.0
    %6315 = vmatprep.subr.mxu0 0.0
    %6316 = vmatpush1.msra.mxu0 0.0
    %6317 = vmatprep.subr.mxu0 0.0
    %6318 = vmatpush1.msra.mxu0 0.0
    %6319 = vmatprep.subr.mxu0 0.0
    %6320 = vmatpush1.msra.mxu0 0.0
    %6321 = vmatprep.subr.mxu0 0.0
    %6322 = vmatpush1.msra.mxu0 0.0
    %6323 = vmatprep.subr.mxu0 0.0
    %6324 = vmatpush1.msra.mxu0 0.0
    %6325 = vmatprep.subr.mxu0 0.0
    %6326 = vmatpush1.msra.mxu0 0.0
    %6327 = vmatprep.subr.mxu0 0.0
    %6328 = vmatpush1.msra.mxu0 0.0
    %6329 = vmatprep.subr.mxu0 0.0
    %6330 = vmatpush1.msra.mxu0 0.0
    %6331 = vmatprep.subr.mxu0 0.0
    %6332 = vmatpush1.msra.mxu0 0.0
    %6333 = vmatprep.subr.mxu0 0.0
    %6334 = vmatpush1.msra.mxu0 0.0
    %6335 = vmatprep.subr.mxu0 0.0
    %6336 = vmatpush1.msra.mxu0 0.0
    %6337 = vmatprep.subr.mxu0 0.0
    %6338 = vmatpush1.msra.mxu0 0.0
    %6339 = vmatprep.subr.mxu0 0.0
    %6340 = vmatpush1.msra.mxu0 0.0
    %6341 = vmatprep.subr.mxu0 0.0
    %6342 = vmatpush1.msra.mxu0 0.0
    %6343 = vmatprep.subr.mxu0 0.0
    %6344 = vmatpush1.msra.mxu0 0.0
    %6345 = vmatprep.subr.mxu0 0.0
    %6346 = vmatpush1.msra.mxu0 0.0
    %6347 = vmatprep.mubr.f32.mxu0 0.0
    %6348 = vmatmul.mubr.f32.gmra.mrb[0].mxu0 %v6210
    %v6349 = vpop.f32.mrb[0].mxu0
    %v6350 = vadd.f32 %v6205, %v6349
    %v6351 = vpop.f32.mrb[0].mxu0
    %v6352 = vadd.f32 %v6207, %v6351
    %6353 = vdwg.mxu0
    %v6354 = vadd.f32 %v6279, %v615
    %v6355 = vadd.f32 %v6281, %v619
    %v6356 = vadd.f32 %v6350, %v623
    %v6357 = vadd.f32 %v6352, %v627
    %v6358 = vtanh.pop %v6354
    %v6359 = vtanh.pop %v6355
    %v6360 = vtanh.pop %v6356
    %v6361 = vtanh.pop %v6357
    %v6362 = vmul.f32 %v6358, 0.5
    %v6363 = vadd.f32 %v6362, 0.5
    %v6364 = vmul.f32 %v6359, 0.5
    %v6365 = vadd.f32 %v6364, 0.5
    %v6366 = vmul.f32 %v6361, 0.5
    %v6367 = vadd.f32 %v6366, 0.5
    %v6368 = vmul.f32 %v6365, %v5560
    %v6369 = vmul.f32 %v6363, %v6360
    %v6370 = vadd.f32 %v6368, %v6369
    %v6371 = vtanh.pop %v6370
    %v6372 = vmul.f32 %v6367, %v6371
    %v6374 = vsel %vm95, %v6066, 0
    %6376 = vmatprep.subr.mxu0 %v865
    %6377 = vmatpush1.msra.mxu0 %v864
    %6378 = vmatprep.subr.mxu0 %v869
    %6379 = vmatpush1.msra.mxu0 %v868
    %6380 = vmatprep.subr.mxu0 %v873
    %6381 = vmatpush1.msra.mxu0 %v872
    %6382 = vmatprep.subr.mxu0 %v877
    %6383 = vmatpush1.msra.mxu0 %v876
    %6384 = vmatprep.subr.mxu0 0.0
    %6385 = vmatpush1.msra.mxu0 0.0
    %6386 = vmatprep.subr.mxu0 0.0
    %6387 = vmatpush1.msra.mxu0 0.0
    %6388 = vmatprep.subr.mxu0 0.0
    %6389 = vmatpush1.msra.mxu0 0.0
    %6390 = vmatprep.subr.mxu0 0.0
    %6391 = vmatpush1.msra.mxu0 0.0
    %6392 = vmatprep.subr.mxu0 0.0
    %6393 = vmatpush1.msra.mxu0 0.0
    %6394 = vmatprep.subr.mxu0 0.0
    %6395 = vmatpush1.msra.mxu0 0.0
    %6396 = vmatprep.subr.mxu0 0.0
    %6397 = vmatpush1.msra.mxu0 0.0
    %6398 = vmatprep.subr.mxu0 0.0
    %6399 = vmatpush1.msra.mxu0 0.0
    %6400 = vmatprep.subr.mxu0 0.0
    %6401 = vmatpush1.msra.mxu0 0.0
    %6402 = vmatprep.subr.mxu0 0.0
    %6403 = vmatpush1.msra.mxu0 0.0
    %6404 = vmatprep.subr.mxu0 0.0
    %6405 = vmatpush1.msra.mxu0 0.0
    %6406 = vmatprep.subr.mxu0 0.0
    %6407 = vmatpush1.msra.mxu0 0.0
    %6408 = vmatprep.subr.mxu0 0.0
    %6409 = vmatpush1.msra.mxu0 0.0
    %6410 = vmatprep.subr.mxu0 0.0
    %6411 = vmatpush1.msra.mxu0 0.0
    %6412 = vmatprep.subr.mxu0 0.0
    %6413 = vmatpush1.msra.mxu0 0.0
    %6414 = vmatprep.subr.mxu0 0.0
    %6415 = vmatpush1.msra.mxu0 0.0
    %6416 = vmatprep.subr.mxu0 0.0
    %6417 = vmatpush1.msra.mxu0 0.0
    %6418 = vmatprep.subr.mxu0 0.0
    %6419 = vmatpush1.msra.mxu0 0.0
    %6420 = vmatprep.subr.mxu0 0.0
    %6421 = vmatpush1.msra.mxu0 0.0
    %6422 = vmatprep.subr.mxu0 0.0
    %6423 = vmatpush1.msra.mxu0 0.0
    %6424 = vmatprep.subr.mxu0 0.0
    %6425 = vmatpush1.msra.mxu0 0.0
    %6426 = vmatprep.subr.mxu0 0.0
    %6427 = vmatpush1.msra.mxu0 0.0
    %6428 = vmatprep.subr.mxu0 0.0
    %6429 = vmatpush1.msra.mxu0 0.0
    %6430 = vmatprep.subr.mxu0 0.0
    %6431 = vmatpush1.msra.mxu0 0.0
    %6432 = vmatprep.subr.mxu0 0.0
    %6433 = vmatpush1.msra.mxu0 0.0
    %6434 = vmatprep.subr.mxu0 0.0
    %6435 = vmatpush1.msra.mxu0 0.0
    %6436 = vmatprep.subr.mxu0 0.0
    %6437 = vmatpush1.msra.mxu0 0.0
    %6438 = vmatprep.subr.mxu0 0.0
    %6439 = vmatpush1.msra.mxu0 0.0
    %6440 = vmatprep.mubr.f32.mxu0 0.0
    %6441 = vmatmul.mubr.f32.gmra.mrb[0].mxu0 %v6374
    %v6442 = vpop.f32.mrb[0].mxu0
    %v6443 = vadd.f32 0.0, %v6442
    %v6444 = vpop.f32.mrb[0].mxu0
    %v6445 = vadd.f32 0.0, %v6444
    %6446 = vdwg.mxu0
    %6447 = vmatprep.subr.mxu0 %v867
    %6448 = vmatpush1.msra.mxu0 %v866
    %6449 = vmatprep.subr.mxu0 %v871
    %6450 = vmatpush1.msra.mxu0 %v870
    %6451 = vmatprep.subr.mxu0 %v875
    %6452 = vmatpush1.msra.mxu0 %v874
    %6453 = vmatprep.subr.mxu0 %v879
    %6454 = vmatpush1.msra.mxu0 %v878
    %6455 = vmatprep.subr.mxu0 0.0
    %6456 = vmatpush1.msra.mxu0 0.0
    %6457 = vmatprep.subr.mxu0 0.0
    %6458 = vmatpush1.msra.mxu0 0.0
    %6459 = vmatprep.subr.mxu0 0.0
    %6460 = vmatpush1.msra.mxu0 0.0
    %6461 = vmatprep.subr.mxu0 0.0
    %6462 = vmatpush1.msra.mxu0 0.0
    %6463 = vmatprep.subr.mxu0 0.0
    %6464 = vmatpush1.msra.mxu0 0.0
    %6465 = vmatprep.subr.mxu0 0.0
    %6466 = vmatpush1.msra.mxu0 0.0
    %6467 = vmatprep.subr.mxu0 0.0
    %6468 = vmatpush1.msra.mxu0 0.0
    %6469 = vmatprep.subr.mxu0 0.0
    %6470 = vmatpush1.msra.mxu0 0.0
    %6471 = vmatprep.subr.mxu0 0.0
    %6472 = vmatpush1.msra.mxu0 0.0
    %6473 = vmatprep.subr.mxu0 0.0
    %6474 = vmatpush1.msra.mxu0 0.0
    %6475 = vmatprep.subr.mxu0 0.0
    %6476 = vmatpush1.msra.mxu0 0.0
    %6477 = vmatprep.subr.mxu0 0.0
    %6478 = vmatpush1.msra.mxu0 0.0
    %6479 = vmatprep.subr.mxu0 0.0
    %6480 = vmatpush1.msra.mxu0 0.0
    %6481 = vmatprep.subr.mxu0 0.0
    %6482 = vmatpush1.msra.mxu0 0.0
    %6483 = vmatprep.subr.mxu0 0.0
    %6484 = vmatpush1.msra.mxu0 0.0
    %6485 = vmatprep.subr.mxu0 0.0
    %6486 = vmatpush1.msra.mxu0 0.0
    %6487 = vmatprep.subr.mxu0 0.0
    %6488 = vmatpush1.msra.mxu0 0.0
    %6489 = vmatprep.subr.mxu0 0.0
    %6490 = vmatpush1.msra.mxu0 0.0
    %6491 = vmatprep.subr.mxu0 0.0
    %6492 = vmatpush1.msra.mxu0 0.0
    %6493 = vmatprep.subr.mxu0 0.0
    %6494 = vmatpush1.msra.mxu0 0.0
    %6495 = vmatprep.subr.mxu0 0.0
    %6496 = vmatpush1.msra.mxu0 0.0
    %6497 = vmatprep.subr.mxu0 0.0
    %6498 = vmatpush1.msra.mxu0 0.0
    %6499 = vmatprep.subr.mxu0 0.0
    %6500 = vmatpush1.msra.mxu0 0.0
    %6501 = vmatprep.subr.mxu0 0.0
    %6502 = vmatpush1.msra.mxu0 0.0
    %6503 = vmatprep.subr.mxu0 0.0
    %6504 = vmatpush1.msra.mxu0 0.0
    %6505 = vmatprep.subr.mxu0 0.0
    %6506 = vmatpush1.msra.mxu0 0.0
    %6507 = vmatprep.subr.mxu0 0.0
    %6508 = vmatpush1.msra.mxu0 0.0
    %6509 = vmatprep.subr.mxu0 0.0
    %6510 = vmatpush1.msra.mxu0 0.0
    %6511 = vmatprep.mubr.f32.mxu0 0.0
    %6512 = vmatmul.mubr.f32.gmra.mrb[0].mxu0 %v6374
    %v6513 = vpop.f32.mrb[0].mxu0
    %v6514 = vadd.f32 0.0, %v6513
    %v6515 = vpop.f32.mrb[0].mxu0
    %v6516 = vadd.f32 0.0, %v6515
    %6517 = vdwg.mxu0
    %v6519 = vsel %vm95, %v6372, 0
    %6521 = vmatprep.subr.mxu0 %v848
    %6522 = vmatpush1.msra.mxu0 %v847
    %6523 = vmatprep.subr.mxu0 %v852
    %6524 = vmatpush1.msra.mxu0 %v851
    %6525 = vmatprep.subr.mxu0 %v856
    %6526 = vmatpush1.msra.mxu0 %v855
    %6527 = vmatprep.subr.mxu0 %v860
    %6528 = vmatpush1.msra.mxu0 %v859
    %6529 = vmatprep.subr.mxu0 0.0
    %6530 = vmatpush1.msra.mxu0 0.0
    %6531 = vmatprep.subr.mxu0 0.0
    %6532 = vmatpush1.msra.mxu0 0.0
    %6533 = vmatprep.subr.mxu0 0.0
    %6534 = vmatpush1.msra.mxu0 0.0
    %6535 = vmatprep.subr.mxu0 0.0
    %6536 = vmatpush1.msra.mxu0 0.0
    %6537 = vmatprep.subr.mxu0 0.0
    %6538 = vmatpush1.msra.mxu0 0.0
    %6539 = vmatprep.subr.mxu0 0.0
    %6540 = vmatpush1.msra.mxu0 0.0
    %6541 = vmatprep.subr.mxu0 0.0
    %6542 = vmatpush1.msra.mxu0 0.0
    %6543 = vmatprep.subr.mxu0 0.0
    %6544 = vmatpush1.msra.mxu0 0.0
    %6545 = vmatprep.subr.mxu0 0.0
    %6546 = vmatpush1.msra.mxu0 0.0
    %6547 = vmatprep.subr.mxu0 0.0
    %6548 = vmatpush1.msra.mxu0 0.0
    %6549 = vmatprep.subr.mxu0 0.0
    %6550 = vmatpush1.msra.mxu0 0.0
    %6551 = vmatprep.subr.mxu0 0.0
    %6552 = vmatpush1.msra.mxu0 0.0
    %6553 = vmatprep.subr.mxu0 0.0
    %6554 = vmatpush1.msra.mxu0 0.0
    %6555 = vmatprep.subr.mxu0 0.0
    %6556 = vmatpush1.msra.mxu0 0.0
    %6557 = vmatprep.subr.mxu0 0.0
    %6558 = vmatpush1.msra.mxu0 0.0
    %6559 = vmatprep.subr.mxu0 0.0
    %6560 = vmatpush1.msra.mxu0 0.0
    %6561 = vmatprep.subr.mxu0 0.0
    %6562 = vmatpush1.msra.mxu0 0.0
    %6563 = vmatprep.subr.mxu0 0.0
    %6564 = vmatpush1.msra.mxu0 0.0
    %6565 = vmatprep.subr.mxu0 0.0
    %6566 = vmatpush1.msra.mxu0 0.0
    %6567 = vmatprep.subr.mxu0 0.0
    %6568 = vmatpush1.msra.mxu0 0.0
    %6569 = vmatprep.subr.mxu0 0.0
    %6570 = vmatpush1.msra.mxu0 0.0
    %6571 = vmatprep.subr.mxu0 0.0
    %6572 = vmatpush1.msra.mxu0 0.0
    %6573 = vmatprep.subr.mxu0 0.0
    %6574 = vmatpush1.msra.mxu0 0.0
    %6575 = vmatprep.subr.mxu0 0.0
    %6576 = vmatpush1.msra.mxu0 0.0
    %6577 = vmatprep.subr.mxu0 0.0
    %6578 = vmatpush1.msra.mxu0 0.0
    %6579 = vmatprep.subr.mxu0 0.0
    %6580 = vmatpush1.msra.mxu0 0.0
    %6581 = vmatprep.subr.mxu0 0.0
    %6582 = vmatpush1.msra.mxu0 0.0
    %6583 = vmatprep.subr.mxu0 0.0
    %6584 = vmatpush1.msra.mxu0 0.0
    %6585 = vmatprep.mubr.f32.mxu0 0.0
    %6586 = vmatmul.mubr.f32.gmra.mrb[0].mxu0 %v6519
    %v6587 = vpop.f32.mrb[0].mxu0
    %v6588 = vadd.f32 %v6443, %v6587
    %v6589 = vpop.f32.mrb[0].mxu0
    %v6590 = vadd.f32 %v6445, %v6589
    %6591 = vdwg.mxu0
    %6592 = vmatprep.subr.mxu0 %v850
    %6593 = vmatpush1.msra.mxu0 %v849
    %6594 = vmatprep.subr.mxu0 %v854
    %6595 = vmatpush1.msra.mxu0 %v853
    %6596 = vmatprep.subr.mxu0 %v858
    %6597 = vmatpush1.msra.mxu0 %v857
    %6598 = vmatprep.subr.mxu0 %v862
    %6599 = vmatpush1.msra.mxu0 %v861
    %6600 = vmatprep.subr.mxu0 0.0
    %6601 = vmatpush1.msra.mxu0 0.0
    %6602 = vmatprep.subr.mxu0 0.0
    %6603 = vmatpush1.msra.mxu0 0.0
    %6604 = vmatprep.subr.mxu0 0.0
    %6605 = vmatpush1.msra.mxu0 0.0
    %6606 = vmatprep.subr.mxu0 0.0
    %6607 = vmatpush1.msra.mxu0 0.0
    %6608 = vmatprep.subr.mxu0 0.0
    %6609 = vmatpush1.msra.mxu0 0.0
    %6610 = vmatprep.subr.mxu0 0.0
    %6611 = vmatpush1.msra.mxu0 0.0
    %6612 = vmatprep.subr.mxu0 0.0
    %6613 = vmatpush1.msra.mxu0 0.0
    %6614 = vmatprep.subr.mxu0 0.0
    %6615 = vmatpush1.msra.mxu0 0.0
    %6616 = vmatprep.subr.mxu0 0.0
    %6617 = vmatpush1.msra.mxu0 0.0
    %6618 = vmatprep.subr.mxu0 0.0
    %6619 = vmatpush1.msra.mxu0 0.0
    %6620 = vmatprep.subr.mxu0 0.0
    %6621 = vmatpush1.msra.mxu0 0.0
    %6622 = vmatprep.subr.mxu0 0.0
    %6623 = vmatpush1.msra.mxu0 0.0
    %6624 = vmatprep.subr.mxu0 0.0
    %6625 = vmatpush1.msra.mxu0 0.0
    %6626 = vmatprep.subr.mxu0 0.0
    %6627 = vmatpush1.msra.mxu0 0.0
    %6628 = vmatprep.subr.mxu0 0.0
    %6629 = vmatpush1.msra.mxu0 0.0
    %6630 = vmatprep.subr.mxu0 0.0
    %6631 = vmatpush1.msra.mxu0 0.0
    %6632 = vmatprep.subr.mxu0 0.0
    %6633 = vmatpush1.msra.mxu0 0.0
    %6634 = vmatprep.subr.mxu0 0.0
    %6635 = vmatpush1.msra.mxu0 0.0
    %6636 = vmatprep.subr.mxu0 0.0
    %6637 = vmatpush1.msra.mxu0 0.0
    %6638 = vmatprep.subr.mxu0 0.0
    %6639 = vmatpush1.msra.mxu0 0.0
    %6640 = vmatprep.subr.mxu0 0.0
    %6641 = vmatpush1.msra.mxu0 0.0
    %6642 = vmatprep.subr.mxu0 0.0
    %6643 = vmatpush1.msra.mxu0 0.0
    %6644 = vmatprep.subr.mxu0 0.0
    %6645 = vmatpush1.msra.mxu0 0.0
    %6646 = vmatprep.subr.mxu0 0.0
    %6647 = vmatpush1.msra.mxu0 0.0
    %6648 = vmatprep.subr.mxu0 0.0
    %6649 = vmatpush1.msra.mxu0 0.0
    %6650 = vmatprep.subr.mxu0 0.0
    %6651 = vmatpush1.msra.mxu0 0.0
    %6652 = vmatprep.subr.mxu0 0.0
    %6653 = vmatpush1.msra.mxu0 0.0
    %6654 = vmatprep.subr.mxu0 0.0
    %6655 = vmatpush1.msra.mxu0 0.0
    %6656 = vmatprep.mubr.f32.mxu0 0.0
    %6657 = vmatmul.mubr.f32.gmra.mrb[0].mxu0 %v6519
    %v6658 = vpop.f32.mrb[0].mxu0
    %v6659 = vadd.f32 %v6514, %v6658
    %v6660 = vpop.f32.mrb[0].mxu0
    %v6661 = vadd.f32 %v6516, %v6660
    %6662 = vdwg.mxu0
    %v6663 = vadd.f32 %v6588, %v1171
    %v6664 = vadd.f32 %v6590, %v1175
    %v6665 = vadd.f32 %v6659, %v1179
    %v6666 = vadd.f32 %v6661, %v1183
    %v6667 = vtanh.pop %v6663
    %v6668 = vtanh.pop %v6664
    %v6669 = vtanh.pop %v6665
    %v6670 = vtanh.pop %v6666
    %v6671 = vmul.f32 %v6667, 0.5
    %v6672 = vadd.f32 %v6671, 0.5
    %v6673 = vmul.f32 %v6668, 0.5
    %v6674 = vadd.f32 %v6673, 0.5
    %v6675 = vmul.f32 %v6670, 0.5
    %v6676 = vadd.f32 %v6675, 0.5
    %v6677 = vmul.f32 %v6674, %v6064
    %v6678 = vmul.f32 %v6672, %v6669
    %v6679 = vadd.f32 %v6677, %v6678
    %v6680 = vtanh.pop %v6679
    %v6681 = vmul.f32 %v6676, %v6680
    %v6682 = vld [vmem:[%s5] sm:$0x1]
    %v6683 = vmul.f32 %v6681, %v6682
    %vm6684 = vcmask 253952
    %v6685 = vsel %vm6684, %v6683, 0.0
    %6686 = vadd.xlane.f32.xlu0 %v6685
    %v6687 = vpop.xlane.xlu0 %6686
    %v6688 = vld [vmem:[#allocation2] sm:$0x1]
    %v6689 = vadd.f32 %v6687, %v6688
    %vm6690 = vcmask 0
    %6691 = vst.msk [vmem:[#allocation10] sm:$0x1] %vm6690, %v6689
    // Predicated region
    $region42: #{tpu_custom_call.1} parent=1 // pred_check
      _
    $region43: #{tpu_custom_call.1} parent=1 // pred_check_branch
      %6693 = sbr.rel (0) target = $region45
    $region44: #{tpu_custom_call.1} parent=1 // pred_region
      %s6695 = ssub.s32 16, 16
      %6696 = vsyncadd [#allocation5], %s6695
      %s6698 = sshll.u32 [#allocation10], 4
      %s6699 = int_to_ptr.vmem [resolvable:$true] %s6698
      %6701 = dma.vmem_to_hbm [thread:$0]  %s6699, 16, %s7, [#allocation5]
    $region45: #{tpu_custom_call.1} parent=1 // pred_fallthru
      _
    // Predicated region
    $region46: #{tpu_custom_call.1} parent=1 // pred_check
      _
    $region47: #{tpu_custom_call.1} parent=1 // pred_check_branch
      %6703 = sbr.rel (0) target = $region49
    $region48: #{tpu_custom_call.1} parent=1 // pred_region
      %6704 = dma.done [#allocation5], 16
    $region49: #{tpu_custom_call.1} parent=1 // pred_fallthru
      _
    %6705 = vsyncpa [#allocation4], 1
    %6706 = vsyncpa [#allocation9], 1
    %6707 = vsyncpa [#allocation5], 1
    %6708 = vsyncpa [#allocation6], 1

</llo_original>
